<compile_context>
chip_gen: v5e
topology: v5e:2x2
jax: 0.10.0
libtpu: 0.0.40
codegen_flags: <defaults>
</compile_context>

<pallas_src>
import jax
import jax.numpy as jnp
from jax import lax
from jax.experimental import pallas as pl
from jax.experimental.pallas import tpu as pltpu


# ----------------------------------------------------------------------------
# Compiler parameters / tiling helpers
# ----------------------------------------------------------------------------
def _compute_vmem_limit_bytes():
    # ~100 MiB on v5e/v6e (128 MiB physical), ~51 MiB on v7x (64 MiB physical),
    # safe 48 MiB fallback if the hardware query is unavailable.
    try:
        cap = getattr(pltpu.get_tpu_info(), "vmem_capacity_bytes", None)
        if cap:
            return int(min(cap * 8 // 10, 100 * (1 << 20)))
    except Exception:
        pass
    return 48 * (1 << 20)


_VMEM_LIMIT_BYTES = _compute_vmem_limit_bytes()
_MAX_TOKEN_TILE = 2048   # capped so the fused head fits v7x's 64 MiB per-TC VMEM


def _cparams(dim_sems):
    return pltpu.CompilerParams(dimension_semantics=dim_sems,
                                vmem_limit_bytes=_VMEM_LIMIT_BYTES)


def _round_up(n, m):
    return -(-n // m) * m


def _pad_and_tile(n, max_tile=_MAX_TOKEN_TILE):
    """Pick a (8,128)-friendly tile and padded extent for a token / HW axis.
    Prefers >= 2 grid steps (both v7x TensorCores get work) and never exceeds
    max_tile.  If nothing divides, the axis is padded (never a giant fallback
    block)."""
    n = int(n)
    for cand in (max_tile, 1024, 512, 256, 128):
        if cand <= max_tile and n % cand == 0 and n // cand >= 2:
            return cand, n
    if n > max_tile:
        return max_tile, _round_up(n, max_tile)
    tile = max(_round_up(n, 8), 8)          # small axis: single padded block
    return tile, tile


def _gelu(x):
    # tanh-form GELU (EUP tanh; guaranteed Mosaic lowering).  nn.GELU's exact
    # erf form differs by <~1e-3 on the logits path (accepted deviation).
    # TODO(synk): switch to exact erf GELU if/when erf lowering is available.
    c = 0.7978845608028654  # sqrt(2/pi)
    return 0.5 * x * (1.0 + jnp.tanh(c * (x + 0.044715 * x * x * x)))


# ----------------------------------------------------------------------------
# Pallas kernels
# ----------------------------------------------------------------------------
def _mlp_kernel_T(x_ref, w1_ref, b1_ref, w2t_ref, b2c_ref, o_ref):
    # get_mlp (1x1 conv -> GELU -> 1x1 conv) on a token tile.  Output written
    # channel-major (Cout, tile) so the wide token axis is lane-dense.
    # f32 operands into each dot (no bf16xbf16->f32 dot anywhere).
    x = x_ref[...].astype(jnp.float32)
    h = _gelu(jnp.dot(x, w1_ref[...], preferred_element_type=jnp.float32)
              + b1_ref[...])
    o = lax.dot_general(w2t_ref[...], h, (((1,), (1,)), ((), ())),
                        preferred_element_type=jnp.float32)
    o_ref[...] = (o + b2c_ref[...]).astype(o_ref.dtype)


def _fused_head_kernel(p_ref, f_ref,
                       w1c_ref, b1c_ref, w2s_ref, b2s_ref, w2b_ref, b2b_ref,
                       ow1_ref, ob1_ref, ow2t_ref, ob2c_ref,
                       o_ref):
    # Fused: pp_scale_proj + pp_bias_proj (consolidated: ONE first-layer matmul
    # + ONE GELU over the concatenated hidden, then two zero-padded second
    # layers), modulation x = feat*scale + bias, and out_head.  pp_scale and
    # pp_bias never leave VMEM; logits stored channel-major (cls_n, tile).
    p = p_ref[...].astype(jnp.float32)                           # (tile, 4)
    h = _gelu(jnp.dot(p, w1c_ref[...], preferred_element_type=jnp.float32)
              + b1c_ref[...])                                    # (tile, 2*chid)
    scale = jnp.dot(h, w2s_ref[...],
                    preferred_element_type=jnp.float32) + b2s_ref[...]
    bias = jnp.dot(h, w2b_ref[...],
                   preferred_element_type=jnp.float32) + b2b_ref[...]
    x = f_ref[...].astype(jnp.float32) * scale + bias            # (tile, C)
    h2 = _gelu(jnp.dot(x, ow1_ref[...], preferred_element_type=jnp.float32)
               + ob1_ref[...])
    o = lax.dot_general(ow2t_ref[...], h2, (((1,), (1,)), ((), ())),
                        preferred_element_type=jnp.float32)      # (cls_n, tile)
    o_ref[...] = (o + ob2c_ref[...]).astype(o_ref.dtype)


def _pp_bg_kernel(f_ref, m_ref, sum_ref, cnt_ref):
    # get_pp_map pass 1 for one (batch, HW tile): accumulate the background-
    # masked sum of per-pixel L2-normalized features and the background count.
    # Both the per-pixel squared norm and the masked column sum run on the
    # (otherwise idle) MXU; the mask arrives lane-dense as (1, thw).
    j = pl.program_id(1)

    @pl.when(j == 0)
    def _():
        sum_ref[...] = jnp.zeros_like(sum_ref)
        cnt_ref[...] = jnp.zeros_like(cnt_ref)

    f = f_ref[0].astype(jnp.float32)                             # (thw, C)
    bg = (m_ref[0] == 0.0).astype(jnp.float32)                   # (1, thw)
    ones_c = jnp.ones((1, f.shape[1]), jnp.float32)
    nsq = lax.dot_general(ones_c, f * f, (((1,), (1,)), ((), ())),
                          preferred_element_type=jnp.float32)    # (1, thw)
    w = bg * lax.rsqrt(jnp.maximum(nsq, 1e-24))                  # (1, thw)
    sum_ref[0] += jnp.dot(w, f, preferred_element_type=jnp.float32)   # (1, C)
    cnt_ref[0] += jnp.sum(bg, axis=1, keepdims=True)             # (1, 1)


def _pp_sim_kernel(f_ref, bm_ref, sim_ref):
    # get_pp_map pass 2: cosine similarity of every pixel against the (already
    # normalized) background mean.  Both contractions over C run on the MXU;
    # output is (1, thw) so HW sits on the 128-lane axis (unmasked stores).
    f = f_ref[0].astype(jnp.float32)                             # (thw, C)
    bm = bm_ref[0]                                               # (1, C)
    ones_c = jnp.ones((1, f.shape[1]), jnp.float32)
    nsq = lax.dot_general(ones_c, f * f, (((1,), (1,)), ((), ())),
                          preferred_element_type=jnp.float32)    # (1, thw)
    dotbm = lax.dot_general(bm, f, (((1,), (1,)), ((), ())),
                            preferred_element_type=jnp.float32)  # (1, thw)
    sim_ref[0] = dotbm * lax.rsqrt(jnp.maximum(nsq, 1e-24))


# ----------------------------------------------------------------------------
# Wrappers around pallas_call
# ----------------------------------------------------------------------------
def mlp_tokens_T(x_tok, params):
    """get_mlp (1x1 conv MLP) on token-layout input (N, Cin) -> (Cout, N) bf16."""
    w1, b1, w2, b2 = params
    cin, chid = w1.shape
    cout = w2.shape[1]
    n = x_tok.shape[0]
    tile, n_pad = _pad_and_tile(n)
    if n_pad != n:
        x_tok = jnp.pad(x_tok, ((0, n_pad - n), (0, 0)))
    out = pl.pallas_call(
        _mlp_kernel_T,
        out_shape=jax.ShapeDtypeStruct((cout, n_pad), jnp.bfloat16),
        grid_spec=pltpu.PrefetchScalarGridSpec(
            num_scalar_prefetch=0,
            grid=(n_pad // tile,),
            in_specs=[
                pl.BlockSpec((tile, cin), lambda i: (i, 0)),
                pl.BlockSpec((cin, chid), lambda i: (0, 0)),
                pl.BlockSpec((1, chid), lambda i: (0, 0)),
                pl.BlockSpec((cout, chid), lambda i: (0, 0)),
                pl.BlockSpec((cout, 1), lambda i: (0, 0)),
            ],
            out_specs=pl.BlockSpec((cout, tile), lambda i: (0, i)),
        ),
        compiler_params=_cparams(("parallel",)),
    )(x_tok.astype(jnp.bfloat16), w1, b1, jnp.transpose(w2), jnp.transpose(b2))
    return out[:, :n]


def fused_pp_out_head(pp_maps_tok, feat_tok, scale_p, bias_p, out_p):
    """Fused pp_scale_proj / pp_bias_proj / modulation / out_head.
    Inputs: pp_maps_tok (T, n_levels), feat_tok (T, C).  Output: (cls_n, T)."""
    sw1, sb1, sw2, sb2 = scale_p
    bw1, bb1, bw2, bb2 = bias_p
    ow1, ob1, ow2, ob2 = out_p
    t, cin = feat_tok.shape
    n_pp = pp_maps_tok.shape[1]
    chid = ow1.shape[1]
    cout = ow2.shape[1]

    # Consolidated scale/bias projection weights (one first-layer matmul + one
    # GELU; second layers zero-padded so no lane slicing of the hidden tile).
    hs, hb = sw1.shape[1], bw1.shape[1]
    w1c = jnp.concatenate([sw1, bw1], axis=1)                      # (n_pp, hs+hb)
    b1c = jnp.concatenate([sb1, bb1], axis=1)                      # (1, hs+hb)
    w2s = jnp.concatenate([sw2, jnp.zeros((hb, sw2.shape[1]), sw2.dtype)], axis=0)
    w2b = jnp.concatenate([jnp.zeros((hs, bw2.shape[1]), bw2.dtype), bw2], axis=0)

    tile, t_pad = _pad_and_tile(t)
    if t_pad != t:
        feat_tok = jnp.pad(feat_tok, ((0, t_pad - t), (0, 0)))
        pp_maps_tok = jnp.pad(pp_maps_tok, ((0, t_pad - t), (0, 0)))

    out = pl.pallas_call(
        _fused_head_kernel,
        out_shape=jax.ShapeDtypeStruct((cout, t_pad), jnp.float32),
        grid_spec=pltpu.PrefetchScalarGridSpec(
            num_scalar_prefetch=0,
            grid=(t_pad // tile,),
            in_specs=[
                pl.BlockSpec((tile, n_pp), lambda i: (i, 0)),
                pl.BlockSpec((tile, cin), lambda i: (i, 0)),
                pl.BlockSpec(w1c.shape, lambda i: (0, 0)),
                pl.BlockSpec(b1c.shape, lambda i: (0, 0)),
                pl.BlockSpec(w2s.shape, lambda i: (0, 0)),
                pl.BlockSpec(sb2.shape, lambda i: (0, 0)),
                pl.BlockSpec(w2b.shape, lambda i: (0, 0)),
                pl.BlockSpec(bb2.shape, lambda i: (0, 0)),
                pl.BlockSpec(ow1.shape, lambda i: (0, 0)),
                pl.BlockSpec(ob1.shape, lambda i: (0, 0)),
                pl.BlockSpec((cout, chid), lambda i: (0, 0)),
                pl.BlockSpec((cout, 1), lambda i: (0, 0)),
            ],
            out_specs=pl.BlockSpec((cout, tile), lambda i: (0, i)),
        ),
        compiler_params=_cparams(("parallel",)),
    )(pp_maps_tok.astype(jnp.float32), feat_tok.astype(jnp.bfloat16),
      w1c, b1c, w2s, sb2, w2b, bb2,
      ow1, ob1, jnp.transpose(ow2), jnp.transpose(ob2))
    return out[:, :t]


def _resize_nearest(y, h, w):  # NCHW, matches F.interpolate(mode='nearest')
    _, _, hh, ww = y.shape
    ri = (jnp.arange(h) * hh) // h
    ci = (jnp.arange(w) * ww) // w
    return y[:, :, ri][:, :, :, ci]


def _resize_nearest_nhwc(y, h, w):
    _, hh, ww, _ = y.shape
    ri = (jnp.arange(h) * hh) // h
    ci = (jnp.arange(w) * ww) // w
    return y[:, ri][:, :, ci]


def get_pp_map_tokens(pp_feats, ocr_mask, img_size):
    """pp_feats: list of (tokens (B, hw, C) bf16, h, w).
    Returns pp_maps in token layout (B*img*img, n_levels), f32."""
    b = ocr_mask.shape[0]
    y = ocr_mask.astype(jnp.float32)
    maps = []
    for tok, h, w in pp_feats:
        hw = h * w
        c = tok.shape[-1]
        thw, hw_pad = _pad_and_tile(hw)
        n_t = hw_pad // thw
        f_bf = tok.astype(jnp.bfloat16)
        # Nearest-resized mask in row layout (B, 1, hw): lane-dense (no (hw,1)
        # lane padding).  Padded pixels are marked foreground (=1) so they
        # contribute nothing to the background sum/count.
        ym = _resize_nearest(y, h, w).reshape(b, 1, hw)
        if hw_pad != hw:
            f_bf = jnp.pad(f_bf, ((0, 0), (0, hw_pad - hw), (0, 0)))
            ym = jnp.pad(ym, ((0, 0), (0, 0), (0, hw_pad - hw)),
                         constant_values=1.0)

        # pass 1: masked sum / count of normalized features (HW tiled reduction
        # with the accumulator resident in VMEM across the 'arbitrary' axis).
        bg_sum, bg_cnt = pl.pallas_call(
            _pp_bg_kernel,
            out_shape=(jax.ShapeDtypeStruct((b, 1, c), jnp.float32),
                       jax.ShapeDtypeStruct((b, 1, 1), jnp.float32)),
            grid_spec=pltpu.PrefetchScalarGridSpec(
                num_scalar_prefetch=0,
                grid=(b, n_t),
                in_specs=[
                    pl.BlockSpec((1, thw, c), lambda i, j: (i, j, 0)),
                    pl.BlockSpec((1, 1, thw), lambda i, j: (i, 0, j)),
                ],
                out_specs=(pl.BlockSpec((1, 1, c), lambda i, j: (i, 0, 0)),
                           pl.BlockSpec((1, 1, 1), lambda i, j: (i, 0, 0))),
            ),
            compiler_params=_cparams(("parallel", "arbitrary")),
        )(f_bf, ym)

        # bg_mean = normalize(bg_sum / clamp(count, 1))  (tiny, plain JAX)
        bm = bg_sum[:, 0, :] / jnp.maximum(bg_cnt[:, 0, :], 1.0)          # (B, C)
        bm = bm / jnp.maximum(
            jnp.sqrt(jnp.sum(bm * bm, axis=-1, keepdims=True)), 1e-12)
        bm = bm[:, None, :]                                               # (B,1,C)

        # pass 2: per-pixel cosine similarity, lane-dense (B, 1, hw_pad) output
        sim = pl.pallas_call(
            _pp_sim_kernel,
            out_shape=jax.ShapeDtypeStruct((b, 1, hw_pad), jnp.float32),
            grid_spec=pltpu.PrefetchScalarGridSpec(
                num_scalar_prefetch=0,
                grid=(b, n_t),
                in_specs=[
                    pl.BlockSpec((1, thw, c), lambda i, j: (i, j, 0)),
                    pl.BlockSpec((1, 1, c), lambda i, j: (i, 0, 0)),
                ],
                out_specs=pl.BlockSpec((1, 1, thw), lambda i, j: (i, 0, j)),
            ),
            compiler_params=_cparams(("parallel", "parallel")),
        )(f_bf, bm)

        # bilinear upsample (align_corners=False / half-pixel) to img_size
        sim = sim[:, :, :hw].reshape(b, 1, h, w)
        sim = jax.image.resize(sim, (b, 1, img_size, img_size), method="bilinear")
        maps.append(sim.reshape(b, img_size * img_size))
    return jnp.stack(maps, axis=-1).reshape(b * img_size * img_size, len(maps))


def dct_align_head(as_feat, params):
    """AdaptiveAvgPool2d(1) -> Flatten -> Linear -> BatchNorm1d(train) -> ReLU
    -> Linear.  Input is only (B,256,4,4); per the perf review this stays in
    plain JAX (kernel-call + DMA overhead would exceed the math).
    TODO(synk): BatchNorm1d uses per-call batch statistics (train mode); an
    eval-mode forward would need running statistics that are not modelled."""
    w1, b1, g, be, w2, b2 = params
    pooled = jnp.mean(as_feat.astype(jnp.float32), axis=(2, 3))          # (B, C)
    h1 = jnp.dot(pooled, w1) + b1
    mu = jnp.mean(h1, axis=0, keepdims=True)
    var = jnp.mean((h1 - mu) ** 2, axis=0, keepdims=True)
    hn = (h1 - mu) * lax.rsqrt(var + 1e-5) * g + be
    hr = jnp.maximum(hn, 0.0)
    return jnp.dot(hr, w2) + b2


# ----------------------------------------------------------------------------
# Stand-ins for external submodules (not defined in model.py)
# ----------------------------------------------------------------------------
def add_coord(x):
    # TODO(synk): AddCoord source not provided; standard CoordConv (with_r=False).
    b, _, h, w = x.shape
    xx = jnp.broadcast_to(jnp.linspace(-1.0, 1.0, w)[None, None, None, :], (b, 1, h, w))
    yy = jnp.broadcast_to(jnp.linspace(-1.0, 1.0, h)[None, None, :, None], (b, 1, h, w))
    return jnp.concatenate([x, xx, yy], axis=1)


def fph_standin(params, dct, qt):
    # TODO(synk): FPH DCT encoder source not provided; deterministic stand-in
    # producing as_feat [B,256,4,4] plus a multi-scale feature list.
    b = dct.shape[0]
    d = dct.astype(jnp.float32) / 20.0                            # [B,1,16,16]
    pooled4 = d.reshape(b, 1, 4, 4, 4, 4).mean(axis=(3, 5))       # [B,1,4,4]
    as_feat = jnp.einsum("bchw,cd->bdhw", pooled4, params["fph_w"])
    as_feat = as_feat + qt.mean(axis=1)[:, None, None, None] * 0.01
    as_feat = jnp.tanh(as_feat)
    return as_feat, [as_feat]


def restormer_loc_standin(params, x_in, ms_dct_feats, dct_align_score, ocr_mask,
                          img_size):
    # TODO(synk): get_restormer('full_model') + load_docres are external/unavailable;
    # deterministic pointwise stand-in.  It emits token-layout activations so
    # the downstream Pallas chain needs no extra transposes.  All f32 math.
    b, _, h, w = x_in.shape
    x = jnp.transpose(x_in, (0, 2, 3, 1))                                   # (b,h,w,6)
    base = jnp.tanh(jnp.einsum("bhwc,cd->bhwd", x, params["loc_w0"]))       # (b,h,w,96)
    dct_mod = jnp.tanh(jnp.mean(ms_dct_feats[0], axis=(1, 2, 3)))           # (b,)
    ocr_nhwc = jnp.transpose(ocr_mask, (0, 2, 3, 1))                        # (b,h,w,1)
    feat = base * (1.0 + dct_align_score[:, None, None, None]) \
        + dct_mod[:, None, None, None]
    feat = feat * (1.0 - ocr_nhwc)
    feat_tok = feat.reshape(b * h * w, base.shape[-1]).astype(jnp.bfloat16)
    loc_feat = jnp.transpose(
        jnp.tanh(jnp.einsum("bhwc,cd->bhwd", base, params["loc_w1"])), (0, 3, 1, 2))
    cnt_feats = jnp.transpose(
        jnp.tanh(jnp.einsum("bhwc,cd->bhwd", base, params["cnt_w"])), (0, 3, 1, 2))
    frg_feats = jnp.transpose(
        jnp.tanh(jnp.einsum("bhwc,cd->bhwd", base, params["frg_w"])), (0, 3, 1, 2))
    pp_feats = []
    for i, s in enumerate([h // 8, h // 4, h // 2, h]):
        fs = _resize_nearest_nhwc(base, s, s)
        pf = jnp.tanh(jnp.einsum("bhwc,cd->bhwd", fs, params["pp_w"][i]))
        pp_feats.append((pf.reshape(b, s * s, pf.shape[-1]).astype(jnp.bfloat16), s, s))
    return feat_tok, loc_feat, cnt_feats, frg_feats, pp_feats


def restormer_rec_standin(params, cnt_feats, frg_feats, is_shuffle):
    # TODO(synk): get_restormer('decoder_only') is external/unavailable; stand-in.
    f = jnp.flip(frg_feats, axis=0) if is_shuffle else frg_feats
    return jnp.einsum("bchw,cd->bdhw", cnt_feats + f, params["rec_w"])


def supcon_parallel_placeholder(proj_feat, mask):
    # TODO(synk): supcon_parallel loss source not provided; placeholder scalar
    # over the (Pallas-computed) focal_proj output.
    return jnp.mean(proj_feat.astype(jnp.float32))


# ----------------------------------------------------------------------------
# Parameter init (deterministic, synthetic)
# ----------------------------------------------------------------------------
def _init_mlp_params(key, cin, cout):
    chid = max(cin // 2, 1)
    k1, k2 = jax.random.split(key)
    w1 = jax.random.normal(k1, (cin, chid), jnp.float32) * (cin ** -0.5)
    b1 = jnp.full((1, chid), 0.01, jnp.float32)
    w2 = jax.random.normal(k2, (chid, cout), jnp.float32) * (chid ** -0.5)
    b2 = jnp.full((1, cout), 0.01, jnp.float32)
    return (w1, b1, w2, b2)


def _init_align_params(key, c=256):
    k1, k2 = jax.random.split(key)
    w1 = jax.random.normal(k1, (c, c // 2), jnp.float32) * (c ** -0.5)
    b1 = jnp.zeros((1, c // 2), jnp.float32)
    gamma = jnp.ones((1, c // 2), jnp.float32)
    beta = jnp.zeros((1, c // 2), jnp.float32)
    w2 = jax.random.normal(k2, (c // 2, 2), jnp.float32) * ((c // 2) ** -0.5)
    b2 = jnp.zeros((1, 2), jnp.float32)
    return (w1, b1, gamma, beta, w2, b2)


def init_params(key, cls_n=2, loc_out_dim=96, dct_feat_dim=256,
                focal_in_dim=(192, 96, 96, 96), focal_out_dim=32, pp_scale_n=4):
    keys = jax.random.split(key, 24)
    p = {}
    p["align_head"] = _init_align_params(keys[0], dct_feat_dim)
    p["pp_scale_proj"] = _init_mlp_params(keys[1], pp_scale_n, loc_out_dim)
    p["pp_bias_proj"] = _init_mlp_params(keys[2], pp_scale_n, loc_out_dim)
    p["out_head"] = _init_mlp_params(keys[3], loc_out_dim, cls_n)
    p["focal_proj"] = [_init_mlp_params(keys[4 + i], focal_in_dim[i], focal_out_dim)
                       for i in range(len(focal_in_dim))]
    # stand-in weights for the external submodules
    p["fph_w"] = jax.random.normal(keys[8], (1, dct_feat_dim), jnp.float32) * 0.1
    p["loc_w0"] = jax.random.normal(keys[9], (6, loc_out_dim), jnp.float32) * 0.2
    p["loc_w1"] = jax.random.normal(keys[10], (loc_out_dim, loc_out_dim), jnp.float32) * (loc_out_dim ** -0.5)
    p["cnt_w"] = jax.random.normal(keys[11], (loc_out_dim, 48), jnp.float32) * (loc_out_dim ** -0.5)
    p["frg_w"] = jax.random.normal(keys[12], (loc_out_dim, 48), jnp.float32) * (loc_out_dim ** -0.5)
    p["pp_w"] = [jax.random.normal(keys[13 + i], (loc_out_dim, focal_in_dim[i]), jnp.float32)
                 * (loc_out_dim ** -0.5) for i in range(len(focal_in_dim))]
    p["rec_w"] = jax.random.normal(keys[17], (48, 4), jnp.float32) * (48 ** -0.5)
    return p


# ----------------------------------------------------------------------------
# ADCDNet forward
# ----------------------------------------------------------------------------
def adcdnet_forward(params, img, dct, qt, mask, ocr_mask, is_train=True):
    img_size = img.shape[2]
    b = img.shape[0]

    # dct_encoder (FPH) + alignment head (plain JAX per review: input is tiny)
    as_feat, ms_dct_feats = fph_standin(params, dct, qt)
    align_logits = dct_align_head(as_feat, params["align_head"])
    align_score = jax.nn.softmax(align_logits, axis=1)[:, -1]

    # restormer_loc on [img, coords, zeros_like(ocr_mask)]
    x_in = jnp.concatenate([add_coord(img), jnp.zeros_like(ocr_mask)], axis=1)
    feat_tok, loc_feat, cnt_feats, frg_feats, pp_feats = restormer_loc_standin(
        params, x_in, ms_dct_feats, align_score, ocr_mask, img_size)

    # prototype-prior maps: two-pass tiled Pallas reduction per level
    pp_maps_tok = get_pp_map_tokens(pp_feats, ocr_mask, img_size)         # Pallas

    # fused pp_scale_proj + pp_bias_proj + (feat*scale+bias) + out_head
    logits_cm = fused_pp_out_head(pp_maps_tok, feat_tok,
                                  params["pp_scale_proj"],
                                  params["pp_bias_proj"],
                                  params["out_head"])                     # (2, T)
    logits = jnp.transpose(logits_cm.reshape(2, b, img_size, img_size),
                           (1, 0, 2, 3))                                  # NCHW

    if not is_train:
        rec_output, focal_losses = None, None
    else:
        rec_img = restormer_rec_standin(params, cnt_feats, frg_feats, is_shuffle=False)
        shuffle_rec_img = restormer_rec_standin(params, cnt_feats, frg_feats, is_shuffle=True)
        norm_dct = dct.astype(jnp.float32) / 20.0
        rec_output = (rec_img, shuffle_rec_img, norm_dct)
        focal_losses = tuple(
            supcon_parallel_placeholder(
                mlp_tokens_T(pp_feats[i][0].reshape(-1, pp_feats[i][0].shape[-1]),
                             params["focal_proj"][i]), mask)              # Pallas
            for i in range(len(pp_feats)))

    return logits, loc_feat, align_logits, rec_output, focal_losses


# ----------------------------------------------------------------------------
if __name__ == "__main__":
    key = jax.random.PRNGKey(0)
    k_img, k_dct, k_qt, k_mask, k_ocr, k_p = jax.random.split(key, 6)

    B, H = 2, 16
    img = jax.random.normal(k_img, (B, 3, H, H), jnp.float32)
    dct = jax.random.randint(k_dct, (B, 1, H, H), -40, 40).astype(jnp.int32)
    qt = jax.random.uniform(k_qt, (B, 64), jnp.float32, 1.0, 16.0)
    mask = (jax.random.uniform(k_mask, (B, 1, H, H)) > 0.7).astype(jnp.float32)
    ocr_mask = (jax.random.uniform(k_ocr, (B, 1, H, H)) > 0.8).astype(jnp.float32)

    params = init_params(k_p)

    fwd = jax.jit(adcdnet_forward, static_argnames=("is_train",))
    out = fwd(params, img, dct, qt, mask, ocr_mask, is_train=True)
    out = jax.block_until_ready(out)

    logits, loc_feat, align_logits, rec_output, focal_losses = out
    assert logits.shape == (B, 2, H, H)
    assert align_logits.shape == (B, 2)
    assert rec_output[0].shape == (B, 4, H, H)
    assert len(focal_losses) == 4

    print("KERNEL_OK")
</pallas_src>

<mosaic_0001>
module attributes {stable_mosaic.version = 11 : i64} {
  func.func @_mlp_kernel_T(%arg0: i32, %arg1: memref<8x192xbf16, #tpu.memory_space<vmem>>, %arg2: memref<192x96xf32, #tpu.memory_space<vmem>>, %arg3: memref<1x96xf32, #tpu.memory_space<vmem>>, %arg4: memref<32x96xf32, #tpu.memory_space<vmem>>, %arg5: memref<32x1xf32, #tpu.memory_space<vmem>>, %arg6: memref<32x8xbf16, #tpu.memory_space<vmem>>) attributes {dimension_semantics = [#tpu.dimension_semantics<parallel>], iteration_bounds = array<i64: 1>, scalar_prefetch = 0 : i64, scratch_operands = 0 : i64, tpu.core_type = #tpu.core_type<tc>, window_params = [{transform_indices = @transform_0, window_bounds = array<i64: 8, 192>}, {pipeline_mode = #tpu.pipeline_mode<synchronous>, transform_indices = @transform_1, window_bounds = array<i64: 192, 96>}, {pipeline_mode = #tpu.pipeline_mode<synchronous>, transform_indices = @transform_2, window_bounds = array<i64: 1, 96>}, {pipeline_mode = #tpu.pipeline_mode<synchronous>, transform_indices = @transform_3, window_bounds = array<i64: 32, 96>}, {pipeline_mode = #tpu.pipeline_mode<synchronous>, transform_indices = @transform_4, window_bounds = array<i64: 32, 1>}, {transform_indices = @transform_5, window_bounds = array<i64: 32, 8>}]} {
    %c0 = arith.constant 0 : index
    %c0_0 = arith.constant 0 : index
    %0 = vector.load %arg1[%c0, %c0_0] : memref<8x192xbf16, #tpu.memory_space<vmem>>, vector<8x192xbf16>
    %1 = arith.extf %0 : vector<8x192xbf16> to vector<8x192xf32>
    %c0_1 = arith.constant 0 : index
    %c0_2 = arith.constant 0 : index
    %2 = vector.load %arg2[%c0_1, %c0_2] : memref<192x96xf32, #tpu.memory_space<vmem>>, vector<192x96xf32>
    %cst = arith.constant dense<0.000000e+00> : vector<8x96xf32>
    %3 = tpu.matmul %1, %2, %cst {dimension_numbers = #tpu.dot_dimension_numbers<[1], [0], [0], [1], [0, 0, 1, 1], [], []>} : vector<8x192xf32>, vector<192x96xf32>, vector<8x96xf32> -> vector<8x96xf32>
    %c0_3 = arith.constant 0 : index
    %c0_4 = arith.constant 0 : index
    %4 = vector.load %arg3[%c0_3, %c0_4] : memref<1x96xf32, #tpu.memory_space<vmem>>, vector<1x96xf32>
    %5 = vector.broadcast %4 : vector<1x96xf32> to vector<8x96xf32>
    %6 = arith.addf %3, %5 : vector<8x96xf32>
    %cst_5 = arith.constant 5.000000e-01 : f32
    %7 = vector.broadcast %cst_5 : f32 to vector<8x96xf32>
    %8 = arith.mulf %7, %6 : vector<8x96xf32>
    %cst_6 = arith.constant 4.471500e-02 : f32
    %9 = vector.broadcast %cst_6 : f32 to vector<8x96xf32>
    %10 = arith.mulf %9, %6 : vector<8x96xf32>
    %11 = arith.mulf %10, %6 : vector<8x96xf32>
    %12 = arith.mulf %11, %6 : vector<8x96xf32>
    %13 = arith.addf %6, %12 : vector<8x96xf32>
    %cst_7 = arith.constant 0.797884583 : f32
    %14 = vector.broadcast %cst_7 : f32 to vector<8x96xf32>
    %15 = arith.mulf %14, %13 : vector<8x96xf32>
    %16 = math.tanh %15 : vector<8x96xf32>
    %cst_8 = arith.constant 1.000000e+00 : f32
    %17 = vector.broadcast %cst_8 : f32 to vector<8x96xf32>
    %18 = arith.addf %17, %16 : vector<8x96xf32>
    %19 = arith.mulf %8, %18 : vector<8x96xf32>
    %c0_9 = arith.constant 0 : index
    %c0_10 = arith.constant 0 : index
    %20 = vector.load %arg4[%c0_9, %c0_10] : memref<32x96xf32, #tpu.memory_space<vmem>>, vector<32x96xf32>
    %cst_11 = arith.constant dense<0.000000e+00> : vector<32x8xf32>
    %21 = tpu.matmul %20, %19, %cst_11 {dimension_numbers = #tpu.dot_dimension_numbers<[1], [1], [0], [0], [0, 0, 1, 0], [], []>} : vector<32x96xf32>, vector<8x96xf32>, vector<32x8xf32> -> vector<32x8xf32>
    %c0_12 = arith.constant 0 : index
    %c0_13 = arith.constant 0 : index
    %22 = vector.load %arg5[%c0_12, %c0_13] : memref<32x1xf32, #tpu.memory_space<vmem>>, vector<32x1xf32>
    %23 = vector.broadcast %22 : vector<32x1xf32> to vector<32x8xf32>
    %24 = arith.addf %21, %23 : vector<32x8xf32>
    %25 = arith.truncf %24 : vector<32x8xf32> to vector<32x8xbf16>
    %c0_14 = arith.constant 0 : index
    %c0_15 = arith.constant 0 : index
    %26 = vector.load %arg6[%c0_14, %c0_15] : memref<32x8xbf16, #tpu.memory_space<vmem>>, vector<32x8xbf16>
    tpu.vector_store %arg6[%c0_14, %c0_15], %25 {strides = array<i32>} : memref<32x8xbf16, #tpu.memory_space<vmem>>, vector<32x8xbf16>,
    return
  }
  func.func @transform_0(%arg0: i32) -> (i32, i32) {
    %c0_i32 = arith.constant 0 : i32
    %c0_i32_0 = arith.constant 0 : i32
    return %arg0, %c0_i32 : i32, i32
  }
  func.func @transform_1(%arg0: i32) -> (i32, i32) {
    %c0_i32 = arith.constant 0 : i32
    %c0_i32_0 = arith.constant 0 : i32
    %c0_i32_1 = arith.constant 0 : i32
    return %c0_i32, %c0_i32_0 : i32, i32
  }
  func.func @transform_2(%arg0: i32) -> (i32, i32) {
    %c0_i32 = arith.constant 0 : i32
    %c0_i32_0 = arith.constant 0 : i32
    %c0_i32_1 = arith.constant 0 : i32
    return %c0_i32, %c0_i32_0 : i32, i32
  }
  func.func @transform_3(%arg0: i32) -> (i32, i32) {
    %c0_i32 = arith.constant 0 : i32
    %c0_i32_0 = arith.constant 0 : i32
    %c0_i32_1 = arith.constant 0 : i32
    return %c0_i32, %c0_i32_0 : i32, i32
  }
  func.func @transform_4(%arg0: i32) -> (i32, i32) {
    %c0_i32 = arith.constant 0 : i32
    %c0_i32_0 = arith.constant 0 : i32
    %c0_i32_1 = arith.constant 0 : i32
    return %c0_i32, %c0_i32_0 : i32, i32
  }
  func.func @transform_5(%arg0: i32) -> (i32, i32) {
    %c0_i32 = arith.constant 0 : i32
    %c0_i32_0 = arith.constant 0 : i32
    return %c0_i32, %arg0 : i32, i32
  }
}

module attributes {stable_mosaic.version = 11 : i64} {
  func.func @_pp_bg_kernel(%arg0: i32, %arg1: i32, %arg2: memref<1x8x192xbf16, #tpu.memory_space<vmem>>, %arg3: memref<1x1x8xf32, #tpu.memory_space<vmem>>, %arg4: memref<1x1x192xf32, #tpu.memory_space<vmem>>, %arg5: memref<1x1x1xf32, #tpu.memory_space<vmem>>) attributes {dimension_semantics = [#tpu.dimension_semantics<parallel>, #tpu.dimension_semantics<arbitrary>], iteration_bounds = array<i64: 2, 1>, scalar_prefetch = 0 : i64, scratch_operands = 0 : i64, tpu.core_type = #tpu.core_type<tc>, window_params = [{transform_indices = @transform_0, window_bounds = array<i64: 1, 8, 192>}, {transform_indices = @transform_1, window_bounds = array<i64: 1, 1, 8>}, {transform_indices = @transform_2, window_bounds = array<i64: 1, 1, 192>}, {transform_indices = @transform_3, window_bounds = array<i64: 1, 1, 1>}]} {
    %c0_i32 = arith.constant 0 : i32
    %0 = arith.cmpi eq, %arg1, %c0_i32 : i32
    %1 = arith.extui %0 : i1 to i32
    %c0_i32_0 = arith.constant 0 : i32
    %2 = arith.cmpi ne, %1, %c0_i32_0 : i32
    scf.if %2 {
      %cst_23 = arith.constant 0.000000e+00 : f32
      %34 = vector.broadcast %cst_23 : f32 to vector<1x1x192xf32>
      %c0_24 = arith.constant 0 : index
      %c0_25 = arith.constant 0 : index
      %c0_26 = arith.constant 0 : index
      %35 = vector.load %arg4[%c0_24, %c0_25, %c0_26] : memref<1x1x192xf32, #tpu.memory_space<vmem>>, vector<1x1x192xf32>
      tpu.vector_store %arg4[%c0_24, %c0_25, %c0_26], %34 {strides = array<i32>} : memref<1x1x192xf32, #tpu.memory_space<vmem>>, vector<1x1x192xf32>,
      %cst_27 = arith.constant 0.000000e+00 : f32
      %36 = vector.broadcast %cst_27 : f32 to vector<1x1x1xf32>
      %c0_28 = arith.constant 0 : index
      %c0_29 = arith.constant 0 : index
      %c0_30 = arith.constant 0 : index
      %37 = vector.load %arg5[%c0_28, %c0_29, %c0_30] : memref<1x1x1xf32, #tpu.memory_space<vmem>>, vector<1x1x1xf32>
      tpu.vector_store %arg5[%c0_28, %c0_29, %c0_30], %36 {strides = array<i32>} : memref<1x1x1xf32, #tpu.memory_space<vmem>>, vector<1x1x1xf32>,
    } else {
    }
    %c0 = arith.constant 0 : index
    %c0_1 = arith.constant 0 : index
    %c0_2 = arith.constant 0 : index
    %3 = vector.load %arg2[%c0, %c0_1, %c0_2] : memref<1x8x192xbf16, #tpu.memory_space<vmem>>, vector<1x8x192xbf16>
    %4 = vector.shape_cast %3 : vector<1x8x192xbf16> to vector<8x192xbf16>
    %5 = arith.extf %4 : vector<8x192xbf16> to vector<8x192xf32>
    %c0_3 = arith.constant 0 : index
    %c0_4 = arith.constant 0 : index
    %c0_5 = arith.constant 0 : index
    %6 = vector.load %arg3[%c0_3, %c0_4, %c0_5] : memref<1x1x8xf32, #tpu.memory_space<vmem>>, vector<1x1x8xf32>
    %7 = vector.shape_cast %6 : vector<1x1x8xf32> to vector<1x8xf32>
    %cst = arith.constant 0.000000e+00 : f32
    %8 = vector.broadcast %cst : f32 to vector<1x8xf32>
    %9 = arith.cmpf oeq, %7, %8 : vector<1x8xf32>
    %10 = arith.extui %9 : vector<1x8xi1> to vector<1x8xi32>
    %11 = arith.sitofp %10 : vector<1x8xi32> to vector<1x8xf32>
    %cst_6 = arith.constant 1.000000e+00 : f32
    %12 = vector.broadcast %cst_6 : f32 to vector<1x192xf32>
    %13 = arith.mulf %5, %5 : vector<8x192xf32>
    %cst_7 = arith.constant dense<0.000000e+00> : vector<1x8xf32>
    %14 = tpu.matmul %12, %13, %cst_7 {dimension_numbers = #tpu.dot_dimension_numbers<[1], [1], [0], [0], [0, 0, 1, 0], [], []>} : vector<1x192xf32>, vector<8x192xf32>, vector<1x8xf32> -> vector<1x8xf32>
    %cst_8 = arith.constant 1.000000e-24 : f32
    %15 = vector.broadcast %cst_8 : f32 to vector<1x8xf32>
    %16 = arith.maximumf %14, %15 : vector<1x8xf32>
    %17 = math.rsqrt %16 : vector<1x8xf32>
    %18 = arith.mulf %11, %17 : vector<1x8xf32>
    %c0_9 = arith.constant 0 : index
    %c0_10 = arith.constant 0 : index
    %c0_11 = arith.constant 0 : index
    %19 = vector.load %arg4[%c0_9, %c0_10, %c0_11] : memref<1x1x192xf32, #tpu.memory_space<vmem>>, vector<1x1x192xf32>
    %20 = vector.shape_cast %19 : vector<1x1x192xf32> to vector<1x192xf32>
    %cst_12 = arith.constant dense<0.000000e+00> : vector<1x192xf32>
    %21 = tpu.matmul %18, %5, %cst_12 {dimension_numbers = #tpu.dot_dimension_numbers<[1], [0], [0], [1], [0, 0, 1, 1], [], []>} : vector<1x8xf32>, vector<8x192xf32>, vector<1x192xf32> -> vector<1x192xf32>
    %22 = arith.addf %20, %21 : vector<1x192xf32>
    %c0_13 = arith.constant 0 : index
    %c0_14 = arith.constant 0 : index
    %c0_15 = arith.constant 0 : index
    %23 = vector.load %arg4[%c0_13, %c0_14, %c0_15] : memref<1x1x192xf32, #tpu.memory_space<vmem>>, vector<1x1x192xf32>
    %24 = vector.shape_cast %23 : vector<1x1x192xf32> to vector<1x192xf32>
    %25 = vector.shape_cast %22 : vector<1x192xf32> to vector<1x1x192xf32>
    tpu.vector_store %arg4[%c0_13, %c0_14, %c0_15], %25 {strides = array<i32>} : memref<1x1x192xf32, #tpu.memory_space<vmem>>, vector<1x1x192xf32>,
    %c0_16 = arith.constant 0 : index
    %c0_17 = arith.constant 0 : index
    %c0_18 = arith.constant 0 : index
    %26 = vector.load %arg5[%c0_16, %c0_17, %c0_18] : memref<1x1x1xf32, #tpu.memory_space<vmem>>, vector<1x1x1xf32>
    %27 = vector.shape_cast %26 : vector<1x1x1xf32> to vector<1x1xf32>
    %cst_19 = arith.constant dense<0.000000e+00> : vector<1xf32>
    %28 = vector.multi_reduction <add>, %11, %cst_19 [1] : vector<1x8xf32> to vector<1xf32>
    %29 = vector.shape_cast %28 : vector<1xf32> to vector<1x1xf32>
    %30 = arith.addf %27, %29 : vector<1x1xf32>
    %c0_20 = arith.constant 0 : index
    %c0_21 = arith.constant 0 : index
    %c0_22 = arith.constant 0 : index
    %31 = vector.load %arg5[%c0_20, %c0_21, %c0_22] : memref<1x1x1xf32, #tpu.memory_space<vmem>>, vector<1x1x1xf32>
    %32 = vector.shape_cast %31 : vector<1x1x1xf32> to vector<1x1xf32>
    %33 = vector.shape_cast %30 : vector<1x1xf32> to vector<1x1x1xf32>
    tpu.vector_store %arg5[%c0_20, %c0_21, %c0_22], %33 {strides = array<i32>} : memref<1x1x1xf32, #tpu.memory_space<vmem>>, vector<1x1x1xf32>,
    return
  }
  func.func @transform_0(%arg0: i32, %arg1: i32) -> (i32, i32, i32) {
    %c0_i32 = arith.constant 0 : i32
    %c0_i32_0 = arith.constant 0 : i32
    return %arg0, %arg1, %c0_i32 : i32, i32, i32
  }
  func.func @transform_1(%arg0: i32, %arg1: i32) -> (i32, i32, i32) {
    %c0_i32 = arith.constant 0 : i32
    %c0_i32_0 = arith.constant 0 : i32
    return %arg0, %c0_i32, %arg1 : i32, i32, i32
  }
  func.func @transform_2(%arg0: i32, %arg1: i32) -> (i32, i32, i32) {
    %c0_i32 = arith.constant 0 : i32
    %c0_i32_0 = arith.constant 0 : i32
    %c0_i32_1 = arith.constant 0 : i32
    return %arg0, %c0_i32, %c0_i32_0 : i32, i32, i32
  }
  func.func @transform_3(%arg0: i32, %arg1: i32) -> (i32, i32, i32) {
    %c0_i32 = arith.constant 0 : i32
    %c0_i32_0 = arith.constant 0 : i32
    %c0_i32_1 = arith.constant 0 : i32
    return %arg0, %c0_i32, %c0_i32_0 : i32, i32, i32
  }
}

module attributes {stable_mosaic.version = 11 : i64} {
  func.func @_pp_sim_kernel(%arg0: i32, %arg1: i32, %arg2: memref<1x8x192xbf16, #tpu.memory_space<vmem>>, %arg3: memref<1x1x192xf32, #tpu.memory_space<vmem>>, %arg4: memref<1x1x8xf32, #tpu.memory_space<vmem>>) attributes {dimension_semantics = [#tpu.dimension_semantics<parallel>, #tpu.dimension_semantics<parallel>], iteration_bounds = array<i64: 2, 1>, scalar_prefetch = 0 : i64, scratch_operands = 0 : i64, tpu.core_type = #tpu.core_type<tc>, window_params = [{transform_indices = @transform_0, window_bounds = array<i64: 1, 8, 192>}, {transform_indices = @transform_1, window_bounds = array<i64: 1, 1, 192>}, {transform_indices = @transform_2, window_bounds = array<i64: 1, 1, 8>}]} {
    %c0 = arith.constant 0 : index
    %c0_0 = arith.constant 0 : index
    %c0_1 = arith.constant 0 : index
    %0 = vector.load %arg2[%c0, %c0_0, %c0_1] : memref<1x8x192xbf16, #tpu.memory_space<vmem>>, vector<1x8x192xbf16>
    %1 = vector.shape_cast %0 : vector<1x8x192xbf16> to vector<8x192xbf16>
    %2 = arith.extf %1 : vector<8x192xbf16> to vector<8x192xf32>
    %c0_2 = arith.constant 0 : index
    %c0_3 = arith.constant 0 : index
    %c0_4 = arith.constant 0 : index
    %3 = vector.load %arg3[%c0_2, %c0_3, %c0_4] : memref<1x1x192xf32, #tpu.memory_space<vmem>>, vector<1x1x192xf32>
    %4 = vector.shape_cast %3 : vector<1x1x192xf32> to vector<1x192xf32>
    %cst = arith.constant 1.000000e+00 : f32
    %5 = vector.broadcast %cst : f32 to vector<1x192xf32>
    %6 = arith.mulf %2, %2 : vector<8x192xf32>
    %cst_5 = arith.constant dense<0.000000e+00> : vector<1x8xf32>
    %7 = tpu.matmul %5, %6, %cst_5 {dimension_numbers = #tpu.dot_dimension_numbers<[1], [1], [0], [0], [0, 0, 1, 0], [], []>} : vector<1x192xf32>, vector<8x192xf32>, vector<1x8xf32> -> vector<1x8xf32>
    %cst_6 = arith.constant dense<0.000000e+00> : vector<1x8xf32>
    %8 = tpu.matmul %4, %2, %cst_6 {dimension_numbers = #tpu.dot_dimension_numbers<[1], [1], [0], [0], [0, 0, 1, 0], [], []>} : vector<1x192xf32>, vector<8x192xf32>, vector<1x8xf32> -> vector<1x8xf32>
    %cst_7 = arith.constant 1.000000e-24 : f32
    %9 = vector.broadcast %cst_7 : f32 to vector<1x8xf32>
    %10 = arith.maximumf %7, %9 : vector<1x8xf32>
    %11 = math.rsqrt %10 : vector<1x8xf32>
    %12 = arith.mulf %8, %11 : vector<1x8xf32>
    %c0_8 = arith.constant 0 : index
    %c0_9 = arith.constant 0 : index
    %c0_10 = arith.constant 0 : index
    %13 = vector.load %arg4[%c0_8, %c0_9, %c0_10] : memref<1x1x8xf32, #tpu.memory_space<vmem>>, vector<1x1x8xf32>
    %14 = vector.shape_cast %13 : vector<1x1x8xf32> to vector<1x8xf32>
    %15 = vector.shape_cast %12 : vector<1x8xf32> to vector<1x1x8xf32>
    tpu.vector_store %arg4[%c0_8, %c0_9, %c0_10], %15 {strides = array<i32>} : memref<1x1x8xf32, #tpu.memory_space<vmem>>, vector<1x1x8xf32>,
    return
  }
  func.func @transform_0(%arg0: i32, %arg1: i32) -> (i32, i32, i32) {
    %c0_i32 = arith.constant 0 : i32
    %c0_i32_0 = arith.constant 0 : i32
    return %arg0, %arg1, %c0_i32 : i32, i32, i32
  }
  func.func @transform_1(%arg0: i32, %arg1: i32) -> (i32, i32, i32) {
    %c0_i32 = arith.constant 0 : i32
    %c0_i32_0 = arith.constant 0 : i32
    %c0_i32_1 = arith.constant 0 : i32
    return %arg0, %c0_i32, %c0_i32_0 : i32, i32, i32
  }
  func.func @transform_2(%arg0: i32, %arg1: i32) -> (i32, i32, i32) {
    %c0_i32 = arith.constant 0 : i32
    %c0_i32_0 = arith.constant 0 : i32
    return %arg0, %c0_i32, %arg1 : i32, i32, i32
  }
}

module attributes {stable_mosaic.version = 11 : i64} {
  func.func @_mlp_kernel_T(%arg0: i32, %arg1: memref<32x96xbf16, #tpu.memory_space<vmem>>, %arg2: memref<96x48xf32, #tpu.memory_space<vmem>>, %arg3: memref<1x48xf32, #tpu.memory_space<vmem>>, %arg4: memref<32x48xf32, #tpu.memory_space<vmem>>, %arg5: memref<32x1xf32, #tpu.memory_space<vmem>>, %arg6: memref<32x32xbf16, #tpu.memory_space<vmem>>) attributes {dimension_semantics = [#tpu.dimension_semantics<parallel>], iteration_bounds = array<i64: 1>, scalar_prefetch = 0 : i64, scratch_operands = 0 : i64, tpu.core_type = #tpu.core_type<tc>, window_params = [{transform_indices = @transform_0, window_bounds = array<i64: 32, 96>}, {pipeline_mode = #tpu.pipeline_mode<synchronous>, transform_indices = @transform_1, window_bounds = array<i64: 96, 48>}, {pipeline_mode = #tpu.pipeline_mode<synchronous>, transform_indices = @transform_2, window_bounds = array<i64: 1, 48>}, {pipeline_mode = #tpu.pipeline_mode<synchronous>, transform_indices = @transform_3, window_bounds = array<i64: 32, 48>}, {pipeline_mode = #tpu.pipeline_mode<synchronous>, transform_indices = @transform_4, window_bounds = array<i64: 32, 1>}, {transform_indices = @transform_5, window_bounds = array<i64: 32, 32>}]} {
    %c0 = arith.constant 0 : index
    %c0_0 = arith.constant 0 : index
    %0 = vector.load %arg1[%c0, %c0_0] : memref<32x96xbf16, #tpu.memory_space<vmem>>, vector<32x96xbf16>
    %1 = arith.extf %0 : vector<32x96xbf16> to vector<32x96xf32>
    %c0_1 = arith.constant 0 : index
    %c0_2 = arith.constant 0 : index
    %2 = vector.load %arg2[%c0_1, %c0_2] : memref<96x48xf32, #tpu.memory_space<vmem>>, vector<96x48xf32>
    %cst = arith.constant dense<0.000000e+00> : vector<32x48xf32>
    %3 = tpu.matmul %1, %2, %cst {dimension_numbers = #tpu.dot_dimension_numbers<[1], [0], [0], [1], [0, 0, 1, 1], [], []>} : vector<32x96xf32>, vector<96x48xf32>, vector<32x48xf32> -> vector<32x48xf32>
    %c0_3 = arith.constant 0 : index
    %c0_4 = arith.constant 0 : index
    %4 = vector.load %arg3[%c0_3, %c0_4] : memref<1x48xf32, #tpu.memory_space<vmem>>, vector<1x48xf32>
    %5 = vector.broadcast %4 : vector<1x48xf32> to vector<32x48xf32>
    %6 = arith.addf %3, %5 : vector<32x48xf32>
    %cst_5 = arith.constant 5.000000e-01 : f32
    %7 = vector.broadcast %cst_5 : f32 to vector<32x48xf32>
    %8 = arith.mulf %7, %6 : vector<32x48xf32>
    %cst_6 = arith.constant 4.471500e-02 : f32
    %9 = vector.broadcast %cst_6 : f32 to vector<32x48xf32>
    %10 = arith.mulf %9, %6 : vector<32x48xf32>
    %11 = arith.mulf %10, %6 : vector<32x48xf32>
    %12 = arith.mulf %11, %6 : vector<32x48xf32>
    %13 = arith.addf %6, %12 : vector<32x48xf32>
    %cst_7 = arith.constant 0.797884583 : f32
    %14 = vector.broadcast %cst_7 : f32 to vector<32x48xf32>
    %15 = arith.mulf %14, %13 : vector<32x48xf32>
    %16 = math.tanh %15 : vector<32x48xf32>
    %cst_8 = arith.constant 1.000000e+00 : f32
    %17 = vector.broadcast %cst_8 : f32 to vector<32x48xf32>
    %18 = arith.addf %17, %16 : vector<32x48xf32>
    %19 = arith.mulf %8, %18 : vector<32x48xf32>
    %c0_9 = arith.constant 0 : index
    %c0_10 = arith.constant 0 : index
    %20 = vector.load %arg4[%c0_9, %c0_10] : memref<32x48xf32, #tpu.memory_space<vmem>>, vector<32x48xf32>
    %cst_11 = arith.constant dense<0.000000e+00> : vector<32x32xf32>
    %21 = tpu.matmul %20, %19, %cst_11 {dimension_numbers = #tpu.dot_dimension_numbers<[1], [1], [0], [0], [0, 0, 1, 0], [], []>} : vector<32x48xf32>, vector<32x48xf32>, vector<32x32xf32> -> vector<32x32xf32>
    %c0_12 = arith.constant 0 : index
    %c0_13 = arith.constant 0 : index
    %22 = vector.load %arg5[%c0_12, %c0_13] : memref<32x1xf32, #tpu.memory_space<vmem>>, vector<32x1xf32>
    %23 = vector.broadcast %22 : vector<32x1xf32> to vector<32x32xf32>
    %24 = arith.addf %21, %23 : vector<32x32xf32>
    %25 = arith.truncf %24 : vector<32x32xf32> to vector<32x32xbf16>
    %c0_14 = arith.constant 0 : index
    %c0_15 = arith.constant 0 : index
    %26 = vector.load %arg6[%c0_14, %c0_15] : memref<32x32xbf16, #tpu.memory_space<vmem>>, vector<32x32xbf16>
    tpu.vector_store %arg6[%c0_14, %c0_15], %25 {strides = array<i32>} : memref<32x32xbf16, #tpu.memory_space<vmem>>, vector<32x32xbf16>,
    return
  }
  func.func @transform_0(%arg0: i32) -> (i32, i32) {
    %c0_i32 = arith.constant 0 : i32
    %c0_i32_0 = arith.constant 0 : i32
    return %arg0, %c0_i32 : i32, i32
  }
  func.func @transform_1(%arg0: i32) -> (i32, i32) {
    %c0_i32 = arith.constant 0 : i32
    %c0_i32_0 = arith.constant 0 : i32
    %c0_i32_1 = arith.constant 0 : i32
    return %c0_i32, %c0_i32_0 : i32, i32
  }
  func.func @transform_2(%arg0: i32) -> (i32, i32) {
    %c0_i32 = arith.constant 0 : i32
    %c0_i32_0 = arith.constant 0 : i32
    %c0_i32_1 = arith.constant 0 : i32
    return %c0_i32, %c0_i32_0 : i32, i32
  }
  func.func @transform_3(%arg0: i32) -> (i32, i32) {
    %c0_i32 = arith.constant 0 : i32
    %c0_i32_0 = arith.constant 0 : i32
    %c0_i32_1 = arith.constant 0 : i32
    return %c0_i32, %c0_i32_0 : i32, i32
  }
  func.func @transform_4(%arg0: i32) -> (i32, i32) {
    %c0_i32 = arith.constant 0 : i32
    %c0_i32_0 = arith.constant 0 : i32
    %c0_i32_1 = arith.constant 0 : i32
    return %c0_i32, %c0_i32_0 : i32, i32
  }
  func.func @transform_5(%arg0: i32) -> (i32, i32) {
    %c0_i32 = arith.constant 0 : i32
    %c0_i32_0 = arith.constant 0 : i32
    return %c0_i32, %arg0 : i32, i32
  }
}

module attributes {stable_mosaic.version = 11 : i64} {
  func.func @_pp_sim_kernel(%arg0: i32, %arg1: i32, %arg2: memref<1x16x96xbf16, #tpu.memory_space<vmem>>, %arg3: memref<1x1x96xf32, #tpu.memory_space<vmem>>, %arg4: memref<1x1x16xf32, #tpu.memory_space<vmem>>) attributes {dimension_semantics = [#tpu.dimension_semantics<parallel>, #tpu.dimension_semantics<parallel>], iteration_bounds = array<i64: 2, 1>, scalar_prefetch = 0 : i64, scratch_operands = 0 : i64, tpu.core_type = #tpu.core_type<tc>, window_params = [{transform_indices = @transform_0, window_bounds = array<i64: 1, 16, 96>}, {transform_indices = @transform_1, window_bounds = array<i64: 1, 1, 96>}, {transform_indices = @transform_2, window_bounds = array<i64: 1, 1, 16>}]} {
    %c0 = arith.constant 0 : index
    %c0_0 = arith.constant 0 : index
    %c0_1 = arith.constant 0 : index
    %0 = vector.load %arg2[%c0, %c0_0, %c0_1] : memref<1x16x96xbf16, #tpu.memory_space<vmem>>, vector<1x16x96xbf16>
    %1 = vector.shape_cast %0 : vector<1x16x96xbf16> to vector<16x96xbf16>
    %2 = arith.extf %1 : vector<16x96xbf16> to vector<16x96xf32>
    %c0_2 = arith.constant 0 : index
    %c0_3 = arith.constant 0 : index
    %c0_4 = arith.constant 0 : index
    %3 = vector.load %arg3[%c0_2, %c0_3, %c0_4] : memref<1x1x96xf32, #tpu.memory_space<vmem>>, vector<1x1x96xf32>
    %4 = vector.shape_cast %3 : vector<1x1x96xf32> to vector<1x96xf32>
    %cst = arith.constant 1.000000e+00 : f32
    %5 = vector.broadcast %cst : f32 to vector<1x96xf32>
    %6 = arith.mulf %2, %2 : vector<16x96xf32>
    %cst_5 = arith.constant dense<0.000000e+00> : vector<1x16xf32>
    %7 = tpu.matmul %5, %6, %cst_5 {dimension_numbers = #tpu.dot_dimension_numbers<[1], [1], [0], [0], [0, 0, 1, 0], [], []>} : vector<1x96xf32>, vector<16x96xf32>, vector<1x16xf32> -> vector<1x16xf32>
    %cst_6 = arith.constant dense<0.000000e+00> : vector<1x16xf32>
    %8 = tpu.matmul %4, %2, %cst_6 {dimension_numbers = #tpu.dot_dimension_numbers<[1], [1], [0], [0], [0, 0, 1, 0], [], []>} : vector<1x96xf32>, vector<16x96xf32>, vector<1x16xf32> -> vector<1x16xf32>
    %cst_7 = arith.constant 1.000000e-24 : f32
    %9 = vector.broadcast %cst_7 : f32 to vector<1x16xf32>
    %10 = arith.maximumf %7, %9 : vector<1x16xf32>
    %11 = math.rsqrt %10 : vector<1x16xf32>
    %12 = arith.mulf %8, %11 : vector<1x16xf32>
    %c0_8 = arith.constant 0 : index
    %c0_9 = arith.constant 0 : index
    %c0_10 = arith.constant 0 : index
    %13 = vector.load %arg4[%c0_8, %c0_9, %c0_10] : memref<1x1x16xf32, #tpu.memory_space<vmem>>, vector<1x1x16xf32>
    %14 = vector.shape_cast %13 : vector<1x1x16xf32> to vector<1x16xf32>
    %15 = vector.shape_cast %12 : vector<1x16xf32> to vector<1x1x16xf32>
    tpu.vector_store %arg4[%c0_8, %c0_9, %c0_10], %15 {strides = array<i32>} : memref<1x1x16xf32, #tpu.memory_space<vmem>>, vector<1x1x16xf32>,
    return
  }
  func.func @transform_0(%arg0: i32, %arg1: i32) -> (i32, i32, i32) {
    %c0_i32 = arith.constant 0 : i32
    %c0_i32_0 = arith.constant 0 : i32
    return %arg0, %arg1, %c0_i32 : i32, i32, i32
  }
  func.func @transform_1(%arg0: i32, %arg1: i32) -> (i32, i32, i32) {
    %c0_i32 = arith.constant 0 : i32
    %c0_i32_0 = arith.constant 0 : i32
    %c0_i32_1 = arith.constant 0 : i32
    return %arg0, %c0_i32, %c0_i32_0 : i32, i32, i32
  }
  func.func @transform_2(%arg0: i32, %arg1: i32) -> (i32, i32, i32) {
    %c0_i32 = arith.constant 0 : i32
    %c0_i32_0 = arith.constant 0 : i32
    return %arg0, %c0_i32, %arg1 : i32, i32, i32
  }
}

module attributes {stable_mosaic.version = 11 : i64} {
  func.func @_pp_bg_kernel(%arg0: i32, %arg1: i32, %arg2: memref<1x16x96xbf16, #tpu.memory_space<vmem>>, %arg3: memref<1x1x16xf32, #tpu.memory_space<vmem>>, %arg4: memref<1x1x96xf32, #tpu.memory_space<vmem>>, %arg5: memref<1x1x1xf32, #tpu.memory_space<vmem>>) attributes {dimension_semantics = [#tpu.dimension_semantics<parallel>, #tpu.dimension_semantics<arbitrary>], iteration_bounds = array<i64: 2, 1>, scalar_prefetch = 0 : i64, scratch_operands = 0 : i64, tpu.core_type = #tpu.core_type<tc>, window_params = [{transform_indices = @transform_0, window_bounds = array<i64: 1, 16, 96>}, {transform_indices = @transform_1, window_bounds = array<i64: 1, 1, 16>}, {transform_indices = @transform_2, window_bounds = array<i64: 1, 1, 96>}, {transform_indices = @transform_3, window_bounds = array<i64: 1, 1, 1>}]} {
    %c0_i32 = arith.constant 0 : i32
    %0 = arith.cmpi eq, %arg1, %c0_i32 : i32
    %1 = arith.extui %0 : i1 to i32
    %c0_i32_0 = arith.constant 0 : i32
    %2 = arith.cmpi ne, %1, %c0_i32_0 : i32
    scf.if %2 {
      %cst_23 = arith.constant 0.000000e+00 : f32
      %34 = vector.broadcast %cst_23 : f32 to vector<1x1x96xf32>
      %c0_24 = arith.constant 0 : index
      %c0_25 = arith.constant 0 : index
      %c0_26 = arith.constant 0 : index
      %35 = vector.load %arg4[%c0_24, %c0_25, %c0_26] : memref<1x1x96xf32, #tpu.memory_space<vmem>>, vector<1x1x96xf32>
      tpu.vector_store %arg4[%c0_24, %c0_25, %c0_26], %34 {strides = array<i32>} : memref<1x1x96xf32, #tpu.memory_space<vmem>>, vector<1x1x96xf32>,
      %cst_27 = arith.constant 0.000000e+00 : f32
      %36 = vector.broadcast %cst_27 : f32 to vector<1x1x1xf32>
      %c0_28 = arith.constant 0 : index
      %c0_29 = arith.constant 0 : index
      %c0_30 = arith.constant 0 : index
      %37 = vector.load %arg5[%c0_28, %c0_29, %c0_30] : memref<1x1x1xf32, #tpu.memory_space<vmem>>, vector<1x1x1xf32>
      tpu.vector_store %arg5[%c0_28, %c0_29, %c0_30], %36 {strides = array<i32>} : memref<1x1x1xf32, #tpu.memory_space<vmem>>, vector<1x1x1xf32>,
    } else {
    }
    %c0 = arith.constant 0 : index
    %c0_1 = arith.constant 0 : index
    %c0_2 = arith.constant 0 : index
    %3 = vector.load %arg2[%c0, %c0_1, %c0_2] : memref<1x16x96xbf16, #tpu.memory_space<vmem>>, vector<1x16x96xbf16>
    %4 = vector.shape_cast %3 : vector<1x16x96xbf16> to vector<16x96xbf16>
    %5 = arith.extf %4 : vector<16x96xbf16> to vector<16x96xf32>
    %c0_3 = arith.constant 0 : index
    %c0_4 = arith.constant 0 : index
    %c0_5 = arith.constant 0 : index
    %6 = vector.load %arg3[%c0_3, %c0_4, %c0_5] : memref<1x1x16xf32, #tpu.memory_space<vmem>>, vector<1x1x16xf32>
    %7 = vector.shape_cast %6 : vector<1x1x16xf32> to vector<1x16xf32>
    %cst = arith.constant 0.000000e+00 : f32
    %8 = vector.broadcast %cst : f32 to vector<1x16xf32>
    %9 = arith.cmpf oeq, %7, %8 : vector<1x16xf32>
    %10 = arith.extui %9 : vector<1x16xi1> to vector<1x16xi32>
    %11 = arith.sitofp %10 : vector<1x16xi32> to vector<1x16xf32>
    %cst_6 = arith.constant 1.000000e+00 : f32
    %12 = vector.broadcast %cst_6 : f32 to vector<1x96xf32>
    %13 = arith.mulf %5, %5 : vector<16x96xf32>
    %cst_7 = arith.constant dense<0.000000e+00> : vector<1x16xf32>
    %14 = tpu.matmul %12, %13, %cst_7 {dimension_numbers = #tpu.dot_dimension_numbers<[1], [1], [0], [0], [0, 0, 1, 0], [], []>} : vector<1x96xf32>, vector<16x96xf32>, vector<1x16xf32> -> vector<1x16xf32>
    %cst_8 = arith.constant 1.000000e-24 : f32
    %15 = vector.broadcast %cst_8 : f32 to vector<1x16xf32>
    %16 = arith.maximumf %14, %15 : vector<1x16xf32>
    %17 = math.rsqrt %16 : vector<1x16xf32>
    %18 = arith.mulf %11, %17 : vector<1x16xf32>
    %c0_9 = arith.constant 0 : index
    %c0_10 = arith.constant 0 : index
    %c0_11 = arith.constant 0 : index
    %19 = vector.load %arg4[%c0_9, %c0_10, %c0_11] : memref<1x1x96xf32, #tpu.memory_space<vmem>>, vector<1x1x96xf32>
    %20 = vector.shape_cast %19 : vector<1x1x96xf32> to vector<1x96xf32>
    %cst_12 = arith.constant dense<0.000000e+00> : vector<1x96xf32>
    %21 = tpu.matmul %18, %5, %cst_12 {dimension_numbers = #tpu.dot_dimension_numbers<[1], [0], [0], [1], [0, 0, 1, 1], [], []>} : vector<1x16xf32>, vector<16x96xf32>, vector<1x96xf32> -> vector<1x96xf32>
    %22 = arith.addf %20, %21 : vector<1x96xf32>
    %c0_13 = arith.constant 0 : index
    %c0_14 = arith.constant 0 : index
    %c0_15 = arith.constant 0 : index
    %23 = vector.load %arg4[%c0_13, %c0_14, %c0_15] : memref<1x1x96xf32, #tpu.memory_space<vmem>>, vector<1x1x96xf32>
    %24 = vector.shape_cast %23 : vector<1x1x96xf32> to vector<1x96xf32>
    %25 = vector.shape_cast %22 : vector<1x96xf32> to vector<1x1x96xf32>
    tpu.vector_store %arg4[%c0_13, %c0_14, %c0_15], %25 {strides = array<i32>} : memref<1x1x96xf32, #tpu.memory_space<vmem>>, vector<1x1x96xf32>,
    %c0_16 = arith.constant 0 : index
    %c0_17 = arith.constant 0 : index
    %c0_18 = arith.constant 0 : index
    %26 = vector.load %arg5[%c0_16, %c0_17, %c0_18] : memref<1x1x1xf32, #tpu.memory_space<vmem>>, vector<1x1x1xf32>
    %27 = vector.shape_cast %26 : vector<1x1x1xf32> to vector<1x1xf32>
    %cst_19 = arith.constant dense<0.000000e+00> : vector<1xf32>
    %28 = vector.multi_reduction <add>, %11, %cst_19 [1] : vector<1x16xf32> to vector<1xf32>
    %29 = vector.shape_cast %28 : vector<1xf32> to vector<1x1xf32>
    %30 = arith.addf %27, %29 : vector<1x1xf32>
    %c0_20 = arith.constant 0 : index
    %c0_21 = arith.constant 0 : index
    %c0_22 = arith.constant 0 : index
    %31 = vector.load %arg5[%c0_20, %c0_21, %c0_22] : memref<1x1x1xf32, #tpu.memory_space<vmem>>, vector<1x1x1xf32>
    %32 = vector.shape_cast %31 : vector<1x1x1xf32> to vector<1x1xf32>
    %33 = vector.shape_cast %30 : vector<1x1xf32> to vector<1x1x1xf32>
    tpu.vector_store %arg5[%c0_20, %c0_21, %c0_22], %33 {strides = array<i32>} : memref<1x1x1xf32, #tpu.memory_space<vmem>>, vector<1x1x1xf32>,
    return
  }
  func.func @transform_0(%arg0: i32, %arg1: i32) -> (i32, i32, i32) {
    %c0_i32 = arith.constant 0 : i32
    %c0_i32_0 = arith.constant 0 : i32
    return %arg0, %arg1, %c0_i32 : i32, i32, i32
  }
  func.func @transform_1(%arg0: i32, %arg1: i32) -> (i32, i32, i32) {
    %c0_i32 = arith.constant 0 : i32
    %c0_i32_0 = arith.constant 0 : i32
    return %arg0, %c0_i32, %arg1 : i32, i32, i32
  }
  func.func @transform_2(%arg0: i32, %arg1: i32) -> (i32, i32, i32) {
    %c0_i32 = arith.constant 0 : i32
    %c0_i32_0 = arith.constant 0 : i32
    %c0_i32_1 = arith.constant 0 : i32
    return %arg0, %c0_i32, %c0_i32_0 : i32, i32, i32
  }
  func.func @transform_3(%arg0: i32, %arg1: i32) -> (i32, i32, i32) {
    %c0_i32 = arith.constant 0 : i32
    %c0_i32_0 = arith.constant 0 : i32
    %c0_i32_1 = arith.constant 0 : i32
    return %arg0, %c0_i32, %c0_i32_0 : i32, i32, i32
  }
}

module attributes {stable_mosaic.version = 11 : i64} {
  func.func @_mlp_kernel_T(%arg0: i32, %arg1: memref<128x96xbf16, #tpu.memory_space<vmem>>, %arg2: memref<96x48xf32, #tpu.memory_space<vmem>>, %arg3: memref<1x48xf32, #tpu.memory_space<vmem>>, %arg4: memref<32x48xf32, #tpu.memory_space<vmem>>, %arg5: memref<32x1xf32, #tpu.memory_space<vmem>>, %arg6: memref<32x128xbf16, #tpu.memory_space<vmem>>) attributes {dimension_semantics = [#tpu.dimension_semantics<parallel>], iteration_bounds = array<i64: 1>, scalar_prefetch = 0 : i64, scratch_operands = 0 : i64, tpu.core_type = #tpu.core_type<tc>, window_params = [{transform_indices = @transform_0, window_bounds = array<i64: 128, 96>}, {pipeline_mode = #tpu.pipeline_mode<synchronous>, transform_indices = @transform_1, window_bounds = array<i64: 96, 48>}, {pipeline_mode = #tpu.pipeline_mode<synchronous>, transform_indices = @transform_2, window_bounds = array<i64: 1, 48>}, {pipeline_mode = #tpu.pipeline_mode<synchronous>, transform_indices = @transform_3, window_bounds = array<i64: 32, 48>}, {pipeline_mode = #tpu.pipeline_mode<synchronous>, transform_indices = @transform_4, window_bounds = array<i64: 32, 1>}, {transform_indices = @transform_5, window_bounds = array<i64: 32, 128>}]} {
    %c0 = arith.constant 0 : index
    %c0_0 = arith.constant 0 : index
    %0 = vector.load %arg1[%c0, %c0_0] : memref<128x96xbf16, #tpu.memory_space<vmem>>, vector<128x96xbf16>
    %1 = arith.extf %0 : vector<128x96xbf16> to vector<128x96xf32>
    %c0_1 = arith.constant 0 : index
    %c0_2 = arith.constant 0 : index
    %2 = vector.load %arg2[%c0_1, %c0_2] : memref<96x48xf32, #tpu.memory_space<vmem>>, vector<96x48xf32>
    %cst = arith.constant dense<0.000000e+00> : vector<128x48xf32>
    %3 = tpu.matmul %1, %2, %cst {dimension_numbers = #tpu.dot_dimension_numbers<[1], [0], [0], [1], [0, 0, 1, 1], [], []>} : vector<128x96xf32>, vector<96x48xf32>, vector<128x48xf32> -> vector<128x48xf32>
    %c0_3 = arith.constant 0 : index
    %c0_4 = arith.constant 0 : index
    %4 = vector.load %arg3[%c0_3, %c0_4] : memref<1x48xf32, #tpu.memory_space<vmem>>, vector<1x48xf32>
    %5 = vector.broadcast %4 : vector<1x48xf32> to vector<128x48xf32>
    %6 = arith.addf %3, %5 : vector<128x48xf32>
    %cst_5 = arith.constant 5.000000e-01 : f32
    %7 = vector.broadcast %cst_5 : f32 to vector<128x48xf32>
    %8 = arith.mulf %7, %6 : vector<128x48xf32>
    %cst_6 = arith.constant 4.471500e-02 : f32
    %9 = vector.broadcast %cst_6 : f32 to vector<128x48xf32>
    %10 = arith.mulf %9, %6 : vector<128x48xf32>
    %11 = arith.mulf %10, %6 : vector<128x48xf32>
    %12 = arith.mulf %11, %6 : vector<128x48xf32>
    %13 = arith.addf %6, %12 : vector<128x48xf32>
    %cst_7 = arith.constant 0.797884583 : f32
    %14 = vector.broadcast %cst_7 : f32 to vector<128x48xf32>
    %15 = arith.mulf %14, %13 : vector<128x48xf32>
    %16 = math.tanh %15 : vector<128x48xf32>
    %cst_8 = arith.constant 1.000000e+00 : f32
    %17 = vector.broadcast %cst_8 : f32 to vector<128x48xf32>
    %18 = arith.addf %17, %16 : vector<128x48xf32>
    %19 = arith.mulf %8, %18 : vector<128x48xf32>
    %c0_9 = arith.constant 0 : index
    %c0_10 = arith.constant 0 : index
    %20 = vector.load %arg4[%c0_9, %c0_10] : memref<32x48xf32, #tpu.memory_space<vmem>>, vector<32x48xf32>
    %cst_11 = arith.constant dense<0.000000e+00> : vector<32x128xf32>
    %21 = tpu.matmul %20, %19, %cst_11 {dimension_numbers = #tpu.dot_dimension_numbers<[1], [1], [0], [0], [0, 0, 1, 0], [], []>} : vector<32x48xf32>, vector<128x48xf32>, vector<32x128xf32> -> vector<32x128xf32>
    %c0_12 = arith.constant 0 : index
    %c0_13 = arith.constant 0 : index
    %22 = vector.load %arg5[%c0_12, %c0_13] : memref<32x1xf32, #tpu.memory_space<vmem>>, vector<32x1xf32>
    %23 = vector.broadcast %22 : vector<32x1xf32> to vector<32x128xf32>
    %24 = arith.addf %21, %23 : vector<32x128xf32>
    %25 = arith.truncf %24 : vector<32x128xf32> to vector<32x128xbf16>
    %c0_14 = arith.constant 0 : index
    %c0_15 = arith.constant 0 : index
    %26 = vector.load %arg6[%c0_14, %c0_15] : memref<32x128xbf16, #tpu.memory_space<vmem>>, vector<32x128xbf16>
    tpu.vector_store %arg6[%c0_14, %c0_15], %25 {strides = array<i32>} : memref<32x128xbf16, #tpu.memory_space<vmem>>, vector<32x128xbf16>,
    return
  }
  func.func @transform_0(%arg0: i32) -> (i32, i32) {
    %c0_i32 = arith.constant 0 : i32
    %c0_i32_0 = arith.constant 0 : i32
    return %arg0, %c0_i32 : i32, i32
  }
  func.func @transform_1(%arg0: i32) -> (i32, i32) {
    %c0_i32 = arith.constant 0 : i32
    %c0_i32_0 = arith.constant 0 : i32
    %c0_i32_1 = arith.constant 0 : i32
    return %c0_i32, %c0_i32_0 : i32, i32
  }
  func.func @transform_2(%arg0: i32) -> (i32, i32) {
    %c0_i32 = arith.constant 0 : i32
    %c0_i32_0 = arith.constant 0 : i32
    %c0_i32_1 = arith.constant 0 : i32
    return %c0_i32, %c0_i32_0 : i32, i32
  }
  func.func @transform_3(%arg0: i32) -> (i32, i32) {
    %c0_i32 = arith.constant 0 : i32
    %c0_i32_0 = arith.constant 0 : i32
    %c0_i32_1 = arith.constant 0 : i32
    return %c0_i32, %c0_i32_0 : i32, i32
  }
  func.func @transform_4(%arg0: i32) -> (i32, i32) {
    %c0_i32 = arith.constant 0 : i32
    %c0_i32_0 = arith.constant 0 : i32
    %c0_i32_1 = arith.constant 0 : i32
    return %c0_i32, %c0_i32_0 : i32, i32
  }
  func.func @transform_5(%arg0: i32) -> (i32, i32) {
    %c0_i32 = arith.constant 0 : i32
    %c0_i32_0 = arith.constant 0 : i32
    return %c0_i32, %arg0 : i32, i32
  }
}

module attributes {stable_mosaic.version = 11 : i64} {
  func.func @_pp_sim_kernel(%arg0: i32, %arg1: i32, %arg2: memref<1x64x96xbf16, #tpu.memory_space<vmem>>, %arg3: memref<1x1x96xf32, #tpu.memory_space<vmem>>, %arg4: memref<1x1x64xf32, #tpu.memory_space<vmem>>) attributes {dimension_semantics = [#tpu.dimension_semantics<parallel>, #tpu.dimension_semantics<parallel>], iteration_bounds = array<i64: 2, 1>, scalar_prefetch = 0 : i64, scratch_operands = 0 : i64, tpu.core_type = #tpu.core_type<tc>, window_params = [{transform_indices = @transform_0, window_bounds = array<i64: 1, 64, 96>}, {transform_indices = @transform_1, window_bounds = array<i64: 1, 1, 96>}, {transform_indices = @transform_2, window_bounds = array<i64: 1, 1, 64>}]} {
    %c0 = arith.constant 0 : index
    %c0_0 = arith.constant 0 : index
    %c0_1 = arith.constant 0 : index
    %0 = vector.load %arg2[%c0, %c0_0, %c0_1] : memref<1x64x96xbf16, #tpu.memory_space<vmem>>, vector<1x64x96xbf16>
    %1 = vector.shape_cast %0 : vector<1x64x96xbf16> to vector<64x96xbf16>
    %2 = arith.extf %1 : vector<64x96xbf16> to vector<64x96xf32>
    %c0_2 = arith.constant 0 : index
    %c0_3 = arith.constant 0 : index
    %c0_4 = arith.constant 0 : index
    %3 = vector.load %arg3[%c0_2, %c0_3, %c0_4] : memref<1x1x96xf32, #tpu.memory_space<vmem>>, vector<1x1x96xf32>
    %4 = vector.shape_cast %3 : vector<1x1x96xf32> to vector<1x96xf32>
    %cst = arith.constant 1.000000e+00 : f32
    %5 = vector.broadcast %cst : f32 to vector<1x96xf32>
    %6 = arith.mulf %2, %2 : vector<64x96xf32>
    %cst_5 = arith.constant dense<0.000000e+00> : vector<1x64xf32>
    %7 = tpu.matmul %5, %6, %cst_5 {dimension_numbers = #tpu.dot_dimension_numbers<[1], [1], [0], [0], [0, 0, 1, 0], [], []>} : vector<1x96xf32>, vector<64x96xf32>, vector<1x64xf32> -> vector<1x64xf32>
    %cst_6 = arith.constant dense<0.000000e+00> : vector<1x64xf32>
    %8 = tpu.matmul %4, %2, %cst_6 {dimension_numbers = #tpu.dot_dimension_numbers<[1], [1], [0], [0], [0, 0, 1, 0], [], []>} : vector<1x96xf32>, vector<64x96xf32>, vector<1x64xf32> -> vector<1x64xf32>
    %cst_7 = arith.constant 1.000000e-24 : f32
    %9 = vector.broadcast %cst_7 : f32 to vector<1x64xf32>
    %10 = arith.maximumf %7, %9 : vector<1x64xf32>
    %11 = math.rsqrt %10 : vector<1x64xf32>
    %12 = arith.mulf %8, %11 : vector<1x64xf32>
    %c0_8 = arith.constant 0 : index
    %c0_9 = arith.constant 0 : index
    %c0_10 = arith.constant 0 : index
    %13 = vector.load %arg4[%c0_8, %c0_9, %c0_10] : memref<1x1x64xf32, #tpu.memory_space<vmem>>, vector<1x1x64xf32>
    %14 = vector.shape_cast %13 : vector<1x1x64xf32> to vector<1x64xf32>
    %15 = vector.shape_cast %12 : vector<1x64xf32> to vector<1x1x64xf32>
    tpu.vector_store %arg4[%c0_8, %c0_9, %c0_10], %15 {strides = array<i32>} : memref<1x1x64xf32, #tpu.memory_space<vmem>>, vector<1x1x64xf32>,
    return
  }
  func.func @transform_0(%arg0: i32, %arg1: i32) -> (i32, i32, i32) {
    %c0_i32 = arith.constant 0 : i32
    %c0_i32_0 = arith.constant 0 : i32
    return %arg0, %arg1, %c0_i32 : i32, i32, i32
  }
  func.func @transform_1(%arg0: i32, %arg1: i32) -> (i32, i32, i32) {
    %c0_i32 = arith.constant 0 : i32
    %c0_i32_0 = arith.constant 0 : i32
    %c0_i32_1 = arith.constant 0 : i32
    return %arg0, %c0_i32, %c0_i32_0 : i32, i32, i32
  }
  func.func @transform_2(%arg0: i32, %arg1: i32) -> (i32, i32, i32) {
    %c0_i32 = arith.constant 0 : i32
    %c0_i32_0 = arith.constant 0 : i32
    return %arg0, %c0_i32, %arg1 : i32, i32, i32
  }
}

module attributes {stable_mosaic.version = 11 : i64} {
  func.func @_pp_bg_kernel(%arg0: i32, %arg1: i32, %arg2: memref<1x64x96xbf16, #tpu.memory_space<vmem>>, %arg3: memref<1x1x64xf32, #tpu.memory_space<vmem>>, %arg4: memref<1x1x96xf32, #tpu.memory_space<vmem>>, %arg5: memref<1x1x1xf32, #tpu.memory_space<vmem>>) attributes {dimension_semantics = [#tpu.dimension_semantics<parallel>, #tpu.dimension_semantics<arbitrary>], iteration_bounds = array<i64: 2, 1>, scalar_prefetch = 0 : i64, scratch_operands = 0 : i64, tpu.core_type = #tpu.core_type<tc>, window_params = [{transform_indices = @transform_0, window_bounds = array<i64: 1, 64, 96>}, {transform_indices = @transform_1, window_bounds = array<i64: 1, 1, 64>}, {transform_indices = @transform_2, window_bounds = array<i64: 1, 1, 96>}, {transform_indices = @transform_3, window_bounds = array<i64: 1, 1, 1>}]} {
    %c0_i32 = arith.constant 0 : i32
    %0 = arith.cmpi eq, %arg1, %c0_i32 : i32
    %1 = arith.extui %0 : i1 to i32
    %c0_i32_0 = arith.constant 0 : i32
    %2 = arith.cmpi ne, %1, %c0_i32_0 : i32
    scf.if %2 {
      %cst_23 = arith.constant 0.000000e+00 : f32
      %34 = vector.broadcast %cst_23 : f32 to vector<1x1x96xf32>
      %c0_24 = arith.constant 0 : index
      %c0_25 = arith.constant 0 : index
      %c0_26 = arith.constant 0 : index
      %35 = vector.load %arg4[%c0_24, %c0_25, %c0_26] : memref<1x1x96xf32, #tpu.memory_space<vmem>>, vector<1x1x96xf32>
      tpu.vector_store %arg4[%c0_24, %c0_25, %c0_26], %34 {strides = array<i32>} : memref<1x1x96xf32, #tpu.memory_space<vmem>>, vector<1x1x96xf32>,
      %cst_27 = arith.constant 0.000000e+00 : f32
      %36 = vector.broadcast %cst_27 : f32 to vector<1x1x1xf32>
      %c0_28 = arith.constant 0 : index
      %c0_29 = arith.constant 0 : index
      %c0_30 = arith.constant 0 : index
      %37 = vector.load %arg5[%c0_28, %c0_29, %c0_30] : memref<1x1x1xf32, #tpu.memory_space<vmem>>, vector<1x1x1xf32>
      tpu.vector_store %arg5[%c0_28, %c0_29, %c0_30], %36 {strides = array<i32>} : memref<1x1x1xf32, #tpu.memory_space<vmem>>, vector<1x1x1xf32>,
    } else {
    }
    %c0 = arith.constant 0 : index
    %c0_1 = arith.constant 0 : index
    %c0_2 = arith.constant 0 : index
    %3 = vector.load %arg2[%c0, %c0_1, %c0_2] : memref<1x64x96xbf16, #tpu.memory_space<vmem>>, vector<1x64x96xbf16>
    %4 = vector.shape_cast %3 : vector<1x64x96xbf16> to vector<64x96xbf16>
    %5 = arith.extf %4 : vector<64x96xbf16> to vector<64x96xf32>
    %c0_3 = arith.constant 0 : index
    %c0_4 = arith.constant 0 : index
    %c0_5 = arith.constant 0 : index
    %6 = vector.load %arg3[%c0_3, %c0_4, %c0_5] : memref<1x1x64xf32, #tpu.memory_space<vmem>>, vector<1x1x64xf32>
    %7 = vector.shape_cast %6 : vector<1x1x64xf32> to vector<1x64xf32>
    %cst = arith.constant 0.000000e+00 : f32
    %8 = vector.broadcast %cst : f32 to vector<1x64xf32>
    %9 = arith.cmpf oeq, %7, %8 : vector<1x64xf32>
    %10 = arith.extui %9 : vector<1x64xi1> to vector<1x64xi32>
    %11 = arith.sitofp %10 : vector<1x64xi32> to vector<1x64xf32>
    %cst_6 = arith.constant 1.000000e+00 : f32
    %12 = vector.broadcast %cst_6 : f32 to vector<1x96xf32>
    %13 = arith.mulf %5, %5 : vector<64x96xf32>
    %cst_7 = arith.constant dense<0.000000e+00> : vector<1x64xf32>
    %14 = tpu.matmul %12, %13, %cst_7 {dimension_numbers = #tpu.dot_dimension_numbers<[1], [1], [0], [0], [0, 0, 1, 0], [], []>} : vector<1x96xf32>, vector<64x96xf32>, vector<1x64xf32> -> vector<1x64xf32>
    %cst_8 = arith.constant 1.000000e-24 : f32
    %15 = vector.broadcast %cst_8 : f32 to vector<1x64xf32>
    %16 = arith.maximumf %14, %15 : vector<1x64xf32>
    %17 = math.rsqrt %16 : vector<1x64xf32>
    %18 = arith.mulf %11, %17 : vector<1x64xf32>
    %c0_9 = arith.constant 0 : index
    %c0_10 = arith.constant 0 : index
    %c0_11 = arith.constant 0 : index
    %19 = vector.load %arg4[%c0_9, %c0_10, %c0_11] : memref<1x1x96xf32, #tpu.memory_space<vmem>>, vector<1x1x96xf32>
    %20 = vector.shape_cast %19 : vector<1x1x96xf32> to vector<1x96xf32>
    %cst_12 = arith.constant dense<0.000000e+00> : vector<1x96xf32>
    %21 = tpu.matmul %18, %5, %cst_12 {dimension_numbers = #tpu.dot_dimension_numbers<[1], [0], [0], [1], [0, 0, 1, 1], [], []>} : vector<1x64xf32>, vector<64x96xf32>, vector<1x96xf32> -> vector<1x96xf32>
    %22 = arith.addf %20, %21 : vector<1x96xf32>
    %c0_13 = arith.constant 0 : index
    %c0_14 = arith.constant 0 : index
    %c0_15 = arith.constant 0 : index
    %23 = vector.load %arg4[%c0_13, %c0_14, %c0_15] : memref<1x1x96xf32, #tpu.memory_space<vmem>>, vector<1x1x96xf32>
    %24 = vector.shape_cast %23 : vector<1x1x96xf32> to vector<1x96xf32>
    %25 = vector.shape_cast %22 : vector<1x96xf32> to vector<1x1x96xf32>
    tpu.vector_store %arg4[%c0_13, %c0_14, %c0_15], %25 {strides = array<i32>} : memref<1x1x96xf32, #tpu.memory_space<vmem>>, vector<1x1x96xf32>,
    %c0_16 = arith.constant 0 : index
    %c0_17 = arith.constant 0 : index
    %c0_18 = arith.constant 0 : index
    %26 = vector.load %arg5[%c0_16, %c0_17, %c0_18] : memref<1x1x1xf32, #tpu.memory_space<vmem>>, vector<1x1x1xf32>
    %27 = vector.shape_cast %26 : vector<1x1x1xf32> to vector<1x1xf32>
    %cst_19 = arith.constant dense<0.000000e+00> : vector<1xf32>
    %28 = vector.multi_reduction <add>, %11, %cst_19 [1] : vector<1x64xf32> to vector<1xf32>
    %29 = vector.shape_cast %28 : vector<1xf32> to vector<1x1xf32>
    %30 = arith.addf %27, %29 : vector<1x1xf32>
    %c0_20 = arith.constant 0 : index
    %c0_21 = arith.constant 0 : index
    %c0_22 = arith.constant 0 : index
    %31 = vector.load %arg5[%c0_20, %c0_21, %c0_22] : memref<1x1x1xf32, #tpu.memory_space<vmem>>, vector<1x1x1xf32>
    %32 = vector.shape_cast %31 : vector<1x1x1xf32> to vector<1x1xf32>
    %33 = vector.shape_cast %30 : vector<1x1xf32> to vector<1x1x1xf32>
    tpu.vector_store %arg5[%c0_20, %c0_21, %c0_22], %33 {strides = array<i32>} : memref<1x1x1xf32, #tpu.memory_space<vmem>>, vector<1x1x1xf32>,
    return
  }
  func.func @transform_0(%arg0: i32, %arg1: i32) -> (i32, i32, i32) {
    %c0_i32 = arith.constant 0 : i32
    %c0_i32_0 = arith.constant 0 : i32
    return %arg0, %arg1, %c0_i32 : i32, i32, i32
  }
  func.func @transform_1(%arg0: i32, %arg1: i32) -> (i32, i32, i32) {
    %c0_i32 = arith.constant 0 : i32
    %c0_i32_0 = arith.constant 0 : i32
    return %arg0, %c0_i32, %arg1 : i32, i32, i32
  }
  func.func @transform_2(%arg0: i32, %arg1: i32) -> (i32, i32, i32) {
    %c0_i32 = arith.constant 0 : i32
    %c0_i32_0 = arith.constant 0 : i32
    %c0_i32_1 = arith.constant 0 : i32
    return %arg0, %c0_i32, %c0_i32_0 : i32, i32, i32
  }
  func.func @transform_3(%arg0: i32, %arg1: i32) -> (i32, i32, i32) {
    %c0_i32 = arith.constant 0 : i32
    %c0_i32_0 = arith.constant 0 : i32
    %c0_i32_1 = arith.constant 0 : i32
    return %arg0, %c0_i32, %c0_i32_0 : i32, i32, i32
  }
}

module attributes {stable_mosaic.version = 11 : i64} {
  func.func @_mlp_kernel_T(%arg0: i32, %arg1: memref<256x96xbf16, #tpu.memory_space<vmem>>, %arg2: memref<96x48xf32, #tpu.memory_space<vmem>>, %arg3: memref<1x48xf32, #tpu.memory_space<vmem>>, %arg4: memref<32x48xf32, #tpu.memory_space<vmem>>, %arg5: memref<32x1xf32, #tpu.memory_space<vmem>>, %arg6: memref<32x256xbf16, #tpu.memory_space<vmem>>) attributes {dimension_semantics = [#tpu.dimension_semantics<parallel>], iteration_bounds = array<i64: 2>, scalar_prefetch = 0 : i64, scratch_operands = 0 : i64, tpu.core_type = #tpu.core_type<tc>, window_params = [{transform_indices = @transform_0, window_bounds = array<i64: 256, 96>}, {pipeline_mode = #tpu.pipeline_mode<synchronous>, transform_indices = @transform_1, window_bounds = array<i64: 96, 48>}, {pipeline_mode = #tpu.pipeline_mode<synchronous>, transform_indices = @transform_2, window_bounds = array<i64: 1, 48>}, {pipeline_mode = #tpu.pipeline_mode<synchronous>, transform_indices = @transform_3, window_bounds = array<i64: 32, 48>}, {pipeline_mode = #tpu.pipeline_mode<synchronous>, transform_indices = @transform_4, window_bounds = array<i64: 32, 1>}, {transform_indices = @transform_5, window_bounds = array<i64: 32, 256>}]} {
    %c0 = arith.constant 0 : index
    %c0_0 = arith.constant 0 : index
    %0 = vector.load %arg1[%c0, %c0_0] : memref<256x96xbf16, #tpu.memory_space<vmem>>, vector<256x96xbf16>
    %1 = arith.extf %0 : vector<256x96xbf16> to vector<256x96xf32>
    %c0_1 = arith.constant 0 : index
    %c0_2 = arith.constant 0 : index
    %2 = vector.load %arg2[%c0_1, %c0_2] : memref<96x48xf32, #tpu.memory_space<vmem>>, vector<96x48xf32>
    %cst = arith.constant dense<0.000000e+00> : vector<256x48xf32>
    %3 = tpu.matmul %1, %2, %cst {dimension_numbers = #tpu.dot_dimension_numbers<[1], [0], [0], [1], [0, 0, 1, 1], [], []>} : vector<256x96xf32>, vector<96x48xf32>, vector<256x48xf32> -> vector<256x48xf32>
    %c0_3 = arith.constant 0 : index
    %c0_4 = arith.constant 0 : index
    %4 = vector.load %arg3[%c0_3, %c0_4] : memref<1x48xf32, #tpu.memory_space<vmem>>, vector<1x48xf32>
    %5 = vector.broadcast %4 : vector<1x48xf32> to vector<256x48xf32>
    %6 = arith.addf %3, %5 : vector<256x48xf32>
    %cst_5 = arith.constant 5.000000e-01 : f32
    %7 = vector.broadcast %cst_5 : f32 to vector<256x48xf32>
    %8 = arith.mulf %7, %6 : vector<256x48xf32>
    %cst_6 = arith.constant 4.471500e-02 : f32
    %9 = vector.broadcast %cst_6 : f32 to vector<256x48xf32>
    %10 = arith.mulf %9, %6 : vector<256x48xf32>
    %11 = arith.mulf %10, %6 : vector<256x48xf32>
    %12 = arith.mulf %11, %6 : vector<256x48xf32>
    %13 = arith.addf %6, %12 : vector<256x48xf32>
    %cst_7 = arith.constant 0.797884583 : f32
    %14 = vector.broadcast %cst_7 : f32 to vector<256x48xf32>
    %15 = arith.mulf %14, %13 : vector<256x48xf32>
    %16 = math.tanh %15 : vector<256x48xf32>
    %cst_8 = arith.constant 1.000000e+00 : f32
    %17 = vector.broadcast %cst_8 : f32 to vector<256x48xf32>
    %18 = arith.addf %17, %16 : vector<256x48xf32>
    %19 = arith.mulf %8, %18 : vector<256x48xf32>
    %c0_9 = arith.constant 0 : index
    %c0_10 = arith.constant 0 : index
    %20 = vector.load %arg4[%c0_9, %c0_10] : memref<32x48xf32, #tpu.memory_space<vmem>>, vector<32x48xf32>
    %cst_11 = arith.constant dense<0.000000e+00> : vector<32x256xf32>
    %21 = tpu.matmul %20, %19, %cst_11 {dimension_numbers = #tpu.dot_dimension_numbers<[1], [1], [0], [0], [0, 0, 1, 0], [], []>} : vector<32x48xf32>, vector<256x48xf32>, vector<32x256xf32> -> vector<32x256xf32>
    %c0_12 = arith.constant 0 : index
    %c0_13 = arith.constant 0 : index
    %22 = vector.load %arg5[%c0_12, %c0_13] : memref<32x1xf32, #tpu.memory_space<vmem>>, vector<32x1xf32>
    %23 = vector.broadcast %22 : vector<32x1xf32> to vector<32x256xf32>
    %24 = arith.addf %21, %23 : vector<32x256xf32>
    %25 = arith.truncf %24 : vector<32x256xf32> to vector<32x256xbf16>
    %c0_14 = arith.constant 0 : index
    %c0_15 = arith.constant 0 : index
    %26 = vector.load %arg6[%c0_14, %c0_15] : memref<32x256xbf16, #tpu.memory_space<vmem>>, vector<32x256xbf16>
    tpu.vector_store %arg6[%c0_14, %c0_15], %25 {strides = array<i32>} : memref<32x256xbf16, #tpu.memory_space<vmem>>, vector<32x256xbf16>,
    return
  }
  func.func @transform_0(%arg0: i32) -> (i32, i32) {
    %c0_i32 = arith.constant 0 : i32
    %c0_i32_0 = arith.constant 0 : i32
    return %arg0, %c0_i32 : i32, i32
  }
  func.func @transform_1(%arg0: i32) -> (i32, i32) {
    %c0_i32 = arith.constant 0 : i32
    %c0_i32_0 = arith.constant 0 : i32
    %c0_i32_1 = arith.constant 0 : i32
    return %c0_i32, %c0_i32_0 : i32, i32
  }
  func.func @transform_2(%arg0: i32) -> (i32, i32) {
    %c0_i32 = arith.constant 0 : i32
    %c0_i32_0 = arith.constant 0 : i32
    %c0_i32_1 = arith.constant 0 : i32
    return %c0_i32, %c0_i32_0 : i32, i32
  }
  func.func @transform_3(%arg0: i32) -> (i32, i32) {
    %c0_i32 = arith.constant 0 : i32
    %c0_i32_0 = arith.constant 0 : i32
    %c0_i32_1 = arith.constant 0 : i32
    return %c0_i32, %c0_i32_0 : i32, i32
  }
  func.func @transform_4(%arg0: i32) -> (i32, i32) {
    %c0_i32 = arith.constant 0 : i32
    %c0_i32_0 = arith.constant 0 : i32
    %c0_i32_1 = arith.constant 0 : i32
    return %c0_i32, %c0_i32_0 : i32, i32
  }
  func.func @transform_5(%arg0: i32) -> (i32, i32) {
    %c0_i32 = arith.constant 0 : i32
    %c0_i32_0 = arith.constant 0 : i32
    return %c0_i32, %arg0 : i32, i32
  }
}

module attributes {stable_mosaic.version = 11 : i64} {
  func.func @_pp_bg_kernel(%arg0: i32, %arg1: i32, %arg2: memref<1x128x96xbf16, #tpu.memory_space<vmem>>, %arg3: memref<1x1x128xf32, #tpu.memory_space<vmem>>, %arg4: memref<1x1x96xf32, #tpu.memory_space<vmem>>, %arg5: memref<1x1x1xf32, #tpu.memory_space<vmem>>) attributes {dimension_semantics = [#tpu.dimension_semantics<parallel>, #tpu.dimension_semantics<arbitrary>], iteration_bounds = array<i64: 2, 2>, scalar_prefetch = 0 : i64, scratch_operands = 0 : i64, tpu.core_type = #tpu.core_type<tc>, window_params = [{transform_indices = @transform_0, window_bounds = array<i64: 1, 128, 96>}, {transform_indices = @transform_1, window_bounds = array<i64: 1, 1, 128>}, {transform_indices = @transform_2, window_bounds = array<i64: 1, 1, 96>}, {transform_indices = @transform_3, window_bounds = array<i64: 1, 1, 1>}]} {
    %c0_i32 = arith.constant 0 : i32
    %0 = arith.cmpi eq, %arg1, %c0_i32 : i32
    %1 = arith.extui %0 : i1 to i32
    %c0_i32_0 = arith.constant 0 : i32
    %2 = arith.cmpi ne, %1, %c0_i32_0 : i32
    scf.if %2 {
      %cst_23 = arith.constant 0.000000e+00 : f32
      %34 = vector.broadcast %cst_23 : f32 to vector<1x1x96xf32>
      %c0_24 = arith.constant 0 : index
      %c0_25 = arith.constant 0 : index
      %c0_26 = arith.constant 0 : index
      %35 = vector.load %arg4[%c0_24, %c0_25, %c0_26] : memref<1x1x96xf32, #tpu.memory_space<vmem>>, vector<1x1x96xf32>
      tpu.vector_store %arg4[%c0_24, %c0_25, %c0_26], %34 {strides = array<i32>} : memref<1x1x96xf32, #tpu.memory_space<vmem>>, vector<1x1x96xf32>,
      %cst_27 = arith.constant 0.000000e+00 : f32
      %36 = vector.broadcast %cst_27 : f32 to vector<1x1x1xf32>
      %c0_28 = arith.constant 0 : index
      %c0_29 = arith.constant 0 : index
      %c0_30 = arith.constant 0 : index
      %37 = vector.load %arg5[%c0_28, %c0_29, %c0_30] : memref<1x1x1xf32, #tpu.memory_space<vmem>>, vector<1x1x1xf32>
      tpu.vector_store %arg5[%c0_28, %c0_29, %c0_30], %36 {strides = array<i32>} : memref<1x1x1xf32, #tpu.memory_space<vmem>>, vector<1x1x1xf32>,
    } else {
    }
    %c0 = arith.constant 0 : index
    %c0_1 = arith.constant 0 : index
    %c0_2 = arith.constant 0 : index
    %3 = vector.load %arg2[%c0, %c0_1, %c0_2] : memref<1x128x96xbf16, #tpu.memory_space<vmem>>, vector<1x128x96xbf16>
    %4 = vector.shape_cast %3 : vector<1x128x96xbf16> to vector<128x96xbf16>
    %5 = arith.extf %4 : vector<128x96xbf16> to vector<128x96xf32>
    %c0_3 = arith.constant 0 : index
    %c0_4 = arith.constant 0 : index
    %c0_5 = arith.constant 0 : index
    %6 = vector.load %arg3[%c0_3, %c0_4, %c0_5] : memref<1x1x128xf32, #tpu.memory_space<vmem>>, vector<1x1x128xf32>
    %7 = vector.shape_cast %6 : vector<1x1x128xf32> to vector<1x128xf32>
    %cst = arith.constant 0.000000e+00 : f32
    %8 = vector.broadcast %cst : f32 to vector<1x128xf32>
    %9 = arith.cmpf oeq, %7, %8 : vector<1x128xf32>
    %10 = arith.extui %9 : vector<1x128xi1> to vector<1x128xi32>
    %11 = arith.sitofp %10 : vector<1x128xi32> to vector<1x128xf32>
    %cst_6 = arith.constant 1.000000e+00 : f32
    %12 = vector.broadcast %cst_6 : f32 to vector<1x96xf32>
    %13 = arith.mulf %5, %5 : vector<128x96xf32>
    %cst_7 = arith.constant dense<0.000000e+00> : vector<1x128xf32>
    %14 = tpu.matmul %12, %13, %cst_7 {dimension_numbers = #tpu.dot_dimension_numbers<[1], [1], [0], [0], [0, 0, 1, 0], [], []>} : vector<1x96xf32>, vector<128x96xf32>, vector<1x128xf32> -> vector<1x128xf32>
    %cst_8 = arith.constant 1.000000e-24 : f32
    %15 = vector.broadcast %cst_8 : f32 to vector<1x128xf32>
    %16 = arith.maximumf %14, %15 : vector<1x128xf32>
    %17 = math.rsqrt %16 : vector<1x128xf32>
    %18 = arith.mulf %11, %17 : vector<1x128xf32>
    %c0_9 = arith.constant 0 : index
    %c0_10 = arith.constant 0 : index
    %c0_11 = arith.constant 0 : index
    %19 = vector.load %arg4[%c0_9, %c0_10, %c0_11] : memref<1x1x96xf32, #tpu.memory_space<vmem>>, vector<1x1x96xf32>
    %20 = vector.shape_cast %19 : vector<1x1x96xf32> to vector<1x96xf32>
    %cst_12 = arith.constant dense<0.000000e+00> : vector<1x96xf32>
    %21 = tpu.matmul %18, %5, %cst_12 {dimension_numbers = #tpu.dot_dimension_numbers<[1], [0], [0], [1], [0, 0, 1, 1], [], []>} : vector<1x128xf32>, vector<128x96xf32>, vector<1x96xf32> -> vector<1x96xf32>
    %22 = arith.addf %20, %21 : vector<1x96xf32>
    %c0_13 = arith.constant 0 : index
    %c0_14 = arith.constant 0 : index
    %c0_15 = arith.constant 0 : index
    %23 = vector.load %arg4[%c0_13, %c0_14, %c0_15] : memref<1x1x96xf32, #tpu.memory_space<vmem>>, vector<1x1x96xf32>
    %24 = vector.shape_cast %23 : vector<1x1x96xf32> to vector<1x96xf32>
    %25 = vector.shape_cast %22 : vector<1x96xf32> to vector<1x1x96xf32>
    tpu.vector_store %arg4[%c0_13, %c0_14, %c0_15], %25 {strides = array<i32>} : memref<1x1x96xf32, #tpu.memory_space<vmem>>, vector<1x1x96xf32>,
    %c0_16 = arith.constant 0 : index
    %c0_17 = arith.constant 0 : index
    %c0_18 = arith.constant 0 : index
    %26 = vector.load %arg5[%c0_16, %c0_17, %c0_18] : memref<1x1x1xf32, #tpu.memory_space<vmem>>, vector<1x1x1xf32>
    %27 = vector.shape_cast %26 : vector<1x1x1xf32> to vector<1x1xf32>
    %cst_19 = arith.constant dense<0.000000e+00> : vector<1xf32>
    %28 = vector.multi_reduction <add>, %11, %cst_19 [1] : vector<1x128xf32> to vector<1xf32>
    %29 = vector.shape_cast %28 : vector<1xf32> to vector<1x1xf32>
    %30 = arith.addf %27, %29 : vector<1x1xf32>
    %c0_20 = arith.constant 0 : index
    %c0_21 = arith.constant 0 : index
    %c0_22 = arith.constant 0 : index
    %31 = vector.load %arg5[%c0_20, %c0_21, %c0_22] : memref<1x1x1xf32, #tpu.memory_space<vmem>>, vector<1x1x1xf32>
    %32 = vector.shape_cast %31 : vector<1x1x1xf32> to vector<1x1xf32>
    %33 = vector.shape_cast %30 : vector<1x1xf32> to vector<1x1x1xf32>
    tpu.vector_store %arg5[%c0_20, %c0_21, %c0_22], %33 {strides = array<i32>} : memref<1x1x1xf32, #tpu.memory_space<vmem>>, vector<1x1x1xf32>,
    return
  }
  func.func @transform_0(%arg0: i32, %arg1: i32) -> (i32, i32, i32) {
    %c0_i32 = arith.constant 0 : i32
    %c0_i32_0 = arith.constant 0 : i32
    return %arg0, %arg1, %c0_i32 : i32, i32, i32
  }
  func.func @transform_1(%arg0: i32, %arg1: i32) -> (i32, i32, i32) {
    %c0_i32 = arith.constant 0 : i32
    %c0_i32_0 = arith.constant 0 : i32
    return %arg0, %c0_i32, %arg1 : i32, i32, i32
  }
  func.func @transform_2(%arg0: i32, %arg1: i32) -> (i32, i32, i32) {
    %c0_i32 = arith.constant 0 : i32
    %c0_i32_0 = arith.constant 0 : i32
    %c0_i32_1 = arith.constant 0 : i32
    return %arg0, %c0_i32, %c0_i32_0 : i32, i32, i32
  }
  func.func @transform_3(%arg0: i32, %arg1: i32) -> (i32, i32, i32) {
    %c0_i32 = arith.constant 0 : i32
    %c0_i32_0 = arith.constant 0 : i32
    %c0_i32_1 = arith.constant 0 : i32
    return %arg0, %c0_i32, %c0_i32_0 : i32, i32, i32
  }
}

module attributes {stable_mosaic.version = 11 : i64} {
  func.func @_pp_sim_kernel(%arg0: i32, %arg1: i32, %arg2: memref<1x128x96xbf16, #tpu.memory_space<vmem>>, %arg3: memref<1x1x96xf32, #tpu.memory_space<vmem>>, %arg4: memref<1x1x128xf32, #tpu.memory_space<vmem>>) attributes {dimension_semantics = [#tpu.dimension_semantics<parallel>, #tpu.dimension_semantics<parallel>], iteration_bounds = array<i64: 2, 2>, scalar_prefetch = 0 : i64, scratch_operands = 0 : i64, tpu.core_type = #tpu.core_type<tc>, window_params = [{transform_indices = @transform_0, window_bounds = array<i64: 1, 128, 96>}, {transform_indices = @transform_1, window_bounds = array<i64: 1, 1, 96>}, {transform_indices = @transform_2, window_bounds = array<i64: 1, 1, 128>}]} {
    %c0 = arith.constant 0 : index
    %c0_0 = arith.constant 0 : index
    %c0_1 = arith.constant 0 : index
    %0 = vector.load %arg2[%c0, %c0_0, %c0_1] : memref<1x128x96xbf16, #tpu.memory_space<vmem>>, vector<1x128x96xbf16>
    %1 = vector.shape_cast %0 : vector<1x128x96xbf16> to vector<128x96xbf16>
    %2 = arith.extf %1 : vector<128x96xbf16> to vector<128x96xf32>
    %c0_2 = arith.constant 0 : index
    %c0_3 = arith.constant 0 : index
    %c0_4 = arith.constant 0 : index
    %3 = vector.load %arg3[%c0_2, %c0_3, %c0_4] : memref<1x1x96xf32, #tpu.memory_space<vmem>>, vector<1x1x96xf32>
    %4 = vector.shape_cast %3 : vector<1x1x96xf32> to vector<1x96xf32>
    %cst = arith.constant 1.000000e+00 : f32
    %5 = vector.broadcast %cst : f32 to vector<1x96xf32>
    %6 = arith.mulf %2, %2 : vector<128x96xf32>
    %cst_5 = arith.constant dense<0.000000e+00> : vector<1x128xf32>
    %7 = tpu.matmul %5, %6, %cst_5 {dimension_numbers = #tpu.dot_dimension_numbers<[1], [1], [0], [0], [0, 0, 1, 0], [], []>} : vector<1x96xf32>, vector<128x96xf32>, vector<1x128xf32> -> vector<1x128xf32>
    %cst_6 = arith.constant dense<0.000000e+00> : vector<1x128xf32>
    %8 = tpu.matmul %4, %2, %cst_6 {dimension_numbers = #tpu.dot_dimension_numbers<[1], [1], [0], [0], [0, 0, 1, 0], [], []>} : vector<1x96xf32>, vector<128x96xf32>, vector<1x128xf32> -> vector<1x128xf32>
    %cst_7 = arith.constant 1.000000e-24 : f32
    %9 = vector.broadcast %cst_7 : f32 to vector<1x128xf32>
    %10 = arith.maximumf %7, %9 : vector<1x128xf32>
    %11 = math.rsqrt %10 : vector<1x128xf32>
    %12 = arith.mulf %8, %11 : vector<1x128xf32>
    %c0_8 = arith.constant 0 : index
    %c0_9 = arith.constant 0 : index
    %c0_10 = arith.constant 0 : index
    %13 = vector.load %arg4[%c0_8, %c0_9, %c0_10] : memref<1x1x128xf32, #tpu.memory_space<vmem>>, vector<1x1x128xf32>
    %14 = vector.shape_cast %13 : vector<1x1x128xf32> to vector<1x128xf32>
    %15 = vector.shape_cast %12 : vector<1x128xf32> to vector<1x1x128xf32>
    tpu.vector_store %arg4[%c0_8, %c0_9, %c0_10], %15 {strides = array<i32>} : memref<1x1x128xf32, #tpu.memory_space<vmem>>, vector<1x1x128xf32>,
    return
  }
  func.func @transform_0(%arg0: i32, %arg1: i32) -> (i32, i32, i32) {
    %c0_i32 = arith.constant 0 : i32
    %c0_i32_0 = arith.constant 0 : i32
    return %arg0, %arg1, %c0_i32 : i32, i32, i32
  }
  func.func @transform_1(%arg0: i32, %arg1: i32) -> (i32, i32, i32) {
    %c0_i32 = arith.constant 0 : i32
    %c0_i32_0 = arith.constant 0 : i32
    %c0_i32_1 = arith.constant 0 : i32
    return %arg0, %c0_i32, %c0_i32_0 : i32, i32, i32
  }
  func.func @transform_2(%arg0: i32, %arg1: i32) -> (i32, i32, i32) {
    %c0_i32 = arith.constant 0 : i32
    %c0_i32_0 = arith.constant 0 : i32
    return %arg0, %c0_i32, %arg1 : i32, i32, i32
  }
}

module attributes {stable_mosaic.version = 11 : i64} {
  func.func @_fused_head_kernel(%arg0: i32, %arg1: memref<256x4xf32, #tpu.memory_space<vmem>>, %arg2: memref<256x96xbf16, #tpu.memory_space<vmem>>, %arg3: memref<4x4xf32, #tpu.memory_space<vmem>>, %arg4: memref<1x4xf32, #tpu.memory_space<vmem>>, %arg5: memref<4x96xf32, #tpu.memory_space<vmem>>, %arg6: memref<1x96xf32, #tpu.memory_space<vmem>>, %arg7: memref<4x96xf32, #tpu.memory_space<vmem>>, %arg8: memref<1x96xf32, #tpu.memory_space<vmem>>, %arg9: memref<96x48xf32, #tpu.memory_space<vmem>>, %arg10: memref<1x48xf32, #tpu.memory_space<vmem>>, %arg11: memref<2x48xf32, #tpu.memory_space<vmem>>, %arg12: memref<2x1xf32, #tpu.memory_space<vmem>>, %arg13: memref<2x256xf32, #tpu.memory_space<vmem>>) attributes {dimension_semantics = [#tpu.dimension_semantics<parallel>], iteration_bounds = array<i64: 2>, scalar_prefetch = 0 : i64, scratch_operands = 0 : i64, tpu.core_type = #tpu.core_type<tc>, window_params = [{transform_indices = @transform_0, window_bounds = array<i64: 256, 4>}, {transform_indices = @transform_1, window_bounds = array<i64: 256, 96>}, {pipeline_mode = #tpu.pipeline_mode<synchronous>, transform_indices = @transform_2, window_bounds = array<i64: 4, 4>}, {pipeline_mode = #tpu.pipeline_mode<synchronous>, transform_indices = @transform_3, window_bounds = array<i64: 1, 4>}, {pipeline_mode = #tpu.pipeline_mode<synchronous>, transform_indices = @transform_4, window_bounds = array<i64: 4, 96>}, {pipeline_mode = #tpu.pipeline_mode<synchronous>, transform_indices = @transform_5, window_bounds = array<i64: 1, 96>}, {pipeline_mode = #tpu.pipeline_mode<synchronous>, transform_indices = @transform_6, window_bounds = array<i64: 4, 96>}, {pipeline_mode = #tpu.pipeline_mode<synchronous>, transform_indices = @transform_7, window_bounds = array<i64: 1, 96>}, {pipeline_mode = #tpu.pipeline_mode<synchronous>, transform_indices = @transform_8, window_bounds = array<i64: 96, 48>}, {pipeline_mode = #tpu.pipeline_mode<synchronous>, transform_indices = @transform_9, window_bounds = array<i64: 1, 48>}, {pipeline_mode = #tpu.pipeline_mode<synchronous>, transform_indices = @transform_10, window_bounds = array<i64: 2, 48>}, {pipeline_mode = #tpu.pipeline_mode<synchronous>, transform_indices = @transform_11, window_bounds = array<i64: 2, 1>}, {transform_indices = @transform_12, window_bounds = array<i64: 2, 256>}]} {
    %c0 = arith.constant 0 : index
    %c0_0 = arith.constant 0 : index
    %0 = vector.load %arg1[%c0, %c0_0] : memref<256x4xf32, #tpu.memory_space<vmem>>, vector<256x4xf32>
    %c0_1 = arith.constant 0 : index
    %c0_2 = arith.constant 0 : index
    %1 = vector.load %arg3[%c0_1, %c0_2] : memref<4x4xf32, #tpu.memory_space<vmem>>, vector<4x4xf32>
    %cst = arith.constant dense<0.000000e+00> : vector<256x4xf32>
    %2 = tpu.matmul %0, %1, %cst {dimension_numbers = #tpu.dot_dimension_numbers<[1], [0], [0], [1], [0, 0, 1, 1], [], []>} : vector<256x4xf32>, vector<4x4xf32>, vector<256x4xf32> -> vector<256x4xf32>
    %c0_3 = arith.constant 0 : index
    %c0_4 = arith.constant 0 : index
    %3 = vector.load %arg4[%c0_3, %c0_4] : memref<1x4xf32, #tpu.memory_space<vmem>>, vector<1x4xf32>
    %4 = vector.broadcast %3 : vector<1x4xf32> to vector<256x4xf32>
    %5 = arith.addf %2, %4 : vector<256x4xf32>
    %cst_5 = arith.constant 5.000000e-01 : f32
    %6 = vector.broadcast %cst_5 : f32 to vector<256x4xf32>
    %7 = arith.mulf %6, %5 : vector<256x4xf32>
    %cst_6 = arith.constant 4.471500e-02 : f32
    %8 = vector.broadcast %cst_6 : f32 to vector<256x4xf32>
    %9 = arith.mulf %8, %5 : vector<256x4xf32>
    %10 = arith.mulf %9, %5 : vector<256x4xf32>
    %11 = arith.mulf %10, %5 : vector<256x4xf32>
    %12 = arith.addf %5, %11 : vector<256x4xf32>
    %cst_7 = arith.constant 0.797884583 : f32
    %13 = vector.broadcast %cst_7 : f32 to vector<256x4xf32>
    %14 = arith.mulf %13, %12 : vector<256x4xf32>
    %15 = math.tanh %14 : vector<256x4xf32>
    %cst_8 = arith.constant 1.000000e+00 : f32
    %16 = vector.broadcast %cst_8 : f32 to vector<256x4xf32>
    %17 = arith.addf %16, %15 : vector<256x4xf32>
    %18 = arith.mulf %7, %17 : vector<256x4xf32>
    %c0_9 = arith.constant 0 : index
    %c0_10 = arith.constant 0 : index
    %19 = vector.load %arg5[%c0_9, %c0_10] : memref<4x96xf32, #tpu.memory_space<vmem>>, vector<4x96xf32>
    %cst_11 = arith.constant dense<0.000000e+00> : vector<256x96xf32>
    %20 = tpu.matmul %18, %19, %cst_11 {dimension_numbers = #tpu.dot_dimension_numbers<[1], [0], [0], [1], [0, 0, 1, 1], [], []>} : vector<256x4xf32>, vector<4x96xf32>, vector<256x96xf32> -> vector<256x96xf32>
    %c0_12 = arith.constant 0 : index
    %c0_13 = arith.constant 0 : index
    %21 = vector.load %arg6[%c0_12, %c0_13] : memref<1x96xf32, #tpu.memory_space<vmem>>, vector<1x96xf32>
    %22 = vector.broadcast %21 : vector<1x96xf32> to vector<256x96xf32>
    %23 = arith.addf %20, %22 : vector<256x96xf32>
    %c0_14 = arith.constant 0 : index
    %c0_15 = arith.constant 0 : index
    %24 = vector.load %arg7[%c0_14, %c0_15] : memref<4x96xf32, #tpu.memory_space<vmem>>, vector<4x96xf32>
    %cst_16 = arith.constant dense<0.000000e+00> : vector<256x96xf32>
    %25 = tpu.matmul %18, %24, %cst_16 {dimension_numbers = #tpu.dot_dimension_numbers<[1], [0], [0], [1], [0, 0, 1, 1], [], []>} : vector<256x4xf32>, vector<4x96xf32>, vector<256x96xf32> -> vector<256x96xf32>
    %c0_17 = arith.constant 0 : index
    %c0_18 = arith.constant 0 : index
    %26 = vector.load %arg8[%c0_17, %c0_18] : memref<1x96xf32, #tpu.memory_space<vmem>>, vector<1x96xf32>
    %27 = vector.broadcast %26 : vector<1x96xf32> to vector<256x96xf32>
    %28 = arith.addf %25, %27 : vector<256x96xf32>
    %c0_19 = arith.constant 0 : index
    %c0_20 = arith.constant 0 : index
    %29 = vector.load %arg2[%c0_19, %c0_20] : memref<256x96xbf16, #tpu.memory_space<vmem>>, vector<256x96xbf16>
    %30 = arith.extf %29 : vector<256x96xbf16> to vector<256x96xf32>
    %31 = arith.mulf %30, %23 : vector<256x96xf32>
    %32 = arith.addf %31, %28 : vector<256x96xf32>
    %c0_21 = arith.constant 0 : index
    %c0_22 = arith.constant 0 : index
    %33 = vector.load %arg9[%c0_21, %c0_22] : memref<96x48xf32, #tpu.memory_space<vmem>>, vector<96x48xf32>
    %cst_23 = arith.constant dense<0.000000e+00> : vector<256x48xf32>
    %34 = tpu.matmul %32, %33, %cst_23 {dimension_numbers = #tpu.dot_dimension_numbers<[1], [0], [0], [1], [0, 0, 1, 1], [], []>} : vector<256x96xf32>, vector<96x48xf32>, vector<256x48xf32> -> vector<256x48xf32>
    %c0_24 = arith.constant 0 : index
    %c0_25 = arith.constant 0 : index
    %35 = vector.load %arg10[%c0_24, %c0_25] : memref<1x48xf32, #tpu.memory_space<vmem>>, vector<1x48xf32>
    %36 = vector.broadcast %35 : vector<1x48xf32> to vector<256x48xf32>
    %37 = arith.addf %34, %36 : vector<256x48xf32>
    %cst_26 = arith.constant 5.000000e-01 : f32
    %38 = vector.broadcast %cst_26 : f32 to vector<256x48xf32>
    %39 = arith.mulf %38, %37 : vector<256x48xf32>
    %cst_27 = arith.constant 4.471500e-02 : f32
    %40 = vector.broadcast %cst_27 : f32 to vector<256x48xf32>
    %41 = arith.mulf %40, %37 : vector<256x48xf32>
    %42 = arith.mulf %41, %37 : vector<256x48xf32>
    %43 = arith.mulf %42, %37 : vector<256x48xf32>
    %44 = arith.addf %37, %43 : vector<256x48xf32>
    %cst_28 = arith.constant 0.797884583 : f32
    %45 = vector.broadcast %cst_28 : f32 to vector<256x48xf32>
    %46 = arith.mulf %45, %44 : vector<256x48xf32>
    %47 = math.tanh %46 : vector<256x48xf32>
    %cst_29 = arith.constant 1.000000e+00 : f32
    %48 = vector.broadcast %cst_29 : f32 to vector<256x48xf32>
    %49 = arith.addf %48, %47 : vector<256x48xf32>
    %50 = arith.mulf %39, %49 : vector<256x48xf32>
    %c0_30 = arith.constant 0 : index
    %c0_31 = arith.constant 0 : index
    %51 = vector.load %arg11[%c0_30, %c0_31] : memref<2x48xf32, #tpu.memory_space<vmem>>, vector<2x48xf32>
    %cst_32 = arith.constant dense<0.000000e+00> : vector<2x256xf32>
    %52 = tpu.matmul %51, %50, %cst_32 {dimension_numbers = #tpu.dot_dimension_numbers<[1], [1], [0], [0], [0, 0, 1, 0], [], []>} : vector<2x48xf32>, vector<256x48xf32>, vector<2x256xf32> -> vector<2x256xf32>
    %c0_33 = arith.constant 0 : index
    %c0_34 = arith.constant 0 : index
    %53 = vector.load %arg12[%c0_33, %c0_34] : memref<2x1xf32, #tpu.memory_space<vmem>>, vector<2x1xf32>
    %54 = vector.broadcast %53 : vector<2x1xf32> to vector<2x256xf32>
    %55 = arith.addf %52, %54 : vector<2x256xf32>
    %c0_35 = arith.constant 0 : index
    %c0_36 = arith.constant 0 : index
    %56 = vector.load %arg13[%c0_35, %c0_36] : memref<2x256xf32, #tpu.memory_space<vmem>>, vector<2x256xf32>
    tpu.vector_store %arg13[%c0_35, %c0_36], %55 {strides = array<i32>} : memref<2x256xf32, #tpu.memory_space<vmem>>, vector<2x256xf32>,
    return
  }
  func.func @transform_0(%arg0: i32) -> (i32, i32) {
    %c0_i32 = arith.constant 0 : i32
    %c0_i32_0 = arith.constant 0 : i32
    return %arg0, %c0_i32 : i32, i32
  }
  func.func @transform_1(%arg0: i32) -> (i32, i32) {
    %c0_i32 = arith.constant 0 : i32
    %c0_i32_0 = arith.constant 0 : i32
    return %arg0, %c0_i32 : i32, i32
  }
  func.func @transform_2(%arg0: i32) -> (i32, i32) {
    %c0_i32 = arith.constant 0 : i32
    %c0_i32_0 = arith.constant 0 : i32
    %c0_i32_1 = arith.constant 0 : i32
    return %c0_i32, %c0_i32_0 : i32, i32
  }
  func.func @transform_3(%arg0: i32) -> (i32, i32) {
    %c0_i32 = arith.constant 0 : i32
    %c0_i32_0 = arith.constant 0 : i32
    %c0_i32_1 = arith.constant 0 : i32
    return %c0_i32, %c0_i32_0 : i32, i32
  }
  func.func @transform_4(%arg0: i32) -> (i32, i32) {
    %c0_i32 = arith.constant 0 : i32
    %c0_i32_0 = arith.constant 0 : i32
    %c0_i32_1 = arith.constant 0 : i32
    return %c0_i32, %c0_i32_0 : i32, i32
  }
  func.func @transform_5(%arg0: i32) -> (i32, i32) {
    %c0_i32 = arith.constant 0 : i32
    %c0_i32_0 = arith.constant 0 : i32
    %c0_i32_1 = arith.constant 0 : i32
    return %c0_i32, %c0_i32_0 : i32, i32
  }
  func.func @transform_6(%arg0: i32) -> (i32, i32) {
    %c0_i32 = arith.constant 0 : i32
    %c0_i32_0 = arith.constant 0 : i32
    %c0_i32_1 = arith.constant 0 : i32
    return %c0_i32, %c0_i32_0 : i32, i32
  }
  func.func @transform_7(%arg0: i32) -> (i32, i32) {
    %c0_i32 = arith.constant 0 : i32
    %c0_i32_0 = arith.constant 0 : i32
    %c0_i32_1 = arith.constant 0 : i32
    return %c0_i32, %c0_i32_0 : i32, i32
  }
  func.func @transform_8(%arg0: i32) -> (i32, i32) {
    %c0_i32 = arith.constant 0 : i32
    %c0_i32_0 = arith.constant 0 : i32
    %c0_i32_1 = arith.constant 0 : i32
    return %c0_i32, %c0_i32_0 : i32, i32
  }
  func.func @transform_9(%arg0: i32) -> (i32, i32) {
    %c0_i32 = arith.constant 0 : i32
    %c0_i32_0 = arith.constant 0 : i32
    %c0_i32_1 = arith.constant 0 : i32
    return %c0_i32, %c0_i32_0 : i32, i32
  }
  func.func @transform_10(%arg0: i32) -> (i32, i32) {
    %c0_i32 = arith.constant 0 : i32
    %c0_i32_0 = arith.constant 0 : i32
    %c0_i32_1 = arith.constant 0 : i32
    return %c0_i32, %c0_i32_0 : i32, i32
  }
  func.func @transform_11(%arg0: i32) -> (i32, i32) {
    %c0_i32 = arith.constant 0 : i32
    %c0_i32_0 = arith.constant 0 : i32
    %c0_i32_1 = arith.constant 0 : i32
    return %c0_i32, %c0_i32_0 : i32, i32
  }
  func.func @transform_12(%arg0: i32) -> (i32, i32) {
    %c0_i32 = arith.constant 0 : i32
    %c0_i32_0 = arith.constant 0 : i32
    return %c0_i32, %arg0 : i32, i32
  }
}

</mosaic_0001>

<llo_original>
// kernel: adcdnet_forward.13
$region0: #{adcdnet_forward.13}
  #allocation0 [shape = 'u32[]', space=smem, size = 0x4, offset = 0x4, fixed_abs, tag = 'smem constant byte address 0x4 - core index']
  #allocation1 [shape = 'u32[72,128]{1,0:T(1,128)}', space=vmem, size = 0x9000, scoped, tag = 'internal scratch']
  %s0 = inlined_call_operand.vmem [shape: bf16[2,8,192], index: 0, kind: input, shape index: {}]
  %s1 = inlined_call_operand.vmem [shape: f32[2,1,8], index: 1, kind: input, shape index: {}]
  %s2 = inlined_call_operand.vmem [shape: f32[2,1,192], index: 2, kind: output, shape index: {0}]
  %s3 = inlined_call_operand.vmem [shape: f32[2,1,1], index: 3, kind: output, shape index: {1}]
  %4 = xla_tuple %s2, %s3
  %s5 = sld [smem:[#allocation0]]
  $region53: #{adcdnet_forward.13} parent=0
    _
  %s7 = ssub.s32 1, %s5
  %s8 = scalar_select 0, %s7, %s5
  loop: start=0, step=1, limit=4
  $region2: #{adcdnet_forward.13} parent=0 // loop_pre_header
    _
  $region3: #{adcdnet_forward.13} parent=0 // loop_header
    %s10 = sphi 0, %s14
    %p11 = scmp.ge.s32.totalorder %s10, 4
    %s17 = sphi 0, %s29
    %s18 = sphi 0, %s25
    %s19 = sphi 0, %s17
    %s20 = sphi 0, %s18
    %s21 = sphi 0, %s19
    %s22 = sphi 0, %s20
    %s34 = sphi 0, %s36
    %s37 = sphi 0, %s34
    %s38 = sphi 0, %s37
    %s54 = sphi 0, %s38
    %s62 = sphi 0, %s64
    %s65 = sphi 0, %s62
    %s66 = sphi 0, %s65
    %s82 = sphi 0, %s66
    %s88 = sphi 0, %s90
    %s91 = sphi 0, %s88
    %s92 = sphi 0, %s91
    %s108 = sphi 0, %s92
    %s114 = sphi 0, %s116
    %s117 = sphi 0, %s114
    %s118 = sphi 0, %s117
    %s134 = sphi 0, %s118
  $region4: #{adcdnet_forward.13} parent=0 // loop_header_branch
    %13 = sbr.rel (%p11) target = $region8
  $region5: #{adcdnet_forward.13} parent=0 // loop_body
    %s15 = ssub.s32 %s10, 1
    %s16 = ssub.s32 %s10, 2
    %s23 = sadd.s32 1, %s18
    %p24 = scmp.ge.s32.totalorder %s23, 1
    %s25 = scalar_select %p24, 0, %s23
    %s26 = sadd.s32 1, %s17
    %s27 = scalar_select %p24, %s26, %s17
    %p28 = scmp.ge.s32.totalorder %s27, 2
    %s29 = scalar_select %p28, 0, %s27
    %s30 = ssub.s32 %s17, %s29
    %s31 = ssub.s32 %s18, %s25
    %s32 = sor.u32 %s30, %s31
    %p33 = scmp.eq.s32.totalorder %s32, 0
    %s35 = sadd.s32 %s34, 1
    %s36 = scalar_select %p33, %s34, %s35
    %p39 = pneg %p33
    %p40 = scmp.eq.s32.totalorder %s10, 1
    %p41 = por %p39, %p40
    %p42 = scmp.ne.s32.totalorder %s34, %s37
    %p43 = scmp.eq.s32.totalorder %s10, 0
    %p44 = por %p42, %p43
    %p45 = scmp.ne.s32.totalorder %s34, %s37
    %p46 = scmp.eq.s32.totalorder %s15, 1
    %p47 = por %p45, %p46
    %p48 = scmp.ne.s32.totalorder %s37, %s38
    %p49 = scmp.eq.s32.totalorder %s15, 0
    %p50 = por %p48, %p49
    %p51 = scmp.ne.s32.totalorder %s37, %s38
    %p52 = scmp.eq.s32.totalorder %s16, 1
    %p53 = por %p51, %p52
    %p55 = scmp.ne.s32.totalorder %s38, %s54
    %p56 = scmp.eq.s32.totalorder %s16, 0
    %p57 = por %p55, %p56
    %s58 = ssub.s32 %s17, %s29
    %s59 = ssub.s32 %s18, %s25
    %s60 = sor.u32 %s58, %s59
    %p61 = scmp.eq.s32.totalorder %s60, 0
    %s63 = sadd.s32 %s62, 1
    %s64 = scalar_select %p61, %s62, %s63
    %p67 = pneg %p61
    %p68 = scmp.eq.s32.totalorder %s10, 1
    %p69 = por %p67, %p68
    %p70 = scmp.ne.s32.totalorder %s62, %s65
    %p71 = scmp.eq.s32.totalorder %s10, 0
    %p72 = por %p70, %p71
    %p73 = scmp.ne.s32.totalorder %s62, %s65
    %p74 = scmp.eq.s32.totalorder %s15, 1
    %p75 = por %p73, %p74
    %p76 = scmp.ne.s32.totalorder %s65, %s66
    %p77 = scmp.eq.s32.totalorder %s15, 0
    %p78 = por %p76, %p77
    %p79 = scmp.ne.s32.totalorder %s65, %s66
    %p80 = scmp.eq.s32.totalorder %s16, 1
    %p81 = por %p79, %p80
    %p83 = scmp.ne.s32.totalorder %s66, %s82
    %p84 = scmp.eq.s32.totalorder %s16, 0
    %p85 = por %p83, %p84
    %s86 = ssub.s32 %s17, %s29
    %p87 = scmp.eq.s32.totalorder %s86, 0
    %s89 = sadd.s32 %s88, 1
    %s90 = scalar_select %p87, %s88, %s89
    %p93 = pneg %p87
    %p94 = scmp.eq.s32.totalorder %s10, 1
    %p95 = por %p93, %p94
    %p96 = scmp.ne.s32.totalorder %s88, %s91
    %p97 = scmp.eq.s32.totalorder %s10, 0
    %p98 = por %p96, %p97
    %p99 = scmp.ne.s32.totalorder %s88, %s91
    %p100 = scmp.eq.s32.totalorder %s15, 1
    %p101 = por %p99, %p100
    %p102 = scmp.ne.s32.totalorder %s91, %s92
    %p103 = scmp.eq.s32.totalorder %s15, 0
    %p104 = por %p102, %p103
    %p105 = scmp.ne.s32.totalorder %s91, %s92
    %p106 = scmp.eq.s32.totalorder %s16, 1
    %p107 = por %p105, %p106
    %p109 = scmp.ne.s32.totalorder %s92, %s108
    %p110 = scmp.eq.s32.totalorder %s16, 0
    %p111 = por %p109, %p110
    %s112 = ssub.s32 %s17, %s29
    %p113 = scmp.eq.s32.totalorder %s112, 0
    %s115 = sadd.s32 %s114, 1
    %s116 = scalar_select %p113, %s114, %s115
    %p119 = pneg %p113
    %p120 = scmp.eq.s32.totalorder %s10, 1
    %p121 = por %p119, %p120
    %p122 = scmp.ne.s32.totalorder %s114, %s117
    %p123 = scmp.eq.s32.totalorder %s10, 0
    %p124 = por %p122, %p123
    %p125 = scmp.ne.s32.totalorder %s114, %s117
    %p126 = scmp.eq.s32.totalorder %s15, 1
    %p127 = por %p125, %p126
    %p128 = scmp.ne.s32.totalorder %s117, %s118
    %p129 = scmp.eq.s32.totalorder %s15, 0
    %p130 = por %p128, %p129
    %p131 = scmp.ne.s32.totalorder %s117, %s118
    %p132 = scmp.eq.s32.totalorder %s16, 1
    %p133 = por %p131, %p132
    %p135 = scmp.ne.s32.totalorder %s118, %s134
    %p136 = scmp.eq.s32.totalorder %s16, 0
    %p137 = por %p135, %p136
    %p138 = scmp.le.s32.totalorder 1, %s10
    %p139 = scmp.lt.s32.totalorder %s10, 3
    %p140 = pnand %p138, %p139
    %p141 = pneg %p140
    // Predicated region
    $region9: #{adcdnet_forward.13} parent=5 // pred_check
      _
    $region10: #{adcdnet_forward.13} parent=5 // pred_check_branch
      %143 = sbr.rel (%p140) target = $region12
    $region11: #{adcdnet_forward.13} parent=5 // pred_region
      %s144 = ssub.s32 %s10, 1
    $region12: #{adcdnet_forward.13} parent=5 // pred_fallthru
      _
    %p145 = scmp.lt.s32.totalorder %s10, 2
    // Predicated region
    $region13: #{adcdnet_forward.13} parent=5 // pred_check
      %p146 = pneg %p145
    $region14: #{adcdnet_forward.13} parent=5 // pred_check_branch
      %148 = sbr.rel (%p146) target = $region16
    $region15: #{adcdnet_forward.13} parent=5 // pred_region
      // Predicated region
      $region17: #{adcdnet_forward.13} parent=15 // pred_check
        %p149 = pneg %p44
      $region18: #{adcdnet_forward.13} parent=15 // pred_check_branch
        %151 = sbr.rel (%p149) target = $region20
      $region19: #{adcdnet_forward.13} parent=15 // pred_region
        %p152 = scmp.lt.s32.totalorder %s17, 1
        %s153 = scalar_select %p152, %s17, 1
        %p154 = scmp.lt.s32.totalorder %s18, 0
        %s155 = scalar_select %p154, %s18, 0
        %s156 = smul.addr %s155, 2
        %s157 = smul.addr %s153, 2
        %s158 = sadd.s32 %s156, %s157
        %s159 = smul.addr %s158, 4
        %s160 = scalar_lea.vmem %s0, %s159
      $region20: #{adcdnet_forward.13} parent=15 // pred_fallthru
        _
      // Predicated region
      $region21: #{adcdnet_forward.13} parent=15 // pred_check
        %p161 = pneg %p72
      $region22: #{adcdnet_forward.13} parent=15 // pred_check_branch
        %163 = sbr.rel (%p161) target = $region24
      $region23: #{adcdnet_forward.13} parent=15 // pred_region
        %p164 = scmp.lt.s32.totalorder %s17, 1
        %s165 = scalar_select %p164, %s17, 1
        %p166 = scmp.lt.s32.totalorder %s18, 0
        %s167 = scalar_select %p166, %s18, 0
        %s168 = sadd.s32 %s167, %s165
        %s169 = scalar_lea.vmem %s1, %s168
      $region24: #{adcdnet_forward.13} parent=15 // pred_fallthru
        _
    $region16: #{adcdnet_forward.13} parent=5 // pred_fallthru
      _
    %p170 = scmp.le.s32.totalorder 1, %s10
    %p171 = scmp.lt.s32.totalorder %s10, 3
    %p172 = pnand %p170, %p171
    %p173 = pneg %p172
    // Predicated region
    $region25: #{adcdnet_forward.13} parent=5 // pred_check
      _
    $region26: #{adcdnet_forward.13} parent=5 // pred_check_branch
      %175 = sbr.rel (%p172) target = $region28
    $region27: #{adcdnet_forward.13} parent=5 // pred_region
      %s176 = ssub.s32 %s10, 1
      %p177 = scmp.lt.s32.totalorder %s19, 1
      %s178 = scalar_select %p177, %s19, 1
      %p179 = scmp.lt.s32.totalorder %s20, 0
      %s180 = scalar_select %p179, %s20, 0
      %s181 = smul.addr %s180, 2
      %s182 = smul.addr %s178, 2
      %s183 = sadd.s32 %s181, %s182
      %s184 = smul.addr %s183, 4
      %s185 = scalar_lea.vmem %s0, %s184
      %p186 = pneg %p50
      %p187 = pneg %p47
      %p188 = scmp.lt.s32.totalorder %s19, 1
      %s189 = scalar_select %p188, %s19, 1
      %p190 = scmp.lt.s32.totalorder %s20, 0
      %s191 = scalar_select %p190, %s20, 0
      %s192 = sadd.s32 %s191, %s189
      %s193 = scalar_lea.vmem %s1, %s192
      %p194 = pneg %p78
      %p195 = pneg %p75
      %p196 = pneg %p104
      %p197 = pneg %p101
      %p198 = scmp.lt.s32.totalorder %s19, 1
      %s199 = scalar_select %p198, %s19, 1
      %s200 = smul.addr %s199, 2
      %s201 = scalar_lea.vmem %s2, %s200
      %p202 = pneg %p130
      %p203 = pneg %p127
      %p204 = scmp.lt.s32.totalorder %s19, 1
      %s205 = scalar_select %p204, %s19, 1
      %s206 = scalar_lea.vmem %s3, %s205
      %p207 = scmp.lt.s32.totalorder %s19, 1
      %s208 = scalar_select %p207, %s19, 1
      %p209 = scmp.lt.s32.totalorder %s20, 0
      %s210 = scalar_select %p209, %s20, 0
      %s211 = smul.addr %s210, 2
      %s212 = smul.addr %s208, 2
      %s213 = sadd.s32 %s211, %s212
      %s214 = smul.addr %s213, 4
      %s215 = scalar_lea.vmem %s0, %s214
      %p216 = scmp.lt.s32.totalorder %s19, 1
      %s217 = scalar_select %p216, %s19, 1
      %p218 = scmp.lt.s32.totalorder %s20, 0
      %s219 = scalar_select %p218, %s20, 0
      %s220 = sadd.s32 %s219, %s217
      %s221 = scalar_lea.vmem %s1, %s220
      %p222 = scmp.lt.s32.totalorder %s19, 1
      %s223 = scalar_select %p222, %s19, 1
      %s224 = smul.addr %s223, 2
      %s225 = scalar_lea.vmem %s2, %s224
      %p226 = scmp.lt.s32.totalorder %s19, 1
      %s227 = scalar_select %p226, %s19, 1
      %s228 = scalar_lea.vmem %s3, %s227
      %p229 = scmp.eq.s32.totalorder %s20, 0
      // Predicated region
      $region29: #{adcdnet_forward.13} parent=27 // pred_check
        %p230 = pneg %p229
      $region30: #{adcdnet_forward.13} parent=27 // pred_check_branch
        %232 = sbr.rel (%p230) target = $region32
      $region31: #{adcdnet_forward.13} parent=27 // pred_region
        %v233 = vlaneseq
        %vm234 = vcmp.ge.s32.totalorder %v233, 0
        %vm235 = vcmp.lt.s32.totalorder %v233, 192
        %vm236 = vmand %vm234, %vm235
        %237 = vst.msk [vmem:[%s225] sm:$0x3] %vm236, 0.0
        %vm238 = vcmask 0
        %239 = vst.msk [vmem:[%s228] sm:$0x1] %vm238, 0.0
      $region32: #{adcdnet_forward.13} parent=27 // pred_fallthru
        _
      %v240 = vld [vmem:[%s215] sm:$0xff]
      %v241 = vunpack.c.l.bf16 %v240
      %v242 = vunpack.c.h.bf16 %v240
      %v243 = vld [vmem:[%s221] sm:$0x1]
      %vm244 = vcmp.eq.f32.partialorder %v243, 0.0
      %v245 = vsel %vm244, 1, 0
      %v246 = vcvt.s32.f32 %v245
      %v247 = vmul.f32 %v241, %v241
      %v248 = vmul.f32 %v242, %v242
      %vm249 = vcmask 523264
      %v251 = vsel %vm249, 1.0, 0
      %v254 = vsel %vm249, %v248, 0
      %256 = vmatpush.xpose.msra.mxu0 0.0
      %257 = vmatpush.xpose.msra.mxu0 0.0
      %258 = vmatpush.xpose.msra.mxu0 0.0
      %259 = vmatpush.xpose.msra.mxu0 0.0
      %260 = vmatpush.xpose.msra.mxu0 0.0
      %261 = vmatpush.xpose.msra.mxu0 0.0
      %262 = vmatpush.xpose.msra.mxu0 0.0
      %263 = vmatpush.xpose.msra.mxu0 0.0
      %264 = vmatpush.xpose.msra.mxu0 0.0
      %265 = vmatpush.xpose.msra.mxu0 0.0
      %266 = vmatpush.xpose.msra.mxu0 0.0
      %267 = vmatpush.xpose.msra.mxu0 0.0
      %268 = vmatpush.xpose.msra.mxu0 0.0
      %269 = vmatpush.xpose.msra.mxu0 0.0
      %270 = vmatpush.xpose.msra.mxu0 0.0
      %271 = vmatpush.xpose.msra.mxu0 %v247
      %272 = vmatmul.f32.gmra.mxu0 1.0
      %v273 = vpop.f32.mrf.mxu0
      %v274 = vadd.f32 0.0, %v273
      %275 = vdwg.mxu0
      %276 = vmatpush.xpose.msra.mxu0 0.0
      %277 = vmatpush.xpose.msra.mxu0 0.0
      %278 = vmatpush.xpose.msra.mxu0 0.0
      %279 = vmatpush.xpose.msra.mxu0 0.0
      %280 = vmatpush.xpose.msra.mxu0 0.0
      %281 = vmatpush.xpose.msra.mxu0 0.0
      %282 = vmatpush.xpose.msra.mxu0 0.0
      %283 = vmatpush.xpose.msra.mxu0 0.0
      %284 = vmatpush.xpose.msra.mxu0 0.0
      %285 = vmatpush.xpose.msra.mxu0 0.0
      %286 = vmatpush.xpose.msra.mxu0 0.0
      %287 = vmatpush.xpose.msra.mxu0 0.0
      %288 = vmatpush.xpose.msra.mxu0 0.0
      %289 = vmatpush.xpose.msra.mxu0 0.0
      %290 = vmatpush.xpose.msra.mxu0 0.0
      %291 = vmatpush.xpose.msra.mxu0 %v254
      %292 = vmatmul.f32.gmra.mxu0 %v251
      %v293 = vpop.f32.mrf.mxu0
      %v294 = vadd.f32 %v274, %v293
      %295 = vdwg.mxu0
      %v296 = vmax.f32 %v294, 1e-24
      %v297 = vrsqrt.pop %v296
      %v298 = vmul.f32 %v297, %v296
      %v299 = vmul.f32 %v298, %v297
      %v300 = vmul.f32 0.5, %v299
      %v301 = vsub.f32 1.5, %v300
      %v302 = vmul.f32 %v297, %v301
      %vm303 = vweird.f32 %v296
      %vm304 = vweird.f32 %v297
      %vm305 = vmor %vm303, %vm304
      %v306 = vsel %vm305, %v297, %v302
      %v307 = vmul.f32 %v246, %v306
      %v308 = vld [vmem:[%s225] sm:$0x3]
      %vm309 = vcmask 64512
      %v311 = vsel %vm309, %v307, 0
      %313 = vmatpush.msra.mxu0 0.0
      %314 = vmatpush.msra.mxu0 0.0
      %315 = vmatpush.msra.mxu0 0.0
      %316 = vmatpush.msra.mxu0 0.0
      %317 = vmatpush.msra.mxu0 0.0
      %318 = vmatpush.msra.mxu0 0.0
      %319 = vmatpush.msra.mxu0 0.0
      %320 = vmatpush.msra.mxu0 0.0
      %321 = vmatpush.msra.mxu0 0.0
      %322 = vmatpush.msra.mxu0 0.0
      %323 = vmatpush.msra.mxu0 0.0
      %324 = vmatpush.msra.mxu0 0.0
      %325 = vmatpush.msra.mxu0 0.0
      %326 = vmatpush.msra.mxu0 0.0
      %327 = vmatpush.msra.mxu0 0.0
      %328 = vmatpush.msra.mxu0 %v241
      %329 = vmatmul.f32.gmra.mxu0 %v311
      %v330 = vpop.f32.mrf.mxu0
      %v331 = vadd.f32 0.0, %v330
      %332 = vdwg.mxu0
      %333 = vmatpush.msra.mxu0 0.0
      %334 = vmatpush.msra.mxu0 0.0
      %335 = vmatpush.msra.mxu0 0.0
      %336 = vmatpush.msra.mxu0 0.0
      %337 = vmatpush.msra.mxu0 0.0
      %338 = vmatpush.msra.mxu0 0.0
      %339 = vmatpush.msra.mxu0 0.0
      %340 = vmatpush.msra.mxu0 0.0
      %341 = vmatpush.msra.mxu0 0.0
      %342 = vmatpush.msra.mxu0 0.0
      %343 = vmatpush.msra.mxu0 0.0
      %344 = vmatpush.msra.mxu0 0.0
      %345 = vmatpush.msra.mxu0 0.0
      %346 = vmatpush.msra.mxu0 0.0
      %347 = vmatpush.msra.mxu0 0.0
      %348 = vmatpush.msra.mxu0 %v242
      %349 = vmatmul.f32.gmra.mxu0 %v311
      %v350 = vpop.f32.mrf.mxu0
      %v351 = vadd.f32 0.0, %v350
      %352 = vdwg.mxu0
      %v355 = vrot.slane %v351, 7
      %vm356 = vcmask 1040384
      %v357 = vsel %vm356, %v331, %v355
      %v359 = vadd.f32 %v308, %v357
      %v360 = vlaneseq
      %vm361 = vcmp.ge.s32.totalorder %v360, 0
      %vm362 = vcmp.lt.s32.totalorder %v360, 192
      %vm363 = vmand %vm361, %vm362
      %364 = vst.msk [vmem:[%s225] sm:$0x3] %vm363, %v359
      %v365 = vld [vmem:[%s228] sm:$0x1]
      %vm366 = vcmask 57344
      %v367 = vsel %vm366, %v246, 0.0
      %368 = vadd.xlane.f32.xlu0 %v367
      %v369 = vpop.xlane.xlu0 %368
      %v370 = vadd.f32 %v365, %v369
      %vm371 = vcmask 0
      %372 = vst.msk [vmem:[%s228] sm:$0x1] %vm371, %v370
      %p373 = scmp.lt.s32.totalorder %s19, 1
      %s374 = scalar_select %p373, %s19, 1
      %s375 = smul.addr %s374, 2
      %s376 = scalar_lea.vmem %s2, %s375
      %p377 = scmp.lt.s32.totalorder %s19, 1
      %s378 = scalar_select %p377, %s19, 1
      %s379 = scalar_lea.vmem %s3, %s378
      // Predicated region
      $region33: #{adcdnet_forward.13} parent=27 // pred_check
        %p380 = pneg %p101
      $region34: #{adcdnet_forward.13} parent=27 // pred_check_branch
        %382 = sbr.rel (%p380) target = $region36
      $region35: #{adcdnet_forward.13} parent=27 // pred_region
        _
      $region36: #{adcdnet_forward.13} parent=27 // pred_fallthru
        _
      // Predicated region
      $region37: #{adcdnet_forward.13} parent=27 // pred_check
        %p383 = pneg %p127
      $region38: #{adcdnet_forward.13} parent=27 // pred_check_branch
        %385 = sbr.rel (%p383) target = $region40
      $region39: #{adcdnet_forward.13} parent=27 // pred_region
        _
      $region40: #{adcdnet_forward.13} parent=27 // pred_fallthru
        _
    $region28: #{adcdnet_forward.13} parent=5 // pred_fallthru
      _
    %p386 = scmp.le.s32.totalorder 2, %s10
    // Predicated region
    $region41: #{adcdnet_forward.13} parent=5 // pred_check
      %p387 = pneg %p386
    $region42: #{adcdnet_forward.13} parent=5 // pred_check_branch
      %389 = sbr.rel (%p387) target = $region44
    $region43: #{adcdnet_forward.13} parent=5 // pred_region
      %s390 = ssub.s32 %s10, 2
      // Predicated region
      $region45: #{adcdnet_forward.13} parent=43 // pred_check
        %p391 = pneg %p107
      $region46: #{adcdnet_forward.13} parent=43 // pred_check_branch
        %393 = sbr.rel (%p391) target = $region48
      $region47: #{adcdnet_forward.13} parent=43 // pred_region
        %p394 = scmp.lt.s32.totalorder %s21, 1
        %s395 = scalar_select %p394, %s21, 1
        %s396 = smul.addr %s395, 2
        %s397 = scalar_lea.vmem %s2, %s396
      $region48: #{adcdnet_forward.13} parent=43 // pred_fallthru
        _
      // Predicated region
      $region49: #{adcdnet_forward.13} parent=43 // pred_check
        %p398 = pneg %p133
      $region50: #{adcdnet_forward.13} parent=43 // pred_check_branch
        %400 = sbr.rel (%p398) target = $region52
      $region51: #{adcdnet_forward.13} parent=43 // pred_region
        %p401 = scmp.lt.s32.totalorder %s21, 1
        %s402 = scalar_select %p401, %s21, 1
        %s403 = scalar_lea.vmem %s3, %s402
      $region52: #{adcdnet_forward.13} parent=43 // pred_fallthru
        _
    $region44: #{adcdnet_forward.13} parent=5 // pred_fallthru
      _
  $region6: #{adcdnet_forward.13} parent=0 // loop_footer
    %s14 = sadd.s32 1, %s10
  $region7: #{adcdnet_forward.13} parent=0 // loop_footer_branch
    %9 = sbr.rel target = $region3
  $region8: #{adcdnet_forward.13} parent=0 // loop_exit
    _

// kernel: adcdnet_forward.22
$region0: #{adcdnet_forward.22}
  #allocation0 [shape = 'u32[]', space=smem, size = 0x4, offset = 0x4, fixed_abs, tag = 'smem constant byte address 0x4 - core index']
  #allocation1 [shape = 'u32[72,128]{1,0:T(1,128)}', space=vmem, size = 0x9000, scoped, tag = 'internal scratch']
  %s0 = inlined_call_operand.vmem [shape: bf16[8,192], index: 0, kind: input, shape index: {}]
  %s1 = inlined_call_operand.vmem [shape: f32[192,96], index: 1, kind: input, shape index: {}]
  %s2 = inlined_call_operand.vmem [shape: f32[1,96], index: 2, kind: input, shape index: {}]
  %s3 = inlined_call_operand.vmem [shape: f32[32,96], index: 3, kind: input, shape index: {}]
  %s4 = inlined_call_operand.vmem [shape: f32[32,1], index: 4, kind: input, shape index: {}]
  %s5 = inlined_call_operand.vmem [shape: bf16[32,8], index: 5, kind: output, shape index: {}]
  %s6 = sld [smem:[#allocation0]]
  $region30: #{adcdnet_forward.22} parent=0
    _
  %s8 = ssub.s32 1, %s6
  %s9 = scalar_select 0, %s8, %s6
  // Predicated region
  $region2: #{adcdnet_forward.22} parent=0 // pred_check
    _
  $region3: #{adcdnet_forward.22} parent=0 // pred_check_branch
    %11 = sbr.rel (0) target = $region5
  $region4: #{adcdnet_forward.22} parent=0 // pred_region
    _
  $region5: #{adcdnet_forward.22} parent=0 // pred_fallthru
    _
  // Predicated region
  $region6: #{adcdnet_forward.22} parent=0 // pred_check
    _
  $region7: #{adcdnet_forward.22} parent=0 // pred_check_branch
    %13 = sbr.rel (0) target = $region9
  $region8: #{adcdnet_forward.22} parent=0 // pred_region
    _
  $region9: #{adcdnet_forward.22} parent=0 // pred_fallthru
    _
  // Predicated region
  $region10: #{adcdnet_forward.22} parent=0 // pred_check
    _
  $region11: #{adcdnet_forward.22} parent=0 // pred_check_branch
    %15 = sbr.rel (0) target = $region13
  $region12: #{adcdnet_forward.22} parent=0 // pred_region
    _
  $region13: #{adcdnet_forward.22} parent=0 // pred_fallthru
    _
  // Predicated region
  $region14: #{adcdnet_forward.22} parent=0 // pred_check
    _
  $region15: #{adcdnet_forward.22} parent=0 // pred_check_branch
    %17 = sbr.rel (0) target = $region17
  $region16: #{adcdnet_forward.22} parent=0 // pred_region
    _
  $region17: #{adcdnet_forward.22} parent=0 // pred_fallthru
    _
  // Predicated region
  $region18: #{adcdnet_forward.22} parent=0 // pred_check
    _
  $region19: #{adcdnet_forward.22} parent=0 // pred_check_branch
    %19 = sbr.rel (0) target = $region21
  $region20: #{adcdnet_forward.22} parent=0 // pred_region
    _
  $region21: #{adcdnet_forward.22} parent=0 // pred_fallthru
    _
  %v20 = vld [vmem:[%s0] sm:$0xff]
  %v21 = vunpack.c.l.bf16 %v20
  %v22 = vunpack.c.h.bf16 %v20
  %v23 = vld [vmem:[%s1] sm:$0xff]
  %v24 = vld [vmem:[%s1 + $0x8] sm:$0xff]
  %v25 = vld [vmem:[%s1 + $0x10] sm:$0xff]
  %v26 = vld [vmem:[%s1 + $0x18] sm:$0xff]
  %v27 = vld [vmem:[%s1 + $0x20] sm:$0xff]
  %v28 = vld [vmem:[%s1 + $0x28] sm:$0xff]
  %v29 = vld [vmem:[%s1 + $0x30] sm:$0xff]
  %v30 = vld [vmem:[%s1 + $0x38] sm:$0xff]
  %v31 = vld [vmem:[%s1 + $0x40] sm:$0xff]
  %v32 = vld [vmem:[%s1 + $0x48] sm:$0xff]
  %v33 = vld [vmem:[%s1 + $0x50] sm:$0xff]
  %v34 = vld [vmem:[%s1 + $0x58] sm:$0xff]
  %v35 = vld [vmem:[%s1 + $0x60] sm:$0xff]
  %v36 = vld [vmem:[%s1 + $0x68] sm:$0xff]
  %v37 = vld [vmem:[%s1 + $0x70] sm:$0xff]
  %v38 = vld [vmem:[%s1 + $0x78] sm:$0xff]
  %v39 = vld [vmem:[%s1 + $0x80] sm:$0xff]
  %v40 = vld [vmem:[%s1 + $0x88] sm:$0xff]
  %v41 = vld [vmem:[%s1 + $0x90] sm:$0xff]
  %v42 = vld [vmem:[%s1 + $0x98] sm:$0xff]
  %v43 = vld [vmem:[%s1 + $0xa0] sm:$0xff]
  %v44 = vld [vmem:[%s1 + $0xa8] sm:$0xff]
  %v45 = vld [vmem:[%s1 + $0xb0] sm:$0xff]
  %v46 = vld [vmem:[%s1 + $0xb8] sm:$0xff]
  %v47 = vld [vmem:[%s2] sm:$0x1]
  %v49 = vperm.slane %v47, 0
  %vm51 = vcmask 523264
  %v53 = vsel %vm51, %v22, 0
  %55 = vmatpush.msra.mxu0 %v38
  %56 = vmatpush.msra.mxu0 %v37
  %57 = vmatpush.msra.mxu0 %v36
  %58 = vmatpush.msra.mxu0 %v35
  %59 = vmatpush.msra.mxu0 %v34
  %60 = vmatpush.msra.mxu0 %v33
  %61 = vmatpush.msra.mxu0 %v32
  %62 = vmatpush.msra.mxu0 %v31
  %63 = vmatpush.msra.mxu0 %v30
  %64 = vmatpush.msra.mxu0 %v29
  %65 = vmatpush.msra.mxu0 %v28
  %66 = vmatpush.msra.mxu0 %v27
  %67 = vmatpush.msra.mxu0 %v26
  %68 = vmatpush.msra.mxu0 %v25
  %69 = vmatpush.msra.mxu0 %v24
  %70 = vmatpush.msra.mxu0 %v23
  %71 = vmatmul.f32.gmra.mxu0 %v21
  %v72 = vpop.f32.mrf.mxu0
  %v73 = vadd.f32 %v49, %v72
  %74 = vdwg.mxu0
  %75 = vmatpush.msra.mxu0 0.0
  %76 = vmatpush.msra.mxu0 0.0
  %77 = vmatpush.msra.mxu0 0.0
  %78 = vmatpush.msra.mxu0 0.0
  %79 = vmatpush.msra.mxu0 0.0
  %80 = vmatpush.msra.mxu0 0.0
  %81 = vmatpush.msra.mxu0 0.0
  %82 = vmatpush.msra.mxu0 0.0
  %83 = vmatpush.msra.mxu0 %v46
  %84 = vmatpush.msra.mxu0 %v45
  %85 = vmatpush.msra.mxu0 %v44
  %86 = vmatpush.msra.mxu0 %v43
  %87 = vmatpush.msra.mxu0 %v42
  %88 = vmatpush.msra.mxu0 %v41
  %89 = vmatpush.msra.mxu0 %v40
  %90 = vmatpush.msra.mxu0 %v39
  %91 = vmatmul.f32.gmra.mxu0 %v53
  %v92 = vpop.f32.mrf.mxu0
  %v93 = vadd.f32 %v73, %v92
  %94 = vdwg.mxu0
  %v95 = vmul.f32 %v93, 0.5
  %v96 = vmul.f32 %v93, 0.044715
  %v97 = vmul.f32 %v96, %v93
  %v98 = vmul.f32 %v97, %v93
  %v99 = vadd.f32 %v93, %v98
  %v100 = vmul.f32 %v99, 0.7978846
  %v101 = vtanh.pop %v100
  %v102 = vadd.f32 %v101, 1.0
  %v103 = vmul.f32 %v95, %v102
  %v104 = vld [vmem:[%s3] sm:$0xff]
  %v105 = vld [vmem:[%s3 + $0x8] sm:$0xff]
  %v106 = vld [vmem:[%s3 + $0x10] sm:$0xff]
  %v107 = vld [vmem:[%s3 + $0x18] sm:$0xff]
  %v108 = vld [vmem:[%s4] sm:$0xff]
  %v109 = vld [vmem:[%s4 + $0x8] sm:$0xff]
  %v110 = vld [vmem:[%s4 + $0x10] sm:$0xff]
  %v111 = vld [vmem:[%s4 + $0x18] sm:$0xff]
  %113 = vset.pattern.permute.xlu0 0
  %114 = vperm.xlu0 %113, %v108
  %v115 = vpop.permute.xlu0 %114
  %118 = vset.pattern.permute.xlu0 0
  %119 = vperm.xlu0 %118, %v109
  %v120 = vpop.permute.xlu0 %119
  %123 = vset.pattern.permute.xlu0 0
  %124 = vperm.xlu0 %123, %v110
  %v125 = vpop.permute.xlu0 %124
  %128 = vset.pattern.permute.xlu0 0
  %129 = vperm.xlu0 %128, %v111
  %v130 = vpop.permute.xlu0 %129
  %vm132 = vcmask 785408
  %v134 = vsel %vm132, %v104, 0
  %v137 = vsel %vm132, %v105, 0
  %v140 = vsel %vm132, %v106, 0
  %v143 = vsel %vm132, %v107, 0
  %v146 = vsel %vm132, %v103, 0
  %148 = vmatpush.xpose.msra.mxu0 0.0
  %149 = vmatpush.xpose.msra.mxu0 0.0
  %150 = vmatpush.xpose.msra.mxu0 0.0
  %151 = vmatpush.xpose.msra.mxu0 0.0
  %152 = vmatpush.xpose.msra.mxu0 0.0
  %153 = vmatpush.xpose.msra.mxu0 0.0
  %154 = vmatpush.xpose.msra.mxu0 0.0
  %155 = vmatpush.xpose.msra.mxu0 0.0
  %156 = vmatpush.xpose.msra.mxu0 0.0
  %157 = vmatpush.xpose.msra.mxu0 0.0
  %158 = vmatpush.xpose.msra.mxu0 0.0
  %159 = vmatpush.xpose.msra.mxu0 0.0
  %160 = vmatpush.xpose.msra.mxu0 0.0
  %161 = vmatpush.xpose.msra.mxu0 0.0
  %162 = vmatpush.xpose.msra.mxu0 0.0
  %163 = vmatpush.xpose.msra.mxu0 %v146
  %164 = vmatmul.f32.gmra.mxu0 %v134
  %v165 = vpop.f32.mrf.mxu0
  %v166 = vadd.f32 %v115, %v165
  %167 = vmatmul.f32.gmra.mxu0 %v137
  %v168 = vpop.f32.mrf.mxu0
  %v169 = vadd.f32 %v120, %v168
  %170 = vmatmul.f32.gmra.mxu0 %v140
  %v171 = vpop.f32.mrf.mxu0
  %v172 = vadd.f32 %v125, %v171
  %173 = vmatmul.f32.gmra.mxu0 %v143
  %v174 = vpop.f32.mrf.mxu0
  %v175 = vadd.f32 %v130, %v174
  %176 = vdwg.mxu0
  %v177 = vpack.c.bf16 %v166, %v166
  %v178 = vpack.c.bf16 %v169, %v169
  %v179 = vpack.c.bf16 %v172, %v172
  %v180 = vpack.c.bf16 %v175, %v175
  %vm181 = vcmask 60416
  %182 = vst.msk [vmem:[%s5] sm:$0xf] %vm181, %v177
  %183 = vst.msk [vmem:[%s5 + $0x4] sm:$0xf] %vm181, %v178
  %184 = vst.msk [vmem:[%s5 + $0x8] sm:$0xf] %vm181, %v179
  %185 = vst.msk [vmem:[%s5 + $0xc] sm:$0xf] %vm181, %v180
  // Predicated region
  $region22: #{adcdnet_forward.22} parent=0 // pred_check
    _
  $region23: #{adcdnet_forward.22} parent=0 // pred_check_branch
    %187 = sbr.rel (0) target = $region25
  $region24: #{adcdnet_forward.22} parent=0 // pred_region
    _
  $region25: #{adcdnet_forward.22} parent=0 // pred_fallthru
    _
  // Predicated region
  $region26: #{adcdnet_forward.22} parent=0 // pred_check
    _
  $region27: #{adcdnet_forward.22} parent=0 // pred_check_branch
    %189 = sbr.rel (0) target = $region29
  $region28: #{adcdnet_forward.22} parent=0 // pred_region
    _
  $region29: #{adcdnet_forward.22} parent=0 // pred_fallthru
    _

// kernel: adcdnet_forward.14
$region0: #{adcdnet_forward.14}
  #allocation0 [shape = 'u32[]', space=smem, size = 0x4, offset = 0x4, fixed_abs, tag = 'smem constant byte address 0x4 - core index']
  #allocation1 [shape = 'u32[72,128]{1,0:T(1,128)}', space=vmem, size = 0x9000, scoped, tag = 'internal scratch']
  %s0 = inlined_call_operand.vmem [shape: bf16[2,8,192], index: 0, kind: input, shape index: {}]
  %s1 = inlined_call_operand.vmem [shape: f32[2,1,192], index: 1, kind: input, shape index: {}]
  %s2 = inlined_call_operand.vmem [shape: f32[2,1,8], index: 2, kind: output, shape index: {}]
  %s3 = sld [smem:[#allocation0]]
  $region41: #{adcdnet_forward.14} parent=0
    _
  %s5 = ssub.s32 1, %s3
  %s6 = scalar_select 0, %s5, %s3
  loop: start=0, step=1, limit=4
  $region2: #{adcdnet_forward.14} parent=0 // loop_pre_header
    _
  $region3: #{adcdnet_forward.14} parent=0 // loop_header
    %s8 = sphi 0, %s12
    %p9 = scmp.ge.s32.totalorder %s8, 4
    %s15 = sphi 0, %s27
    %s16 = sphi 0, %s23
    %s17 = sphi 0, %s15
    %s18 = sphi 0, %s16
    %s19 = sphi 0, %s17
    %s20 = sphi 0, %s18
    %s32 = sphi 0, %s34
    %s35 = sphi 0, %s32
    %s36 = sphi 0, %s35
    %s52 = sphi 0, %s36
    %s58 = sphi 0, %s60
    %s61 = sphi 0, %s58
    %s62 = sphi 0, %s61
    %s78 = sphi 0, %s62
    %s86 = sphi 0, %s88
    %s89 = sphi 0, %s86
    %s90 = sphi 0, %s89
    %s106 = sphi 0, %s90
  $region4: #{adcdnet_forward.14} parent=0 // loop_header_branch
    %11 = sbr.rel (%p9) target = $region8
  $region5: #{adcdnet_forward.14} parent=0 // loop_body
    %s13 = ssub.s32 %s8, 1
    %s14 = ssub.s32 %s8, 2
    %s21 = sadd.s32 1, %s16
    %p22 = scmp.ge.s32.totalorder %s21, 1
    %s23 = scalar_select %p22, 0, %s21
    %s24 = sadd.s32 1, %s15
    %s25 = scalar_select %p22, %s24, %s15
    %p26 = scmp.ge.s32.totalorder %s25, 2
    %s27 = scalar_select %p26, 0, %s25
    %s28 = ssub.s32 %s15, %s27
    %s29 = ssub.s32 %s16, %s23
    %s30 = sor.u32 %s28, %s29
    %p31 = scmp.eq.s32.totalorder %s30, 0
    %s33 = sadd.s32 %s32, 1
    %s34 = scalar_select %p31, %s32, %s33
    %p37 = pneg %p31
    %p38 = scmp.eq.s32.totalorder %s8, 1
    %p39 = por %p37, %p38
    %p40 = scmp.ne.s32.totalorder %s32, %s35
    %p41 = scmp.eq.s32.totalorder %s8, 0
    %p42 = por %p40, %p41
    %p43 = scmp.ne.s32.totalorder %s32, %s35
    %p44 = scmp.eq.s32.totalorder %s13, 1
    %p45 = por %p43, %p44
    %p46 = scmp.ne.s32.totalorder %s35, %s36
    %p47 = scmp.eq.s32.totalorder %s13, 0
    %p48 = por %p46, %p47
    %p49 = scmp.ne.s32.totalorder %s35, %s36
    %p50 = scmp.eq.s32.totalorder %s14, 1
    %p51 = por %p49, %p50
    %p53 = scmp.ne.s32.totalorder %s36, %s52
    %p54 = scmp.eq.s32.totalorder %s14, 0
    %p55 = por %p53, %p54
    %s56 = ssub.s32 %s15, %s27
    %p57 = scmp.eq.s32.totalorder %s56, 0
    %s59 = sadd.s32 %s58, 1
    %s60 = scalar_select %p57, %s58, %s59
    %p63 = pneg %p57
    %p64 = scmp.eq.s32.totalorder %s8, 1
    %p65 = por %p63, %p64
    %p66 = scmp.ne.s32.totalorder %s58, %s61
    %p67 = scmp.eq.s32.totalorder %s8, 0
    %p68 = por %p66, %p67
    %p69 = scmp.ne.s32.totalorder %s58, %s61
    %p70 = scmp.eq.s32.totalorder %s13, 1
    %p71 = por %p69, %p70
    %p72 = scmp.ne.s32.totalorder %s61, %s62
    %p73 = scmp.eq.s32.totalorder %s13, 0
    %p74 = por %p72, %p73
    %p75 = scmp.ne.s32.totalorder %s61, %s62
    %p76 = scmp.eq.s32.totalorder %s14, 1
    %p77 = por %p75, %p76
    %p79 = scmp.ne.s32.totalorder %s62, %s78
    %p80 = scmp.eq.s32.totalorder %s14, 0
    %p81 = por %p79, %p80
    %s82 = ssub.s32 %s15, %s27
    %s83 = ssub.s32 %s16, %s23
    %s84 = sor.u32 %s82, %s83
    %p85 = scmp.eq.s32.totalorder %s84, 0
    %s87 = sadd.s32 %s86, 1
    %s88 = scalar_select %p85, %s86, %s87
    %p91 = pneg %p85
    %p92 = scmp.eq.s32.totalorder %s8, 1
    %p93 = por %p91, %p92
    %p94 = scmp.ne.s32.totalorder %s86, %s89
    %p95 = scmp.eq.s32.totalorder %s8, 0
    %p96 = por %p94, %p95
    %p97 = scmp.ne.s32.totalorder %s86, %s89
    %p98 = scmp.eq.s32.totalorder %s13, 1
    %p99 = por %p97, %p98
    %p100 = scmp.ne.s32.totalorder %s89, %s90
    %p101 = scmp.eq.s32.totalorder %s13, 0
    %p102 = por %p100, %p101
    %p103 = scmp.ne.s32.totalorder %s89, %s90
    %p104 = scmp.eq.s32.totalorder %s14, 1
    %p105 = por %p103, %p104
    %p107 = scmp.ne.s32.totalorder %s90, %s106
    %p108 = scmp.eq.s32.totalorder %s14, 0
    %p109 = por %p107, %p108
    %p110 = scmp.le.s32.totalorder 1, %s8
    %p111 = scmp.lt.s32.totalorder %s8, 3
    %p112 = pnand %p110, %p111
    %p113 = pneg %p112
    // Predicated region
    $region9: #{adcdnet_forward.14} parent=5 // pred_check
      _
    $region10: #{adcdnet_forward.14} parent=5 // pred_check_branch
      %115 = sbr.rel (%p112) target = $region12
    $region11: #{adcdnet_forward.14} parent=5 // pred_region
      %s116 = ssub.s32 %s8, 1
    $region12: #{adcdnet_forward.14} parent=5 // pred_fallthru
      _
    %p117 = scmp.lt.s32.totalorder %s8, 2
    // Predicated region
    $region13: #{adcdnet_forward.14} parent=5 // pred_check
      %p118 = pneg %p117
    $region14: #{adcdnet_forward.14} parent=5 // pred_check_branch
      %120 = sbr.rel (%p118) target = $region16
    $region15: #{adcdnet_forward.14} parent=5 // pred_region
      // Predicated region
      $region17: #{adcdnet_forward.14} parent=15 // pred_check
        %p121 = pneg %p42
      $region18: #{adcdnet_forward.14} parent=15 // pred_check_branch
        %123 = sbr.rel (%p121) target = $region20
      $region19: #{adcdnet_forward.14} parent=15 // pred_region
        %p124 = scmp.lt.s32.totalorder %s15, 1
        %s125 = scalar_select %p124, %s15, 1
        %p126 = scmp.lt.s32.totalorder %s16, 0
        %s127 = scalar_select %p126, %s16, 0
        %s128 = smul.addr %s127, 2
        %s129 = smul.addr %s125, 2
        %s130 = sadd.s32 %s128, %s129
        %s131 = smul.addr %s130, 4
        %s132 = scalar_lea.vmem %s0, %s131
      $region20: #{adcdnet_forward.14} parent=15 // pred_fallthru
        _
      // Predicated region
      $region21: #{adcdnet_forward.14} parent=15 // pred_check
        %p133 = pneg %p68
      $region22: #{adcdnet_forward.14} parent=15 // pred_check_branch
        %135 = sbr.rel (%p133) target = $region24
      $region23: #{adcdnet_forward.14} parent=15 // pred_region
        %p136 = scmp.lt.s32.totalorder %s15, 1
        %s137 = scalar_select %p136, %s15, 1
        %s138 = smul.addr %s137, 2
        %s139 = scalar_lea.vmem %s1, %s138
      $region24: #{adcdnet_forward.14} parent=15 // pred_fallthru
        _
    $region16: #{adcdnet_forward.14} parent=5 // pred_fallthru
      _
    %p140 = scmp.le.s32.totalorder 1, %s8
    %p141 = scmp.lt.s32.totalorder %s8, 3
    %p142 = pnand %p140, %p141
    %p143 = pneg %p142
    // Predicated region
    $region25: #{adcdnet_forward.14} parent=5 // pred_check
      _
    $region26: #{adcdnet_forward.14} parent=5 // pred_check_branch
      %145 = sbr.rel (%p142) target = $region28
    $region27: #{adcdnet_forward.14} parent=5 // pred_region
      %s146 = ssub.s32 %s8, 1
      %p147 = scmp.lt.s32.totalorder %s17, 1
      %s148 = scalar_select %p147, %s17, 1
      %p149 = scmp.lt.s32.totalorder %s18, 0
      %s150 = scalar_select %p149, %s18, 0
      %s151 = smul.addr %s150, 2
      %s152 = smul.addr %s148, 2
      %s153 = sadd.s32 %s151, %s152
      %s154 = smul.addr %s153, 4
      %s155 = scalar_lea.vmem %s0, %s154
      %p156 = pneg %p48
      %p157 = pneg %p45
      %p158 = scmp.lt.s32.totalorder %s17, 1
      %s159 = scalar_select %p158, %s17, 1
      %s160 = smul.addr %s159, 2
      %s161 = scalar_lea.vmem %s1, %s160
      %p162 = pneg %p74
      %p163 = pneg %p71
      %p164 = pneg %p102
      %p165 = pneg %p99
      %p166 = scmp.lt.s32.totalorder %s17, 1
      %s167 = scalar_select %p166, %s17, 1
      %p168 = scmp.lt.s32.totalorder %s18, 0
      %s169 = scalar_select %p168, %s18, 0
      %s170 = sadd.s32 %s169, %s167
      %s171 = scalar_lea.vmem %s2, %s170
      %p172 = scmp.lt.s32.totalorder %s17, 1
      %s173 = scalar_select %p172, %s17, 1
      %p174 = scmp.lt.s32.totalorder %s18, 0
      %s175 = scalar_select %p174, %s18, 0
      %s176 = smul.addr %s175, 2
      %s177 = smul.addr %s173, 2
      %s178 = sadd.s32 %s176, %s177
      %s179 = smul.addr %s178, 4
      %s180 = scalar_lea.vmem %s0, %s179
      %p181 = scmp.lt.s32.totalorder %s17, 1
      %s182 = scalar_select %p181, %s17, 1
      %s183 = smul.addr %s182, 2
      %s184 = scalar_lea.vmem %s1, %s183
      %p185 = scmp.lt.s32.totalorder %s17, 1
      %s186 = scalar_select %p185, %s17, 1
      %p187 = scmp.lt.s32.totalorder %s18, 0
      %s188 = scalar_select %p187, %s18, 0
      %s189 = sadd.s32 %s188, %s186
      %s190 = scalar_lea.vmem %s2, %s189
      %v191 = vld [vmem:[%s180] sm:$0xff]
      %v192 = vunpack.c.l.bf16 %v191
      %v193 = vunpack.c.h.bf16 %v191
      %v194 = vld [vmem:[%s184] sm:$0x3]
      %v195 = vmul.f32 %v192, %v192
      %v196 = vmul.f32 %v193, %v193
      %vm197 = vcmask 523264
      %v199 = vsel %vm197, 1.0, 0
      %v202 = vsel %vm197, %v196, 0
      %204 = vmatpush.xpose.msra.mxu0 0.0
      %205 = vmatpush.xpose.msra.mxu0 0.0
      %206 = vmatpush.xpose.msra.mxu0 0.0
      %207 = vmatpush.xpose.msra.mxu0 0.0
      %208 = vmatpush.xpose.msra.mxu0 0.0
      %209 = vmatpush.xpose.msra.mxu0 0.0
      %210 = vmatpush.xpose.msra.mxu0 0.0
      %211 = vmatpush.xpose.msra.mxu0 0.0
      %212 = vmatpush.xpose.msra.mxu0 0.0
      %213 = vmatpush.xpose.msra.mxu0 0.0
      %214 = vmatpush.xpose.msra.mxu0 0.0
      %215 = vmatpush.xpose.msra.mxu0 0.0
      %216 = vmatpush.xpose.msra.mxu0 0.0
      %217 = vmatpush.xpose.msra.mxu0 0.0
      %218 = vmatpush.xpose.msra.mxu0 0.0
      %219 = vmatpush.xpose.msra.mxu0 %v195
      %220 = vmatmul.f32.gmra.mxu0 1.0
      %v221 = vpop.f32.mrf.mxu0
      %v222 = vadd.f32 0.0, %v221
      %223 = vdwg.mxu0
      %224 = vmatpush.xpose.msra.mxu0 0.0
      %225 = vmatpush.xpose.msra.mxu0 0.0
      %226 = vmatpush.xpose.msra.mxu0 0.0
      %227 = vmatpush.xpose.msra.mxu0 0.0
      %228 = vmatpush.xpose.msra.mxu0 0.0
      %229 = vmatpush.xpose.msra.mxu0 0.0
      %230 = vmatpush.xpose.msra.mxu0 0.0
      %231 = vmatpush.xpose.msra.mxu0 0.0
      %232 = vmatpush.xpose.msra.mxu0 0.0
      %233 = vmatpush.xpose.msra.mxu0 0.0
      %234 = vmatpush.xpose.msra.mxu0 0.0
      %235 = vmatpush.xpose.msra.mxu0 0.0
      %236 = vmatpush.xpose.msra.mxu0 0.0
      %237 = vmatpush.xpose.msra.mxu0 0.0
      %238 = vmatpush.xpose.msra.mxu0 0.0
      %239 = vmatpush.xpose.msra.mxu0 %v202
      %240 = vmatmul.f32.gmra.mxu0 %v199
      %v241 = vpop.f32.mrf.mxu0
      %v242 = vadd.f32 %v222, %v241
      %243 = vdwg.mxu0
      %v245 = vperm.slane %v194, 0
      %v246 = vperm.slane %v194, 1
      %v248 = vsel %vm197, %v246, 0
      %v251 = vsel %vm197, %v193, 0
      %253 = vmatpush.xpose.msra.mxu0 0.0
      %254 = vmatpush.xpose.msra.mxu0 0.0
      %255 = vmatpush.xpose.msra.mxu0 0.0
      %256 = vmatpush.xpose.msra.mxu0 0.0
      %257 = vmatpush.xpose.msra.mxu0 0.0
      %258 = vmatpush.xpose.msra.mxu0 0.0
      %259 = vmatpush.xpose.msra.mxu0 0.0
      %260 = vmatpush.xpose.msra.mxu0 0.0
      %261 = vmatpush.xpose.msra.mxu0 0.0
      %262 = vmatpush.xpose.msra.mxu0 0.0
      %263 = vmatpush.xpose.msra.mxu0 0.0
      %264 = vmatpush.xpose.msra.mxu0 0.0
      %265 = vmatpush.xpose.msra.mxu0 0.0
      %266 = vmatpush.xpose.msra.mxu0 0.0
      %267 = vmatpush.xpose.msra.mxu0 0.0
      %268 = vmatpush.xpose.msra.mxu0 %v192
      %269 = vmatmul.f32.gmra.mxu0 %v245
      %v270 = vpop.f32.mrf.mxu0
      %v271 = vadd.f32 0.0, %v270
      %272 = vdwg.mxu0
      %273 = vmatpush.xpose.msra.mxu0 0.0
      %274 = vmatpush.xpose.msra.mxu0 0.0
      %275 = vmatpush.xpose.msra.mxu0 0.0
      %276 = vmatpush.xpose.msra.mxu0 0.0
      %277 = vmatpush.xpose.msra.mxu0 0.0
      %278 = vmatpush.xpose.msra.mxu0 0.0
      %279 = vmatpush.xpose.msra.mxu0 0.0
      %280 = vmatpush.xpose.msra.mxu0 0.0
      %281 = vmatpush.xpose.msra.mxu0 0.0
      %282 = vmatpush.xpose.msra.mxu0 0.0
      %283 = vmatpush.xpose.msra.mxu0 0.0
      %284 = vmatpush.xpose.msra.mxu0 0.0
      %285 = vmatpush.xpose.msra.mxu0 0.0
      %286 = vmatpush.xpose.msra.mxu0 0.0
      %287 = vmatpush.xpose.msra.mxu0 0.0
      %288 = vmatpush.xpose.msra.mxu0 %v251
      %289 = vmatmul.f32.gmra.mxu0 %v248
      %v290 = vpop.f32.mrf.mxu0
      %v291 = vadd.f32 %v271, %v290
      %292 = vdwg.mxu0
      %v293 = vmax.f32 %v242, 1e-24
      %v294 = vrsqrt.pop %v293
      %v295 = vmul.f32 %v294, %v293
      %v296 = vmul.f32 %v295, %v294
      %v297 = vmul.f32 0.5, %v296
      %v298 = vsub.f32 1.5, %v297
      %v299 = vmul.f32 %v294, %v298
      %vm300 = vweird.f32 %v293
      %vm301 = vweird.f32 %v294
      %vm302 = vmor %vm300, %vm301
      %v303 = vsel %vm302, %v294, %v299
      %v304 = vmul.f32 %v291, %v303
      %vm305 = vcmask 57344
      %306 = vst.msk [vmem:[%s190] sm:$0x1] %vm305, %v304
      %p307 = scmp.lt.s32.totalorder %s17, 1
      %s308 = scalar_select %p307, %s17, 1
      %p309 = scmp.lt.s32.totalorder %s18, 0
      %s310 = scalar_select %p309, %s18, 0
      %s311 = sadd.s32 %s310, %s308
      %s312 = scalar_lea.vmem %s2, %s311
      // Predicated region
      $region29: #{adcdnet_forward.14} parent=27 // pred_check
        %p313 = pneg %p99
      $region30: #{adcdnet_forward.14} parent=27 // pred_check_branch
        %315 = sbr.rel (%p313) target = $region32
      $region31: #{adcdnet_forward.14} parent=27 // pred_region
        _
      $region32: #{adcdnet_forward.14} parent=27 // pred_fallthru
        _
    $region28: #{adcdnet_forward.14} parent=5 // pred_fallthru
      _
    %p316 = scmp.le.s32.totalorder 2, %s8
    // Predicated region
    $region33: #{adcdnet_forward.14} parent=5 // pred_check
      %p317 = pneg %p316
    $region34: #{adcdnet_forward.14} parent=5 // pred_check_branch
      %319 = sbr.rel (%p317) target = $region36
    $region35: #{adcdnet_forward.14} parent=5 // pred_region
      %s320 = ssub.s32 %s8, 2
      // Predicated region
      $region37: #{adcdnet_forward.14} parent=35 // pred_check
        %p321 = pneg %p105
      $region38: #{adcdnet_forward.14} parent=35 // pred_check_branch
        %323 = sbr.rel (%p321) target = $region40
      $region39: #{adcdnet_forward.14} parent=35 // pred_region
        %p324 = scmp.lt.s32.totalorder %s19, 1
        %s325 = scalar_select %p324, %s19, 1
        %p326 = scmp.lt.s32.totalorder %s20, 0
        %s327 = scalar_select %p326, %s20, 0
        %s328 = sadd.s32 %s327, %s325
        %s329 = scalar_lea.vmem %s2, %s328
      $region40: #{adcdnet_forward.14} parent=35 // pred_fallthru
        _
    $region36: #{adcdnet_forward.14} parent=5 // pred_fallthru
      _
  $region6: #{adcdnet_forward.14} parent=0 // loop_footer
    %s12 = sadd.s32 1, %s8
  $region7: #{adcdnet_forward.14} parent=0 // loop_footer_branch
    %7 = sbr.rel target = $region3
  $region8: #{adcdnet_forward.14} parent=0 // loop_exit
    _

// kernel: adcdnet_forward.23
$region0: #{adcdnet_forward.23}
  #allocation0 [shape = 'u32[]', space=smem, size = 0x4, offset = 0x4, fixed_abs, tag = 'smem constant byte address 0x4 - core index']
  #allocation1 [shape = 'u32[72,128]{1,0:T(1,128)}', space=vmem, size = 0x9000, scoped, tag = 'internal scratch']
  %s0 = inlined_call_operand.vmem [shape: bf16[32,96], index: 0, kind: input, shape index: {}]
  %s1 = inlined_call_operand.vmem [shape: f32[96,48], index: 1, kind: input, shape index: {}]
  %s2 = inlined_call_operand.vmem [shape: f32[1,48], index: 2, kind: input, shape index: {}]
  %s3 = inlined_call_operand.vmem [shape: f32[32,48], index: 3, kind: input, shape index: {}]
  %s4 = inlined_call_operand.vmem [shape: f32[32,1], index: 4, kind: input, shape index: {}]
  %s5 = inlined_call_operand.vmem [shape: bf16[32,32], index: 5, kind: output, shape index: {}]
  %s6 = sld [smem:[#allocation0]]
  $region30: #{adcdnet_forward.23} parent=0
    _
  %s8 = ssub.s32 1, %s6
  %s9 = scalar_select 0, %s8, %s6
  // Predicated region
  $region2: #{adcdnet_forward.23} parent=0 // pred_check
    _
  $region3: #{adcdnet_forward.23} parent=0 // pred_check_branch
    %11 = sbr.rel (0) target = $region5
  $region4: #{adcdnet_forward.23} parent=0 // pred_region
    _
  $region5: #{adcdnet_forward.23} parent=0 // pred_fallthru
    _
  // Predicated region
  $region6: #{adcdnet_forward.23} parent=0 // pred_check
    _
  $region7: #{adcdnet_forward.23} parent=0 // pred_check_branch
    %13 = sbr.rel (0) target = $region9
  $region8: #{adcdnet_forward.23} parent=0 // pred_region
    _
  $region9: #{adcdnet_forward.23} parent=0 // pred_fallthru
    _
  // Predicated region
  $region10: #{adcdnet_forward.23} parent=0 // pred_check
    _
  $region11: #{adcdnet_forward.23} parent=0 // pred_check_branch
    %15 = sbr.rel (0) target = $region13
  $region12: #{adcdnet_forward.23} parent=0 // pred_region
    _
  $region13: #{adcdnet_forward.23} parent=0 // pred_fallthru
    _
  // Predicated region
  $region14: #{adcdnet_forward.23} parent=0 // pred_check
    _
  $region15: #{adcdnet_forward.23} parent=0 // pred_check_branch
    %17 = sbr.rel (0) target = $region17
  $region16: #{adcdnet_forward.23} parent=0 // pred_region
    _
  $region17: #{adcdnet_forward.23} parent=0 // pred_fallthru
    _
  // Predicated region
  $region18: #{adcdnet_forward.23} parent=0 // pred_check
    _
  $region19: #{adcdnet_forward.23} parent=0 // pred_check_branch
    %19 = sbr.rel (0) target = $region21
  $region20: #{adcdnet_forward.23} parent=0 // pred_region
    _
  $region21: #{adcdnet_forward.23} parent=0 // pred_fallthru
    _
  %v20 = vld [vmem:[%s0] sm:$0xf]
  %v21 = vld [vmem:[%s0 + $0x4] sm:$0xf]
  %v22 = vld [vmem:[%s0 + $0x8] sm:$0xf]
  %v23 = vld [vmem:[%s0 + $0xc] sm:$0xf]
  %v24 = vunpack.c.l.bf16 %v20
  %v25 = vunpack.c.l.bf16 %v21
  %v26 = vunpack.c.l.bf16 %v22
  %v27 = vunpack.c.l.bf16 %v23
  %v28 = vld [vmem:[%s1] sm:$0xff]
  %v29 = vld [vmem:[%s1 + $0x8] sm:$0xff]
  %v30 = vld [vmem:[%s1 + $0x10] sm:$0xff]
  %v31 = vld [vmem:[%s1 + $0x18] sm:$0xff]
  %v32 = vld [vmem:[%s1 + $0x20] sm:$0xff]
  %v33 = vld [vmem:[%s1 + $0x28] sm:$0xff]
  %v34 = vld [vmem:[%s1 + $0x30] sm:$0xff]
  %v35 = vld [vmem:[%s1 + $0x38] sm:$0xff]
  %v36 = vld [vmem:[%s1 + $0x40] sm:$0xff]
  %v37 = vld [vmem:[%s1 + $0x48] sm:$0xff]
  %v38 = vld [vmem:[%s1 + $0x50] sm:$0xff]
  %v39 = vld [vmem:[%s1 + $0x58] sm:$0xff]
  %v40 = vld [vmem:[%s2] sm:$0x1]
  %v42 = vperm.slane %v40, 0
  %vm44 = vcmask 785408
  %v46 = vsel %vm44, %v24, 0
  %v49 = vsel %vm44, %v25, 0
  %v52 = vsel %vm44, %v26, 0
  %v55 = vsel %vm44, %v27, 0
  %57 = vmatpush.msra.mxu0 0.0
  %58 = vmatpush.msra.mxu0 0.0
  %59 = vmatpush.msra.mxu0 0.0
  %60 = vmatpush.msra.mxu0 0.0
  %61 = vmatpush.msra.mxu0 %v39
  %62 = vmatpush.msra.mxu0 %v38
  %63 = vmatpush.msra.mxu0 %v37
  %64 = vmatpush.msra.mxu0 %v36
  %65 = vmatpush.msra.mxu0 %v35
  %66 = vmatpush.msra.mxu0 %v34
  %67 = vmatpush.msra.mxu0 %v33
  %68 = vmatpush.msra.mxu0 %v32
  %69 = vmatpush.msra.mxu0 %v31
  %70 = vmatpush.msra.mxu0 %v30
  %71 = vmatpush.msra.mxu0 %v29
  %72 = vmatpush.msra.mxu0 %v28
  %73 = vmatmul.f32.gmra.mxu0 %v46
  %v74 = vpop.f32.mrf.mxu0
  %v75 = vadd.f32 %v42, %v74
  %76 = vmatmul.f32.gmra.mxu0 %v49
  %v77 = vpop.f32.mrf.mxu0
  %v78 = vadd.f32 %v42, %v77
  %79 = vmatmul.f32.gmra.mxu0 %v52
  %v80 = vpop.f32.mrf.mxu0
  %v81 = vadd.f32 %v42, %v80
  %82 = vmatmul.f32.gmra.mxu0 %v55
  %v83 = vpop.f32.mrf.mxu0
  %v84 = vadd.f32 %v42, %v83
  %85 = vdwg.mxu0
  %v86 = vmul.f32 %v75, 0.5
  %v87 = vmul.f32 %v78, 0.5
  %v88 = vmul.f32 %v81, 0.5
  %v89 = vmul.f32 %v84, 0.5
  %v90 = vmul.f32 %v75, 0.044715
  %v91 = vmul.f32 %v78, 0.044715
  %v92 = vmul.f32 %v81, 0.044715
  %v93 = vmul.f32 %v84, 0.044715
  %v94 = vmul.f32 %v90, %v75
  %v95 = vmul.f32 %v91, %v78
  %v96 = vmul.f32 %v92, %v81
  %v97 = vmul.f32 %v93, %v84
  %v98 = vmul.f32 %v94, %v75
  %v99 = vmul.f32 %v95, %v78
  %v100 = vmul.f32 %v96, %v81
  %v101 = vmul.f32 %v97, %v84
  %v102 = vadd.f32 %v75, %v98
  %v103 = vadd.f32 %v78, %v99
  %v104 = vadd.f32 %v81, %v100
  %v105 = vadd.f32 %v84, %v101
  %v106 = vmul.f32 %v102, 0.7978846
  %v107 = vmul.f32 %v103, 0.7978846
  %v108 = vmul.f32 %v104, 0.7978846
  %v109 = vmul.f32 %v105, 0.7978846
  %v110 = vtanh.pop %v106
  %v111 = vtanh.pop %v107
  %v112 = vtanh.pop %v108
  %v113 = vtanh.pop %v109
  %v114 = vadd.f32 %v110, 1.0
  %v115 = vadd.f32 %v111, 1.0
  %v116 = vadd.f32 %v112, 1.0
  %v117 = vadd.f32 %v113, 1.0
  %v118 = vmul.f32 %v86, %v114
  %v119 = vmul.f32 %v87, %v115
  %v120 = vmul.f32 %v88, %v116
  %v121 = vmul.f32 %v89, %v117
  %v122 = vld [vmem:[%s3] sm:$0xff]
  %v123 = vld [vmem:[%s3 + $0x8] sm:$0xff]
  %v124 = vld [vmem:[%s3 + $0x10] sm:$0xff]
  %v125 = vld [vmem:[%s3 + $0x18] sm:$0xff]
  %v126 = vld [vmem:[%s4] sm:$0xff]
  %v127 = vld [vmem:[%s4 + $0x8] sm:$0xff]
  %v128 = vld [vmem:[%s4 + $0x10] sm:$0xff]
  %v129 = vld [vmem:[%s4 + $0x18] sm:$0xff]
  %131 = vset.pattern.permute.xlu0 0
  %132 = vperm.xlu0 %131, %v126
  %v133 = vpop.permute.xlu0 %132
  %136 = vset.pattern.permute.xlu0 0
  %137 = vperm.xlu0 %136, %v127
  %v138 = vpop.permute.xlu0 %137
  %141 = vset.pattern.permute.xlu0 0
  %142 = vperm.xlu0 %141, %v128
  %v143 = vpop.permute.xlu0 %142
  %146 = vset.pattern.permute.xlu0 0
  %147 = vperm.xlu0 %146, %v129
  %v148 = vpop.permute.xlu0 %147
  %vm150 = vcmask 392192
  %v152 = vsel %vm150, %v122, 0
  %v155 = vsel %vm150, %v123, 0
  %v158 = vsel %vm150, %v124, 0
  %v161 = vsel %vm150, %v125, 0
  %v164 = vsel %vm150, %v118, 0
  %v167 = vsel %vm150, %v119, 0
  %v170 = vsel %vm150, %v120, 0
  %v173 = vsel %vm150, %v121, 0
  %175 = vmatpush.xpose.msra.mxu0 0.0
  %176 = vmatpush.xpose.msra.mxu0 0.0
  %177 = vmatpush.xpose.msra.mxu0 0.0
  %178 = vmatpush.xpose.msra.mxu0 0.0
  %179 = vmatpush.xpose.msra.mxu0 0.0
  %180 = vmatpush.xpose.msra.mxu0 0.0
  %181 = vmatpush.xpose.msra.mxu0 0.0
  %182 = vmatpush.xpose.msra.mxu0 0.0
  %183 = vmatpush.xpose.msra.mxu0 0.0
  %184 = vmatpush.xpose.msra.mxu0 0.0
  %185 = vmatpush.xpose.msra.mxu0 0.0
  %186 = vmatpush.xpose.msra.mxu0 0.0
  %187 = vmatpush.xpose.msra.mxu0 %v173
  %188 = vmatpush.xpose.msra.mxu0 %v170
  %189 = vmatpush.xpose.msra.mxu0 %v167
  %190 = vmatpush.xpose.msra.mxu0 %v164
  %191 = vmatmul.f32.gmra.mxu0 %v152
  %v192 = vpop.f32.mrf.mxu0
  %v193 = vadd.f32 %v133, %v192
  %194 = vmatmul.f32.gmra.mxu0 %v155
  %v195 = vpop.f32.mrf.mxu0
  %v196 = vadd.f32 %v138, %v195
  %197 = vmatmul.f32.gmra.mxu0 %v158
  %v198 = vpop.f32.mrf.mxu0
  %v199 = vadd.f32 %v143, %v198
  %200 = vmatmul.f32.gmra.mxu0 %v161
  %v201 = vpop.f32.mrf.mxu0
  %v202 = vadd.f32 %v148, %v201
  %203 = vdwg.mxu0
  %v204 = vpack.c.bf16 %v193, %v193
  %v205 = vpack.c.bf16 %v196, %v196
  %v206 = vpack.c.bf16 %v199, %v199
  %v207 = vpack.c.bf16 %v202, %v202
  %vm208 = vcmask 257024
  %209 = vst.msk [vmem:[%s5] sm:$0xf] %vm208, %v204
  %210 = vst.msk [vmem:[%s5 + $0x4] sm:$0xf] %vm208, %v205
  %211 = vst.msk [vmem:[%s5 + $0x8] sm:$0xf] %vm208, %v206
  %212 = vst.msk [vmem:[%s5 + $0xc] sm:$0xf] %vm208, %v207
  // Predicated region
  $region22: #{adcdnet_forward.23} parent=0 // pred_check
    _
  $region23: #{adcdnet_forward.23} parent=0 // pred_check_branch
    %214 = sbr.rel (0) target = $region25
  $region24: #{adcdnet_forward.23} parent=0 // pred_region
    _
  $region25: #{adcdnet_forward.23} parent=0 // pred_fallthru
    _
  // Predicated region
  $region26: #{adcdnet_forward.23} parent=0 // pred_check
    _
  $region27: #{adcdnet_forward.23} parent=0 // pred_check_branch
    %216 = sbr.rel (0) target = $region29
  $region28: #{adcdnet_forward.23} parent=0 // pred_region
    _
  $region29: #{adcdnet_forward.23} parent=0 // pred_fallthru
    _

// kernel: adcdnet_forward.16
$region0: #{adcdnet_forward.16}
  #allocation0 [shape = 'u32[]', space=smem, size = 0x4, offset = 0x4, fixed_abs, tag = 'smem constant byte address 0x4 - core index']
  #allocation1 [shape = 'u32[72,128]{1,0:T(1,128)}', space=vmem, size = 0x9000, scoped, tag = 'internal scratch']
  %s0 = inlined_call_operand.vmem [shape: bf16[2,16,96], index: 0, kind: input, shape index: {}]
  %s1 = inlined_call_operand.vmem [shape: f32[2,1,96], index: 1, kind: input, shape index: {}]
  %s2 = inlined_call_operand.vmem [shape: f32[2,1,16], index: 2, kind: output, shape index: {}]
  %s3 = sld [smem:[#allocation0]]
  $region41: #{adcdnet_forward.16} parent=0
    _
  %s5 = ssub.s32 1, %s3
  %s6 = scalar_select 0, %s5, %s3
  loop: start=0, step=1, limit=4
  $region2: #{adcdnet_forward.16} parent=0 // loop_pre_header
    _
  $region3: #{adcdnet_forward.16} parent=0 // loop_header
    %s8 = sphi 0, %s12
    %p9 = scmp.ge.s32.totalorder %s8, 4
    %s15 = sphi 0, %s27
    %s16 = sphi 0, %s23
    %s17 = sphi 0, %s15
    %s18 = sphi 0, %s16
    %s19 = sphi 0, %s17
    %s20 = sphi 0, %s18
    %s32 = sphi 0, %s34
    %s35 = sphi 0, %s32
    %s36 = sphi 0, %s35
    %s52 = sphi 0, %s36
    %s58 = sphi 0, %s60
    %s61 = sphi 0, %s58
    %s62 = sphi 0, %s61
    %s78 = sphi 0, %s62
    %s86 = sphi 0, %s88
    %s89 = sphi 0, %s86
    %s90 = sphi 0, %s89
    %s106 = sphi 0, %s90
  $region4: #{adcdnet_forward.16} parent=0 // loop_header_branch
    %11 = sbr.rel (%p9) target = $region8
  $region5: #{adcdnet_forward.16} parent=0 // loop_body
    %s13 = ssub.s32 %s8, 1
    %s14 = ssub.s32 %s8, 2
    %s21 = sadd.s32 1, %s16
    %p22 = scmp.ge.s32.totalorder %s21, 1
    %s23 = scalar_select %p22, 0, %s21
    %s24 = sadd.s32 1, %s15
    %s25 = scalar_select %p22, %s24, %s15
    %p26 = scmp.ge.s32.totalorder %s25, 2
    %s27 = scalar_select %p26, 0, %s25
    %s28 = ssub.s32 %s15, %s27
    %s29 = ssub.s32 %s16, %s23
    %s30 = sor.u32 %s28, %s29
    %p31 = scmp.eq.s32.totalorder %s30, 0
    %s33 = sadd.s32 %s32, 1
    %s34 = scalar_select %p31, %s32, %s33
    %p37 = pneg %p31
    %p38 = scmp.eq.s32.totalorder %s8, 1
    %p39 = por %p37, %p38
    %p40 = scmp.ne.s32.totalorder %s32, %s35
    %p41 = scmp.eq.s32.totalorder %s8, 0
    %p42 = por %p40, %p41
    %p43 = scmp.ne.s32.totalorder %s32, %s35
    %p44 = scmp.eq.s32.totalorder %s13, 1
    %p45 = por %p43, %p44
    %p46 = scmp.ne.s32.totalorder %s35, %s36
    %p47 = scmp.eq.s32.totalorder %s13, 0
    %p48 = por %p46, %p47
    %p49 = scmp.ne.s32.totalorder %s35, %s36
    %p50 = scmp.eq.s32.totalorder %s14, 1
    %p51 = por %p49, %p50
    %p53 = scmp.ne.s32.totalorder %s36, %s52
    %p54 = scmp.eq.s32.totalorder %s14, 0
    %p55 = por %p53, %p54
    %s56 = ssub.s32 %s15, %s27
    %p57 = scmp.eq.s32.totalorder %s56, 0
    %s59 = sadd.s32 %s58, 1
    %s60 = scalar_select %p57, %s58, %s59
    %p63 = pneg %p57
    %p64 = scmp.eq.s32.totalorder %s8, 1
    %p65 = por %p63, %p64
    %p66 = scmp.ne.s32.totalorder %s58, %s61
    %p67 = scmp.eq.s32.totalorder %s8, 0
    %p68 = por %p66, %p67
    %p69 = scmp.ne.s32.totalorder %s58, %s61
    %p70 = scmp.eq.s32.totalorder %s13, 1
    %p71 = por %p69, %p70
    %p72 = scmp.ne.s32.totalorder %s61, %s62
    %p73 = scmp.eq.s32.totalorder %s13, 0
    %p74 = por %p72, %p73
    %p75 = scmp.ne.s32.totalorder %s61, %s62
    %p76 = scmp.eq.s32.totalorder %s14, 1
    %p77 = por %p75, %p76
    %p79 = scmp.ne.s32.totalorder %s62, %s78
    %p80 = scmp.eq.s32.totalorder %s14, 0
    %p81 = por %p79, %p80
    %s82 = ssub.s32 %s15, %s27
    %s83 = ssub.s32 %s16, %s23
    %s84 = sor.u32 %s82, %s83
    %p85 = scmp.eq.s32.totalorder %s84, 0
    %s87 = sadd.s32 %s86, 1
    %s88 = scalar_select %p85, %s86, %s87
    %p91 = pneg %p85
    %p92 = scmp.eq.s32.totalorder %s8, 1
    %p93 = por %p91, %p92
    %p94 = scmp.ne.s32.totalorder %s86, %s89
    %p95 = scmp.eq.s32.totalorder %s8, 0
    %p96 = por %p94, %p95
    %p97 = scmp.ne.s32.totalorder %s86, %s89
    %p98 = scmp.eq.s32.totalorder %s13, 1
    %p99 = por %p97, %p98
    %p100 = scmp.ne.s32.totalorder %s89, %s90
    %p101 = scmp.eq.s32.totalorder %s13, 0
    %p102 = por %p100, %p101
    %p103 = scmp.ne.s32.totalorder %s89, %s90
    %p104 = scmp.eq.s32.totalorder %s14, 1
    %p105 = por %p103, %p104
    %p107 = scmp.ne.s32.totalorder %s90, %s106
    %p108 = scmp.eq.s32.totalorder %s14, 0
    %p109 = por %p107, %p108
    %p110 = scmp.le.s32.totalorder 1, %s8
    %p111 = scmp.lt.s32.totalorder %s8, 3
    %p112 = pnand %p110, %p111
    %p113 = pneg %p112
    // Predicated region
    $region9: #{adcdnet_forward.16} parent=5 // pred_check
      _
    $region10: #{adcdnet_forward.16} parent=5 // pred_check_branch
      %115 = sbr.rel (%p112) target = $region12
    $region11: #{adcdnet_forward.16} parent=5 // pred_region
      %s116 = ssub.s32 %s8, 1
    $region12: #{adcdnet_forward.16} parent=5 // pred_fallthru
      _
    %p117 = scmp.lt.s32.totalorder %s8, 2
    // Predicated region
    $region13: #{adcdnet_forward.16} parent=5 // pred_check
      %p118 = pneg %p117
    $region14: #{adcdnet_forward.16} parent=5 // pred_check_branch
      %120 = sbr.rel (%p118) target = $region16
    $region15: #{adcdnet_forward.16} parent=5 // pred_region
      // Predicated region
      $region17: #{adcdnet_forward.16} parent=15 // pred_check
        %p121 = pneg %p42
      $region18: #{adcdnet_forward.16} parent=15 // pred_check_branch
        %123 = sbr.rel (%p121) target = $region20
      $region19: #{adcdnet_forward.16} parent=15 // pred_region
        %s124 = smul.u32 2, %s16
        %p125 = scmp.lt.s32.totalorder %s15, 1
        %s126 = scalar_select %p125, %s15, 1
        %p127 = scmp.lt.s32.totalorder %s124, 1
        %s128 = scalar_select %p127, %s124, 1
        %s129 = smul.addr %s126, 2
        %s130 = sadd.s32 %s128, %s129
        %s131 = smul.addr %s130, 4
        %s132 = scalar_lea.vmem %s0, %s131
        %s133 = smul.u32 2, %s16
      $region20: #{adcdnet_forward.16} parent=15 // pred_fallthru
        _
      // Predicated region
      $region21: #{adcdnet_forward.16} parent=15 // pred_check
        %p134 = pneg %p68
      $region22: #{adcdnet_forward.16} parent=15 // pred_check_branch
        %136 = sbr.rel (%p134) target = $region24
      $region23: #{adcdnet_forward.16} parent=15 // pred_region
        %p137 = scmp.lt.s32.totalorder %s15, 1
        %s138 = scalar_select %p137, %s15, 1
        %s139 = scalar_lea.vmem %s1, %s138
      $region24: #{adcdnet_forward.16} parent=15 // pred_fallthru
        _
    $region16: #{adcdnet_forward.16} parent=5 // pred_fallthru
      _
    %p140 = scmp.le.s32.totalorder 1, %s8
    %p141 = scmp.lt.s32.totalorder %s8, 3
    %p142 = pnand %p140, %p141
    %p143 = pneg %p142
    // Predicated region
    $region25: #{adcdnet_forward.16} parent=5 // pred_check
      _
    $region26: #{adcdnet_forward.16} parent=5 // pred_check_branch
      %145 = sbr.rel (%p142) target = $region28
    $region27: #{adcdnet_forward.16} parent=5 // pred_region
      %s146 = ssub.s32 %s8, 1
      %s147 = smul.u32 2, %s18
      %p148 = scmp.lt.s32.totalorder %s17, 1
      %s149 = scalar_select %p148, %s17, 1
      %p150 = scmp.lt.s32.totalorder %s147, 1
      %s151 = scalar_select %p150, %s147, 1
      %s152 = smul.addr %s149, 2
      %s153 = sadd.s32 %s151, %s152
      %s154 = smul.addr %s153, 4
      %s155 = scalar_lea.vmem %s0, %s154
      %p156 = pneg %p48
      %p157 = pneg %p45
      %p158 = scmp.lt.s32.totalorder %s17, 1
      %s159 = scalar_select %p158, %s17, 1
      %s160 = scalar_lea.vmem %s1, %s159
      %p161 = pneg %p74
      %p162 = pneg %p71
      %p163 = pneg %p102
      %p164 = pneg %p99
      %p165 = scmp.lt.s32.totalorder %s17, 1
      %s166 = scalar_select %p165, %s17, 1
      %p167 = scmp.lt.s32.totalorder %s18, 0
      %s168 = scalar_select %p167, %s18, 0
      %s169 = sadd.s32 %s168, %s166
      %s170 = scalar_lea.vmem %s2, %s169
      %s171 = smul.u32 2, %s18
      %p172 = scmp.lt.s32.totalorder %s17, 1
      %s173 = scalar_select %p172, %s17, 1
      %p174 = scmp.lt.s32.totalorder %s171, 1
      %s175 = scalar_select %p174, %s171, 1
      %s176 = smul.addr %s173, 2
      %s177 = sadd.s32 %s175, %s176
      %s178 = smul.addr %s177, 4
      %s179 = scalar_lea.vmem %s0, %s178
      %s180 = smul.u32 2, %s18
      %p181 = scmp.lt.s32.totalorder %s17, 1
      %s182 = scalar_select %p181, %s17, 1
      %s183 = scalar_lea.vmem %s1, %s182
      %p184 = scmp.lt.s32.totalorder %s17, 1
      %s185 = scalar_select %p184, %s17, 1
      %p186 = scmp.lt.s32.totalorder %s18, 0
      %s187 = scalar_select %p186, %s18, 0
      %s188 = sadd.s32 %s187, %s185
      %s189 = scalar_lea.vmem %s2, %s188
      %v190 = vld [vmem:[%s179] sm:$0xf]
      %v191 = vld [vmem:[%s179 + $0x4] sm:$0xf]
      %v192 = vunpack.c.l.bf16 %v190
      %v193 = vunpack.c.l.bf16 %v191
      %v194 = vld [vmem:[%s183] sm:$0x1]
      %v195 = vmul.f32 %v192, %v192
      %v196 = vmul.f32 %v193, %v193
      %vm197 = vcmask 785408
      %v199 = vsel %vm197, 1.0, 0
      %v202 = vsel %vm197, %v195, 0
      %v205 = vsel %vm197, %v196, 0
      %207 = vmatpush.xpose.msra.mxu0 0.0
      %208 = vmatpush.xpose.msra.mxu0 0.0
      %209 = vmatpush.xpose.msra.mxu0 0.0
      %210 = vmatpush.xpose.msra.mxu0 0.0
      %211 = vmatpush.xpose.msra.mxu0 0.0
      %212 = vmatpush.xpose.msra.mxu0 0.0
      %213 = vmatpush.xpose.msra.mxu0 0.0
      %214 = vmatpush.xpose.msra.mxu0 0.0
      %215 = vmatpush.xpose.msra.mxu0 0.0
      %216 = vmatpush.xpose.msra.mxu0 0.0
      %217 = vmatpush.xpose.msra.mxu0 0.0
      %218 = vmatpush.xpose.msra.mxu0 0.0
      %219 = vmatpush.xpose.msra.mxu0 0.0
      %220 = vmatpush.xpose.msra.mxu0 0.0
      %221 = vmatpush.xpose.msra.mxu0 %v205
      %222 = vmatpush.xpose.msra.mxu0 %v202
      %223 = vmatmul.f32.gmra.mxu0 %v199
      %v224 = vpop.f32.mrf.mxu0
      %v225 = vadd.f32 0.0, %v224
      %226 = vdwg.mxu0
      %v228 = vsel %vm197, %v194, 0
      %v231 = vsel %vm197, %v192, 0
      %v234 = vsel %vm197, %v193, 0
      %236 = vmatpush.xpose.msra.mxu0 0.0
      %237 = vmatpush.xpose.msra.mxu0 0.0
      %238 = vmatpush.xpose.msra.mxu0 0.0
      %239 = vmatpush.xpose.msra.mxu0 0.0
      %240 = vmatpush.xpose.msra.mxu0 0.0
      %241 = vmatpush.xpose.msra.mxu0 0.0
      %242 = vmatpush.xpose.msra.mxu0 0.0
      %243 = vmatpush.xpose.msra.mxu0 0.0
      %244 = vmatpush.xpose.msra.mxu0 0.0
      %245 = vmatpush.xpose.msra.mxu0 0.0
      %246 = vmatpush.xpose.msra.mxu0 0.0
      %247 = vmatpush.xpose.msra.mxu0 0.0
      %248 = vmatpush.xpose.msra.mxu0 0.0
      %249 = vmatpush.xpose.msra.mxu0 0.0
      %250 = vmatpush.xpose.msra.mxu0 %v234
      %251 = vmatpush.xpose.msra.mxu0 %v231
      %252 = vmatmul.f32.gmra.mxu0 %v228
      %v253 = vpop.f32.mrf.mxu0
      %v254 = vadd.f32 0.0, %v253
      %255 = vdwg.mxu0
      %v256 = vmax.f32 %v225, 1e-24
      %v257 = vrsqrt.pop %v256
      %v258 = vmul.f32 %v257, %v256
      %v259 = vmul.f32 %v258, %v257
      %v260 = vmul.f32 0.5, %v259
      %v261 = vsub.f32 1.5, %v260
      %v262 = vmul.f32 %v257, %v261
      %vm263 = vweird.f32 %v256
      %vm264 = vweird.f32 %v257
      %vm265 = vmor %vm263, %vm264
      %v266 = vsel %vm265, %v257, %v262
      %v267 = vmul.f32 %v254, %v266
      %vm268 = vcmask 122880
      %269 = vst.msk [vmem:[%s189] sm:$0x1] %vm268, %v267
      %p270 = scmp.lt.s32.totalorder %s17, 1
      %s271 = scalar_select %p270, %s17, 1
      %p272 = scmp.lt.s32.totalorder %s18, 0
      %s273 = scalar_select %p272, %s18, 0
      %s274 = sadd.s32 %s273, %s271
      %s275 = scalar_lea.vmem %s2, %s274
      // Predicated region
      $region29: #{adcdnet_forward.16} parent=27 // pred_check
        %p276 = pneg %p99
      $region30: #{adcdnet_forward.16} parent=27 // pred_check_branch
        %278 = sbr.rel (%p276) target = $region32
      $region31: #{adcdnet_forward.16} parent=27 // pred_region
        _
      $region32: #{adcdnet_forward.16} parent=27 // pred_fallthru
        _
    $region28: #{adcdnet_forward.16} parent=5 // pred_fallthru
      _
    %p279 = scmp.le.s32.totalorder 2, %s8
    // Predicated region
    $region33: #{adcdnet_forward.16} parent=5 // pred_check
      %p280 = pneg %p279
    $region34: #{adcdnet_forward.16} parent=5 // pred_check_branch
      %282 = sbr.rel (%p280) target = $region36
    $region35: #{adcdnet_forward.16} parent=5 // pred_region
      %s283 = ssub.s32 %s8, 2
      // Predicated region
      $region37: #{adcdnet_forward.16} parent=35 // pred_check
        %p284 = pneg %p105
      $region38: #{adcdnet_forward.16} parent=35 // pred_check_branch
        %286 = sbr.rel (%p284) target = $region40
      $region39: #{adcdnet_forward.16} parent=35 // pred_region
        %p287 = scmp.lt.s32.totalorder %s19, 1
        %s288 = scalar_select %p287, %s19, 1
        %p289 = scmp.lt.s32.totalorder %s20, 0
        %s290 = scalar_select %p289, %s20, 0
        %s291 = sadd.s32 %s290, %s288
        %s292 = scalar_lea.vmem %s2, %s291
      $region40: #{adcdnet_forward.16} parent=35 // pred_fallthru
        _
    $region36: #{adcdnet_forward.16} parent=5 // pred_fallthru
      _
  $region6: #{adcdnet_forward.16} parent=0 // loop_footer
    %s12 = sadd.s32 1, %s8
  $region7: #{adcdnet_forward.16} parent=0 // loop_footer_branch
    %7 = sbr.rel target = $region3
  $region8: #{adcdnet_forward.16} parent=0 // loop_exit
    _

// kernel: adcdnet_forward.15
$region0: #{adcdnet_forward.15}
  #allocation0 [shape = 'u32[]', space=smem, size = 0x4, offset = 0x4, fixed_abs, tag = 'smem constant byte address 0x4 - core index']
  #allocation1 [shape = 'u32[72,128]{1,0:T(1,128)}', space=vmem, size = 0x9000, scoped, tag = 'internal scratch']
  %s0 = inlined_call_operand.vmem [shape: bf16[2,16,96], index: 0, kind: input, shape index: {}]
  %s1 = inlined_call_operand.vmem [shape: f32[2,1,16], index: 1, kind: input, shape index: {}]
  %s2 = inlined_call_operand.vmem [shape: f32[2,1,96], index: 2, kind: output, shape index: {0}]
  %s3 = inlined_call_operand.vmem [shape: f32[2,1,1], index: 3, kind: output, shape index: {1}]
  %4 = xla_tuple %s2, %s3
  %s5 = sld [smem:[#allocation0]]
  $region53: #{adcdnet_forward.15} parent=0
    _
  %s7 = ssub.s32 1, %s5
  %s8 = scalar_select 0, %s7, %s5
  loop: start=0, step=1, limit=4
  $region2: #{adcdnet_forward.15} parent=0 // loop_pre_header
    _
  $region3: #{adcdnet_forward.15} parent=0 // loop_header
    %s10 = sphi 0, %s14
    %p11 = scmp.ge.s32.totalorder %s10, 4
    %s17 = sphi 0, %s29
    %s18 = sphi 0, %s25
    %s19 = sphi 0, %s17
    %s20 = sphi 0, %s18
    %s21 = sphi 0, %s19
    %s22 = sphi 0, %s20
    %s34 = sphi 0, %s36
    %s37 = sphi 0, %s34
    %s38 = sphi 0, %s37
    %s54 = sphi 0, %s38
    %s62 = sphi 0, %s64
    %s65 = sphi 0, %s62
    %s66 = sphi 0, %s65
    %s82 = sphi 0, %s66
    %s88 = sphi 0, %s90
    %s91 = sphi 0, %s88
    %s92 = sphi 0, %s91
    %s108 = sphi 0, %s92
    %s114 = sphi 0, %s116
    %s117 = sphi 0, %s114
    %s118 = sphi 0, %s117
    %s134 = sphi 0, %s118
  $region4: #{adcdnet_forward.15} parent=0 // loop_header_branch
    %13 = sbr.rel (%p11) target = $region8
  $region5: #{adcdnet_forward.15} parent=0 // loop_body
    %s15 = ssub.s32 %s10, 1
    %s16 = ssub.s32 %s10, 2
    %s23 = sadd.s32 1, %s18
    %p24 = scmp.ge.s32.totalorder %s23, 1
    %s25 = scalar_select %p24, 0, %s23
    %s26 = sadd.s32 1, %s17
    %s27 = scalar_select %p24, %s26, %s17
    %p28 = scmp.ge.s32.totalorder %s27, 2
    %s29 = scalar_select %p28, 0, %s27
    %s30 = ssub.s32 %s17, %s29
    %s31 = ssub.s32 %s18, %s25
    %s32 = sor.u32 %s30, %s31
    %p33 = scmp.eq.s32.totalorder %s32, 0
    %s35 = sadd.s32 %s34, 1
    %s36 = scalar_select %p33, %s34, %s35
    %p39 = pneg %p33
    %p40 = scmp.eq.s32.totalorder %s10, 1
    %p41 = por %p39, %p40
    %p42 = scmp.ne.s32.totalorder %s34, %s37
    %p43 = scmp.eq.s32.totalorder %s10, 0
    %p44 = por %p42, %p43
    %p45 = scmp.ne.s32.totalorder %s34, %s37
    %p46 = scmp.eq.s32.totalorder %s15, 1
    %p47 = por %p45, %p46
    %p48 = scmp.ne.s32.totalorder %s37, %s38
    %p49 = scmp.eq.s32.totalorder %s15, 0
    %p50 = por %p48, %p49
    %p51 = scmp.ne.s32.totalorder %s37, %s38
    %p52 = scmp.eq.s32.totalorder %s16, 1
    %p53 = por %p51, %p52
    %p55 = scmp.ne.s32.totalorder %s38, %s54
    %p56 = scmp.eq.s32.totalorder %s16, 0
    %p57 = por %p55, %p56
    %s58 = ssub.s32 %s17, %s29
    %s59 = ssub.s32 %s18, %s25
    %s60 = sor.u32 %s58, %s59
    %p61 = scmp.eq.s32.totalorder %s60, 0
    %s63 = sadd.s32 %s62, 1
    %s64 = scalar_select %p61, %s62, %s63
    %p67 = pneg %p61
    %p68 = scmp.eq.s32.totalorder %s10, 1
    %p69 = por %p67, %p68
    %p70 = scmp.ne.s32.totalorder %s62, %s65
    %p71 = scmp.eq.s32.totalorder %s10, 0
    %p72 = por %p70, %p71
    %p73 = scmp.ne.s32.totalorder %s62, %s65
    %p74 = scmp.eq.s32.totalorder %s15, 1
    %p75 = por %p73, %p74
    %p76 = scmp.ne.s32.totalorder %s65, %s66
    %p77 = scmp.eq.s32.totalorder %s15, 0
    %p78 = por %p76, %p77
    %p79 = scmp.ne.s32.totalorder %s65, %s66
    %p80 = scmp.eq.s32.totalorder %s16, 1
    %p81 = por %p79, %p80
    %p83 = scmp.ne.s32.totalorder %s66, %s82
    %p84 = scmp.eq.s32.totalorder %s16, 0
    %p85 = por %p83, %p84
    %s86 = ssub.s32 %s17, %s29
    %p87 = scmp.eq.s32.totalorder %s86, 0
    %s89 = sadd.s32 %s88, 1
    %s90 = scalar_select %p87, %s88, %s89
    %p93 = pneg %p87
    %p94 = scmp.eq.s32.totalorder %s10, 1
    %p95 = por %p93, %p94
    %p96 = scmp.ne.s32.totalorder %s88, %s91
    %p97 = scmp.eq.s32.totalorder %s10, 0
    %p98 = por %p96, %p97
    %p99 = scmp.ne.s32.totalorder %s88, %s91
    %p100 = scmp.eq.s32.totalorder %s15, 1
    %p101 = por %p99, %p100
    %p102 = scmp.ne.s32.totalorder %s91, %s92
    %p103 = scmp.eq.s32.totalorder %s15, 0
    %p104 = por %p102, %p103
    %p105 = scmp.ne.s32.totalorder %s91, %s92
    %p106 = scmp.eq.s32.totalorder %s16, 1
    %p107 = por %p105, %p106
    %p109 = scmp.ne.s32.totalorder %s92, %s108
    %p110 = scmp.eq.s32.totalorder %s16, 0
    %p111 = por %p109, %p110
    %s112 = ssub.s32 %s17, %s29
    %p113 = scmp.eq.s32.totalorder %s112, 0
    %s115 = sadd.s32 %s114, 1
    %s116 = scalar_select %p113, %s114, %s115
    %p119 = pneg %p113
    %p120 = scmp.eq.s32.totalorder %s10, 1
    %p121 = por %p119, %p120
    %p122 = scmp.ne.s32.totalorder %s114, %s117
    %p123 = scmp.eq.s32.totalorder %s10, 0
    %p124 = por %p122, %p123
    %p125 = scmp.ne.s32.totalorder %s114, %s117
    %p126 = scmp.eq.s32.totalorder %s15, 1
    %p127 = por %p125, %p126
    %p128 = scmp.ne.s32.totalorder %s117, %s118
    %p129 = scmp.eq.s32.totalorder %s15, 0
    %p130 = por %p128, %p129
    %p131 = scmp.ne.s32.totalorder %s117, %s118
    %p132 = scmp.eq.s32.totalorder %s16, 1
    %p133 = por %p131, %p132
    %p135 = scmp.ne.s32.totalorder %s118, %s134
    %p136 = scmp.eq.s32.totalorder %s16, 0
    %p137 = por %p135, %p136
    %p138 = scmp.le.s32.totalorder 1, %s10
    %p139 = scmp.lt.s32.totalorder %s10, 3
    %p140 = pnand %p138, %p139
    %p141 = pneg %p140
    // Predicated region
    $region9: #{adcdnet_forward.15} parent=5 // pred_check
      _
    $region10: #{adcdnet_forward.15} parent=5 // pred_check_branch
      %143 = sbr.rel (%p140) target = $region12
    $region11: #{adcdnet_forward.15} parent=5 // pred_region
      %s144 = ssub.s32 %s10, 1
    $region12: #{adcdnet_forward.15} parent=5 // pred_fallthru
      _
    %p145 = scmp.lt.s32.totalorder %s10, 2
    // Predicated region
    $region13: #{adcdnet_forward.15} parent=5 // pred_check
      %p146 = pneg %p145
    $region14: #{adcdnet_forward.15} parent=5 // pred_check_branch
      %148 = sbr.rel (%p146) target = $region16
    $region15: #{adcdnet_forward.15} parent=5 // pred_region
      // Predicated region
      $region17: #{adcdnet_forward.15} parent=15 // pred_check
        %p149 = pneg %p44
      $region18: #{adcdnet_forward.15} parent=15 // pred_check_branch
        %151 = sbr.rel (%p149) target = $region20
      $region19: #{adcdnet_forward.15} parent=15 // pred_region
        %s152 = smul.u32 2, %s18
        %p153 = scmp.lt.s32.totalorder %s17, 1
        %s154 = scalar_select %p153, %s17, 1
        %p155 = scmp.lt.s32.totalorder %s152, 1
        %s156 = scalar_select %p155, %s152, 1
        %s157 = smul.addr %s154, 2
        %s158 = sadd.s32 %s156, %s157
        %s159 = smul.addr %s158, 4
        %s160 = scalar_lea.vmem %s0, %s159
        %s161 = smul.u32 2, %s18
      $region20: #{adcdnet_forward.15} parent=15 // pred_fallthru
        _
      // Predicated region
      $region21: #{adcdnet_forward.15} parent=15 // pred_check
        %p162 = pneg %p72
      $region22: #{adcdnet_forward.15} parent=15 // pred_check_branch
        %164 = sbr.rel (%p162) target = $region24
      $region23: #{adcdnet_forward.15} parent=15 // pred_region
        %p165 = scmp.lt.s32.totalorder %s17, 1
        %s166 = scalar_select %p165, %s17, 1
        %p167 = scmp.lt.s32.totalorder %s18, 0
        %s168 = scalar_select %p167, %s18, 0
        %s169 = sadd.s32 %s168, %s166
        %s170 = scalar_lea.vmem %s1, %s169
      $region24: #{adcdnet_forward.15} parent=15 // pred_fallthru
        _
    $region16: #{adcdnet_forward.15} parent=5 // pred_fallthru
      _
    %p171 = scmp.le.s32.totalorder 1, %s10
    %p172 = scmp.lt.s32.totalorder %s10, 3
    %p173 = pnand %p171, %p172
    %p174 = pneg %p173
    // Predicated region
    $region25: #{adcdnet_forward.15} parent=5 // pred_check
      _
    $region26: #{adcdnet_forward.15} parent=5 // pred_check_branch
      %176 = sbr.rel (%p173) target = $region28
    $region27: #{adcdnet_forward.15} parent=5 // pred_region
      %s177 = ssub.s32 %s10, 1
      %s178 = smul.u32 2, %s20
      %p179 = scmp.lt.s32.totalorder %s19, 1
      %s180 = scalar_select %p179, %s19, 1
      %p181 = scmp.lt.s32.totalorder %s178, 1
      %s182 = scalar_select %p181, %s178, 1
      %s183 = smul.addr %s180, 2
      %s184 = sadd.s32 %s182, %s183
      %s185 = smul.addr %s184, 4
      %s186 = scalar_lea.vmem %s0, %s185
      %p187 = pneg %p50
      %p188 = pneg %p47
      %p189 = scmp.lt.s32.totalorder %s19, 1
      %s190 = scalar_select %p189, %s19, 1
      %p191 = scmp.lt.s32.totalorder %s20, 0
      %s192 = scalar_select %p191, %s20, 0
      %s193 = sadd.s32 %s192, %s190
      %s194 = scalar_lea.vmem %s1, %s193
      %p195 = pneg %p78
      %p196 = pneg %p75
      %p197 = pneg %p104
      %p198 = pneg %p101
      %p199 = scmp.lt.s32.totalorder %s19, 1
      %s200 = scalar_select %p199, %s19, 1
      %s201 = scalar_lea.vmem %s2, %s200
      %p202 = pneg %p130
      %p203 = pneg %p127
      %p204 = scmp.lt.s32.totalorder %s19, 1
      %s205 = scalar_select %p204, %s19, 1
      %s206 = scalar_lea.vmem %s3, %s205
      %s207 = smul.u32 2, %s20
      %p208 = scmp.lt.s32.totalorder %s19, 1
      %s209 = scalar_select %p208, %s19, 1
      %p210 = scmp.lt.s32.totalorder %s207, 1
      %s211 = scalar_select %p210, %s207, 1
      %s212 = smul.addr %s209, 2
      %s213 = sadd.s32 %s211, %s212
      %s214 = smul.addr %s213, 4
      %s215 = scalar_lea.vmem %s0, %s214
      %s216 = smul.u32 2, %s20
      %p217 = scmp.lt.s32.totalorder %s19, 1
      %s218 = scalar_select %p217, %s19, 1
      %p219 = scmp.lt.s32.totalorder %s20, 0
      %s220 = scalar_select %p219, %s20, 0
      %s221 = sadd.s32 %s220, %s218
      %s222 = scalar_lea.vmem %s1, %s221
      %p223 = scmp.lt.s32.totalorder %s19, 1
      %s224 = scalar_select %p223, %s19, 1
      %s225 = scalar_lea.vmem %s2, %s224
      %p226 = scmp.lt.s32.totalorder %s19, 1
      %s227 = scalar_select %p226, %s19, 1
      %s228 = scalar_lea.vmem %s3, %s227
      %p229 = scmp.eq.s32.totalorder %s20, 0
      // Predicated region
      $region29: #{adcdnet_forward.15} parent=27 // pred_check
        %p230 = pneg %p229
      $region30: #{adcdnet_forward.15} parent=27 // pred_check_branch
        %232 = sbr.rel (%p230) target = $region32
      $region31: #{adcdnet_forward.15} parent=27 // pred_region
        %vm233 = vcmask 778240
        %234 = vst.msk [vmem:[%s225] sm:$0x1] %vm233, 0.0
        %vm235 = vcmask 0
        %236 = vst.msk [vmem:[%s228] sm:$0x1] %vm235, 0.0
      $region32: #{adcdnet_forward.15} parent=27 // pred_fallthru
        _
      %v237 = vld [vmem:[%s215] sm:$0xf]
      %v238 = vld [vmem:[%s215 + $0x4] sm:$0xf]
      %v239 = vunpack.c.l.bf16 %v237
      %v240 = vunpack.c.l.bf16 %v238
      %v241 = vld [vmem:[%s222] sm:$0x1]
      %vm242 = vcmp.eq.f32.partialorder %v241, 0.0
      %v243 = vsel %vm242, 1, 0
      %v244 = vcvt.s32.f32 %v243
      %v245 = vmul.f32 %v239, %v239
      %v246 = vmul.f32 %v240, %v240
      %vm247 = vcmask 785408
      %v249 = vsel %vm247, 1.0, 0
      %v252 = vsel %vm247, %v245, 0
      %v255 = vsel %vm247, %v246, 0
      %257 = vmatpush.xpose.msra.mxu0 0.0
      %258 = vmatpush.xpose.msra.mxu0 0.0
      %259 = vmatpush.xpose.msra.mxu0 0.0
      %260 = vmatpush.xpose.msra.mxu0 0.0
      %261 = vmatpush.xpose.msra.mxu0 0.0
      %262 = vmatpush.xpose.msra.mxu0 0.0
      %263 = vmatpush.xpose.msra.mxu0 0.0
      %264 = vmatpush.xpose.msra.mxu0 0.0
      %265 = vmatpush.xpose.msra.mxu0 0.0
      %266 = vmatpush.xpose.msra.mxu0 0.0
      %267 = vmatpush.xpose.msra.mxu0 0.0
      %268 = vmatpush.xpose.msra.mxu0 0.0
      %269 = vmatpush.xpose.msra.mxu0 0.0
      %270 = vmatpush.xpose.msra.mxu0 0.0
      %271 = vmatpush.xpose.msra.mxu0 %v255
      %272 = vmatpush.xpose.msra.mxu0 %v252
      %273 = vmatmul.f32.gmra.mxu0 %v249
      %v274 = vpop.f32.mrf.mxu0
      %v275 = vadd.f32 0.0, %v274
      %276 = vdwg.mxu0
      %v277 = vmax.f32 %v275, 1e-24
      %v278 = vrsqrt.pop %v277
      %v279 = vmul.f32 %v278, %v277
      %v280 = vmul.f32 %v279, %v278
      %v281 = vmul.f32 0.5, %v280
      %v282 = vsub.f32 1.5, %v281
      %v283 = vmul.f32 %v278, %v282
      %vm284 = vweird.f32 %v277
      %vm285 = vweird.f32 %v278
      %vm286 = vmor %vm284, %vm285
      %v287 = vsel %vm286, %v278, %v283
      %v288 = vmul.f32 %v244, %v287
      %v289 = vld [vmem:[%s225] sm:$0x1]
      %vm290 = vcmask 130048
      %v292 = vsel %vm290, %v288, 0
      %294 = vmatpush.msra.mxu0 0.0
      %295 = vmatpush.msra.mxu0 0.0
      %296 = vmatpush.msra.mxu0 0.0
      %297 = vmatpush.msra.mxu0 0.0
      %298 = vmatpush.msra.mxu0 0.0
      %299 = vmatpush.msra.mxu0 0.0
      %300 = vmatpush.msra.mxu0 0.0
      %301 = vmatpush.msra.mxu0 0.0
      %302 = vmatpush.msra.mxu0 0.0
      %303 = vmatpush.msra.mxu0 0.0
      %304 = vmatpush.msra.mxu0 0.0
      %305 = vmatpush.msra.mxu0 0.0
      %306 = vmatpush.msra.mxu0 0.0
      %307 = vmatpush.msra.mxu0 0.0
      %308 = vmatpush.msra.mxu0 %v240
      %309 = vmatpush.msra.mxu0 %v239
      %310 = vmatmul.f32.gmra.mxu0 %v292
      %v311 = vpop.f32.mrf.mxu0
      %v312 = vadd.f32 0.0, %v311
      %313 = vdwg.mxu0
      %v314 = vadd.f32 %v289, %v312
      %vm315 = vcmask 778240
      %316 = vst.msk [vmem:[%s225] sm:$0x1] %vm315, %v314
      %v317 = vld [vmem:[%s228] sm:$0x1]
      %vm318 = vcmask 122880
      %v319 = vsel %vm318, %v244, 0.0
      %320 = vadd.xlane.f32.xlu0 %v319
      %v321 = vpop.xlane.xlu0 %320
      %v322 = vadd.f32 %v317, %v321
      %vm323 = vcmask 0
      %324 = vst.msk [vmem:[%s228] sm:$0x1] %vm323, %v322
      %p325 = scmp.lt.s32.totalorder %s19, 1
      %s326 = scalar_select %p325, %s19, 1
      %s327 = scalar_lea.vmem %s2, %s326
      %p328 = scmp.lt.s32.totalorder %s19, 1
      %s329 = scalar_select %p328, %s19, 1
      %s330 = scalar_lea.vmem %s3, %s329
      // Predicated region
      $region33: #{adcdnet_forward.15} parent=27 // pred_check
        %p331 = pneg %p101
      $region34: #{adcdnet_forward.15} parent=27 // pred_check_branch
        %333 = sbr.rel (%p331) target = $region36
      $region35: #{adcdnet_forward.15} parent=27 // pred_region
        _
      $region36: #{adcdnet_forward.15} parent=27 // pred_fallthru
        _
      // Predicated region
      $region37: #{adcdnet_forward.15} parent=27 // pred_check
        %p334 = pneg %p127
      $region38: #{adcdnet_forward.15} parent=27 // pred_check_branch
        %336 = sbr.rel (%p334) target = $region40
      $region39: #{adcdnet_forward.15} parent=27 // pred_region
        _
      $region40: #{adcdnet_forward.15} parent=27 // pred_fallthru
        _
    $region28: #{adcdnet_forward.15} parent=5 // pred_fallthru
      _
    %p337 = scmp.le.s32.totalorder 2, %s10
    // Predicated region
    $region41: #{adcdnet_forward.15} parent=5 // pred_check
      %p338 = pneg %p337
    $region42: #{adcdnet_forward.15} parent=5 // pred_check_branch
      %340 = sbr.rel (%p338) target = $region44
    $region43: #{adcdnet_forward.15} parent=5 // pred_region
      %s341 = ssub.s32 %s10, 2
      // Predicated region
      $region45: #{adcdnet_forward.15} parent=43 // pred_check
        %p342 = pneg %p107
      $region46: #{adcdnet_forward.15} parent=43 // pred_check_branch
        %344 = sbr.rel (%p342) target = $region48
      $region47: #{adcdnet_forward.15} parent=43 // pred_region
        %p345 = scmp.lt.s32.totalorder %s21, 1
        %s346 = scalar_select %p345, %s21, 1
        %s347 = scalar_lea.vmem %s2, %s346
      $region48: #{adcdnet_forward.15} parent=43 // pred_fallthru
        _
      // Predicated region
      $region49: #{adcdnet_forward.15} parent=43 // pred_check
        %p348 = pneg %p133
      $region50: #{adcdnet_forward.15} parent=43 // pred_check_branch
        %350 = sbr.rel (%p348) target = $region52
      $region51: #{adcdnet_forward.15} parent=43 // pred_region
        %p351 = scmp.lt.s32.totalorder %s21, 1
        %s352 = scalar_select %p351, %s21, 1
        %s353 = scalar_lea.vmem %s3, %s352
      $region52: #{adcdnet_forward.15} parent=43 // pred_fallthru
        _
    $region44: #{adcdnet_forward.15} parent=5 // pred_fallthru
      _
  $region6: #{adcdnet_forward.15} parent=0 // loop_footer
    %s14 = sadd.s32 1, %s10
  $region7: #{adcdnet_forward.15} parent=0 // loop_footer_branch
    %9 = sbr.rel target = $region3
  $region8: #{adcdnet_forward.15} parent=0 // loop_exit
    _

// kernel: adcdnet_forward.18
$region0: #{adcdnet_forward.18}
  #allocation0 [shape = 'u32[]', space=smem, size = 0x4, offset = 0x4, fixed_abs, tag = 'smem constant byte address 0x4 - core index']
  #allocation1 [shape = 'u32[72,128]{1,0:T(1,128)}', space=vmem, size = 0x9000, scoped, tag = 'internal scratch']
  %s0 = inlined_call_operand.vmem [shape: bf16[2,64,96], index: 0, kind: input, shape index: {}]
  %s1 = inlined_call_operand.vmem [shape: f32[2,1,96], index: 1, kind: input, shape index: {}]
  %s2 = inlined_call_operand.vmem [shape: f32[2,1,64], index: 2, kind: output, shape index: {}]
  %s3 = sld [smem:[#allocation0]]
  $region41: #{adcdnet_forward.18} parent=0
    _
  %s5 = ssub.s32 1, %s3
  %s6 = scalar_select 0, %s5, %s3
  loop: start=0, step=1, limit=4
  $region2: #{adcdnet_forward.18} parent=0 // loop_pre_header
    _
  $region3: #{adcdnet_forward.18} parent=0 // loop_header
    %s8 = sphi 0, %s12
    %p9 = scmp.ge.s32.totalorder %s8, 4
    %s15 = sphi 0, %s27
    %s16 = sphi 0, %s23
    %s17 = sphi 0, %s15
    %s18 = sphi 0, %s16
    %s19 = sphi 0, %s17
    %s20 = sphi 0, %s18
    %s32 = sphi 0, %s34
    %s35 = sphi 0, %s32
    %s36 = sphi 0, %s35
    %s52 = sphi 0, %s36
    %s58 = sphi 0, %s60
    %s61 = sphi 0, %s58
    %s62 = sphi 0, %s61
    %s78 = sphi 0, %s62
    %s86 = sphi 0, %s88
    %s89 = sphi 0, %s86
    %s90 = sphi 0, %s89
    %s106 = sphi 0, %s90
  $region4: #{adcdnet_forward.18} parent=0 // loop_header_branch
    %11 = sbr.rel (%p9) target = $region8
  $region5: #{adcdnet_forward.18} parent=0 // loop_body
    %s13 = ssub.s32 %s8, 1
    %s14 = ssub.s32 %s8, 2
    %s21 = sadd.s32 1, %s16
    %p22 = scmp.ge.s32.totalorder %s21, 1
    %s23 = scalar_select %p22, 0, %s21
    %s24 = sadd.s32 1, %s15
    %s25 = scalar_select %p22, %s24, %s15
    %p26 = scmp.ge.s32.totalorder %s25, 2
    %s27 = scalar_select %p26, 0, %s25
    %s28 = ssub.s32 %s15, %s27
    %s29 = ssub.s32 %s16, %s23
    %s30 = sor.u32 %s28, %s29
    %p31 = scmp.eq.s32.totalorder %s30, 0
    %s33 = sadd.s32 %s32, 1
    %s34 = scalar_select %p31, %s32, %s33
    %p37 = pneg %p31
    %p38 = scmp.eq.s32.totalorder %s8, 1
    %p39 = por %p37, %p38
    %p40 = scmp.ne.s32.totalorder %s32, %s35
    %p41 = scmp.eq.s32.totalorder %s8, 0
    %p42 = por %p40, %p41
    %p43 = scmp.ne.s32.totalorder %s32, %s35
    %p44 = scmp.eq.s32.totalorder %s13, 1
    %p45 = por %p43, %p44
    %p46 = scmp.ne.s32.totalorder %s35, %s36
    %p47 = scmp.eq.s32.totalorder %s13, 0
    %p48 = por %p46, %p47
    %p49 = scmp.ne.s32.totalorder %s35, %s36
    %p50 = scmp.eq.s32.totalorder %s14, 1
    %p51 = por %p49, %p50
    %p53 = scmp.ne.s32.totalorder %s36, %s52
    %p54 = scmp.eq.s32.totalorder %s14, 0
    %p55 = por %p53, %p54
    %s56 = ssub.s32 %s15, %s27
    %p57 = scmp.eq.s32.totalorder %s56, 0
    %s59 = sadd.s32 %s58, 1
    %s60 = scalar_select %p57, %s58, %s59
    %p63 = pneg %p57
    %p64 = scmp.eq.s32.totalorder %s8, 1
    %p65 = por %p63, %p64
    %p66 = scmp.ne.s32.totalorder %s58, %s61
    %p67 = scmp.eq.s32.totalorder %s8, 0
    %p68 = por %p66, %p67
    %p69 = scmp.ne.s32.totalorder %s58, %s61
    %p70 = scmp.eq.s32.totalorder %s13, 1
    %p71 = por %p69, %p70
    %p72 = scmp.ne.s32.totalorder %s61, %s62
    %p73 = scmp.eq.s32.totalorder %s13, 0
    %p74 = por %p72, %p73
    %p75 = scmp.ne.s32.totalorder %s61, %s62
    %p76 = scmp.eq.s32.totalorder %s14, 1
    %p77 = por %p75, %p76
    %p79 = scmp.ne.s32.totalorder %s62, %s78
    %p80 = scmp.eq.s32.totalorder %s14, 0
    %p81 = por %p79, %p80
    %s82 = ssub.s32 %s15, %s27
    %s83 = ssub.s32 %s16, %s23
    %s84 = sor.u32 %s82, %s83
    %p85 = scmp.eq.s32.totalorder %s84, 0
    %s87 = sadd.s32 %s86, 1
    %s88 = scalar_select %p85, %s86, %s87
    %p91 = pneg %p85
    %p92 = scmp.eq.s32.totalorder %s8, 1
    %p93 = por %p91, %p92
    %p94 = scmp.ne.s32.totalorder %s86, %s89
    %p95 = scmp.eq.s32.totalorder %s8, 0
    %p96 = por %p94, %p95
    %p97 = scmp.ne.s32.totalorder %s86, %s89
    %p98 = scmp.eq.s32.totalorder %s13, 1
    %p99 = por %p97, %p98
    %p100 = scmp.ne.s32.totalorder %s89, %s90
    %p101 = scmp.eq.s32.totalorder %s13, 0
    %p102 = por %p100, %p101
    %p103 = scmp.ne.s32.totalorder %s89, %s90
    %p104 = scmp.eq.s32.totalorder %s14, 1
    %p105 = por %p103, %p104
    %p107 = scmp.ne.s32.totalorder %s90, %s106
    %p108 = scmp.eq.s32.totalorder %s14, 0
    %p109 = por %p107, %p108
    %p110 = scmp.le.s32.totalorder 1, %s8
    %p111 = scmp.lt.s32.totalorder %s8, 3
    %p112 = pnand %p110, %p111
    %p113 = pneg %p112
    // Predicated region
    $region9: #{adcdnet_forward.18} parent=5 // pred_check
      _
    $region10: #{adcdnet_forward.18} parent=5 // pred_check_branch
      %115 = sbr.rel (%p112) target = $region12
    $region11: #{adcdnet_forward.18} parent=5 // pred_region
      %s116 = ssub.s32 %s8, 1
    $region12: #{adcdnet_forward.18} parent=5 // pred_fallthru
      _
    %p117 = scmp.lt.s32.totalorder %s8, 2
    // Predicated region
    $region13: #{adcdnet_forward.18} parent=5 // pred_check
      %p118 = pneg %p117
    $region14: #{adcdnet_forward.18} parent=5 // pred_check_branch
      %120 = sbr.rel (%p118) target = $region16
    $region15: #{adcdnet_forward.18} parent=5 // pred_region
      // Predicated region
      $region17: #{adcdnet_forward.18} parent=15 // pred_check
        %p121 = pneg %p42
      $region18: #{adcdnet_forward.18} parent=15 // pred_check_branch
        %123 = sbr.rel (%p121) target = $region20
      $region19: #{adcdnet_forward.18} parent=15 // pred_region
        %s124 = smul.u32 8, %s16
        %p125 = scmp.lt.s32.totalorder %s15, 1
        %s126 = scalar_select %p125, %s15, 1
        %p127 = scmp.lt.s32.totalorder %s124, 7
        %s128 = scalar_select %p127, %s124, 7
        %s129 = smul.addr %s126, 8
        %s130 = sadd.s32 %s128, %s129
        %s131 = smul.addr %s130, 4
        %s132 = scalar_lea.vmem %s0, %s131
        %s133 = smul.u32 8, %s16
      $region20: #{adcdnet_forward.18} parent=15 // pred_fallthru
        _
      // Predicated region
      $region21: #{adcdnet_forward.18} parent=15 // pred_check
        %p134 = pneg %p68
      $region22: #{adcdnet_forward.18} parent=15 // pred_check_branch
        %136 = sbr.rel (%p134) target = $region24
      $region23: #{adcdnet_forward.18} parent=15 // pred_region
        %p137 = scmp.lt.s32.totalorder %s15, 1
        %s138 = scalar_select %p137, %s15, 1
        %s139 = scalar_lea.vmem %s1, %s138
      $region24: #{adcdnet_forward.18} parent=15 // pred_fallthru
        _
    $region16: #{adcdnet_forward.18} parent=5 // pred_fallthru
      _
    %p140 = scmp.le.s32.totalorder 1, %s8
    %p141 = scmp.lt.s32.totalorder %s8, 3
    %p142 = pnand %p140, %p141
    %p143 = pneg %p142
    // Predicated region
    $region25: #{adcdnet_forward.18} parent=5 // pred_check
      _
    $region26: #{adcdnet_forward.18} parent=5 // pred_check_branch
      %145 = sbr.rel (%p142) target = $region28
    $region27: #{adcdnet_forward.18} parent=5 // pred_region
      %s146 = ssub.s32 %s8, 1
      %s147 = smul.u32 8, %s18
      %p148 = scmp.lt.s32.totalorder %s17, 1
      %s149 = scalar_select %p148, %s17, 1
      %p150 = scmp.lt.s32.totalorder %s147, 7
      %s151 = scalar_select %p150, %s147, 7
      %s152 = smul.addr %s149, 8
      %s153 = sadd.s32 %s151, %s152
      %s154 = smul.addr %s153, 4
      %s155 = scalar_lea.vmem %s0, %s154
      %p156 = pneg %p48
      %p157 = pneg %p45
      %p158 = scmp.lt.s32.totalorder %s17, 1
      %s159 = scalar_select %p158, %s17, 1
      %s160 = scalar_lea.vmem %s1, %s159
      %p161 = pneg %p74
      %p162 = pneg %p71
      %p163 = pneg %p102
      %p164 = pneg %p99
      %p165 = scmp.lt.s32.totalorder %s17, 1
      %s166 = scalar_select %p165, %s17, 1
      %p167 = scmp.lt.s32.totalorder %s18, 0
      %s168 = scalar_select %p167, %s18, 0
      %s169 = sadd.s32 %s168, %s166
      %s170 = scalar_lea.vmem %s2, %s169
      %s171 = smul.u32 8, %s18
      %p172 = scmp.lt.s32.totalorder %s17, 1
      %s173 = scalar_select %p172, %s17, 1
      %p174 = scmp.lt.s32.totalorder %s171, 7
      %s175 = scalar_select %p174, %s171, 7
      %s176 = smul.addr %s173, 8
      %s177 = sadd.s32 %s175, %s176
      %s178 = smul.addr %s177, 4
      %s179 = scalar_lea.vmem %s0, %s178
      %s180 = smul.u32 8, %s18
      %p181 = scmp.lt.s32.totalorder %s17, 1
      %s182 = scalar_select %p181, %s17, 1
      %s183 = scalar_lea.vmem %s1, %s182
      %p184 = scmp.lt.s32.totalorder %s17, 1
      %s185 = scalar_select %p184, %s17, 1
      %p186 = scmp.lt.s32.totalorder %s18, 0
      %s187 = scalar_select %p186, %s18, 0
      %s188 = sadd.s32 %s187, %s185
      %s189 = scalar_lea.vmem %s2, %s188
      %v190 = vld [vmem:[%s179] sm:$0xf]
      %v191 = vld [vmem:[%s179 + $0x4] sm:$0xf]
      %v192 = vld [vmem:[%s179 + $0x8] sm:$0xf]
      %v193 = vld [vmem:[%s179 + $0xc] sm:$0xf]
      %v194 = vld [vmem:[%s179 + $0x10] sm:$0xf]
      %v195 = vld [vmem:[%s179 + $0x14] sm:$0xf]
      %v196 = vld [vmem:[%s179 + $0x18] sm:$0xf]
      %v197 = vld [vmem:[%s179 + $0x1c] sm:$0xf]
      %v198 = vunpack.c.l.bf16 %v190
      %v199 = vunpack.c.l.bf16 %v191
      %v200 = vunpack.c.l.bf16 %v192
      %v201 = vunpack.c.l.bf16 %v193
      %v202 = vunpack.c.l.bf16 %v194
      %v203 = vunpack.c.l.bf16 %v195
      %v204 = vunpack.c.l.bf16 %v196
      %v205 = vunpack.c.l.bf16 %v197
      %v206 = vld [vmem:[%s183] sm:$0x1]
      %v207 = vmul.f32 %v198, %v198
      %v208 = vmul.f32 %v199, %v199
      %v209 = vmul.f32 %v200, %v200
      %v210 = vmul.f32 %v201, %v201
      %v211 = vmul.f32 %v202, %v202
      %v212 = vmul.f32 %v203, %v203
      %v213 = vmul.f32 %v204, %v204
      %v214 = vmul.f32 %v205, %v205
      %vm215 = vcmask 785408
      %v217 = vsel %vm215, 1.0, 0
      %v220 = vsel %vm215, %v207, 0
      %v223 = vsel %vm215, %v208, 0
      %v226 = vsel %vm215, %v209, 0
      %v229 = vsel %vm215, %v210, 0
      %v232 = vsel %vm215, %v211, 0
      %v235 = vsel %vm215, %v212, 0
      %v238 = vsel %vm215, %v213, 0
      %v241 = vsel %vm215, %v214, 0
      %243 = vmatpush.xpose.msra.mxu0 0.0
      %244 = vmatpush.xpose.msra.mxu0 0.0
      %245 = vmatpush.xpose.msra.mxu0 0.0
      %246 = vmatpush.xpose.msra.mxu0 0.0
      %247 = vmatpush.xpose.msra.mxu0 0.0
      %248 = vmatpush.xpose.msra.mxu0 0.0
      %249 = vmatpush.xpose.msra.mxu0 0.0
      %250 = vmatpush.xpose.msra.mxu0 0.0
      %251 = vmatpush.xpose.msra.mxu0 %v241
      %252 = vmatpush.xpose.msra.mxu0 %v238
      %253 = vmatpush.xpose.msra.mxu0 %v235
      %254 = vmatpush.xpose.msra.mxu0 %v232
      %255 = vmatpush.xpose.msra.mxu0 %v229
      %256 = vmatpush.xpose.msra.mxu0 %v226
      %257 = vmatpush.xpose.msra.mxu0 %v223
      %258 = vmatpush.xpose.msra.mxu0 %v220
      %259 = vmatmul.f32.gmra.mxu0 %v217
      %v260 = vpop.f32.mrf.mxu0
      %v261 = vadd.f32 0.0, %v260
      %262 = vdwg.mxu0
      %v264 = vsel %vm215, %v206, 0
      %v267 = vsel %vm215, %v198, 0
      %v270 = vsel %vm215, %v199, 0
      %v273 = vsel %vm215, %v200, 0
      %v276 = vsel %vm215, %v201, 0
      %v279 = vsel %vm215, %v202, 0
      %v282 = vsel %vm215, %v203, 0
      %v285 = vsel %vm215, %v204, 0
      %v288 = vsel %vm215, %v205, 0
      %290 = vmatpush.xpose.msra.mxu0 0.0
      %291 = vmatpush.xpose.msra.mxu0 0.0
      %292 = vmatpush.xpose.msra.mxu0 0.0
      %293 = vmatpush.xpose.msra.mxu0 0.0
      %294 = vmatpush.xpose.msra.mxu0 0.0
      %295 = vmatpush.xpose.msra.mxu0 0.0
      %296 = vmatpush.xpose.msra.mxu0 0.0
      %297 = vmatpush.xpose.msra.mxu0 0.0
      %298 = vmatpush.xpose.msra.mxu0 %v288
      %299 = vmatpush.xpose.msra.mxu0 %v285
      %300 = vmatpush.xpose.msra.mxu0 %v282
      %301 = vmatpush.xpose.msra.mxu0 %v279
      %302 = vmatpush.xpose.msra.mxu0 %v276
      %303 = vmatpush.xpose.msra.mxu0 %v273
      %304 = vmatpush.xpose.msra.mxu0 %v270
      %305 = vmatpush.xpose.msra.mxu0 %v267
      %306 = vmatmul.f32.gmra.mxu0 %v264
      %v307 = vpop.f32.mrf.mxu0
      %v308 = vadd.f32 0.0, %v307
      %309 = vdwg.mxu0
      %v310 = vmax.f32 %v261, 1e-24
      %v311 = vrsqrt.pop %v310
      %v312 = vmul.f32 %v311, %v310
      %v313 = vmul.f32 %v312, %v311
      %v314 = vmul.f32 0.5, %v313
      %v315 = vsub.f32 1.5, %v314
      %v316 = vmul.f32 %v311, %v315
      %vm317 = vweird.f32 %v310
      %vm318 = vweird.f32 %v311
      %vm319 = vmor %vm317, %vm318
      %v320 = vsel %vm319, %v311, %v316
      %v321 = vmul.f32 %v308, %v320
      %vm322 = vcmask 516096
      %323 = vst.msk [vmem:[%s189] sm:$0x1] %vm322, %v321
      %p324 = scmp.lt.s32.totalorder %s17, 1
      %s325 = scalar_select %p324, %s17, 1
      %p326 = scmp.lt.s32.totalorder %s18, 0
      %s327 = scalar_select %p326, %s18, 0
      %s328 = sadd.s32 %s327, %s325
      %s329 = scalar_lea.vmem %s2, %s328
      // Predicated region
      $region29: #{adcdnet_forward.18} parent=27 // pred_check
        %p330 = pneg %p99
      $region30: #{adcdnet_forward.18} parent=27 // pred_check_branch
        %332 = sbr.rel (%p330) target = $region32
      $region31: #{adcdnet_forward.18} parent=27 // pred_region
        _
      $region32: #{adcdnet_forward.18} parent=27 // pred_fallthru
        _
    $region28: #{adcdnet_forward.18} parent=5 // pred_fallthru
      _
    %p333 = scmp.le.s32.totalorder 2, %s8
    // Predicated region
    $region33: #{adcdnet_forward.18} parent=5 // pred_check
      %p334 = pneg %p333
    $region34: #{adcdnet_forward.18} parent=5 // pred_check_branch
      %336 = sbr.rel (%p334) target = $region36
    $region35: #{adcdnet_forward.18} parent=5 // pred_region
      %s337 = ssub.s32 %s8, 2
      // Predicated region
      $region37: #{adcdnet_forward.18} parent=35 // pred_check
        %p338 = pneg %p105
      $region38: #{adcdnet_forward.18} parent=35 // pred_check_branch
        %340 = sbr.rel (%p338) target = $region40
      $region39: #{adcdnet_forward.18} parent=35 // pred_region
        %p341 = scmp.lt.s32.totalorder %s19, 1
        %s342 = scalar_select %p341, %s19, 1
        %p343 = scmp.lt.s32.totalorder %s20, 0
        %s344 = scalar_select %p343, %s20, 0
        %s345 = sadd.s32 %s344, %s342
        %s346 = scalar_lea.vmem %s2, %s345
      $region40: #{adcdnet_forward.18} parent=35 // pred_fallthru
        _
    $region36: #{adcdnet_forward.18} parent=5 // pred_fallthru
      _
  $region6: #{adcdnet_forward.18} parent=0 // loop_footer
    %s12 = sadd.s32 1, %s8
  $region7: #{adcdnet_forward.18} parent=0 // loop_footer_branch
    %7 = sbr.rel target = $region3
  $region8: #{adcdnet_forward.18} parent=0 // loop_exit
    _

// kernel: adcdnet_forward.17
$region0: #{adcdnet_forward.17}
  #allocation0 [shape = 'u32[]', space=smem, size = 0x4, offset = 0x4, fixed_abs, tag = 'smem constant byte address 0x4 - core index']
  #allocation1 [shape = 'u32[72,128]{1,0:T(1,128)}', space=vmem, size = 0x9000, scoped, tag = 'internal scratch']
  %s0 = inlined_call_operand.vmem [shape: bf16[2,64,96], index: 0, kind: input, shape index: {}]
  %s1 = inlined_call_operand.vmem [shape: f32[2,1,64], index: 1, kind: input, shape index: {}]
  %s2 = inlined_call_operand.vmem [shape: f32[2,1,96], index: 2, kind: output, shape index: {0}]
  %s3 = inlined_call_operand.vmem [shape: f32[2,1,1], index: 3, kind: output, shape index: {1}]
  %4 = xla_tuple %s2, %s3
  %s5 = sld [smem:[#allocation0]]
  $region53: #{adcdnet_forward.17} parent=0
    _
  %s7 = ssub.s32 1, %s5
  %s8 = scalar_select 0, %s7, %s5
  loop: start=0, step=1, limit=4
  $region2: #{adcdnet_forward.17} parent=0 // loop_pre_header
    _
  $region3: #{adcdnet_forward.17} parent=0 // loop_header
    %s10 = sphi 0, %s14
    %p11 = scmp.ge.s32.totalorder %s10, 4
    %s17 = sphi 0, %s29
    %s18 = sphi 0, %s25
    %s19 = sphi 0, %s17
    %s20 = sphi 0, %s18
    %s21 = sphi 0, %s19
    %s22 = sphi 0, %s20
    %s34 = sphi 0, %s36
    %s37 = sphi 0, %s34
    %s38 = sphi 0, %s37
    %s54 = sphi 0, %s38
    %s62 = sphi 0, %s64
    %s65 = sphi 0, %s62
    %s66 = sphi 0, %s65
    %s82 = sphi 0, %s66
    %s88 = sphi 0, %s90
    %s91 = sphi 0, %s88
    %s92 = sphi 0, %s91
    %s108 = sphi 0, %s92
    %s114 = sphi 0, %s116
    %s117 = sphi 0, %s114
    %s118 = sphi 0, %s117
    %s134 = sphi 0, %s118
  $region4: #{adcdnet_forward.17} parent=0 // loop_header_branch
    %13 = sbr.rel (%p11) target = $region8
  $region5: #{adcdnet_forward.17} parent=0 // loop_body
    %s15 = ssub.s32 %s10, 1
    %s16 = ssub.s32 %s10, 2
    %s23 = sadd.s32 1, %s18
    %p24 = scmp.ge.s32.totalorder %s23, 1
    %s25 = scalar_select %p24, 0, %s23
    %s26 = sadd.s32 1, %s17
    %s27 = scalar_select %p24, %s26, %s17
    %p28 = scmp.ge.s32.totalorder %s27, 2
    %s29 = scalar_select %p28, 0, %s27
    %s30 = ssub.s32 %s17, %s29
    %s31 = ssub.s32 %s18, %s25
    %s32 = sor.u32 %s30, %s31
    %p33 = scmp.eq.s32.totalorder %s32, 0
    %s35 = sadd.s32 %s34, 1
    %s36 = scalar_select %p33, %s34, %s35
    %p39 = pneg %p33
    %p40 = scmp.eq.s32.totalorder %s10, 1
    %p41 = por %p39, %p40
    %p42 = scmp.ne.s32.totalorder %s34, %s37
    %p43 = scmp.eq.s32.totalorder %s10, 0
    %p44 = por %p42, %p43
    %p45 = scmp.ne.s32.totalorder %s34, %s37
    %p46 = scmp.eq.s32.totalorder %s15, 1
    %p47 = por %p45, %p46
    %p48 = scmp.ne.s32.totalorder %s37, %s38
    %p49 = scmp.eq.s32.totalorder %s15, 0
    %p50 = por %p48, %p49
    %p51 = scmp.ne.s32.totalorder %s37, %s38
    %p52 = scmp.eq.s32.totalorder %s16, 1
    %p53 = por %p51, %p52
    %p55 = scmp.ne.s32.totalorder %s38, %s54
    %p56 = scmp.eq.s32.totalorder %s16, 0
    %p57 = por %p55, %p56
    %s58 = ssub.s32 %s17, %s29
    %s59 = ssub.s32 %s18, %s25
    %s60 = sor.u32 %s58, %s59
    %p61 = scmp.eq.s32.totalorder %s60, 0
    %s63 = sadd.s32 %s62, 1
    %s64 = scalar_select %p61, %s62, %s63
    %p67 = pneg %p61
    %p68 = scmp.eq.s32.totalorder %s10, 1
    %p69 = por %p67, %p68
    %p70 = scmp.ne.s32.totalorder %s62, %s65
    %p71 = scmp.eq.s32.totalorder %s10, 0
    %p72 = por %p70, %p71
    %p73 = scmp.ne.s32.totalorder %s62, %s65
    %p74 = scmp.eq.s32.totalorder %s15, 1
    %p75 = por %p73, %p74
    %p76 = scmp.ne.s32.totalorder %s65, %s66
    %p77 = scmp.eq.s32.totalorder %s15, 0
    %p78 = por %p76, %p77
    %p79 = scmp.ne.s32.totalorder %s65, %s66
    %p80 = scmp.eq.s32.totalorder %s16, 1
    %p81 = por %p79, %p80
    %p83 = scmp.ne.s32.totalorder %s66, %s82
    %p84 = scmp.eq.s32.totalorder %s16, 0
    %p85 = por %p83, %p84
    %s86 = ssub.s32 %s17, %s29
    %p87 = scmp.eq.s32.totalorder %s86, 0
    %s89 = sadd.s32 %s88, 1
    %s90 = scalar_select %p87, %s88, %s89
    %p93 = pneg %p87
    %p94 = scmp.eq.s32.totalorder %s10, 1
    %p95 = por %p93, %p94
    %p96 = scmp.ne.s32.totalorder %s88, %s91
    %p97 = scmp.eq.s32.totalorder %s10, 0
    %p98 = por %p96, %p97
    %p99 = scmp.ne.s32.totalorder %s88, %s91
    %p100 = scmp.eq.s32.totalorder %s15, 1
    %p101 = por %p99, %p100
    %p102 = scmp.ne.s32.totalorder %s91, %s92
    %p103 = scmp.eq.s32.totalorder %s15, 0
    %p104 = por %p102, %p103
    %p105 = scmp.ne.s32.totalorder %s91, %s92
    %p106 = scmp.eq.s32.totalorder %s16, 1
    %p107 = por %p105, %p106
    %p109 = scmp.ne.s32.totalorder %s92, %s108
    %p110 = scmp.eq.s32.totalorder %s16, 0
    %p111 = por %p109, %p110
    %s112 = ssub.s32 %s17, %s29
    %p113 = scmp.eq.s32.totalorder %s112, 0
    %s115 = sadd.s32 %s114, 1
    %s116 = scalar_select %p113, %s114, %s115
    %p119 = pneg %p113
    %p120 = scmp.eq.s32.totalorder %s10, 1
    %p121 = por %p119, %p120
    %p122 = scmp.ne.s32.totalorder %s114, %s117
    %p123 = scmp.eq.s32.totalorder %s10, 0
    %p124 = por %p122, %p123
    %p125 = scmp.ne.s32.totalorder %s114, %s117
    %p126 = scmp.eq.s32.totalorder %s15, 1
    %p127 = por %p125, %p126
    %p128 = scmp.ne.s32.totalorder %s117, %s118
    %p129 = scmp.eq.s32.totalorder %s15, 0
    %p130 = por %p128, %p129
    %p131 = scmp.ne.s32.totalorder %s117, %s118
    %p132 = scmp.eq.s32.totalorder %s16, 1
    %p133 = por %p131, %p132
    %p135 = scmp.ne.s32.totalorder %s118, %s134
    %p136 = scmp.eq.s32.totalorder %s16, 0
    %p137 = por %p135, %p136
    %p138 = scmp.le.s32.totalorder 1, %s10
    %p139 = scmp.lt.s32.totalorder %s10, 3
    %p140 = pnand %p138, %p139
    %p141 = pneg %p140
    // Predicated region
    $region9: #{adcdnet_forward.17} parent=5 // pred_check
      _
    $region10: #{adcdnet_forward.17} parent=5 // pred_check_branch
      %143 = sbr.rel (%p140) target = $region12
    $region11: #{adcdnet_forward.17} parent=5 // pred_region
      %s144 = ssub.s32 %s10, 1
    $region12: #{adcdnet_forward.17} parent=5 // pred_fallthru
      _
    %p145 = scmp.lt.s32.totalorder %s10, 2
    // Predicated region
    $region13: #{adcdnet_forward.17} parent=5 // pred_check
      %p146 = pneg %p145
    $region14: #{adcdnet_forward.17} parent=5 // pred_check_branch
      %148 = sbr.rel (%p146) target = $region16
    $region15: #{adcdnet_forward.17} parent=5 // pred_region
      // Predicated region
      $region17: #{adcdnet_forward.17} parent=15 // pred_check
        %p149 = pneg %p44
      $region18: #{adcdnet_forward.17} parent=15 // pred_check_branch
        %151 = sbr.rel (%p149) target = $region20
      $region19: #{adcdnet_forward.17} parent=15 // pred_region
        %s152 = smul.u32 8, %s18
        %p153 = scmp.lt.s32.totalorder %s17, 1
        %s154 = scalar_select %p153, %s17, 1
        %p155 = scmp.lt.s32.totalorder %s152, 7
        %s156 = scalar_select %p155, %s152, 7
        %s157 = smul.addr %s154, 8
        %s158 = sadd.s32 %s156, %s157
        %s159 = smul.addr %s158, 4
        %s160 = scalar_lea.vmem %s0, %s159
        %s161 = smul.u32 8, %s18
      $region20: #{adcdnet_forward.17} parent=15 // pred_fallthru
        _
      // Predicated region
      $region21: #{adcdnet_forward.17} parent=15 // pred_check
        %p162 = pneg %p72
      $region22: #{adcdnet_forward.17} parent=15 // pred_check_branch
        %164 = sbr.rel (%p162) target = $region24
      $region23: #{adcdnet_forward.17} parent=15 // pred_region
        %p165 = scmp.lt.s32.totalorder %s17, 1
        %s166 = scalar_select %p165, %s17, 1
        %p167 = scmp.lt.s32.totalorder %s18, 0
        %s168 = scalar_select %p167, %s18, 0
        %s169 = sadd.s32 %s168, %s166
        %s170 = scalar_lea.vmem %s1, %s169
      $region24: #{adcdnet_forward.17} parent=15 // pred_fallthru
        _
    $region16: #{adcdnet_forward.17} parent=5 // pred_fallthru
      _
    %p171 = scmp.le.s32.totalorder 1, %s10
    %p172 = scmp.lt.s32.totalorder %s10, 3
    %p173 = pnand %p171, %p172
    %p174 = pneg %p173
    // Predicated region
    $region25: #{adcdnet_forward.17} parent=5 // pred_check
      _
    $region26: #{adcdnet_forward.17} parent=5 // pred_check_branch
      %176 = sbr.rel (%p173) target = $region28
    $region27: #{adcdnet_forward.17} parent=5 // pred_region
      %s177 = ssub.s32 %s10, 1
      %s178 = smul.u32 8, %s20
      %p179 = scmp.lt.s32.totalorder %s19, 1
      %s180 = scalar_select %p179, %s19, 1
      %p181 = scmp.lt.s32.totalorder %s178, 7
      %s182 = scalar_select %p181, %s178, 7
      %s183 = smul.addr %s180, 8
      %s184 = sadd.s32 %s182, %s183
      %s185 = smul.addr %s184, 4
      %s186 = scalar_lea.vmem %s0, %s185
      %p187 = pneg %p50
      %p188 = pneg %p47
      %p189 = scmp.lt.s32.totalorder %s19, 1
      %s190 = scalar_select %p189, %s19, 1
      %p191 = scmp.lt.s32.totalorder %s20, 0
      %s192 = scalar_select %p191, %s20, 0
      %s193 = sadd.s32 %s192, %s190
      %s194 = scalar_lea.vmem %s1, %s193
      %p195 = pneg %p78
      %p196 = pneg %p75
      %p197 = pneg %p104
      %p198 = pneg %p101
      %p199 = scmp.lt.s32.totalorder %s19, 1
      %s200 = scalar_select %p199, %s19, 1
      %s201 = scalar_lea.vmem %s2, %s200
      %p202 = pneg %p130
      %p203 = pneg %p127
      %p204 = scmp.lt.s32.totalorder %s19, 1
      %s205 = scalar_select %p204, %s19, 1
      %s206 = scalar_lea.vmem %s3, %s205
      %s207 = smul.u32 8, %s20
      %p208 = scmp.lt.s32.totalorder %s19, 1
      %s209 = scalar_select %p208, %s19, 1
      %p210 = scmp.lt.s32.totalorder %s207, 7
      %s211 = scalar_select %p210, %s207, 7
      %s212 = smul.addr %s209, 8
      %s213 = sadd.s32 %s211, %s212
      %s214 = smul.addr %s213, 4
      %s215 = scalar_lea.vmem %s0, %s214
      %s216 = smul.u32 8, %s20
      %p217 = scmp.lt.s32.totalorder %s19, 1
      %s218 = scalar_select %p217, %s19, 1
      %p219 = scmp.lt.s32.totalorder %s20, 0
      %s220 = scalar_select %p219, %s20, 0
      %s221 = sadd.s32 %s220, %s218
      %s222 = scalar_lea.vmem %s1, %s221
      %p223 = scmp.lt.s32.totalorder %s19, 1
      %s224 = scalar_select %p223, %s19, 1
      %s225 = scalar_lea.vmem %s2, %s224
      %p226 = scmp.lt.s32.totalorder %s19, 1
      %s227 = scalar_select %p226, %s19, 1
      %s228 = scalar_lea.vmem %s3, %s227
      %p229 = scmp.eq.s32.totalorder %s20, 0
      // Predicated region
      $region29: #{adcdnet_forward.17} parent=27 // pred_check
        %p230 = pneg %p229
      $region30: #{adcdnet_forward.17} parent=27 // pred_check_branch
        %232 = sbr.rel (%p230) target = $region32
      $region31: #{adcdnet_forward.17} parent=27 // pred_region
        %vm233 = vcmask 778240
        %234 = vst.msk [vmem:[%s225] sm:$0x1] %vm233, 0.0
        %vm235 = vcmask 0
        %236 = vst.msk [vmem:[%s228] sm:$0x1] %vm235, 0.0
      $region32: #{adcdnet_forward.17} parent=27 // pred_fallthru
        _
      %v237 = vld [vmem:[%s215] sm:$0xf]
      %v238 = vld [vmem:[%s215 + $0x4] sm:$0xf]
      %v239 = vld [vmem:[%s215 + $0x8] sm:$0xf]
      %v240 = vld [vmem:[%s215 + $0xc] sm:$0xf]
      %v241 = vld [vmem:[%s215 + $0x10] sm:$0xf]
      %v242 = vld [vmem:[%s215 + $0x14] sm:$0xf]
      %v243 = vld [vmem:[%s215 + $0x18] sm:$0xf]
      %v244 = vld [vmem:[%s215 + $0x1c] sm:$0xf]
      %v245 = vunpack.c.l.bf16 %v237
      %v246 = vunpack.c.l.bf16 %v238
      %v247 = vunpack.c.l.bf16 %v239
      %v248 = vunpack.c.l.bf16 %v240
      %v249 = vunpack.c.l.bf16 %v241
      %v250 = vunpack.c.l.bf16 %v242
      %v251 = vunpack.c.l.bf16 %v243
      %v252 = vunpack.c.l.bf16 %v244
      %v253 = vld [vmem:[%s222] sm:$0x1]
      %vm254 = vcmp.eq.f32.partialorder %v253, 0.0
      %v255 = vsel %vm254, 1, 0
      %v256 = vcvt.s32.f32 %v255
      %v257 = vmul.f32 %v245, %v245
      %v258 = vmul.f32 %v246, %v246
      %v259 = vmul.f32 %v247, %v247
      %v260 = vmul.f32 %v248, %v248
      %v261 = vmul.f32 %v249, %v249
      %v262 = vmul.f32 %v250, %v250
      %v263 = vmul.f32 %v251, %v251
      %v264 = vmul.f32 %v252, %v252
      %vm265 = vcmask 785408
      %v267 = vsel %vm265, 1.0, 0
      %v270 = vsel %vm265, %v257, 0
      %v273 = vsel %vm265, %v258, 0
      %v276 = vsel %vm265, %v259, 0
      %v279 = vsel %vm265, %v260, 0
      %v282 = vsel %vm265, %v261, 0
      %v285 = vsel %vm265, %v262, 0
      %v288 = vsel %vm265, %v263, 0
      %v291 = vsel %vm265, %v264, 0
      %293 = vmatpush.xpose.msra.mxu0 0.0
      %294 = vmatpush.xpose.msra.mxu0 0.0
      %295 = vmatpush.xpose.msra.mxu0 0.0
      %296 = vmatpush.xpose.msra.mxu0 0.0
      %297 = vmatpush.xpose.msra.mxu0 0.0
      %298 = vmatpush.xpose.msra.mxu0 0.0
      %299 = vmatpush.xpose.msra.mxu0 0.0
      %300 = vmatpush.xpose.msra.mxu0 0.0
      %301 = vmatpush.xpose.msra.mxu0 %v291
      %302 = vmatpush.xpose.msra.mxu0 %v288
      %303 = vmatpush.xpose.msra.mxu0 %v285
      %304 = vmatpush.xpose.msra.mxu0 %v282
      %305 = vmatpush.xpose.msra.mxu0 %v279
      %306 = vmatpush.xpose.msra.mxu0 %v276
      %307 = vmatpush.xpose.msra.mxu0 %v273
      %308 = vmatpush.xpose.msra.mxu0 %v270
      %309 = vmatmul.f32.gmra.mxu0 %v267
      %v310 = vpop.f32.mrf.mxu0
      %v311 = vadd.f32 0.0, %v310
      %312 = vdwg.mxu0
      %v313 = vmax.f32 %v311, 1e-24
      %v314 = vrsqrt.pop %v313
      %v315 = vmul.f32 %v314, %v313
      %v316 = vmul.f32 %v315, %v314
      %v317 = vmul.f32 0.5, %v316
      %v318 = vsub.f32 1.5, %v317
      %v319 = vmul.f32 %v314, %v318
      %vm320 = vweird.f32 %v313
      %vm321 = vweird.f32 %v314
      %vm322 = vmor %vm320, %vm321
      %v323 = vsel %vm322, %v314, %v319
      %v324 = vmul.f32 %v256, %v323
      %v325 = vld [vmem:[%s225] sm:$0x1]
      %vm326 = vcmask 523264
      %v328 = vsel %vm326, %v324, 0
      %330 = vmatpush.msra.mxu0 0.0
      %331 = vmatpush.msra.mxu0 0.0
      %332 = vmatpush.msra.mxu0 0.0
      %333 = vmatpush.msra.mxu0 0.0
      %334 = vmatpush.msra.mxu0 0.0
      %335 = vmatpush.msra.mxu0 0.0
      %336 = vmatpush.msra.mxu0 0.0
      %337 = vmatpush.msra.mxu0 0.0
      %338 = vmatpush.msra.mxu0 %v252
      %339 = vmatpush.msra.mxu0 %v251
      %340 = vmatpush.msra.mxu0 %v250
      %341 = vmatpush.msra.mxu0 %v249
      %342 = vmatpush.msra.mxu0 %v248
      %343 = vmatpush.msra.mxu0 %v247
      %344 = vmatpush.msra.mxu0 %v246
      %345 = vmatpush.msra.mxu0 %v245
      %346 = vmatmul.f32.gmra.mxu0 %v328
      %v347 = vpop.f32.mrf.mxu0
      %v348 = vadd.f32 0.0, %v347
      %349 = vdwg.mxu0
      %v350 = vadd.f32 %v325, %v348
      %vm351 = vcmask 778240
      %352 = vst.msk [vmem:[%s225] sm:$0x1] %vm351, %v350
      %v353 = vld [vmem:[%s228] sm:$0x1]
      %vm354 = vcmask 516096
      %v355 = vsel %vm354, %v256, 0.0
      %356 = vadd.xlane.f32.xlu0 %v355
      %v357 = vpop.xlane.xlu0 %356
      %v358 = vadd.f32 %v353, %v357
      %vm359 = vcmask 0
      %360 = vst.msk [vmem:[%s228] sm:$0x1] %vm359, %v358
      %p361 = scmp.lt.s32.totalorder %s19, 1
      %s362 = scalar_select %p361, %s19, 1
      %s363 = scalar_lea.vmem %s2, %s362
      %p364 = scmp.lt.s32.totalorder %s19, 1
      %s365 = scalar_select %p364, %s19, 1
      %s366 = scalar_lea.vmem %s3, %s365
      // Predicated region
      $region33: #{adcdnet_forward.17} parent=27 // pred_check
        %p367 = pneg %p101
      $region34: #{adcdnet_forward.17} parent=27 // pred_check_branch
        %369 = sbr.rel (%p367) target = $region36
      $region35: #{adcdnet_forward.17} parent=27 // pred_region
        _
      $region36: #{adcdnet_forward.17} parent=27 // pred_fallthru
        _
      // Predicated region
      $region37: #{adcdnet_forward.17} parent=27 // pred_check
        %p370 = pneg %p127
      $region38: #{adcdnet_forward.17} parent=27 // pred_check_branch
        %372 = sbr.rel (%p370) target = $region40
      $region39: #{adcdnet_forward.17} parent=27 // pred_region
        _
      $region40: #{adcdnet_forward.17} parent=27 // pred_fallthru
        _
    $region28: #{adcdnet_forward.17} parent=5 // pred_fallthru
      _
    %p373 = scmp.le.s32.totalorder 2, %s10
    // Predicated region
    $region41: #{adcdnet_forward.17} parent=5 // pred_check
      %p374 = pneg %p373
    $region42: #{adcdnet_forward.17} parent=5 // pred_check_branch
      %376 = sbr.rel (%p374) target = $region44
    $region43: #{adcdnet_forward.17} parent=5 // pred_region
      %s377 = ssub.s32 %s10, 2
      // Predicated region
      $region45: #{adcdnet_forward.17} parent=43 // pred_check
        %p378 = pneg %p107
      $region46: #{adcdnet_forward.17} parent=43 // pred_check_branch
        %380 = sbr.rel (%p378) target = $region48
      $region47: #{adcdnet_forward.17} parent=43 // pred_region
        %p381 = scmp.lt.s32.totalorder %s21, 1
        %s382 = scalar_select %p381, %s21, 1
        %s383 = scalar_lea.vmem %s2, %s382
      $region48: #{adcdnet_forward.17} parent=43 // pred_fallthru
        _
      // Predicated region
      $region49: #{adcdnet_forward.17} parent=43 // pred_check
        %p384 = pneg %p133
      $region50: #{adcdnet_forward.17} parent=43 // pred_check_branch
        %386 = sbr.rel (%p384) target = $region52
      $region51: #{adcdnet_forward.17} parent=43 // pred_region
        %p387 = scmp.lt.s32.totalorder %s21, 1
        %s388 = scalar_select %p387, %s21, 1
        %s389 = scalar_lea.vmem %s3, %s388
      $region52: #{adcdnet_forward.17} parent=43 // pred_fallthru
        _
    $region44: #{adcdnet_forward.17} parent=5 // pred_fallthru
      _
  $region6: #{adcdnet_forward.17} parent=0 // loop_footer
    %s14 = sadd.s32 1, %s10
  $region7: #{adcdnet_forward.17} parent=0 // loop_footer_branch
    %9 = sbr.rel target = $region3
  $region8: #{adcdnet_forward.17} parent=0 // loop_exit
    _

// kernel: adcdnet_forward.24
$region0: #{adcdnet_forward.24}
  #allocation0 [shape = 'u32[]', space=smem, size = 0x4, offset = 0x4, fixed_abs, tag = 'smem constant byte address 0x4 - core index']
  #allocation1 [shape = 'u32[72,128]{1,0:T(1,128)}', space=vmem, size = 0x9000, scoped, tag = 'internal scratch']
  %s0 = inlined_call_operand.vmem [shape: bf16[128,96], index: 0, kind: input, shape index: {}]
  %s1 = inlined_call_operand.vmem [shape: f32[96,48], index: 1, kind: input, shape index: {}]
  %s2 = inlined_call_operand.vmem [shape: f32[1,48], index: 2, kind: input, shape index: {}]
  %s3 = inlined_call_operand.vmem [shape: f32[32,48], index: 3, kind: input, shape index: {}]
  %s4 = inlined_call_operand.vmem [shape: f32[32,1], index: 4, kind: input, shape index: {}]
  %s5 = inlined_call_operand.vmem [shape: bf16[32,128], index: 5, kind: output, shape index: {}]
  %s6 = sld [smem:[#allocation0]]
  $region30: #{adcdnet_forward.24} parent=0
    _
  %s8 = ssub.s32 1, %s6
  %s9 = scalar_select 0, %s8, %s6
  // Predicated region
  $region2: #{adcdnet_forward.24} parent=0 // pred_check
    _
  $region3: #{adcdnet_forward.24} parent=0 // pred_check_branch
    %11 = sbr.rel (0) target = $region5
  $region4: #{adcdnet_forward.24} parent=0 // pred_region
    _
  $region5: #{adcdnet_forward.24} parent=0 // pred_fallthru
    _
  // Predicated region
  $region6: #{adcdnet_forward.24} parent=0 // pred_check
    _
  $region7: #{adcdnet_forward.24} parent=0 // pred_check_branch
    %13 = sbr.rel (0) target = $region9
  $region8: #{adcdnet_forward.24} parent=0 // pred_region
    _
  $region9: #{adcdnet_forward.24} parent=0 // pred_fallthru
    _
  // Predicated region
  $region10: #{adcdnet_forward.24} parent=0 // pred_check
    _
  $region11: #{adcdnet_forward.24} parent=0 // pred_check_branch
    %15 = sbr.rel (0) target = $region13
  $region12: #{adcdnet_forward.24} parent=0 // pred_region
    _
  $region13: #{adcdnet_forward.24} parent=0 // pred_fallthru
    _
  // Predicated region
  $region14: #{adcdnet_forward.24} parent=0 // pred_check
    _
  $region15: #{adcdnet_forward.24} parent=0 // pred_check_branch
    %17 = sbr.rel (0) target = $region17
  $region16: #{adcdnet_forward.24} parent=0 // pred_region
    _
  $region17: #{adcdnet_forward.24} parent=0 // pred_fallthru
    _
  // Predicated region
  $region18: #{adcdnet_forward.24} parent=0 // pred_check
    _
  $region19: #{adcdnet_forward.24} parent=0 // pred_check_branch
    %19 = sbr.rel (0) target = $region21
  $region20: #{adcdnet_forward.24} parent=0 // pred_region
    _
  $region21: #{adcdnet_forward.24} parent=0 // pred_fallthru
    _
  %v20 = vld [vmem:[%s0] sm:$0xf]
  %v21 = vld [vmem:[%s0 + $0x4] sm:$0xf]
  %v22 = vld [vmem:[%s0 + $0x8] sm:$0xf]
  %v23 = vld [vmem:[%s0 + $0xc] sm:$0xf]
  %v24 = vld [vmem:[%s0 + $0x10] sm:$0xf]
  %v25 = vld [vmem:[%s0 + $0x14] sm:$0xf]
  %v26 = vld [vmem:[%s0 + $0x18] sm:$0xf]
  %v27 = vld [vmem:[%s0 + $0x1c] sm:$0xf]
  %v28 = vld [vmem:[%s0 + $0x20] sm:$0xf]
  %v29 = vld [vmem:[%s0 + $0x24] sm:$0xf]
  %v30 = vld [vmem:[%s0 + $0x28] sm:$0xf]
  %v31 = vld [vmem:[%s0 + $0x2c] sm:$0xf]
  %v32 = vld [vmem:[%s0 + $0x30] sm:$0xf]
  %v33 = vld [vmem:[%s0 + $0x34] sm:$0xf]
  %v34 = vld [vmem:[%s0 + $0x38] sm:$0xf]
  %v35 = vld [vmem:[%s0 + $0x3c] sm:$0xf]
  %v36 = vunpack.c.l.bf16 %v20
  %v37 = vunpack.c.l.bf16 %v21
  %v38 = vunpack.c.l.bf16 %v22
  %v39 = vunpack.c.l.bf16 %v23
  %v40 = vunpack.c.l.bf16 %v24
  %v41 = vunpack.c.l.bf16 %v25
  %v42 = vunpack.c.l.bf16 %v26
  %v43 = vunpack.c.l.bf16 %v27
  %v44 = vunpack.c.l.bf16 %v28
  %v45 = vunpack.c.l.bf16 %v29
  %v46 = vunpack.c.l.bf16 %v30
  %v47 = vunpack.c.l.bf16 %v31
  %v48 = vunpack.c.l.bf16 %v32
  %v49 = vunpack.c.l.bf16 %v33
  %v50 = vunpack.c.l.bf16 %v34
  %v51 = vunpack.c.l.bf16 %v35
  %v52 = vld [vmem:[%s1] sm:$0xff]
  %v53 = vld [vmem:[%s1 + $0x8] sm:$0xff]
  %v54 = vld [vmem:[%s1 + $0x10] sm:$0xff]
  %v55 = vld [vmem:[%s1 + $0x18] sm:$0xff]
  %v56 = vld [vmem:[%s1 + $0x20] sm:$0xff]
  %v57 = vld [vmem:[%s1 + $0x28] sm:$0xff]
  %v58 = vld [vmem:[%s1 + $0x30] sm:$0xff]
  %v59 = vld [vmem:[%s1 + $0x38] sm:$0xff]
  %v60 = vld [vmem:[%s1 + $0x40] sm:$0xff]
  %v61 = vld [vmem:[%s1 + $0x48] sm:$0xff]
  %v62 = vld [vmem:[%s1 + $0x50] sm:$0xff]
  %v63 = vld [vmem:[%s1 + $0x58] sm:$0xff]
  %v64 = vld [vmem:[%s2] sm:$0x1]
  %v66 = vperm.slane %v64, 0
  %vm68 = vcmask 785408
  %v70 = vsel %vm68, %v36, 0
  %v73 = vsel %vm68, %v37, 0
  %v76 = vsel %vm68, %v38, 0
  %v79 = vsel %vm68, %v39, 0
  %v82 = vsel %vm68, %v40, 0
  %v85 = vsel %vm68, %v41, 0
  %v88 = vsel %vm68, %v42, 0
  %v91 = vsel %vm68, %v43, 0
  %v94 = vsel %vm68, %v44, 0
  %v97 = vsel %vm68, %v45, 0
  %v100 = vsel %vm68, %v46, 0
  %v103 = vsel %vm68, %v47, 0
  %v106 = vsel %vm68, %v48, 0
  %v109 = vsel %vm68, %v49, 0
  %v112 = vsel %vm68, %v50, 0
  %v115 = vsel %vm68, %v51, 0
  %117 = vmatpush.msra.mxu0 0.0
  %118 = vmatpush.msra.mxu0 0.0
  %119 = vmatpush.msra.mxu0 0.0
  %120 = vmatpush.msra.mxu0 0.0
  %121 = vmatpush.msra.mxu0 %v63
  %122 = vmatpush.msra.mxu0 %v62
  %123 = vmatpush.msra.mxu0 %v61
  %124 = vmatpush.msra.mxu0 %v60
  %125 = vmatpush.msra.mxu0 %v59
  %126 = vmatpush.msra.mxu0 %v58
  %127 = vmatpush.msra.mxu0 %v57
  %128 = vmatpush.msra.mxu0 %v56
  %129 = vmatpush.msra.mxu0 %v55
  %130 = vmatpush.msra.mxu0 %v54
  %131 = vmatpush.msra.mxu0 %v53
  %132 = vmatpush.msra.mxu0 %v52
  %133 = vmatmul.f32.gmra.mxu0 %v70
  %v134 = vpop.f32.mrf.mxu0
  %v135 = vadd.f32 %v66, %v134
  %136 = vmatmul.f32.gmra.mxu0 %v73
  %v137 = vpop.f32.mrf.mxu0
  %v138 = vadd.f32 %v66, %v137
  %139 = vmatmul.f32.gmra.mxu0 %v76
  %v140 = vpop.f32.mrf.mxu0
  %v141 = vadd.f32 %v66, %v140
  %142 = vmatmul.f32.gmra.mxu0 %v79
  %v143 = vpop.f32.mrf.mxu0
  %v144 = vadd.f32 %v66, %v143
  %145 = vmatmul.f32.gmra.mxu0 %v82
  %v146 = vpop.f32.mrf.mxu0
  %v147 = vadd.f32 %v66, %v146
  %148 = vmatmul.f32.gmra.mxu0 %v85
  %v149 = vpop.f32.mrf.mxu0
  %v150 = vadd.f32 %v66, %v149
  %151 = vmatmul.f32.gmra.mxu0 %v88
  %v152 = vpop.f32.mrf.mxu0
  %v153 = vadd.f32 %v66, %v152
  %154 = vmatmul.f32.gmra.mxu0 %v91
  %v155 = vpop.f32.mrf.mxu0
  %v156 = vadd.f32 %v66, %v155
  %157 = vmatmul.f32.gmra.mxu0 %v94
  %v158 = vpop.f32.mrf.mxu0
  %v159 = vadd.f32 %v66, %v158
  %160 = vmatmul.f32.gmra.mxu0 %v97
  %v161 = vpop.f32.mrf.mxu0
  %v162 = vadd.f32 %v66, %v161
  %163 = vmatmul.f32.gmra.mxu0 %v100
  %v164 = vpop.f32.mrf.mxu0
  %v165 = vadd.f32 %v66, %v164
  %166 = vmatmul.f32.gmra.mxu0 %v103
  %v167 = vpop.f32.mrf.mxu0
  %v168 = vadd.f32 %v66, %v167
  %169 = vmatmul.f32.gmra.mxu0 %v106
  %v170 = vpop.f32.mrf.mxu0
  %v171 = vadd.f32 %v66, %v170
  %172 = vmatmul.f32.gmra.mxu0 %v109
  %v173 = vpop.f32.mrf.mxu0
  %v174 = vadd.f32 %v66, %v173
  %175 = vmatmul.f32.gmra.mxu0 %v112
  %v176 = vpop.f32.mrf.mxu0
  %v177 = vadd.f32 %v66, %v176
  %178 = vmatmul.f32.gmra.mxu0 %v115
  %v179 = vpop.f32.mrf.mxu0
  %v180 = vadd.f32 %v66, %v179
  %181 = vdwg.mxu0
  %v182 = vmul.f32 %v135, 0.5
  %v183 = vmul.f32 %v138, 0.5
  %v184 = vmul.f32 %v141, 0.5
  %v185 = vmul.f32 %v144, 0.5
  %v186 = vmul.f32 %v147, 0.5
  %v187 = vmul.f32 %v150, 0.5
  %v188 = vmul.f32 %v153, 0.5
  %v189 = vmul.f32 %v156, 0.5
  %v190 = vmul.f32 %v159, 0.5
  %v191 = vmul.f32 %v162, 0.5
  %v192 = vmul.f32 %v165, 0.5
  %v193 = vmul.f32 %v168, 0.5
  %v194 = vmul.f32 %v171, 0.5
  %v195 = vmul.f32 %v174, 0.5
  %v196 = vmul.f32 %v177, 0.5
  %v197 = vmul.f32 %v180, 0.5
  %v198 = vmul.f32 %v135, 0.044715
  %v199 = vmul.f32 %v138, 0.044715
  %v200 = vmul.f32 %v141, 0.044715
  %v201 = vmul.f32 %v144, 0.044715
  %v202 = vmul.f32 %v147, 0.044715
  %v203 = vmul.f32 %v150, 0.044715
  %v204 = vmul.f32 %v153, 0.044715
  %v205 = vmul.f32 %v156, 0.044715
  %v206 = vmul.f32 %v159, 0.044715
  %v207 = vmul.f32 %v162, 0.044715
  %v208 = vmul.f32 %v165, 0.044715
  %v209 = vmul.f32 %v168, 0.044715
  %v210 = vmul.f32 %v171, 0.044715
  %v211 = vmul.f32 %v174, 0.044715
  %v212 = vmul.f32 %v177, 0.044715
  %v213 = vmul.f32 %v180, 0.044715
  %v214 = vmul.f32 %v198, %v135
  %v215 = vmul.f32 %v199, %v138
  %v216 = vmul.f32 %v200, %v141
  %v217 = vmul.f32 %v201, %v144
  %v218 = vmul.f32 %v202, %v147
  %v219 = vmul.f32 %v203, %v150
  %v220 = vmul.f32 %v204, %v153
  %v221 = vmul.f32 %v205, %v156
  %v222 = vmul.f32 %v206, %v159
  %v223 = vmul.f32 %v207, %v162
  %v224 = vmul.f32 %v208, %v165
  %v225 = vmul.f32 %v209, %v168
  %v226 = vmul.f32 %v210, %v171
  %v227 = vmul.f32 %v211, %v174
  %v228 = vmul.f32 %v212, %v177
  %v229 = vmul.f32 %v213, %v180
  %v230 = vmul.f32 %v214, %v135
  %v231 = vmul.f32 %v215, %v138
  %v232 = vmul.f32 %v216, %v141
  %v233 = vmul.f32 %v217, %v144
  %v234 = vmul.f32 %v218, %v147
  %v235 = vmul.f32 %v219, %v150
  %v236 = vmul.f32 %v220, %v153
  %v237 = vmul.f32 %v221, %v156
  %v238 = vmul.f32 %v222, %v159
  %v239 = vmul.f32 %v223, %v162
  %v240 = vmul.f32 %v224, %v165
  %v241 = vmul.f32 %v225, %v168
  %v242 = vmul.f32 %v226, %v171
  %v243 = vmul.f32 %v227, %v174
  %v244 = vmul.f32 %v228, %v177
  %v245 = vmul.f32 %v229, %v180
  %v246 = vadd.f32 %v135, %v230
  %v247 = vadd.f32 %v138, %v231
  %v248 = vadd.f32 %v141, %v232
  %v249 = vadd.f32 %v144, %v233
  %v250 = vadd.f32 %v147, %v234
  %v251 = vadd.f32 %v150, %v235
  %v252 = vadd.f32 %v153, %v236
  %v253 = vadd.f32 %v156, %v237
  %v254 = vadd.f32 %v159, %v238
  %v255 = vadd.f32 %v162, %v239
  %v256 = vadd.f32 %v165, %v240
  %v257 = vadd.f32 %v168, %v241
  %v258 = vadd.f32 %v171, %v242
  %v259 = vadd.f32 %v174, %v243
  %v260 = vadd.f32 %v177, %v244
  %v261 = vadd.f32 %v180, %v245
  %v262 = vmul.f32 %v246, 0.7978846
  %v263 = vmul.f32 %v247, 0.7978846
  %v264 = vmul.f32 %v248, 0.7978846
  %v265 = vmul.f32 %v249, 0.7978846
  %v266 = vmul.f32 %v250, 0.7978846
  %v267 = vmul.f32 %v251, 0.7978846
  %v268 = vmul.f32 %v252, 0.7978846
  %v269 = vmul.f32 %v253, 0.7978846
  %v270 = vmul.f32 %v254, 0.7978846
  %v271 = vmul.f32 %v255, 0.7978846
  %v272 = vmul.f32 %v256, 0.7978846
  %v273 = vmul.f32 %v257, 0.7978846
  %v274 = vmul.f32 %v258, 0.7978846
  %v275 = vmul.f32 %v259, 0.7978846
  %v276 = vmul.f32 %v260, 0.7978846
  %v277 = vmul.f32 %v261, 0.7978846
  %v278 = vtanh.pop %v262
  %v279 = vtanh.pop %v263
  %v280 = vtanh.pop %v264
  %v281 = vtanh.pop %v265
  %v282 = vtanh.pop %v266
  %v283 = vtanh.pop %v267
  %v284 = vtanh.pop %v268
  %v285 = vtanh.pop %v269
  %v286 = vtanh.pop %v270
  %v287 = vtanh.pop %v271
  %v288 = vtanh.pop %v272
  %v289 = vtanh.pop %v273
  %v290 = vtanh.pop %v274
  %v291 = vtanh.pop %v275
  %v292 = vtanh.pop %v276
  %v293 = vtanh.pop %v277
  %v294 = vadd.f32 %v278, 1.0
  %v295 = vadd.f32 %v279, 1.0
  %v296 = vadd.f32 %v280, 1.0
  %v297 = vadd.f32 %v281, 1.0
  %v298 = vadd.f32 %v282, 1.0
  %v299 = vadd.f32 %v283, 1.0
  %v300 = vadd.f32 %v284, 1.0
  %v301 = vadd.f32 %v285, 1.0
  %v302 = vadd.f32 %v286, 1.0
  %v303 = vadd.f32 %v287, 1.0
  %v304 = vadd.f32 %v288, 1.0
  %v305 = vadd.f32 %v289, 1.0
  %v306 = vadd.f32 %v290, 1.0
  %v307 = vadd.f32 %v291, 1.0
  %v308 = vadd.f32 %v292, 1.0
  %v309 = vadd.f32 %v293, 1.0
  %v310 = vmul.f32 %v182, %v294
  %v311 = vmul.f32 %v183, %v295
  %v312 = vmul.f32 %v184, %v296
  %v313 = vmul.f32 %v185, %v297
  %v314 = vmul.f32 %v186, %v298
  %v315 = vmul.f32 %v187, %v299
  %v316 = vmul.f32 %v188, %v300
  %v317 = vmul.f32 %v189, %v301
  %v318 = vmul.f32 %v190, %v302
  %v319 = vmul.f32 %v191, %v303
  %v320 = vmul.f32 %v192, %v304
  %v321 = vmul.f32 %v193, %v305
  %v322 = vmul.f32 %v194, %v306
  %v323 = vmul.f32 %v195, %v307
  %v324 = vmul.f32 %v196, %v308
  %v325 = vmul.f32 %v197, %v309
  %v326 = vld [vmem:[%s3] sm:$0xff]
  %v327 = vld [vmem:[%s3 + $0x8] sm:$0xff]
  %v328 = vld [vmem:[%s3 + $0x10] sm:$0xff]
  %v329 = vld [vmem:[%s3 + $0x18] sm:$0xff]
  %v330 = vld [vmem:[%s4] sm:$0xff]
  %v331 = vld [vmem:[%s4 + $0x8] sm:$0xff]
  %v332 = vld [vmem:[%s4 + $0x10] sm:$0xff]
  %v333 = vld [vmem:[%s4 + $0x18] sm:$0xff]
  %335 = vset.pattern.permute.xlu0 0
  %336 = vperm.xlu0 %335, %v330
  %v337 = vpop.permute.xlu0 %336
  %340 = vset.pattern.permute.xlu0 0
  %341 = vperm.xlu0 %340, %v331
  %v342 = vpop.permute.xlu0 %341
  %345 = vset.pattern.permute.xlu0 0
  %346 = vperm.xlu0 %345, %v332
  %v347 = vpop.permute.xlu0 %346
  %350 = vset.pattern.permute.xlu0 0
  %351 = vperm.xlu0 %350, %v333
  %v352 = vpop.permute.xlu0 %351
  %vm354 = vcmask 392192
  %v356 = vsel %vm354, %v326, 0
  %v359 = vsel %vm354, %v327, 0
  %v362 = vsel %vm354, %v328, 0
  %v365 = vsel %vm354, %v329, 0
  %v368 = vsel %vm354, %v310, 0
  %v371 = vsel %vm354, %v311, 0
  %v374 = vsel %vm354, %v312, 0
  %v377 = vsel %vm354, %v313, 0
  %v380 = vsel %vm354, %v314, 0
  %v383 = vsel %vm354, %v315, 0
  %v386 = vsel %vm354, %v316, 0
  %v389 = vsel %vm354, %v317, 0
  %v392 = vsel %vm354, %v318, 0
  %v395 = vsel %vm354, %v319, 0
  %v398 = vsel %vm354, %v320, 0
  %v401 = vsel %vm354, %v321, 0
  %v404 = vsel %vm354, %v322, 0
  %v407 = vsel %vm354, %v323, 0
  %v410 = vsel %vm354, %v324, 0
  %v413 = vsel %vm354, %v325, 0
  %415 = vmatpush.xpose.msra.mxu0 %v413
  %416 = vmatpush.xpose.msra.mxu0 %v410
  %417 = vmatpush.xpose.msra.mxu0 %v407
  %418 = vmatpush.xpose.msra.mxu0 %v404
  %419 = vmatpush.xpose.msra.mxu0 %v401
  %420 = vmatpush.xpose.msra.mxu0 %v398
  %421 = vmatpush.xpose.msra.mxu0 %v395
  %422 = vmatpush.xpose.msra.mxu0 %v392
  %423 = vmatpush.xpose.msra.mxu0 %v389
  %424 = vmatpush.xpose.msra.mxu0 %v386
  %425 = vmatpush.xpose.msra.mxu0 %v383
  %426 = vmatpush.xpose.msra.mxu0 %v380
  %427 = vmatpush.xpose.msra.mxu0 %v377
  %428 = vmatpush.xpose.msra.mxu0 %v374
  %429 = vmatpush.xpose.msra.mxu0 %v371
  %430 = vmatpush.xpose.msra.mxu0 %v368
  %431 = vmatmul.f32.gmra.mxu0 %v356
  %v432 = vpop.f32.mrf.mxu0
  %v433 = vadd.f32 %v337, %v432
  %434 = vmatmul.f32.gmra.mxu0 %v359
  %v435 = vpop.f32.mrf.mxu0
  %v436 = vadd.f32 %v342, %v435
  %437 = vmatmul.f32.gmra.mxu0 %v362
  %v438 = vpop.f32.mrf.mxu0
  %v439 = vadd.f32 %v347, %v438
  %440 = vmatmul.f32.gmra.mxu0 %v365
  %v441 = vpop.f32.mrf.mxu0
  %v442 = vadd.f32 %v352, %v441
  %443 = vdwg.mxu0
  %v444 = vpack.c.bf16 %v433, %v433
  %v445 = vpack.c.bf16 %v436, %v436
  %v446 = vpack.c.bf16 %v439, %v439
  %v447 = vpack.c.bf16 %v442, %v442
  %448 = vst [vmem:[%s5] sm:$0xf] %v444
  %449 = vst [vmem:[%s5 + $0x4] sm:$0xf] %v445
  %450 = vst [vmem:[%s5 + $0x8] sm:$0xf] %v446
  %451 = vst [vmem:[%s5 + $0xc] sm:$0xf] %v447
  // Predicated region
  $region22: #{adcdnet_forward.24} parent=0 // pred_check
    _
  $region23: #{adcdnet_forward.24} parent=0 // pred_check_branch
    %453 = sbr.rel (0) target = $region25
  $region24: #{adcdnet_forward.24} parent=0 // pred_region
    _
  $region25: #{adcdnet_forward.24} parent=0 // pred_fallthru
    _
  // Predicated region
  $region26: #{adcdnet_forward.24} parent=0 // pred_check
    _
  $region27: #{adcdnet_forward.24} parent=0 // pred_check_branch
    %455 = sbr.rel (0) target = $region29
  $region28: #{adcdnet_forward.24} parent=0 // pred_region
    _
  $region29: #{adcdnet_forward.24} parent=0 // pred_fallthru
    _

// kernel: adcdnet_forward.20
$region0: #{adcdnet_forward.20}
  #allocation0 [shape = 'u32[]', space=smem, size = 0x4, offset = 0x4, fixed_abs, tag = 'smem constant byte address 0x4 - core index']
  #allocation1 [shape = 'u32[72,128]{1,0:T(1,128)}', space=vmem, size = 0x9000, scoped, tag = 'internal scratch']
  %s0 = inlined_call_operand.vmem [shape: bf16[2,256,96], index: 0, kind: input, shape index: {}]
  %s1 = inlined_call_operand.vmem [shape: f32[2,1,96], index: 1, kind: input, shape index: {}]
  %s2 = inlined_call_operand.vmem [shape: f32[2,1,256], index: 2, kind: output, shape index: {}]
  %s3 = sld [smem:[#allocation0]]
  $region41: #{adcdnet_forward.20} parent=0
    _
  %s5 = ssub.s32 1, %s3
  %s6 = scalar_select 0, %s5, %s3
  loop: start=0, step=1, limit=6
  $region2: #{adcdnet_forward.20} parent=0 // loop_pre_header
    _
  $region3: #{adcdnet_forward.20} parent=0 // loop_header
    %s8 = sphi 0, %s12
    %p9 = scmp.ge.s32.totalorder %s8, 6
    %s15 = sphi 0, %s27
    %s16 = sphi 0, %s23
    %s17 = sphi 0, %s15
    %s18 = sphi 0, %s16
    %s19 = sphi 0, %s17
    %s20 = sphi 0, %s18
    %s32 = sphi 0, %s34
    %s35 = sphi 0, %s32
    %s36 = sphi 0, %s35
    %s52 = sphi 0, %s36
    %s58 = sphi 0, %s60
    %s61 = sphi 0, %s58
    %s62 = sphi 0, %s61
    %s78 = sphi 0, %s62
    %s86 = sphi 0, %s88
    %s89 = sphi 0, %s86
    %s90 = sphi 0, %s89
    %s106 = sphi 0, %s90
  $region4: #{adcdnet_forward.20} parent=0 // loop_header_branch
    %11 = sbr.rel (%p9) target = $region8
  $region5: #{adcdnet_forward.20} parent=0 // loop_body
    %s13 = ssub.s32 %s8, 1
    %s14 = ssub.s32 %s8, 2
    %s21 = sadd.s32 1, %s16
    %p22 = scmp.ge.s32.totalorder %s21, 2
    %s23 = scalar_select %p22, 0, %s21
    %s24 = sadd.s32 1, %s15
    %s25 = scalar_select %p22, %s24, %s15
    %p26 = scmp.ge.s32.totalorder %s25, 2
    %s27 = scalar_select %p26, 0, %s25
    %s28 = ssub.s32 %s15, %s27
    %s29 = ssub.s32 %s16, %s23
    %s30 = sor.u32 %s28, %s29
    %p31 = scmp.eq.s32.totalorder %s30, 0
    %s33 = sadd.s32 %s32, 1
    %s34 = scalar_select %p31, %s32, %s33
    %p37 = pneg %p31
    %p38 = scmp.eq.s32.totalorder %s8, 3
    %p39 = por %p37, %p38
    %p40 = scmp.ne.s32.totalorder %s32, %s35
    %p41 = scmp.eq.s32.totalorder %s8, 0
    %p42 = por %p40, %p41
    %p43 = scmp.ne.s32.totalorder %s32, %s35
    %p44 = scmp.eq.s32.totalorder %s13, 3
    %p45 = por %p43, %p44
    %p46 = scmp.ne.s32.totalorder %s35, %s36
    %p47 = scmp.eq.s32.totalorder %s13, 0
    %p48 = por %p46, %p47
    %p49 = scmp.ne.s32.totalorder %s35, %s36
    %p50 = scmp.eq.s32.totalorder %s14, 3
    %p51 = por %p49, %p50
    %p53 = scmp.ne.s32.totalorder %s36, %s52
    %p54 = scmp.eq.s32.totalorder %s14, 0
    %p55 = por %p53, %p54
    %s56 = ssub.s32 %s15, %s27
    %p57 = scmp.eq.s32.totalorder %s56, 0
    %s59 = sadd.s32 %s58, 1
    %s60 = scalar_select %p57, %s58, %s59
    %p63 = pneg %p57
    %p64 = scmp.eq.s32.totalorder %s8, 3
    %p65 = por %p63, %p64
    %p66 = scmp.ne.s32.totalorder %s58, %s61
    %p67 = scmp.eq.s32.totalorder %s8, 0
    %p68 = por %p66, %p67
    %p69 = scmp.ne.s32.totalorder %s58, %s61
    %p70 = scmp.eq.s32.totalorder %s13, 3
    %p71 = por %p69, %p70
    %p72 = scmp.ne.s32.totalorder %s61, %s62
    %p73 = scmp.eq.s32.totalorder %s13, 0
    %p74 = por %p72, %p73
    %p75 = scmp.ne.s32.totalorder %s61, %s62
    %p76 = scmp.eq.s32.totalorder %s14, 3
    %p77 = por %p75, %p76
    %p79 = scmp.ne.s32.totalorder %s62, %s78
    %p80 = scmp.eq.s32.totalorder %s14, 0
    %p81 = por %p79, %p80
    %s82 = ssub.s32 %s15, %s27
    %s83 = ssub.s32 %s16, %s23
    %s84 = sor.u32 %s82, %s83
    %p85 = scmp.eq.s32.totalorder %s84, 0
    %s87 = sadd.s32 %s86, 1
    %s88 = scalar_select %p85, %s86, %s87
    %p91 = pneg %p85
    %p92 = scmp.eq.s32.totalorder %s8, 3
    %p93 = por %p91, %p92
    %p94 = scmp.ne.s32.totalorder %s86, %s89
    %p95 = scmp.eq.s32.totalorder %s8, 0
    %p96 = por %p94, %p95
    %p97 = scmp.ne.s32.totalorder %s86, %s89
    %p98 = scmp.eq.s32.totalorder %s13, 3
    %p99 = por %p97, %p98
    %p100 = scmp.ne.s32.totalorder %s89, %s90
    %p101 = scmp.eq.s32.totalorder %s13, 0
    %p102 = por %p100, %p101
    %p103 = scmp.ne.s32.totalorder %s89, %s90
    %p104 = scmp.eq.s32.totalorder %s14, 3
    %p105 = por %p103, %p104
    %p107 = scmp.ne.s32.totalorder %s90, %s106
    %p108 = scmp.eq.s32.totalorder %s14, 0
    %p109 = por %p107, %p108
    %p110 = scmp.le.s32.totalorder 1, %s8
    %p111 = scmp.lt.s32.totalorder %s8, 5
    %p112 = pnand %p110, %p111
    %p113 = pneg %p112
    // Predicated region
    $region9: #{adcdnet_forward.20} parent=5 // pred_check
      _
    $region10: #{adcdnet_forward.20} parent=5 // pred_check_branch
      %115 = sbr.rel (%p112) target = $region12
    $region11: #{adcdnet_forward.20} parent=5 // pred_region
      %s116 = ssub.s32 %s8, 1
    $region12: #{adcdnet_forward.20} parent=5 // pred_fallthru
      _
    %p117 = scmp.lt.s32.totalorder %s8, 4
    // Predicated region
    $region13: #{adcdnet_forward.20} parent=5 // pred_check
      %p118 = pneg %p117
    $region14: #{adcdnet_forward.20} parent=5 // pred_check_branch
      %120 = sbr.rel (%p118) target = $region16
    $region15: #{adcdnet_forward.20} parent=5 // pred_region
      // Predicated region
      $region17: #{adcdnet_forward.20} parent=15 // pred_check
        %p121 = pneg %p42
      $region18: #{adcdnet_forward.20} parent=15 // pred_check_branch
        %123 = sbr.rel (%p121) target = $region20
      $region19: #{adcdnet_forward.20} parent=15 // pred_region
        %s124 = smul.u32 16, %s16
        %p125 = scmp.lt.s32.totalorder %s15, 1
        %s126 = scalar_select %p125, %s15, 1
        %p127 = scmp.lt.s32.totalorder %s124, 31
        %s128 = scalar_select %p127, %s124, 31
        %s129 = smul.addr %s126, 32
        %s130 = sadd.s32 %s128, %s129
        %s131 = smul.addr %s130, 4
        %s132 = scalar_lea.vmem %s0, %s131
        %s133 = smul.u32 16, %s16
      $region20: #{adcdnet_forward.20} parent=15 // pred_fallthru
        _
      // Predicated region
      $region21: #{adcdnet_forward.20} parent=15 // pred_check
        %p134 = pneg %p68
      $region22: #{adcdnet_forward.20} parent=15 // pred_check_branch
        %136 = sbr.rel (%p134) target = $region24
      $region23: #{adcdnet_forward.20} parent=15 // pred_region
        %p137 = scmp.lt.s32.totalorder %s15, 1
        %s138 = scalar_select %p137, %s15, 1
        %s139 = scalar_lea.vmem %s1, %s138
      $region24: #{adcdnet_forward.20} parent=15 // pred_fallthru
        _
    $region16: #{adcdnet_forward.20} parent=5 // pred_fallthru
      _
    %p140 = scmp.le.s32.totalorder 1, %s8
    %p141 = scmp.lt.s32.totalorder %s8, 5
    %p142 = pnand %p140, %p141
    %p143 = pneg %p142
    // Predicated region
    $region25: #{adcdnet_forward.20} parent=5 // pred_check
      _
    $region26: #{adcdnet_forward.20} parent=5 // pred_check_branch
      %145 = sbr.rel (%p142) target = $region28
    $region27: #{adcdnet_forward.20} parent=5 // pred_region
      %s146 = ssub.s32 %s8, 1
      %s147 = smul.u32 16, %s18
      %p148 = scmp.lt.s32.totalorder %s17, 1
      %s149 = scalar_select %p148, %s17, 1
      %p150 = scmp.lt.s32.totalorder %s147, 31
      %s151 = scalar_select %p150, %s147, 31
      %s152 = smul.addr %s149, 32
      %s153 = sadd.s32 %s151, %s152
      %s154 = smul.addr %s153, 4
      %s155 = scalar_lea.vmem %s0, %s154
      %p156 = pneg %p48
      %p157 = pneg %p45
      %p158 = scmp.lt.s32.totalorder %s17, 1
      %s159 = scalar_select %p158, %s17, 1
      %s160 = scalar_lea.vmem %s1, %s159
      %p161 = pneg %p74
      %p162 = pneg %p71
      %p163 = pneg %p102
      %p164 = pneg %p99
      %p165 = scmp.lt.s32.totalorder %s17, 1
      %s166 = scalar_select %p165, %s17, 1
      %p167 = scmp.lt.s32.totalorder %s18, 1
      %s168 = scalar_select %p167, %s18, 1
      %s169 = smul.addr %s166, 2
      %s170 = sadd.s32 %s168, %s169
      %s171 = scalar_lea.vmem %s2, %s170
      %s172 = smul.u32 16, %s18
      %p173 = scmp.lt.s32.totalorder %s17, 1
      %s174 = scalar_select %p173, %s17, 1
      %p175 = scmp.lt.s32.totalorder %s172, 31
      %s176 = scalar_select %p175, %s172, 31
      %s177 = smul.addr %s174, 32
      %s178 = sadd.s32 %s176, %s177
      %s179 = smul.addr %s178, 4
      %s180 = scalar_lea.vmem %s0, %s179
      %s181 = smul.u32 16, %s18
      %p182 = scmp.lt.s32.totalorder %s17, 1
      %s183 = scalar_select %p182, %s17, 1
      %s184 = scalar_lea.vmem %s1, %s183
      %p185 = scmp.lt.s32.totalorder %s17, 1
      %s186 = scalar_select %p185, %s17, 1
      %p187 = scmp.lt.s32.totalorder %s18, 1
      %s188 = scalar_select %p187, %s18, 1
      %s189 = smul.addr %s186, 2
      %s190 = sadd.s32 %s188, %s189
      %s191 = scalar_lea.vmem %s2, %s190
      %v192 = vld [vmem:[%s180] sm:$0xf]
      %v193 = vld [vmem:[%s180 + $0x4] sm:$0xf]
      %v194 = vld [vmem:[%s180 + $0x8] sm:$0xf]
      %v195 = vld [vmem:[%s180 + $0xc] sm:$0xf]
      %v196 = vld [vmem:[%s180 + $0x10] sm:$0xf]
      %v197 = vld [vmem:[%s180 + $0x14] sm:$0xf]
      %v198 = vld [vmem:[%s180 + $0x18] sm:$0xf]
      %v199 = vld [vmem:[%s180 + $0x1c] sm:$0xf]
      %v200 = vld [vmem:[%s180 + $0x20] sm:$0xf]
      %v201 = vld [vmem:[%s180 + $0x24] sm:$0xf]
      %v202 = vld [vmem:[%s180 + $0x28] sm:$0xf]
      %v203 = vld [vmem:[%s180 + $0x2c] sm:$0xf]
      %v204 = vld [vmem:[%s180 + $0x30] sm:$0xf]
      %v205 = vld [vmem:[%s180 + $0x34] sm:$0xf]
      %v206 = vld [vmem:[%s180 + $0x38] sm:$0xf]
      %v207 = vld [vmem:[%s180 + $0x3c] sm:$0xf]
      %v208 = vunpack.c.l.bf16 %v192
      %v209 = vunpack.c.l.bf16 %v193
      %v210 = vunpack.c.l.bf16 %v194
      %v211 = vunpack.c.l.bf16 %v195
      %v212 = vunpack.c.l.bf16 %v196
      %v213 = vunpack.c.l.bf16 %v197
      %v214 = vunpack.c.l.bf16 %v198
      %v215 = vunpack.c.l.bf16 %v199
      %v216 = vunpack.c.l.bf16 %v200
      %v217 = vunpack.c.l.bf16 %v201
      %v218 = vunpack.c.l.bf16 %v202
      %v219 = vunpack.c.l.bf16 %v203
      %v220 = vunpack.c.l.bf16 %v204
      %v221 = vunpack.c.l.bf16 %v205
      %v222 = vunpack.c.l.bf16 %v206
      %v223 = vunpack.c.l.bf16 %v207
      %v224 = vld [vmem:[%s184] sm:$0x1]
      %v225 = vmul.f32 %v208, %v208
      %v226 = vmul.f32 %v209, %v209
      %v227 = vmul.f32 %v210, %v210
      %v228 = vmul.f32 %v211, %v211
      %v229 = vmul.f32 %v212, %v212
      %v230 = vmul.f32 %v213, %v213
      %v231 = vmul.f32 %v214, %v214
      %v232 = vmul.f32 %v215, %v215
      %v233 = vmul.f32 %v216, %v216
      %v234 = vmul.f32 %v217, %v217
      %v235 = vmul.f32 %v218, %v218
      %v236 = vmul.f32 %v219, %v219
      %v237 = vmul.f32 %v220, %v220
      %v238 = vmul.f32 %v221, %v221
      %v239 = vmul.f32 %v222, %v222
      %v240 = vmul.f32 %v223, %v223
      %vm241 = vcmask 785408
      %v243 = vsel %vm241, 1.0, 0
      %v246 = vsel %vm241, %v225, 0
      %v249 = vsel %vm241, %v226, 0
      %v252 = vsel %vm241, %v227, 0
      %v255 = vsel %vm241, %v228, 0
      %v258 = vsel %vm241, %v229, 0
      %v261 = vsel %vm241, %v230, 0
      %v264 = vsel %vm241, %v231, 0
      %v267 = vsel %vm241, %v232, 0
      %v270 = vsel %vm241, %v233, 0
      %v273 = vsel %vm241, %v234, 0
      %v276 = vsel %vm241, %v235, 0
      %v279 = vsel %vm241, %v236, 0
      %v282 = vsel %vm241, %v237, 0
      %v285 = vsel %vm241, %v238, 0
      %v288 = vsel %vm241, %v239, 0
      %v291 = vsel %vm241, %v240, 0
      %293 = vmatpush.xpose.msra.mxu0 %v291
      %294 = vmatpush.xpose.msra.mxu0 %v288
      %295 = vmatpush.xpose.msra.mxu0 %v285
      %296 = vmatpush.xpose.msra.mxu0 %v282
      %297 = vmatpush.xpose.msra.mxu0 %v279
      %298 = vmatpush.xpose.msra.mxu0 %v276
      %299 = vmatpush.xpose.msra.mxu0 %v273
      %300 = vmatpush.xpose.msra.mxu0 %v270
      %301 = vmatpush.xpose.msra.mxu0 %v267
      %302 = vmatpush.xpose.msra.mxu0 %v264
      %303 = vmatpush.xpose.msra.mxu0 %v261
      %304 = vmatpush.xpose.msra.mxu0 %v258
      %305 = vmatpush.xpose.msra.mxu0 %v255
      %306 = vmatpush.xpose.msra.mxu0 %v252
      %307 = vmatpush.xpose.msra.mxu0 %v249
      %308 = vmatpush.xpose.msra.mxu0 %v246
      %309 = vmatmul.f32.gmra.mxu0 %v243
      %v310 = vpop.f32.mrf.mxu0
      %v311 = vadd.f32 0.0, %v310
      %312 = vdwg.mxu0
      %v314 = vsel %vm241, %v224, 0
      %v317 = vsel %vm241, %v208, 0
      %v320 = vsel %vm241, %v209, 0
      %v323 = vsel %vm241, %v210, 0
      %v326 = vsel %vm241, %v211, 0
      %v329 = vsel %vm241, %v212, 0
      %v332 = vsel %vm241, %v213, 0
      %v335 = vsel %vm241, %v214, 0
      %v338 = vsel %vm241, %v215, 0
      %v341 = vsel %vm241, %v216, 0
      %v344 = vsel %vm241, %v217, 0
      %v347 = vsel %vm241, %v218, 0
      %v350 = vsel %vm241, %v219, 0
      %v353 = vsel %vm241, %v220, 0
      %v356 = vsel %vm241, %v221, 0
      %v359 = vsel %vm241, %v222, 0
      %v362 = vsel %vm241, %v223, 0
      %364 = vmatpush.xpose.msra.mxu0 %v362
      %365 = vmatpush.xpose.msra.mxu0 %v359
      %366 = vmatpush.xpose.msra.mxu0 %v356
      %367 = vmatpush.xpose.msra.mxu0 %v353
      %368 = vmatpush.xpose.msra.mxu0 %v350
      %369 = vmatpush.xpose.msra.mxu0 %v347
      %370 = vmatpush.xpose.msra.mxu0 %v344
      %371 = vmatpush.xpose.msra.mxu0 %v341
      %372 = vmatpush.xpose.msra.mxu0 %v338
      %373 = vmatpush.xpose.msra.mxu0 %v335
      %374 = vmatpush.xpose.msra.mxu0 %v332
      %375 = vmatpush.xpose.msra.mxu0 %v329
      %376 = vmatpush.xpose.msra.mxu0 %v326
      %377 = vmatpush.xpose.msra.mxu0 %v323
      %378 = vmatpush.xpose.msra.mxu0 %v320
      %379 = vmatpush.xpose.msra.mxu0 %v317
      %380 = vmatmul.f32.gmra.mxu0 %v314
      %v381 = vpop.f32.mrf.mxu0
      %v382 = vadd.f32 0.0, %v381
      %383 = vdwg.mxu0
      %v384 = vmax.f32 %v311, 1e-24
      %v385 = vrsqrt.pop %v384
      %v386 = vmul.f32 %v385, %v384
      %v387 = vmul.f32 %v386, %v385
      %v388 = vmul.f32 0.5, %v387
      %v389 = vsub.f32 1.5, %v388
      %v390 = vmul.f32 %v385, %v389
      %vm391 = vweird.f32 %v384
      %vm392 = vweird.f32 %v385
      %vm393 = vmor %vm391, %vm392
      %v394 = vsel %vm393, %v385, %v390
      %v395 = vmul.f32 %v382, %v394
      %396 = vst [vmem:[%s191] sm:$0x1] %v395
      %p397 = scmp.lt.s32.totalorder %s17, 1
      %s398 = scalar_select %p397, %s17, 1
      %p399 = scmp.lt.s32.totalorder %s18, 1
      %s400 = scalar_select %p399, %s18, 1
      %s401 = smul.addr %s398, 2
      %s402 = sadd.s32 %s400, %s401
      %s403 = scalar_lea.vmem %s2, %s402
      // Predicated region
      $region29: #{adcdnet_forward.20} parent=27 // pred_check
        %p404 = pneg %p99
      $region30: #{adcdnet_forward.20} parent=27 // pred_check_branch
        %406 = sbr.rel (%p404) target = $region32
      $region31: #{adcdnet_forward.20} parent=27 // pred_region
        _
      $region32: #{adcdnet_forward.20} parent=27 // pred_fallthru
        _
    $region28: #{adcdnet_forward.20} parent=5 // pred_fallthru
      _
    %p407 = scmp.le.s32.totalorder 2, %s8
    // Predicated region
    $region33: #{adcdnet_forward.20} parent=5 // pred_check
      %p408 = pneg %p407
    $region34: #{adcdnet_forward.20} parent=5 // pred_check_branch
      %410 = sbr.rel (%p408) target = $region36
    $region35: #{adcdnet_forward.20} parent=5 // pred_region
      %s411 = ssub.s32 %s8, 2
      // Predicated region
      $region37: #{adcdnet_forward.20} parent=35 // pred_check
        %p412 = pneg %p105
      $region38: #{adcdnet_forward.20} parent=35 // pred_check_branch
        %414 = sbr.rel (%p412) target = $region40
      $region39: #{adcdnet_forward.20} parent=35 // pred_region
        %p415 = scmp.lt.s32.totalorder %s19, 1
        %s416 = scalar_select %p415, %s19, 1
        %p417 = scmp.lt.s32.totalorder %s20, 1
        %s418 = scalar_select %p417, %s20, 1
        %s419 = smul.addr %s416, 2
        %s420 = sadd.s32 %s418, %s419
        %s421 = scalar_lea.vmem %s2, %s420
      $region40: #{adcdnet_forward.20} parent=35 // pred_fallthru
        _
    $region36: #{adcdnet_forward.20} parent=5 // pred_fallthru
      _
  $region6: #{adcdnet_forward.20} parent=0 // loop_footer
    %s12 = sadd.s32 1, %s8
  $region7: #{adcdnet_forward.20} parent=0 // loop_footer_branch
    %7 = sbr.rel target = $region3
  $region8: #{adcdnet_forward.20} parent=0 // loop_exit
    _

// kernel: adcdnet_forward.19
$region0: #{adcdnet_forward.19}
  #allocation0 [shape = 'u32[]', space=smem, size = 0x4, offset = 0x4, fixed_abs, tag = 'smem constant byte address 0x4 - core index']
  #allocation1 [shape = 'u32[72,128]{1,0:T(1,128)}', space=vmem, size = 0x9000, scoped, tag = 'internal scratch']
  %s0 = inlined_call_operand.vmem [shape: bf16[2,256,96], index: 0, kind: input, shape index: {}]
  %s1 = inlined_call_operand.vmem [shape: f32[2,1,256], index: 1, kind: input, shape index: {}]
  %s2 = inlined_call_operand.vmem [shape: f32[2,1,96], index: 2, kind: output, shape index: {0}]
  %s3 = inlined_call_operand.vmem [shape: f32[2,1,1], index: 3, kind: output, shape index: {1}]
  %4 = xla_tuple %s2, %s3
  %s5 = sld [smem:[#allocation0]]
  $region53: #{adcdnet_forward.19} parent=0
    _
  %s7 = ssub.s32 1, %s5
  %s8 = scalar_select 0, %s7, %s5
  loop: start=0, step=1, limit=6
  $region2: #{adcdnet_forward.19} parent=0 // loop_pre_header
    _
  $region3: #{adcdnet_forward.19} parent=0 // loop_header
    %s10 = sphi 0, %s14
    %p11 = scmp.ge.s32.totalorder %s10, 6
    %s17 = sphi 0, %s29
    %s18 = sphi 0, %s25
    %s19 = sphi 0, %s17
    %s20 = sphi 0, %s18
    %s21 = sphi 0, %s19
    %s22 = sphi 0, %s20
    %s34 = sphi 0, %s36
    %s37 = sphi 0, %s34
    %s38 = sphi 0, %s37
    %s54 = sphi 0, %s38
    %s62 = sphi 0, %s64
    %s65 = sphi 0, %s62
    %s66 = sphi 0, %s65
    %s82 = sphi 0, %s66
    %s88 = sphi 0, %s90
    %s91 = sphi 0, %s88
    %s92 = sphi 0, %s91
    %s108 = sphi 0, %s92
    %s114 = sphi 0, %s116
    %s117 = sphi 0, %s114
    %s118 = sphi 0, %s117
    %s134 = sphi 0, %s118
  $region4: #{adcdnet_forward.19} parent=0 // loop_header_branch
    %13 = sbr.rel (%p11) target = $region8
  $region5: #{adcdnet_forward.19} parent=0 // loop_body
    %s15 = ssub.s32 %s10, 1
    %s16 = ssub.s32 %s10, 2
    %s23 = sadd.s32 1, %s18
    %p24 = scmp.ge.s32.totalorder %s23, 2
    %s25 = scalar_select %p24, 0, %s23
    %s26 = sadd.s32 1, %s17
    %s27 = scalar_select %p24, %s26, %s17
    %p28 = scmp.ge.s32.totalorder %s27, 2
    %s29 = scalar_select %p28, 0, %s27
    %s30 = ssub.s32 %s17, %s29
    %s31 = ssub.s32 %s18, %s25
    %s32 = sor.u32 %s30, %s31
    %p33 = scmp.eq.s32.totalorder %s32, 0
    %s35 = sadd.s32 %s34, 1
    %s36 = scalar_select %p33, %s34, %s35
    %p39 = pneg %p33
    %p40 = scmp.eq.s32.totalorder %s10, 3
    %p41 = por %p39, %p40
    %p42 = scmp.ne.s32.totalorder %s34, %s37
    %p43 = scmp.eq.s32.totalorder %s10, 0
    %p44 = por %p42, %p43
    %p45 = scmp.ne.s32.totalorder %s34, %s37
    %p46 = scmp.eq.s32.totalorder %s15, 3
    %p47 = por %p45, %p46
    %p48 = scmp.ne.s32.totalorder %s37, %s38
    %p49 = scmp.eq.s32.totalorder %s15, 0
    %p50 = por %p48, %p49
    %p51 = scmp.ne.s32.totalorder %s37, %s38
    %p52 = scmp.eq.s32.totalorder %s16, 3
    %p53 = por %p51, %p52
    %p55 = scmp.ne.s32.totalorder %s38, %s54
    %p56 = scmp.eq.s32.totalorder %s16, 0
    %p57 = por %p55, %p56
    %s58 = ssub.s32 %s17, %s29
    %s59 = ssub.s32 %s18, %s25
    %s60 = sor.u32 %s58, %s59
    %p61 = scmp.eq.s32.totalorder %s60, 0
    %s63 = sadd.s32 %s62, 1
    %s64 = scalar_select %p61, %s62, %s63
    %p67 = pneg %p61
    %p68 = scmp.eq.s32.totalorder %s10, 3
    %p69 = por %p67, %p68
    %p70 = scmp.ne.s32.totalorder %s62, %s65
    %p71 = scmp.eq.s32.totalorder %s10, 0
    %p72 = por %p70, %p71
    %p73 = scmp.ne.s32.totalorder %s62, %s65
    %p74 = scmp.eq.s32.totalorder %s15, 3
    %p75 = por %p73, %p74
    %p76 = scmp.ne.s32.totalorder %s65, %s66
    %p77 = scmp.eq.s32.totalorder %s15, 0
    %p78 = por %p76, %p77
    %p79 = scmp.ne.s32.totalorder %s65, %s66
    %p80 = scmp.eq.s32.totalorder %s16, 3
    %p81 = por %p79, %p80
    %p83 = scmp.ne.s32.totalorder %s66, %s82
    %p84 = scmp.eq.s32.totalorder %s16, 0
    %p85 = por %p83, %p84
    %s86 = ssub.s32 %s17, %s29
    %p87 = scmp.eq.s32.totalorder %s86, 0
    %s89 = sadd.s32 %s88, 1
    %s90 = scalar_select %p87, %s88, %s89
    %p93 = pneg %p87
    %p94 = scmp.eq.s32.totalorder %s10, 3
    %p95 = por %p93, %p94
    %p96 = scmp.ne.s32.totalorder %s88, %s91
    %p97 = scmp.eq.s32.totalorder %s10, 0
    %p98 = por %p96, %p97
    %p99 = scmp.ne.s32.totalorder %s88, %s91
    %p100 = scmp.eq.s32.totalorder %s15, 3
    %p101 = por %p99, %p100
    %p102 = scmp.ne.s32.totalorder %s91, %s92
    %p103 = scmp.eq.s32.totalorder %s15, 0
    %p104 = por %p102, %p103
    %p105 = scmp.ne.s32.totalorder %s91, %s92
    %p106 = scmp.eq.s32.totalorder %s16, 3
    %p107 = por %p105, %p106
    %p109 = scmp.ne.s32.totalorder %s92, %s108
    %p110 = scmp.eq.s32.totalorder %s16, 0
    %p111 = por %p109, %p110
    %s112 = ssub.s32 %s17, %s29
    %p113 = scmp.eq.s32.totalorder %s112, 0
    %s115 = sadd.s32 %s114, 1
    %s116 = scalar_select %p113, %s114, %s115
    %p119 = pneg %p113
    %p120 = scmp.eq.s32.totalorder %s10, 3
    %p121 = por %p119, %p120
    %p122 = scmp.ne.s32.totalorder %s114, %s117
    %p123 = scmp.eq.s32.totalorder %s10, 0
    %p124 = por %p122, %p123
    %p125 = scmp.ne.s32.totalorder %s114, %s117
    %p126 = scmp.eq.s32.totalorder %s15, 3
    %p127 = por %p125, %p126
    %p128 = scmp.ne.s32.totalorder %s117, %s118
    %p129 = scmp.eq.s32.totalorder %s15, 0
    %p130 = por %p128, %p129
    %p131 = scmp.ne.s32.totalorder %s117, %s118
    %p132 = scmp.eq.s32.totalorder %s16, 3
    %p133 = por %p131, %p132
    %p135 = scmp.ne.s32.totalorder %s118, %s134
    %p136 = scmp.eq.s32.totalorder %s16, 0
    %p137 = por %p135, %p136
    %p138 = scmp.le.s32.totalorder 1, %s10
    %p139 = scmp.lt.s32.totalorder %s10, 5
    %p140 = pnand %p138, %p139
    %p141 = pneg %p140
    // Predicated region
    $region9: #{adcdnet_forward.19} parent=5 // pred_check
      _
    $region10: #{adcdnet_forward.19} parent=5 // pred_check_branch
      %143 = sbr.rel (%p140) target = $region12
    $region11: #{adcdnet_forward.19} parent=5 // pred_region
      %s144 = ssub.s32 %s10, 1
    $region12: #{adcdnet_forward.19} parent=5 // pred_fallthru
      _
    %p145 = scmp.lt.s32.totalorder %s10, 4
    // Predicated region
    $region13: #{adcdnet_forward.19} parent=5 // pred_check
      %p146 = pneg %p145
    $region14: #{adcdnet_forward.19} parent=5 // pred_check_branch
      %148 = sbr.rel (%p146) target = $region16
    $region15: #{adcdnet_forward.19} parent=5 // pred_region
      // Predicated region
      $region17: #{adcdnet_forward.19} parent=15 // pred_check
        %p149 = pneg %p44
      $region18: #{adcdnet_forward.19} parent=15 // pred_check_branch
        %151 = sbr.rel (%p149) target = $region20
      $region19: #{adcdnet_forward.19} parent=15 // pred_region
        %s152 = smul.u32 16, %s18
        %p153 = scmp.lt.s32.totalorder %s17, 1
        %s154 = scalar_select %p153, %s17, 1
        %p155 = scmp.lt.s32.totalorder %s152, 31
        %s156 = scalar_select %p155, %s152, 31
        %s157 = smul.addr %s154, 32
        %s158 = sadd.s32 %s156, %s157
        %s159 = smul.addr %s158, 4
        %s160 = scalar_lea.vmem %s0, %s159
        %s161 = smul.u32 16, %s18
      $region20: #{adcdnet_forward.19} parent=15 // pred_fallthru
        _
      // Predicated region
      $region21: #{adcdnet_forward.19} parent=15 // pred_check
        %p162 = pneg %p72
      $region22: #{adcdnet_forward.19} parent=15 // pred_check_branch
        %164 = sbr.rel (%p162) target = $region24
      $region23: #{adcdnet_forward.19} parent=15 // pred_region
        %p165 = scmp.lt.s32.totalorder %s17, 1
        %s166 = scalar_select %p165, %s17, 1
        %p167 = scmp.lt.s32.totalorder %s18, 1
        %s168 = scalar_select %p167, %s18, 1
        %s169 = smul.addr %s166, 2
        %s170 = sadd.s32 %s168, %s169
        %s171 = scalar_lea.vmem %s1, %s170
      $region24: #{adcdnet_forward.19} parent=15 // pred_fallthru
        _
    $region16: #{adcdnet_forward.19} parent=5 // pred_fallthru
      _
    %p172 = scmp.le.s32.totalorder 1, %s10
    %p173 = scmp.lt.s32.totalorder %s10, 5
    %p174 = pnand %p172, %p173
    %p175 = pneg %p174
    // Predicated region
    $region25: #{adcdnet_forward.19} parent=5 // pred_check
      _
    $region26: #{adcdnet_forward.19} parent=5 // pred_check_branch
      %177 = sbr.rel (%p174) target = $region28
    $region27: #{adcdnet_forward.19} parent=5 // pred_region
      %s178 = ssub.s32 %s10, 1
      %s179 = smul.u32 16, %s20
      %p180 = scmp.lt.s32.totalorder %s19, 1
      %s181 = scalar_select %p180, %s19, 1
      %p182 = scmp.lt.s32.totalorder %s179, 31
      %s183 = scalar_select %p182, %s179, 31
      %s184 = smul.addr %s181, 32
      %s185 = sadd.s32 %s183, %s184
      %s186 = smul.addr %s185, 4
      %s187 = scalar_lea.vmem %s0, %s186
      %p188 = pneg %p50
      %p189 = pneg %p47
      %p190 = scmp.lt.s32.totalorder %s19, 1
      %s191 = scalar_select %p190, %s19, 1
      %p192 = scmp.lt.s32.totalorder %s20, 1
      %s193 = scalar_select %p192, %s20, 1
      %s194 = smul.addr %s191, 2
      %s195 = sadd.s32 %s193, %s194
      %s196 = scalar_lea.vmem %s1, %s195
      %p197 = pneg %p78
      %p198 = pneg %p75
      %p199 = pneg %p104
      %p200 = pneg %p101
      %p201 = scmp.lt.s32.totalorder %s19, 1
      %s202 = scalar_select %p201, %s19, 1
      %s203 = scalar_lea.vmem %s2, %s202
      %p204 = pneg %p130
      %p205 = pneg %p127
      %p206 = scmp.lt.s32.totalorder %s19, 1
      %s207 = scalar_select %p206, %s19, 1
      %s208 = scalar_lea.vmem %s3, %s207
      %s209 = smul.u32 16, %s20
      %p210 = scmp.lt.s32.totalorder %s19, 1
      %s211 = scalar_select %p210, %s19, 1
      %p212 = scmp.lt.s32.totalorder %s209, 31
      %s213 = scalar_select %p212, %s209, 31
      %s214 = smul.addr %s211, 32
      %s215 = sadd.s32 %s213, %s214
      %s216 = smul.addr %s215, 4
      %s217 = scalar_lea.vmem %s0, %s216
      %s218 = smul.u32 16, %s20
      %p219 = scmp.lt.s32.totalorder %s19, 1
      %s220 = scalar_select %p219, %s19, 1
      %p221 = scmp.lt.s32.totalorder %s20, 1
      %s222 = scalar_select %p221, %s20, 1
      %s223 = smul.addr %s220, 2
      %s224 = sadd.s32 %s222, %s223
      %s225 = scalar_lea.vmem %s1, %s224
      %p226 = scmp.lt.s32.totalorder %s19, 1
      %s227 = scalar_select %p226, %s19, 1
      %s228 = scalar_lea.vmem %s2, %s227
      %p229 = scmp.lt.s32.totalorder %s19, 1
      %s230 = scalar_select %p229, %s19, 1
      %s231 = scalar_lea.vmem %s3, %s230
      %p232 = scmp.eq.s32.totalorder %s20, 0
      // Predicated region
      $region29: #{adcdnet_forward.19} parent=27 // pred_check
        %p233 = pneg %p232
      $region30: #{adcdnet_forward.19} parent=27 // pred_check_branch
        %235 = sbr.rel (%p233) target = $region32
      $region31: #{adcdnet_forward.19} parent=27 // pred_region
        %vm236 = vcmask 778240
        %237 = vst.msk [vmem:[%s228] sm:$0x1] %vm236, 0.0
        %vm238 = vcmask 0
        %239 = vst.msk [vmem:[%s231] sm:$0x1] %vm238, 0.0
      $region32: #{adcdnet_forward.19} parent=27 // pred_fallthru
        _
      %v240 = vld [vmem:[%s217] sm:$0xf]
      %v241 = vld [vmem:[%s217 + $0x4] sm:$0xf]
      %v242 = vld [vmem:[%s217 + $0x8] sm:$0xf]
      %v243 = vld [vmem:[%s217 + $0xc] sm:$0xf]
      %v244 = vld [vmem:[%s217 + $0x10] sm:$0xf]
      %v245 = vld [vmem:[%s217 + $0x14] sm:$0xf]
      %v246 = vld [vmem:[%s217 + $0x18] sm:$0xf]
      %v247 = vld [vmem:[%s217 + $0x1c] sm:$0xf]
      %v248 = vld [vmem:[%s217 + $0x20] sm:$0xf]
      %v249 = vld [vmem:[%s217 + $0x24] sm:$0xf]
      %v250 = vld [vmem:[%s217 + $0x28] sm:$0xf]
      %v251 = vld [vmem:[%s217 + $0x2c] sm:$0xf]
      %v252 = vld [vmem:[%s217 + $0x30] sm:$0xf]
      %v253 = vld [vmem:[%s217 + $0x34] sm:$0xf]
      %v254 = vld [vmem:[%s217 + $0x38] sm:$0xf]
      %v255 = vld [vmem:[%s217 + $0x3c] sm:$0xf]
      %v256 = vunpack.c.l.bf16 %v240
      %v257 = vunpack.c.l.bf16 %v241
      %v258 = vunpack.c.l.bf16 %v242
      %v259 = vunpack.c.l.bf16 %v243
      %v260 = vunpack.c.l.bf16 %v244
      %v261 = vunpack.c.l.bf16 %v245
      %v262 = vunpack.c.l.bf16 %v246
      %v263 = vunpack.c.l.bf16 %v247
      %v264 = vunpack.c.l.bf16 %v248
      %v265 = vunpack.c.l.bf16 %v249
      %v266 = vunpack.c.l.bf16 %v250
      %v267 = vunpack.c.l.bf16 %v251
      %v268 = vunpack.c.l.bf16 %v252
      %v269 = vunpack.c.l.bf16 %v253
      %v270 = vunpack.c.l.bf16 %v254
      %v271 = vunpack.c.l.bf16 %v255
      %v272 = vld [vmem:[%s225] sm:$0x1]
      %vm273 = vcmp.eq.f32.partialorder %v272, 0.0
      %v274 = vsel %vm273, 1, 0
      %v275 = vcvt.s32.f32 %v274
      %v276 = vmul.f32 %v256, %v256
      %v277 = vmul.f32 %v257, %v257
      %v278 = vmul.f32 %v258, %v258
      %v279 = vmul.f32 %v259, %v259
      %v280 = vmul.f32 %v260, %v260
      %v281 = vmul.f32 %v261, %v261
      %v282 = vmul.f32 %v262, %v262
      %v283 = vmul.f32 %v263, %v263
      %v284 = vmul.f32 %v264, %v264
      %v285 = vmul.f32 %v265, %v265
      %v286 = vmul.f32 %v266, %v266
      %v287 = vmul.f32 %v267, %v267
      %v288 = vmul.f32 %v268, %v268
      %v289 = vmul.f32 %v269, %v269
      %v290 = vmul.f32 %v270, %v270
      %v291 = vmul.f32 %v271, %v271
      %vm292 = vcmask 785408
      %v294 = vsel %vm292, 1.0, 0
      %v297 = vsel %vm292, %v276, 0
      %v300 = vsel %vm292, %v277, 0
      %v303 = vsel %vm292, %v278, 0
      %v306 = vsel %vm292, %v279, 0
      %v309 = vsel %vm292, %v280, 0
      %v312 = vsel %vm292, %v281, 0
      %v315 = vsel %vm292, %v282, 0
      %v318 = vsel %vm292, %v283, 0
      %v321 = vsel %vm292, %v284, 0
      %v324 = vsel %vm292, %v285, 0
      %v327 = vsel %vm292, %v286, 0
      %v330 = vsel %vm292, %v287, 0
      %v333 = vsel %vm292, %v288, 0
      %v336 = vsel %vm292, %v289, 0
      %v339 = vsel %vm292, %v290, 0
      %v342 = vsel %vm292, %v291, 0
      %344 = vmatpush.xpose.msra.mxu0 %v342
      %345 = vmatpush.xpose.msra.mxu0 %v339
      %346 = vmatpush.xpose.msra.mxu0 %v336
      %347 = vmatpush.xpose.msra.mxu0 %v333
      %348 = vmatpush.xpose.msra.mxu0 %v330
      %349 = vmatpush.xpose.msra.mxu0 %v327
      %350 = vmatpush.xpose.msra.mxu0 %v324
      %351 = vmatpush.xpose.msra.mxu0 %v321
      %352 = vmatpush.xpose.msra.mxu0 %v318
      %353 = vmatpush.xpose.msra.mxu0 %v315
      %354 = vmatpush.xpose.msra.mxu0 %v312
      %355 = vmatpush.xpose.msra.mxu0 %v309
      %356 = vmatpush.xpose.msra.mxu0 %v306
      %357 = vmatpush.xpose.msra.mxu0 %v303
      %358 = vmatpush.xpose.msra.mxu0 %v300
      %359 = vmatpush.xpose.msra.mxu0 %v297
      %360 = vmatmul.f32.gmra.mxu0 %v294
      %v361 = vpop.f32.mrf.mxu0
      %v362 = vadd.f32 0.0, %v361
      %363 = vdwg.mxu0
      %v364 = vmax.f32 %v362, 1e-24
      %v365 = vrsqrt.pop %v364
      %v366 = vmul.f32 %v365, %v364
      %v367 = vmul.f32 %v366, %v365
      %v368 = vmul.f32 0.5, %v367
      %v369 = vsub.f32 1.5, %v368
      %v370 = vmul.f32 %v365, %v369
      %vm371 = vweird.f32 %v364
      %vm372 = vweird.f32 %v365
      %vm373 = vmor %vm371, %vm372
      %v374 = vsel %vm373, %v365, %v370
      %v375 = vmul.f32 %v275, %v374
      %v376 = vld [vmem:[%s228] sm:$0x1]
      %377 = vmatpush.msra.mxu0 %v271
      %378 = vmatpush.msra.mxu0 %v270
      %379 = vmatpush.msra.mxu0 %v269
      %380 = vmatpush.msra.mxu0 %v268
      %381 = vmatpush.msra.mxu0 %v267
      %382 = vmatpush.msra.mxu0 %v266
      %383 = vmatpush.msra.mxu0 %v265
      %384 = vmatpush.msra.mxu0 %v264
      %385 = vmatpush.msra.mxu0 %v263
      %386 = vmatpush.msra.mxu0 %v262
      %387 = vmatpush.msra.mxu0 %v261
      %388 = vmatpush.msra.mxu0 %v260
      %389 = vmatpush.msra.mxu0 %v259
      %390 = vmatpush.msra.mxu0 %v258
      %391 = vmatpush.msra.mxu0 %v257
      %392 = vmatpush.msra.mxu0 %v256
      %393 = vmatmul.f32.gmra.mxu0 %v375
      %v394 = vpop.f32.mrf.mxu0
      %v395 = vadd.f32 0.0, %v394
      %396 = vdwg.mxu0
      %v397 = vadd.f32 %v376, %v395
      %vm398 = vcmask 778240
      %399 = vst.msk [vmem:[%s228] sm:$0x1] %vm398, %v397
      %v400 = vld [vmem:[%s231] sm:$0x1]
      %vm401 = vcmask 1040384
      %v402 = vsel %vm401, %v275, 0.0
      %403 = vadd.xlane.f32.xlu0 %v402
      %v404 = vpop.xlane.xlu0 %403
      %v405 = vadd.f32 %v400, %v404
      %vm406 = vcmask 0
      %407 = vst.msk [vmem:[%s231] sm:$0x1] %vm406, %v405
      %p408 = scmp.lt.s32.totalorder %s19, 1
      %s409 = scalar_select %p408, %s19, 1
      %s410 = scalar_lea.vmem %s2, %s409
      %p411 = scmp.lt.s32.totalorder %s19, 1
      %s412 = scalar_select %p411, %s19, 1
      %s413 = scalar_lea.vmem %s3, %s412
      // Predicated region
      $region33: #{adcdnet_forward.19} parent=27 // pred_check
        %p414 = pneg %p101
      $region34: #{adcdnet_forward.19} parent=27 // pred_check_branch
        %416 = sbr.rel (%p414) target = $region36
      $region35: #{adcdnet_forward.19} parent=27 // pred_region
        _
      $region36: #{adcdnet_forward.19} parent=27 // pred_fallthru
        _
      // Predicated region
      $region37: #{adcdnet_forward.19} parent=27 // pred_check
        %p417 = pneg %p127
      $region38: #{adcdnet_forward.19} parent=27 // pred_check_branch
        %419 = sbr.rel (%p417) target = $region40
      $region39: #{adcdnet_forward.19} parent=27 // pred_region
        _
      $region40: #{adcdnet_forward.19} parent=27 // pred_fallthru
        _
    $region28: #{adcdnet_forward.19} parent=5 // pred_fallthru
      _
    %p420 = scmp.le.s32.totalorder 2, %s10
    // Predicated region
    $region41: #{adcdnet_forward.19} parent=5 // pred_check
      %p421 = pneg %p420
    $region42: #{adcdnet_forward.19} parent=5 // pred_check_branch
      %423 = sbr.rel (%p421) target = $region44
    $region43: #{adcdnet_forward.19} parent=5 // pred_region
      %s424 = ssub.s32 %s10, 2
      // Predicated region
      $region45: #{adcdnet_forward.19} parent=43 // pred_check
        %p425 = pneg %p107
      $region46: #{adcdnet_forward.19} parent=43 // pred_check_branch
        %427 = sbr.rel (%p425) target = $region48
      $region47: #{adcdnet_forward.19} parent=43 // pred_region
        %p428 = scmp.lt.s32.totalorder %s21, 1
        %s429 = scalar_select %p428, %s21, 1
        %s430 = scalar_lea.vmem %s2, %s429
      $region48: #{adcdnet_forward.19} parent=43 // pred_fallthru
        _
      // Predicated region
      $region49: #{adcdnet_forward.19} parent=43 // pred_check
        %p431 = pneg %p133
      $region50: #{adcdnet_forward.19} parent=43 // pred_check_branch
        %433 = sbr.rel (%p431) target = $region52
      $region51: #{adcdnet_forward.19} parent=43 // pred_region
        %p434 = scmp.lt.s32.totalorder %s21, 1
        %s435 = scalar_select %p434, %s21, 1
        %s436 = scalar_lea.vmem %s3, %s435
      $region52: #{adcdnet_forward.19} parent=43 // pred_fallthru
        _
    $region44: #{adcdnet_forward.19} parent=5 // pred_fallthru
      _
  $region6: #{adcdnet_forward.19} parent=0 // loop_footer
    %s14 = sadd.s32 1, %s10
  $region7: #{adcdnet_forward.19} parent=0 // loop_footer_branch
    %9 = sbr.rel target = $region3
  $region8: #{adcdnet_forward.19} parent=0 // loop_exit
    _

// kernel: adcdnet_forward.25
$region0: #{adcdnet_forward.25}
  #allocation0 [shape = 'u32[]', space=smem, size = 0x4, offset = 0x4, fixed_abs, tag = 'smem constant byte address 0x4 - core index']
  #allocation1 [shape = 'u32[72,128]{1,0:T(1,128)}', space=vmem, size = 0x9000, scoped, tag = 'internal scratch']
  %s0 = inlined_call_operand.vmem [shape: bf16[512,96], index: 0, kind: input, shape index: {}]
  %s1 = inlined_call_operand.vmem [shape: f32[96,48], index: 1, kind: input, shape index: {}]
  %s2 = inlined_call_operand.vmem [shape: f32[1,48], index: 2, kind: input, shape index: {}]
  %s3 = inlined_call_operand.vmem [shape: f32[32,48], index: 3, kind: input, shape index: {}]
  %s4 = inlined_call_operand.vmem [shape: f32[32,1], index: 4, kind: input, shape index: {}]
  %s5 = inlined_call_operand.vmem [shape: bf16[32,512], index: 5, kind: output, shape index: {}]
  %s6 = sld [smem:[#allocation0]]
  $region87: #{adcdnet_forward.25} parent=0
    _
  %s8 = ssub.s32 1, %s6
  %s9 = scalar_select 0, %s8, %s6
  $region1: #{adcdnet_forward.25} parent=0
    #allocation2 [shape = 'u8[32768]{0}', space=vmem, size = 0x8000, scoped, tag = 'output window, operand 0']
    loop: start=0, step=1, limit=4
    $region2: #{adcdnet_forward.25} parent=1 // loop_pre_header
      _
    $region3: #{adcdnet_forward.25} parent=1 // loop_header
      %s11 = sphi 0, %s15
      %p12 = scmp.ge.s32.totalorder %s11, 4
      %s21 = sphi 0, %s23
      %s24 = sphi 0, %s21
      %s25 = sphi 0, %s24
      %s41 = sphi 0, %s25
      %s45 = sphi 0, %s45
      %s47 = sphi 0, %s45
      %s48 = sphi 0, %s47
      %s62 = sphi 0, %s48
      %s66 = sphi 0, %s66
      %s68 = sphi 0, %s66
      %s69 = sphi 0, %s68
      %s83 = sphi 0, %s69
      %s87 = sphi 0, %s87
      %s89 = sphi 0, %s87
      %s90 = sphi 0, %s89
      %s104 = sphi 0, %s90
      %s108 = sphi 0, %s108
      %s110 = sphi 0, %s108
      %s111 = sphi 0, %s110
      %s125 = sphi 0, %s111
      %s131 = sphi 0, %s133
      %s134 = sphi 0, %s131
      %s135 = sphi 0, %s134
      %s151 = sphi 0, %s135
    $region4: #{adcdnet_forward.25} parent=1 // loop_header_branch
      %14 = sbr.rel (%p12) target = $region8
    $region5: #{adcdnet_forward.25} parent=1 // loop_body
      %s16 = ssub.s32 %s11, 1
      %s17 = ssub.s32 %s11, 2
      %s18 = sadd.s32 %s11, 1
      %s19 = ssub.s32 %s11, %s18
      %p20 = scmp.eq.s32.totalorder %s19, 0
      %s22 = sadd.s32 %s21, 1
      %s23 = scalar_select %p20, %s21, %s22
      %p26 = pneg %p20
      %p27 = scmp.eq.s32.totalorder %s11, 1
      %p28 = por %p26, %p27
      %p29 = scmp.ne.s32.totalorder %s21, %s24
      %p30 = scmp.eq.s32.totalorder %s11, 0
      %p31 = por %p29, %p30
      %p32 = scmp.ne.s32.totalorder %s21, %s24
      %p33 = scmp.eq.s32.totalorder %s16, 1
      %p34 = por %p32, %p33
      %p35 = scmp.ne.s32.totalorder %s24, %s25
      %p36 = scmp.eq.s32.totalorder %s16, 0
      %p37 = por %p35, %p36
      %p38 = scmp.ne.s32.totalorder %s24, %s25
      %p39 = scmp.eq.s32.totalorder %s17, 1
      %p40 = por %p38, %p39
      %p42 = scmp.ne.s32.totalorder %s25, %s41
      %p43 = scmp.eq.s32.totalorder %s17, 0
      %p44 = por %p42, %p43
      %s46 = sadd.s32 %s45, 1
      %p49 = scmp.eq.s32.totalorder %s11, 1
      %p50 = scmp.ne.s32.totalorder %s45, %s47
      %p51 = scmp.eq.s32.totalorder %s11, 0
      %p52 = por %p50, %p51
      %p53 = scmp.ne.s32.totalorder %s45, %s47
      %p54 = scmp.eq.s32.totalorder %s16, 1
      %p55 = por %p53, %p54
      %p56 = scmp.ne.s32.totalorder %s47, %s48
      %p57 = scmp.eq.s32.totalorder %s16, 0
      %p58 = por %p56, %p57
      %p59 = scmp.ne.s32.totalorder %s47, %s48
      %p60 = scmp.eq.s32.totalorder %s17, 1
      %p61 = por %p59, %p60
      %p63 = scmp.ne.s32.totalorder %s48, %s62
      %p64 = scmp.eq.s32.totalorder %s17, 0
      %p65 = por %p63, %p64
      %s67 = sadd.s32 %s66, 1
      %p70 = scmp.eq.s32.totalorder %s11, 1
      %p71 = scmp.ne.s32.totalorder %s66, %s68
      %p72 = scmp.eq.s32.totalorder %s11, 0
      %p73 = por %p71, %p72
      %p74 = scmp.ne.s32.totalorder %s66, %s68
      %p75 = scmp.eq.s32.totalorder %s16, 1
      %p76 = por %p74, %p75
      %p77 = scmp.ne.s32.totalorder %s68, %s69
      %p78 = scmp.eq.s32.totalorder %s16, 0
      %p79 = por %p77, %p78
      %p80 = scmp.ne.s32.totalorder %s68, %s69
      %p81 = scmp.eq.s32.totalorder %s17, 1
      %p82 = por %p80, %p81
      %p84 = scmp.ne.s32.totalorder %s69, %s83
      %p85 = scmp.eq.s32.totalorder %s17, 0
      %p86 = por %p84, %p85
      %s88 = sadd.s32 %s87, 1
      %p91 = scmp.eq.s32.totalorder %s11, 1
      %p92 = scmp.ne.s32.totalorder %s87, %s89
      %p93 = scmp.eq.s32.totalorder %s11, 0
      %p94 = por %p92, %p93
      %p95 = scmp.ne.s32.totalorder %s87, %s89
      %p96 = scmp.eq.s32.totalorder %s16, 1
      %p97 = por %p95, %p96
      %p98 = scmp.ne.s32.totalorder %s89, %s90
      %p99 = scmp.eq.s32.totalorder %s16, 0
      %p100 = por %p98, %p99
      %p101 = scmp.ne.s32.totalorder %s89, %s90
      %p102 = scmp.eq.s32.totalorder %s17, 1
      %p103 = por %p101, %p102
      %p105 = scmp.ne.s32.totalorder %s90, %s104
      %p106 = scmp.eq.s32.totalorder %s17, 0
      %p107 = por %p105, %p106
      %s109 = sadd.s32 %s108, 1
      %p112 = scmp.eq.s32.totalorder %s11, 1
      %p113 = scmp.ne.s32.totalorder %s108, %s110
      %p114 = scmp.eq.s32.totalorder %s11, 0
      %p115 = por %p113, %p114
      %p116 = scmp.ne.s32.totalorder %s108, %s110
      %p117 = scmp.eq.s32.totalorder %s16, 1
      %p118 = por %p116, %p117
      %p119 = scmp.ne.s32.totalorder %s110, %s111
      %p120 = scmp.eq.s32.totalorder %s16, 0
      %p121 = por %p119, %p120
      %p122 = scmp.ne.s32.totalorder %s110, %s111
      %p123 = scmp.eq.s32.totalorder %s17, 1
      %p124 = por %p122, %p123
      %p126 = scmp.ne.s32.totalorder %s111, %s125
      %p127 = scmp.eq.s32.totalorder %s17, 0
      %p128 = por %p126, %p127
      %s129 = ssub.s32 %s11, %s18
      %p130 = scmp.eq.s32.totalorder %s129, 0
      %s132 = sadd.s32 %s131, 1
      %s133 = scalar_select %p130, %s131, %s132
      %p136 = pneg %p130
      %p137 = scmp.eq.s32.totalorder %s11, 1
      %p138 = por %p136, %p137
      %p139 = scmp.ne.s32.totalorder %s131, %s134
      %p140 = scmp.eq.s32.totalorder %s11, 0
      %p141 = por %p139, %p140
      %p142 = scmp.ne.s32.totalorder %s131, %s134
      %p143 = scmp.eq.s32.totalorder %s16, 1
      %p144 = por %p142, %p143
      %p145 = scmp.ne.s32.totalorder %s134, %s135
      %p146 = scmp.eq.s32.totalorder %s16, 0
      %p147 = por %p145, %p146
      %p148 = scmp.ne.s32.totalorder %s134, %s135
      %p149 = scmp.eq.s32.totalorder %s17, 1
      %p150 = por %p148, %p149
      %p152 = scmp.ne.s32.totalorder %s135, %s151
      %p153 = scmp.eq.s32.totalorder %s17, 0
      %p154 = por %p152, %p153
      %p155 = scmp.le.s32.totalorder 1, %s11
      %p156 = scmp.lt.s32.totalorder %s11, 3
      %p157 = pnand %p155, %p156
      %p158 = pneg %p157
      // Predicated region
      $region9: #{adcdnet_forward.25} parent=5 // pred_check
        _
      $region10: #{adcdnet_forward.25} parent=5 // pred_check_branch
        %160 = sbr.rel (%p157) target = $region12
      $region11: #{adcdnet_forward.25} parent=5 // pred_region
        %s161 = ssub.s32 %s11, 1
        // Predicated region
        $region13: #{adcdnet_forward.25} parent=11 // pred_check
          %p162 = pneg %p58
        $region14: #{adcdnet_forward.25} parent=11 // pred_check_branch
          %164 = sbr.rel (%p162) target = $region16
        $region15: #{adcdnet_forward.25} parent=11 // pred_region
          _
        $region16: #{adcdnet_forward.25} parent=11 // pred_fallthru
          _
        // Predicated region
        $region17: #{adcdnet_forward.25} parent=11 // pred_check
          %p165 = pneg %p79
        $region18: #{adcdnet_forward.25} parent=11 // pred_check_branch
          %167 = sbr.rel (%p165) target = $region20
        $region19: #{adcdnet_forward.25} parent=11 // pred_region
          _
        $region20: #{adcdnet_forward.25} parent=11 // pred_fallthru
          _
        // Predicated region
        $region21: #{adcdnet_forward.25} parent=11 // pred_check
          %p168 = pneg %p100
        $region22: #{adcdnet_forward.25} parent=11 // pred_check_branch
          %170 = sbr.rel (%p168) target = $region24
        $region23: #{adcdnet_forward.25} parent=11 // pred_region
          _
        $region24: #{adcdnet_forward.25} parent=11 // pred_fallthru
          _
        // Predicated region
        $region25: #{adcdnet_forward.25} parent=11 // pred_check
          %p171 = pneg %p121
        $region26: #{adcdnet_forward.25} parent=11 // pred_check_branch
          %173 = sbr.rel (%p171) target = $region28
        $region27: #{adcdnet_forward.25} parent=11 // pred_region
          _
        $region28: #{adcdnet_forward.25} parent=11 // pred_fallthru
          _
      $region12: #{adcdnet_forward.25} parent=5 // pred_fallthru
        _
      %p174 = scmp.lt.s32.totalorder %s11, 2
      // Predicated region
      $region29: #{adcdnet_forward.25} parent=5 // pred_check
        %p175 = pneg %p174
      $region30: #{adcdnet_forward.25} parent=5 // pred_check_branch
        %177 = sbr.rel (%p175) target = $region32
      $region31: #{adcdnet_forward.25} parent=5 // pred_region
        // Predicated region
        $region33: #{adcdnet_forward.25} parent=31 // pred_check
          %p178 = pneg %p31
        $region34: #{adcdnet_forward.25} parent=31 // pred_check_branch
          %180 = sbr.rel (%p178) target = $region36
        $region35: #{adcdnet_forward.25} parent=31 // pred_region
          %s181 = smul.u32 32, %s11
          %p182 = scmp.lt.s32.totalorder %s181, 63
          %s183 = scalar_select %p182, %s181, 63
          %s184 = smul.addr %s183, 4
          %s185 = scalar_lea.vmem %s0, %s184
          %s186 = smul.u32 32, %s11
        $region36: #{adcdnet_forward.25} parent=31 // pred_fallthru
          _
      $region32: #{adcdnet_forward.25} parent=5 // pred_fallthru
        _
      %p187 = scmp.le.s32.totalorder 1, %s11
      %p188 = scmp.lt.s32.totalorder %s11, 3
      %p189 = pnand %p187, %p188
      %p190 = pneg %p189
      // Predicated region
      $region37: #{adcdnet_forward.25} parent=5 // pred_check
        _
      $region38: #{adcdnet_forward.25} parent=5 // pred_check_branch
        %192 = sbr.rel (%p189) target = $region40
      $region39: #{adcdnet_forward.25} parent=5 // pred_region
        %s193 = ssub.s32 %s11, 1
        %s194 = smul.u32 32, %s16
        %p195 = scmp.lt.s32.totalorder %s194, 63
        %s196 = scalar_select %p195, %s194, 63
        %s197 = smul.addr %s196, 4
        %s198 = scalar_lea.vmem %s0, %s197
        %p199 = pneg %p37
        %p200 = pneg %p34
        %p201 = pneg %p58
        %p202 = pneg %p55
        %p203 = pneg %p79
        %p204 = pneg %p76
        %p205 = pneg %p100
        %p206 = pneg %p97
        %p207 = pneg %p121
        %p208 = pneg %p118
        %p209 = pneg %p147
        %p210 = pneg %p144
        %s211 = sand.u32 %s134, 1
        %s212 = sand.u32 %s134, 1
        %s213 = smul.addr %s212, 32
        %s214 = scalar_lea.vmem [#allocation2], %s213
        %s215 = smul.u32 32, %s16
        %p216 = scmp.lt.s32.totalorder %s215, 63
        %s217 = scalar_select %p216, %s215, 63
        %s218 = smul.addr %s217, 4
        %s219 = scalar_lea.vmem %s0, %s218
        %s220 = smul.u32 32, %s16
        %s221 = smul.u32 2, %s16
        %v222 = vld [vmem:[%s219] sm:$0xf]
        %v223 = vld [vmem:[%s219 + $0x4] sm:$0xf]
        %v224 = vld [vmem:[%s219 + $0x8] sm:$0xf]
        %v225 = vld [vmem:[%s219 + $0xc] sm:$0xf]
        %v226 = vld [vmem:[%s219 + $0x10] sm:$0xf]
        %v227 = vld [vmem:[%s219 + $0x14] sm:$0xf]
        %v228 = vld [vmem:[%s219 + $0x18] sm:$0xf]
        %v229 = vld [vmem:[%s219 + $0x1c] sm:$0xf]
        %v230 = vld [vmem:[%s219 + $0x20] sm:$0xf]
        %v231 = vld [vmem:[%s219 + $0x24] sm:$0xf]
        %v232 = vld [vmem:[%s219 + $0x28] sm:$0xf]
        %v233 = vld [vmem:[%s219 + $0x2c] sm:$0xf]
        %v234 = vld [vmem:[%s219 + $0x30] sm:$0xf]
        %v235 = vld [vmem:[%s219 + $0x34] sm:$0xf]
        %v236 = vld [vmem:[%s219 + $0x38] sm:$0xf]
        %v237 = vld [vmem:[%s219 + $0x3c] sm:$0xf]
        %v238 = vld [vmem:[%s219 + $0x40] sm:$0xf]
        %v239 = vld [vmem:[%s219 + $0x44] sm:$0xf]
        %v240 = vld [vmem:[%s219 + $0x48] sm:$0xf]
        %v241 = vld [vmem:[%s219 + $0x4c] sm:$0xf]
        %v242 = vld [vmem:[%s219 + $0x50] sm:$0xf]
        %v243 = vld [vmem:[%s219 + $0x54] sm:$0xf]
        %v244 = vld [vmem:[%s219 + $0x58] sm:$0xf]
        %v245 = vld [vmem:[%s219 + $0x5c] sm:$0xf]
        %v246 = vld [vmem:[%s219 + $0x60] sm:$0xf]
        %v247 = vld [vmem:[%s219 + $0x64] sm:$0xf]
        %v248 = vld [vmem:[%s219 + $0x68] sm:$0xf]
        %v249 = vld [vmem:[%s219 + $0x6c] sm:$0xf]
        %v250 = vld [vmem:[%s219 + $0x70] sm:$0xf]
        %v251 = vld [vmem:[%s219 + $0x74] sm:$0xf]
        %v252 = vld [vmem:[%s219 + $0x78] sm:$0xf]
        %v253 = vld [vmem:[%s219 + $0x7c] sm:$0xf]
        %v254 = vunpack.c.l.bf16 %v222
        %v255 = vunpack.c.l.bf16 %v223
        %v256 = vunpack.c.l.bf16 %v224
        %v257 = vunpack.c.l.bf16 %v225
        %v258 = vunpack.c.l.bf16 %v226
        %v259 = vunpack.c.l.bf16 %v227
        %v260 = vunpack.c.l.bf16 %v228
        %v261 = vunpack.c.l.bf16 %v229
        %v262 = vunpack.c.l.bf16 %v230
        %v263 = vunpack.c.l.bf16 %v231
        %v264 = vunpack.c.l.bf16 %v232
        %v265 = vunpack.c.l.bf16 %v233
        %v266 = vunpack.c.l.bf16 %v234
        %v267 = vunpack.c.l.bf16 %v235
        %v268 = vunpack.c.l.bf16 %v236
        %v269 = vunpack.c.l.bf16 %v237
        %v270 = vunpack.c.l.bf16 %v238
        %v271 = vunpack.c.l.bf16 %v239
        %v272 = vunpack.c.l.bf16 %v240
        %v273 = vunpack.c.l.bf16 %v241
        %v274 = vunpack.c.l.bf16 %v242
        %v275 = vunpack.c.l.bf16 %v243
        %v276 = vunpack.c.l.bf16 %v244
        %v277 = vunpack.c.l.bf16 %v245
        %v278 = vunpack.c.l.bf16 %v246
        %v279 = vunpack.c.l.bf16 %v247
        %v280 = vunpack.c.l.bf16 %v248
        %v281 = vunpack.c.l.bf16 %v249
        %v282 = vunpack.c.l.bf16 %v250
        %v283 = vunpack.c.l.bf16 %v251
        %v284 = vunpack.c.l.bf16 %v252
        %v285 = vunpack.c.l.bf16 %v253
        %v286 = vld [vmem:[%s1] sm:$0xff]
        %v287 = vld [vmem:[%s1 + $0x8] sm:$0xff]
        %v288 = vld [vmem:[%s1 + $0x10] sm:$0xff]
        %v289 = vld [vmem:[%s1 + $0x18] sm:$0xff]
        %v290 = vld [vmem:[%s1 + $0x20] sm:$0xff]
        %v291 = vld [vmem:[%s1 + $0x28] sm:$0xff]
        %v292 = vld [vmem:[%s1 + $0x30] sm:$0xff]
        %v293 = vld [vmem:[%s1 + $0x38] sm:$0xff]
        %v294 = vld [vmem:[%s1 + $0x40] sm:$0xff]
        %v295 = vld [vmem:[%s1 + $0x48] sm:$0xff]
        %v296 = vld [vmem:[%s1 + $0x50] sm:$0xff]
        %v297 = vld [vmem:[%s1 + $0x58] sm:$0xff]
        %v298 = vld [vmem:[%s2] sm:$0x1]
        %v300 = vperm.slane %v298, 0
        %vm302 = vcmask 785408
        %v304 = vsel %vm302, %v254, 0
        %v307 = vsel %vm302, %v255, 0
        %v310 = vsel %vm302, %v256, 0
        %v313 = vsel %vm302, %v257, 0
        %v316 = vsel %vm302, %v258, 0
        %v319 = vsel %vm302, %v259, 0
        %v322 = vsel %vm302, %v260, 0
        %v325 = vsel %vm302, %v261, 0
        %v328 = vsel %vm302, %v262, 0
        %v331 = vsel %vm302, %v263, 0
        %v334 = vsel %vm302, %v264, 0
        %v337 = vsel %vm302, %v265, 0
        %v340 = vsel %vm302, %v266, 0
        %v343 = vsel %vm302, %v267, 0
        %v346 = vsel %vm302, %v268, 0
        %v349 = vsel %vm302, %v269, 0
        %v352 = vsel %vm302, %v270, 0
        %v355 = vsel %vm302, %v271, 0
        %v358 = vsel %vm302, %v272, 0
        %v361 = vsel %vm302, %v273, 0
        %v364 = vsel %vm302, %v274, 0
        %v367 = vsel %vm302, %v275, 0
        %v370 = vsel %vm302, %v276, 0
        %v373 = vsel %vm302, %v277, 0
        %v376 = vsel %vm302, %v278, 0
        %v379 = vsel %vm302, %v279, 0
        %v382 = vsel %vm302, %v280, 0
        %v385 = vsel %vm302, %v281, 0
        %v388 = vsel %vm302, %v282, 0
        %v391 = vsel %vm302, %v283, 0
        %v394 = vsel %vm302, %v284, 0
        %v397 = vsel %vm302, %v285, 0
        %399 = vmatpush.msra.mxu0 0.0
        %400 = vmatpush.msra.mxu0 0.0
        %401 = vmatpush.msra.mxu0 0.0
        %402 = vmatpush.msra.mxu0 0.0
        %403 = vmatpush.msra.mxu0 %v297
        %404 = vmatpush.msra.mxu0 %v296
        %405 = vmatpush.msra.mxu0 %v295
        %406 = vmatpush.msra.mxu0 %v294
        %407 = vmatpush.msra.mxu0 %v293
        %408 = vmatpush.msra.mxu0 %v292
        %409 = vmatpush.msra.mxu0 %v291
        %410 = vmatpush.msra.mxu0 %v290
        %411 = vmatpush.msra.mxu0 %v289
        %412 = vmatpush.msra.mxu0 %v288
        %413 = vmatpush.msra.mxu0 %v287
        %414 = vmatpush.msra.mxu0 %v286
        %415 = vmatmul.f32.gmra.mxu0 %v304
        %v416 = vpop.f32.mrf.mxu0
        %v417 = vadd.f32 %v300, %v416
        %418 = vmatmul.f32.gmra.mxu0 %v307
        %v419 = vpop.f32.mrf.mxu0
        %v420 = vadd.f32 %v300, %v419
        %421 = vmatmul.f32.gmra.mxu0 %v310
        %v422 = vpop.f32.mrf.mxu0
        %v423 = vadd.f32 %v300, %v422
        %424 = vmatmul.f32.gmra.mxu0 %v313
        %v425 = vpop.f32.mrf.mxu0
        %v426 = vadd.f32 %v300, %v425
        %427 = vmatmul.f32.gmra.mxu0 %v316
        %v428 = vpop.f32.mrf.mxu0
        %v429 = vadd.f32 %v300, %v428
        %430 = vmatmul.f32.gmra.mxu0 %v319
        %v431 = vpop.f32.mrf.mxu0
        %v432 = vadd.f32 %v300, %v431
        %433 = vmatmul.f32.gmra.mxu0 %v322
        %v434 = vpop.f32.mrf.mxu0
        %v435 = vadd.f32 %v300, %v434
        %436 = vmatmul.f32.gmra.mxu0 %v325
        %v437 = vpop.f32.mrf.mxu0
        %v438 = vadd.f32 %v300, %v437
        %439 = vmatmul.f32.gmra.mxu0 %v328
        %v440 = vpop.f32.mrf.mxu0
        %v441 = vadd.f32 %v300, %v440
        %442 = vmatmul.f32.gmra.mxu0 %v331
        %v443 = vpop.f32.mrf.mxu0
        %v444 = vadd.f32 %v300, %v443
        %445 = vmatmul.f32.gmra.mxu0 %v334
        %v446 = vpop.f32.mrf.mxu0
        %v447 = vadd.f32 %v300, %v446
        %448 = vmatmul.f32.gmra.mxu0 %v337
        %v449 = vpop.f32.mrf.mxu0
        %v450 = vadd.f32 %v300, %v449
        %451 = vmatmul.f32.gmra.mxu0 %v340
        %v452 = vpop.f32.mrf.mxu0
        %v453 = vadd.f32 %v300, %v452
        %454 = vmatmul.f32.gmra.mxu0 %v343
        %v455 = vpop.f32.mrf.mxu0
        %v456 = vadd.f32 %v300, %v455
        %457 = vmatmul.f32.gmra.mxu0 %v346
        %v458 = vpop.f32.mrf.mxu0
        %v459 = vadd.f32 %v300, %v458
        %460 = vmatmul.f32.gmra.mxu0 %v349
        %v461 = vpop.f32.mrf.mxu0
        %v462 = vadd.f32 %v300, %v461
        %463 = vmatmul.f32.gmra.mxu0 %v352
        %v464 = vpop.f32.mrf.mxu0
        %v465 = vadd.f32 %v300, %v464
        %466 = vmatmul.f32.gmra.mxu0 %v355
        %v467 = vpop.f32.mrf.mxu0
        %v468 = vadd.f32 %v300, %v467
        %469 = vmatmul.f32.gmra.mxu0 %v358
        %v470 = vpop.f32.mrf.mxu0
        %v471 = vadd.f32 %v300, %v470
        %472 = vmatmul.f32.gmra.mxu0 %v361
        %v473 = vpop.f32.mrf.mxu0
        %v474 = vadd.f32 %v300, %v473
        %475 = vmatmul.f32.gmra.mxu0 %v364
        %v476 = vpop.f32.mrf.mxu0
        %v477 = vadd.f32 %v300, %v476
        %478 = vmatmul.f32.gmra.mxu0 %v367
        %v479 = vpop.f32.mrf.mxu0
        %v480 = vadd.f32 %v300, %v479
        %481 = vmatmul.f32.gmra.mxu0 %v370
        %v482 = vpop.f32.mrf.mxu0
        %v483 = vadd.f32 %v300, %v482
        %484 = vmatmul.f32.gmra.mxu0 %v373
        %v485 = vpop.f32.mrf.mxu0
        %v486 = vadd.f32 %v300, %v485
        %487 = vmatmul.f32.gmra.mxu0 %v376
        %v488 = vpop.f32.mrf.mxu0
        %v489 = vadd.f32 %v300, %v488
        %490 = vmatmul.f32.gmra.mxu0 %v379
        %v491 = vpop.f32.mrf.mxu0
        %v492 = vadd.f32 %v300, %v491
        %493 = vmatmul.f32.gmra.mxu0 %v382
        %v494 = vpop.f32.mrf.mxu0
        %v495 = vadd.f32 %v300, %v494
        %496 = vmatmul.f32.gmra.mxu0 %v385
        %v497 = vpop.f32.mrf.mxu0
        %v498 = vadd.f32 %v300, %v497
        %499 = vmatmul.f32.gmra.mxu0 %v388
        %v500 = vpop.f32.mrf.mxu0
        %v501 = vadd.f32 %v300, %v500
        %502 = vmatmul.f32.gmra.mxu0 %v391
        %v503 = vpop.f32.mrf.mxu0
        %v504 = vadd.f32 %v300, %v503
        %505 = vmatmul.f32.gmra.mxu0 %v394
        %v506 = vpop.f32.mrf.mxu0
        %v507 = vadd.f32 %v300, %v506
        %508 = vmatmul.f32.gmra.mxu0 %v397
        %v509 = vpop.f32.mrf.mxu0
        %v510 = vadd.f32 %v300, %v509
        %511 = vdwg.mxu0
        %v512 = vmul.f32 %v417, 0.5
        %v513 = vmul.f32 %v420, 0.5
        %v514 = vmul.f32 %v423, 0.5
        %v515 = vmul.f32 %v426, 0.5
        %v516 = vmul.f32 %v429, 0.5
        %v517 = vmul.f32 %v432, 0.5
        %v518 = vmul.f32 %v435, 0.5
        %v519 = vmul.f32 %v438, 0.5
        %v520 = vmul.f32 %v441, 0.5
        %v521 = vmul.f32 %v444, 0.5
        %v522 = vmul.f32 %v447, 0.5
        %v523 = vmul.f32 %v450, 0.5
        %v524 = vmul.f32 %v453, 0.5
        %v525 = vmul.f32 %v456, 0.5
        %v526 = vmul.f32 %v459, 0.5
        %v527 = vmul.f32 %v462, 0.5
        %v528 = vmul.f32 %v465, 0.5
        %v529 = vmul.f32 %v468, 0.5
        %v530 = vmul.f32 %v471, 0.5
        %v531 = vmul.f32 %v474, 0.5
        %v532 = vmul.f32 %v477, 0.5
        %v533 = vmul.f32 %v480, 0.5
        %v534 = vmul.f32 %v483, 0.5
        %v535 = vmul.f32 %v486, 0.5
        %v536 = vmul.f32 %v489, 0.5
        %v537 = vmul.f32 %v492, 0.5
        %v538 = vmul.f32 %v495, 0.5
        %v539 = vmul.f32 %v498, 0.5
        %v540 = vmul.f32 %v501, 0.5
        %v541 = vmul.f32 %v504, 0.5
        %v542 = vmul.f32 %v507, 0.5
        %v543 = vmul.f32 %v510, 0.5
        %v544 = vmul.f32 %v417, 0.044715
        %v545 = vmul.f32 %v420, 0.044715
        %v546 = vmul.f32 %v423, 0.044715
        %v547 = vmul.f32 %v426, 0.044715
        %v548 = vmul.f32 %v429, 0.044715
        %v549 = vmul.f32 %v432, 0.044715
        %v550 = vmul.f32 %v435, 0.044715
        %v551 = vmul.f32 %v438, 0.044715
        %v552 = vmul.f32 %v441, 0.044715
        %v553 = vmul.f32 %v444, 0.044715
        %v554 = vmul.f32 %v447, 0.044715
        %v555 = vmul.f32 %v450, 0.044715
        %v556 = vmul.f32 %v453, 0.044715
        %v557 = vmul.f32 %v456, 0.044715
        %v558 = vmul.f32 %v459, 0.044715
        %v559 = vmul.f32 %v462, 0.044715
        %v560 = vmul.f32 %v465, 0.044715
        %v561 = vmul.f32 %v468, 0.044715
        %v562 = vmul.f32 %v471, 0.044715
        %v563 = vmul.f32 %v474, 0.044715
        %v564 = vmul.f32 %v477, 0.044715
        %v565 = vmul.f32 %v480, 0.044715
        %v566 = vmul.f32 %v483, 0.044715
        %v567 = vmul.f32 %v486, 0.044715
        %v568 = vmul.f32 %v489, 0.044715
        %v569 = vmul.f32 %v492, 0.044715
        %v570 = vmul.f32 %v495, 0.044715
        %v571 = vmul.f32 %v498, 0.044715
        %v572 = vmul.f32 %v501, 0.044715
        %v573 = vmul.f32 %v504, 0.044715
        %v574 = vmul.f32 %v507, 0.044715
        %v575 = vmul.f32 %v510, 0.044715
        %v576 = vmul.f32 %v544, %v417
        %v577 = vmul.f32 %v545, %v420
        %v578 = vmul.f32 %v546, %v423
        %v579 = vmul.f32 %v547, %v426
        %v580 = vmul.f32 %v548, %v429
        %v581 = vmul.f32 %v549, %v432
        %v582 = vmul.f32 %v550, %v435
        %v583 = vmul.f32 %v551, %v438
        %v584 = vmul.f32 %v552, %v441
        %v585 = vmul.f32 %v553, %v444
        %v586 = vmul.f32 %v554, %v447
        %v587 = vmul.f32 %v555, %v450
        %v588 = vmul.f32 %v556, %v453
        %v589 = vmul.f32 %v557, %v456
        %v590 = vmul.f32 %v558, %v459
        %v591 = vmul.f32 %v559, %v462
        %v592 = vmul.f32 %v560, %v465
        %v593 = vmul.f32 %v561, %v468
        %v594 = vmul.f32 %v562, %v471
        %v595 = vmul.f32 %v563, %v474
        %v596 = vmul.f32 %v564, %v477
        %v597 = vmul.f32 %v565, %v480
        %v598 = vmul.f32 %v566, %v483
        %v599 = vmul.f32 %v567, %v486
        %v600 = vmul.f32 %v568, %v489
        %v601 = vmul.f32 %v569, %v492
        %v602 = vmul.f32 %v570, %v495
        %v603 = vmul.f32 %v571, %v498
        %v604 = vmul.f32 %v572, %v501
        %v605 = vmul.f32 %v573, %v504
        %v606 = vmul.f32 %v574, %v507
        %v607 = vmul.f32 %v575, %v510
        %v608 = vmul.f32 %v576, %v417
        %v609 = vmul.f32 %v577, %v420
        %v610 = vmul.f32 %v578, %v423
        %v611 = vmul.f32 %v579, %v426
        %v612 = vmul.f32 %v580, %v429
        %v613 = vmul.f32 %v581, %v432
        %v614 = vmul.f32 %v582, %v435
        %v615 = vmul.f32 %v583, %v438
        %v616 = vmul.f32 %v584, %v441
        %v617 = vmul.f32 %v585, %v444
        %v618 = vmul.f32 %v586, %v447
        %v619 = vmul.f32 %v587, %v450
        %v620 = vmul.f32 %v588, %v453
        %v621 = vmul.f32 %v589, %v456
        %v622 = vmul.f32 %v590, %v459
        %v623 = vmul.f32 %v591, %v462
        %v624 = vmul.f32 %v592, %v465
        %v625 = vmul.f32 %v593, %v468
        %v626 = vmul.f32 %v594, %v471
        %v627 = vmul.f32 %v595, %v474
        %v628 = vmul.f32 %v596, %v477
        %v629 = vmul.f32 %v597, %v480
        %v630 = vmul.f32 %v598, %v483
        %v631 = vmul.f32 %v599, %v486
        %v632 = vmul.f32 %v600, %v489
        %v633 = vmul.f32 %v601, %v492
        %v634 = vmul.f32 %v602, %v495
        %v635 = vmul.f32 %v603, %v498
        %v636 = vmul.f32 %v604, %v501
        %v637 = vmul.f32 %v605, %v504
        %v638 = vmul.f32 %v606, %v507
        %v639 = vmul.f32 %v607, %v510
        %v640 = vadd.f32 %v417, %v608
        %v641 = vadd.f32 %v420, %v609
        %v642 = vadd.f32 %v423, %v610
        %v643 = vadd.f32 %v426, %v611
        %v644 = vadd.f32 %v429, %v612
        %v645 = vadd.f32 %v432, %v613
        %v646 = vadd.f32 %v435, %v614
        %v647 = vadd.f32 %v438, %v615
        %v648 = vadd.f32 %v441, %v616
        %v649 = vadd.f32 %v444, %v617
        %v650 = vadd.f32 %v447, %v618
        %v651 = vadd.f32 %v450, %v619
        %v652 = vadd.f32 %v453, %v620
        %v653 = vadd.f32 %v456, %v621
        %v654 = vadd.f32 %v459, %v622
        %v655 = vadd.f32 %v462, %v623
        %v656 = vadd.f32 %v465, %v624
        %v657 = vadd.f32 %v468, %v625
        %v658 = vadd.f32 %v471, %v626
        %v659 = vadd.f32 %v474, %v627
        %v660 = vadd.f32 %v477, %v628
        %v661 = vadd.f32 %v480, %v629
        %v662 = vadd.f32 %v483, %v630
        %v663 = vadd.f32 %v486, %v631
        %v664 = vadd.f32 %v489, %v632
        %v665 = vadd.f32 %v492, %v633
        %v666 = vadd.f32 %v495, %v634
        %v667 = vadd.f32 %v498, %v635
        %v668 = vadd.f32 %v501, %v636
        %v669 = vadd.f32 %v504, %v637
        %v670 = vadd.f32 %v507, %v638
        %v671 = vadd.f32 %v510, %v639
        %v672 = vmul.f32 %v640, 0.7978846
        %v673 = vmul.f32 %v641, 0.7978846
        %v674 = vmul.f32 %v642, 0.7978846
        %v675 = vmul.f32 %v643, 0.7978846
        %v676 = vmul.f32 %v644, 0.7978846
        %v677 = vmul.f32 %v645, 0.7978846
        %v678 = vmul.f32 %v646, 0.7978846
        %v679 = vmul.f32 %v647, 0.7978846
        %v680 = vmul.f32 %v648, 0.7978846
        %v681 = vmul.f32 %v649, 0.7978846
        %v682 = vmul.f32 %v650, 0.7978846
        %v683 = vmul.f32 %v651, 0.7978846
        %v684 = vmul.f32 %v652, 0.7978846
        %v685 = vmul.f32 %v653, 0.7978846
        %v686 = vmul.f32 %v654, 0.7978846
        %v687 = vmul.f32 %v655, 0.7978846
        %v688 = vmul.f32 %v656, 0.7978846
        %v689 = vmul.f32 %v657, 0.7978846
        %v690 = vmul.f32 %v658, 0.7978846
        %v691 = vmul.f32 %v659, 0.7978846
        %v692 = vmul.f32 %v660, 0.7978846
        %v693 = vmul.f32 %v661, 0.7978846
        %v694 = vmul.f32 %v662, 0.7978846
        %v695 = vmul.f32 %v663, 0.7978846
        %v696 = vmul.f32 %v664, 0.7978846
        %v697 = vmul.f32 %v665, 0.7978846
        %v698 = vmul.f32 %v666, 0.7978846
        %v699 = vmul.f32 %v667, 0.7978846
        %v700 = vmul.f32 %v668, 0.7978846
        %v701 = vmul.f32 %v669, 0.7978846
        %v702 = vmul.f32 %v670, 0.7978846
        %v703 = vmul.f32 %v671, 0.7978846
        %v704 = vtanh.pop %v672
        %v705 = vtanh.pop %v673
        %v706 = vtanh.pop %v674
        %v707 = vtanh.pop %v675
        %v708 = vtanh.pop %v676
        %v709 = vtanh.pop %v677
        %v710 = vtanh.pop %v678
        %v711 = vtanh.pop %v679
        %v712 = vtanh.pop %v680
        %v713 = vtanh.pop %v681
        %v714 = vtanh.pop %v682
        %v715 = vtanh.pop %v683
        %v716 = vtanh.pop %v684
        %v717 = vtanh.pop %v685
        %v718 = vtanh.pop %v686
        %v719 = vtanh.pop %v687
        %v720 = vtanh.pop %v688
        %v721 = vtanh.pop %v689
        %v722 = vtanh.pop %v690
        %v723 = vtanh.pop %v691
        %v724 = vtanh.pop %v692
        %v725 = vtanh.pop %v693
        %v726 = vtanh.pop %v694
        %v727 = vtanh.pop %v695
        %v728 = vtanh.pop %v696
        %v729 = vtanh.pop %v697
        %v730 = vtanh.pop %v698
        %v731 = vtanh.pop %v699
        %v732 = vtanh.pop %v700
        %v733 = vtanh.pop %v701
        %v734 = vtanh.pop %v702
        %v735 = vtanh.pop %v703
        %v736 = vadd.f32 %v704, 1.0
        %v737 = vadd.f32 %v705, 1.0
        %v738 = vadd.f32 %v706, 1.0
        %v739 = vadd.f32 %v707, 1.0
        %v740 = vadd.f32 %v708, 1.0
        %v741 = vadd.f32 %v709, 1.0
        %v742 = vadd.f32 %v710, 1.0
        %v743 = vadd.f32 %v711, 1.0
        %v744 = vadd.f32 %v712, 1.0
        %v745 = vadd.f32 %v713, 1.0
        %v746 = vadd.f32 %v714, 1.0
        %v747 = vadd.f32 %v715, 1.0
        %v748 = vadd.f32 %v716, 1.0
        %v749 = vadd.f32 %v717, 1.0
        %v750 = vadd.f32 %v718, 1.0
        %v751 = vadd.f32 %v719, 1.0
        %v752 = vadd.f32 %v720, 1.0
        %v753 = vadd.f32 %v721, 1.0
        %v754 = vadd.f32 %v722, 1.0
        %v755 = vadd.f32 %v723, 1.0
        %v756 = vadd.f32 %v724, 1.0
        %v757 = vadd.f32 %v725, 1.0
        %v758 = vadd.f32 %v726, 1.0
        %v759 = vadd.f32 %v727, 1.0
        %v760 = vadd.f32 %v728, 1.0
        %v761 = vadd.f32 %v729, 1.0
        %v762 = vadd.f32 %v730, 1.0
        %v763 = vadd.f32 %v731, 1.0
        %v764 = vadd.f32 %v732, 1.0
        %v765 = vadd.f32 %v733, 1.0
        %v766 = vadd.f32 %v734, 1.0
        %v767 = vadd.f32 %v735, 1.0
        %v768 = vmul.f32 %v512, %v736
        %v769 = vmul.f32 %v513, %v737
        %v770 = vmul.f32 %v514, %v738
        %v771 = vmul.f32 %v515, %v739
        %v772 = vmul.f32 %v516, %v740
        %v773 = vmul.f32 %v517, %v741
        %v774 = vmul.f32 %v518, %v742
        %v775 = vmul.f32 %v519, %v743
        %v776 = vmul.f32 %v520, %v744
        %v777 = vmul.f32 %v521, %v745
        %v778 = vmul.f32 %v522, %v746
        %v779 = vmul.f32 %v523, %v747
        %v780 = vmul.f32 %v524, %v748
        %v781 = vmul.f32 %v525, %v749
        %v782 = vmul.f32 %v526, %v750
        %v783 = vmul.f32 %v527, %v751
        %v784 = vmul.f32 %v528, %v752
        %v785 = vmul.f32 %v529, %v753
        %v786 = vmul.f32 %v530, %v754
        %v787 = vmul.f32 %v531, %v755
        %v788 = vmul.f32 %v532, %v756
        %v789 = vmul.f32 %v533, %v757
        %v790 = vmul.f32 %v534, %v758
        %v791 = vmul.f32 %v535, %v759
        %v792 = vmul.f32 %v536, %v760
        %v793 = vmul.f32 %v537, %v761
        %v794 = vmul.f32 %v538, %v762
        %v795 = vmul.f32 %v539, %v763
        %v796 = vmul.f32 %v540, %v764
        %v797 = vmul.f32 %v541, %v765
        %v798 = vmul.f32 %v542, %v766
        %v799 = vmul.f32 %v543, %v767
        %v800 = vld [vmem:[%s3] sm:$0xff]
        %v801 = vld [vmem:[%s3 + $0x8] sm:$0xff]
        %v802 = vld [vmem:[%s3 + $0x10] sm:$0xff]
        %v803 = vld [vmem:[%s3 + $0x18] sm:$0xff]
        %v804 = vld [vmem:[%s4] sm:$0xff]
        %v805 = vld [vmem:[%s4 + $0x8] sm:$0xff]
        %v806 = vld [vmem:[%s4 + $0x10] sm:$0xff]
        %v807 = vld [vmem:[%s4 + $0x18] sm:$0xff]
        %809 = vset.pattern.permute.xlu0 0
        %810 = vperm.xlu0 %809, %v804
        %v811 = vpop.permute.xlu0 %810
        %814 = vset.pattern.permute.xlu0 0
        %815 = vperm.xlu0 %814, %v805
        %v816 = vpop.permute.xlu0 %815
        %819 = vset.pattern.permute.xlu0 0
        %820 = vperm.xlu0 %819, %v806
        %v821 = vpop.permute.xlu0 %820
        %824 = vset.pattern.permute.xlu0 0
        %825 = vperm.xlu0 %824, %v807
        %v826 = vpop.permute.xlu0 %825
        %vm828 = vcmask 392192
        %v830 = vsel %vm828, %v800, 0
        %v833 = vsel %vm828, %v801, 0
        %v836 = vsel %vm828, %v802, 0
        %v839 = vsel %vm828, %v803, 0
        %v842 = vsel %vm828, %v768, 0
        %v845 = vsel %vm828, %v769, 0
        %v848 = vsel %vm828, %v770, 0
        %v851 = vsel %vm828, %v771, 0
        %v854 = vsel %vm828, %v772, 0
        %v857 = vsel %vm828, %v773, 0
        %v860 = vsel %vm828, %v774, 0
        %v863 = vsel %vm828, %v775, 0
        %v866 = vsel %vm828, %v776, 0
        %v869 = vsel %vm828, %v777, 0
        %v872 = vsel %vm828, %v778, 0
        %v875 = vsel %vm828, %v779, 0
        %v878 = vsel %vm828, %v780, 0
        %v881 = vsel %vm828, %v781, 0
        %v884 = vsel %vm828, %v782, 0
        %v887 = vsel %vm828, %v783, 0
        %v890 = vsel %vm828, %v784, 0
        %v893 = vsel %vm828, %v785, 0
        %v896 = vsel %vm828, %v786, 0
        %v899 = vsel %vm828, %v787, 0
        %v902 = vsel %vm828, %v788, 0
        %v905 = vsel %vm828, %v789, 0
        %v908 = vsel %vm828, %v790, 0
        %v911 = vsel %vm828, %v791, 0
        %v914 = vsel %vm828, %v792, 0
        %v917 = vsel %vm828, %v793, 0
        %v920 = vsel %vm828, %v794, 0
        %v923 = vsel %vm828, %v795, 0
        %v926 = vsel %vm828, %v796, 0
        %v929 = vsel %vm828, %v797, 0
        %v932 = vsel %vm828, %v798, 0
        %v935 = vsel %vm828, %v799, 0
        %937 = vmatpush.xpose.msra.mxu0 %v887
        %938 = vmatpush.xpose.msra.mxu0 %v884
        %939 = vmatpush.xpose.msra.mxu0 %v881
        %940 = vmatpush.xpose.msra.mxu0 %v878
        %941 = vmatpush.xpose.msra.mxu0 %v875
        %942 = vmatpush.xpose.msra.mxu0 %v872
        %943 = vmatpush.xpose.msra.mxu0 %v869
        %944 = vmatpush.xpose.msra.mxu0 %v866
        %945 = vmatpush.xpose.msra.mxu0 %v863
        %946 = vmatpush.xpose.msra.mxu0 %v860
        %947 = vmatpush.xpose.msra.mxu0 %v857
        %948 = vmatpush.xpose.msra.mxu0 %v854
        %949 = vmatpush.xpose.msra.mxu0 %v851
        %950 = vmatpush.xpose.msra.mxu0 %v848
        %951 = vmatpush.xpose.msra.mxu0 %v845
        %952 = vmatpush.xpose.msra.mxu0 %v842
        %953 = vmatmul.f32.gmra.mxu0 %v830
        %v954 = vpop.f32.mrf.mxu0
        %v955 = vadd.f32 %v811, %v954
        %956 = vmatmul.f32.gmra.mxu0 %v833
        %v957 = vpop.f32.mrf.mxu0
        %v958 = vadd.f32 %v816, %v957
        %959 = vmatmul.f32.gmra.mxu0 %v836
        %v960 = vpop.f32.mrf.mxu0
        %v961 = vadd.f32 %v821, %v960
        %962 = vmatmul.f32.gmra.mxu0 %v839
        %v963 = vpop.f32.mrf.mxu0
        %v964 = vadd.f32 %v826, %v963
        %965 = vdwg.mxu0
        %966 = vmatpush.xpose.msra.mxu0 %v935
        %967 = vmatpush.xpose.msra.mxu0 %v932
        %968 = vmatpush.xpose.msra.mxu0 %v929
        %969 = vmatpush.xpose.msra.mxu0 %v926
        %970 = vmatpush.xpose.msra.mxu0 %v923
        %971 = vmatpush.xpose.msra.mxu0 %v920
        %972 = vmatpush.xpose.msra.mxu0 %v917
        %973 = vmatpush.xpose.msra.mxu0 %v914
        %974 = vmatpush.xpose.msra.mxu0 %v911
        %975 = vmatpush.xpose.msra.mxu0 %v908
        %976 = vmatpush.xpose.msra.mxu0 %v905
        %977 = vmatpush.xpose.msra.mxu0 %v902
        %978 = vmatpush.xpose.msra.mxu0 %v899
        %979 = vmatpush.xpose.msra.mxu0 %v896
        %980 = vmatpush.xpose.msra.mxu0 %v893
        %981 = vmatpush.xpose.msra.mxu0 %v890
        %982 = vmatmul.f32.gmra.mxu0 %v830
        %v983 = vpop.f32.mrf.mxu0
        %v984 = vadd.f32 %v811, %v983
        %985 = vmatmul.f32.gmra.mxu0 %v833
        %v986 = vpop.f32.mrf.mxu0
        %v987 = vadd.f32 %v816, %v986
        %988 = vmatmul.f32.gmra.mxu0 %v836
        %v989 = vpop.f32.mrf.mxu0
        %v990 = vadd.f32 %v821, %v989
        %991 = vmatmul.f32.gmra.mxu0 %v839
        %v992 = vpop.f32.mrf.mxu0
        %v993 = vadd.f32 %v826, %v992
        %994 = vdwg.mxu0
        %v995 = vpack.c.bf16 %v984, %v955
        %v996 = vpack.c.bf16 %v987, %v958
        %v997 = vpack.c.bf16 %v990, %v961
        %v998 = vpack.c.bf16 %v993, %v964
        %999 = vst [vmem:[%s214] sm:$0xff] %v995
        %1000 = vst [vmem:[%s214 + $0x8] sm:$0xff] %v996
        %1001 = vst [vmem:[%s214 + $0x10] sm:$0xff] %v997
        %1002 = vst [vmem:[%s214 + $0x18] sm:$0xff] %v998
        %s1003 = sand.u32 %s134, 1
        %s1004 = sand.u32 %s134, 1
        %s1005 = smul.addr %s1004, 32
        %s1006 = scalar_lea.vmem [#allocation2], %s1005
        // Predicated region
        $region41: #{adcdnet_forward.25} parent=39 // pred_check
          %p1007 = pneg %p144
        $region42: #{adcdnet_forward.25} parent=39 // pred_check_branch
          %1009 = sbr.rel (%p1007) target = $region44
        $region43: #{adcdnet_forward.25} parent=39 // pred_region
          %s1010 = smul.u32 2, %s16
          %s1011 = smul.addr %s1010, 4
          %s1012 = scalar_lea.vmem %s5, %s1011
          // Predicated region
          $region45: #{adcdnet_forward.25} parent=43 // pred_check
            _
          $region46: #{adcdnet_forward.25} parent=43 // pred_check_branch
            %1014 = sbr.rel (0) target = $region48
          $region47: #{adcdnet_forward.25} parent=43 // pred_region
            // Predicated region
            $region49: #{adcdnet_forward.25} parent=47 // pred_check
              _
            $region50: #{adcdnet_forward.25} parent=47 // pred_check_branch
              %1016 = sbr.rel (0) target = $region52
            $region51: #{adcdnet_forward.25} parent=47 // pred_region
              // Predicated region
              $region64: #{adcdnet_forward.25} parent=51 // pred_check
                _
              $region65: #{adcdnet_forward.25} parent=51 // pred_check_branch
                %1038 = sbr.rel (0) target = $region67
              $region66: #{adcdnet_forward.25} parent=51 // pred_region
                loop: start=0, step=1, limit=1
                $region68: #{adcdnet_forward.25} parent=66 // loop_pre_header
                  _
                $region69: #{adcdnet_forward.25} parent=66 // loop_header
                  %s1040 = sphi 0, %s1044
                  %p1041 = scmp.ge.s32.totalorder %s1040, 1
                  %s1045 = sphi %s1006, %s1006
                  %s1046 = sphi %s1012, %s1012
                $region70: #{adcdnet_forward.25} parent=66 // loop_header_branch
                  %1043 = sbr.rel (%p1041) target = $region74
                $region71: #{adcdnet_forward.25} parent=66 // loop_body
                  %v1047 = vld [vmem:[%s1045] sm:$0xff]
                  %1048 = vst [vmem:[%s1046] sm:$0xff] %v1047
                  %v1049 = vld [vmem:[%s1045 + $0x8] sm:$0xff]
                  %1050 = vst [vmem:[%s1046 + $0x10] sm:$0xff] %v1049
                  %v1051 = vld [vmem:[%s1045 + $0x10] sm:$0xff]
                  %1052 = vst [vmem:[%s1046 + $0x20] sm:$0xff] %v1051
                  %v1053 = vld [vmem:[%s1045 + $0x18] sm:$0xff]
                  %1054 = vst [vmem:[%s1046 + $0x30] sm:$0xff] %v1053
                $region72: #{adcdnet_forward.25} parent=66 // loop_footer
                  %s1044 = sadd.s32 1, %s1040
                $region73: #{adcdnet_forward.25} parent=66 // loop_footer_branch
                  %1039 = sbr.rel target = $region69
                $region74: #{adcdnet_forward.25} parent=66 // loop_exit
                  _
              $region67: #{adcdnet_forward.25} parent=51 // pred_fallthru
                _
              // Predicated region
              $region75: #{adcdnet_forward.25} parent=51 // pred_check
                _
              $region76: #{adcdnet_forward.25} parent=51 // pred_check_branch
                %1056 = sbr.rel target = $region78
              $region77: #{adcdnet_forward.25} parent=51 // pred_region
                _
              $region78: #{adcdnet_forward.25} parent=51 // pred_fallthru
                _
            $region52: #{adcdnet_forward.25} parent=47 // pred_fallthru
              _
            // Predicated region
            $region53: #{adcdnet_forward.25} parent=47 // pred_check
              _
            $region54: #{adcdnet_forward.25} parent=47 // pred_check_branch
              %1018 = sbr.rel target = $region56
            $region55: #{adcdnet_forward.25} parent=47 // pred_region
              %s1020 = ssub.s32 256, 1
              loop: start=0, step=1, limit=1
              $region57: #{adcdnet_forward.25} parent=55 // loop_pre_header
                _
              $region58: #{adcdnet_forward.25} parent=55 // loop_header
                %s1022 = sphi 0, %s1026
                %p1023 = scmp.ge.s32.totalorder %s1022, 1
                %s1027 = sphi %s1006, %s1006
                %s1028 = sphi %s1012, %s1012
              $region59: #{adcdnet_forward.25} parent=55 // loop_header_branch
                %1025 = sbr.rel (%p1023) target = $region63
              $region60: #{adcdnet_forward.25} parent=55 // loop_body
                %v1029 = vld [vmem:[%s1027] sm:%s1020]
                %1030 = vst [vmem:[%s1028] sm:%s1020] %v1029
                %v1031 = vld [vmem:[%s1027 + $0x8] sm:%s1020]
                %1032 = vst [vmem:[%s1028 + $0x10] sm:%s1020] %v1031
                %v1033 = vld [vmem:[%s1027 + $0x10] sm:%s1020]
                %1034 = vst [vmem:[%s1028 + $0x20] sm:%s1020] %v1033
                %v1035 = vld [vmem:[%s1027 + $0x18] sm:%s1020]
                %1036 = vst [vmem:[%s1028 + $0x30] sm:%s1020] %v1035
              $region61: #{adcdnet_forward.25} parent=55 // loop_footer
                %s1026 = sadd.s32 1, %s1022
              $region62: #{adcdnet_forward.25} parent=55 // loop_footer_branch
                %1021 = sbr.rel target = $region58
              $region63: #{adcdnet_forward.25} parent=55 // loop_exit
                _
            $region56: #{adcdnet_forward.25} parent=47 // pred_fallthru
              _
          $region48: #{adcdnet_forward.25} parent=43 // pred_fallthru
            _
          %1057 = vnop
        $region44: #{adcdnet_forward.25} parent=39 // pred_fallthru
          _
      $region40: #{adcdnet_forward.25} parent=5 // pred_fallthru
        _
      %p1058 = scmp.le.s32.totalorder 2, %s11
      // Predicated region
      $region79: #{adcdnet_forward.25} parent=5 // pred_check
        %p1059 = pneg %p1058
      $region80: #{adcdnet_forward.25} parent=5 // pred_check_branch
        %1061 = sbr.rel (%p1059) target = $region82
      $region81: #{adcdnet_forward.25} parent=5 // pred_region
        %s1062 = ssub.s32 %s11, 2
        // Predicated region
        $region83: #{adcdnet_forward.25} parent=81 // pred_check
          %p1063 = pneg %p150
        $region84: #{adcdnet_forward.25} parent=81 // pred_check_branch
          %1065 = sbr.rel (%p1063) target = $region86
        $region85: #{adcdnet_forward.25} parent=81 // pred_region
          %s1066 = sand.u32 %s135, 1
          %s1067 = sand.u32 %s135, 1
          %s1068 = smul.addr %s1067, 32
          %s1069 = scalar_lea.vmem [#allocation2], %s1068
        $region86: #{adcdnet_forward.25} parent=81 // pred_fallthru
          _
      $region82: #{adcdnet_forward.25} parent=5 // pred_fallthru
        _
    $region6: #{adcdnet_forward.25} parent=1 // loop_footer
      %s15 = sadd.s32 1, %s11
    $region7: #{adcdnet_forward.25} parent=1 // loop_footer_branch
      %10 = sbr.rel target = $region3
    $region8: #{adcdnet_forward.25} parent=1 // loop_exit
      _

// kernel: adcdnet_forward.21
$region0: #{adcdnet_forward.21}
  #allocation0 [shape = 'u32[]', space=smem, size = 0x4, offset = 0x4, fixed_abs, tag = 'smem constant byte address 0x4 - core index']
  #allocation1 [shape = 'u32[72,128]{1,0:T(1,128)}', space=vmem, size = 0x9000, scoped, tag = 'internal scratch']
  %s0 = inlined_call_operand.vmem [shape: f32[512,4], index: 0, kind: input, shape index: {}]
  %s1 = inlined_call_operand.vmem [shape: bf16[512,96], index: 1, kind: input, shape index: {}]
  %s2 = inlined_call_operand.vmem [shape: f32[4,4], index: 2, kind: input, shape index: {}]
  %s3 = inlined_call_operand.vmem [shape: f32[1,4], index: 3, kind: input, shape index: {}]
  %s4 = inlined_call_operand.vmem [shape: f32[4,96], index: 4, kind: input, shape index: {}]
  %s5 = inlined_call_operand.vmem [shape: f32[1,96], index: 5, kind: input, shape index: {}]
  %s6 = inlined_call_operand.vmem [shape: f32[4,96], index: 6, kind: input, shape index: {}]
  %s7 = inlined_call_operand.vmem [shape: f32[1,96], index: 7, kind: input, shape index: {}]
  %s8 = inlined_call_operand.vmem [shape: f32[96,48], index: 8, kind: input, shape index: {}]
  %s9 = inlined_call_operand.vmem [shape: f32[1,48], index: 9, kind: input, shape index: {}]
  %s10 = inlined_call_operand.vmem [shape: f32[2,48], index: 10, kind: input, shape index: {}]
  %s11 = inlined_call_operand.vmem [shape: f32[2,1], index: 11, kind: input, shape index: {}]
  %s12 = inlined_call_operand.vmem [shape: f32[2,512], index: 12, kind: output, shape index: {}]
  %s13 = sld [smem:[#allocation0]]
  $region81: #{adcdnet_forward.21} parent=0
    _
  %s15 = ssub.s32 1, %s13
  %s16 = scalar_select 0, %s15, %s13
  loop: start=0, step=1, limit=4
  $region2: #{adcdnet_forward.21} parent=0 // loop_pre_header
    _
  $region3: #{adcdnet_forward.21} parent=0 // loop_header
    %s18 = sphi 0, %s22
    %p19 = scmp.ge.s32.totalorder %s18, 4
    %s28 = sphi 0, %s30
    %s31 = sphi 0, %s28
    %s32 = sphi 0, %s31
    %s48 = sphi 0, %s32
    %s54 = sphi 0, %s56
    %s57 = sphi 0, %s54
    %s58 = sphi 0, %s57
    %s74 = sphi 0, %s58
    %s78 = sphi 0, %s78
    %s80 = sphi 0, %s78
    %s81 = sphi 0, %s80
    %s95 = sphi 0, %s81
    %s99 = sphi 0, %s99
    %s101 = sphi 0, %s99
    %s102 = sphi 0, %s101
    %s116 = sphi 0, %s102
    %s120 = sphi 0, %s120
    %s122 = sphi 0, %s120
    %s123 = sphi 0, %s122
    %s137 = sphi 0, %s123
    %s141 = sphi 0, %s141
    %s143 = sphi 0, %s141
    %s144 = sphi 0, %s143
    %s158 = sphi 0, %s144
    %s162 = sphi 0, %s162
    %s164 = sphi 0, %s162
    %s165 = sphi 0, %s164
    %s179 = sphi 0, %s165
    %s183 = sphi 0, %s183
    %s185 = sphi 0, %s183
    %s186 = sphi 0, %s185
    %s200 = sphi 0, %s186
    %s204 = sphi 0, %s204
    %s206 = sphi 0, %s204
    %s207 = sphi 0, %s206
    %s221 = sphi 0, %s207
    %s225 = sphi 0, %s225
    %s227 = sphi 0, %s225
    %s228 = sphi 0, %s227
    %s242 = sphi 0, %s228
    %s246 = sphi 0, %s246
    %s248 = sphi 0, %s246
    %s249 = sphi 0, %s248
    %s263 = sphi 0, %s249
    %s267 = sphi 0, %s267
    %s269 = sphi 0, %s267
    %s270 = sphi 0, %s269
    %s284 = sphi 0, %s270
    %s290 = sphi 0, %s292
    %s293 = sphi 0, %s290
    %s294 = sphi 0, %s293
    %s310 = sphi 0, %s294
  $region4: #{adcdnet_forward.21} parent=0 // loop_header_branch
    %21 = sbr.rel (%p19) target = $region8
  $region5: #{adcdnet_forward.21} parent=0 // loop_body
    %s23 = ssub.s32 %s18, 1
    %s24 = ssub.s32 %s18, 2
    %s25 = sadd.s32 %s18, 1
    %s26 = ssub.s32 %s18, %s25
    %p27 = scmp.eq.s32.totalorder %s26, 0
    %s29 = sadd.s32 %s28, 1
    %s30 = scalar_select %p27, %s28, %s29
    %p33 = pneg %p27
    %p34 = scmp.eq.s32.totalorder %s18, 1
    %p35 = por %p33, %p34
    %p36 = scmp.ne.s32.totalorder %s28, %s31
    %p37 = scmp.eq.s32.totalorder %s18, 0
    %p38 = por %p36, %p37
    %p39 = scmp.ne.s32.totalorder %s28, %s31
    %p40 = scmp.eq.s32.totalorder %s23, 1
    %p41 = por %p39, %p40
    %p42 = scmp.ne.s32.totalorder %s31, %s32
    %p43 = scmp.eq.s32.totalorder %s23, 0
    %p44 = por %p42, %p43
    %p45 = scmp.ne.s32.totalorder %s31, %s32
    %p46 = scmp.eq.s32.totalorder %s24, 1
    %p47 = por %p45, %p46
    %p49 = scmp.ne.s32.totalorder %s32, %s48
    %p50 = scmp.eq.s32.totalorder %s24, 0
    %p51 = por %p49, %p50
    %s52 = ssub.s32 %s18, %s25
    %p53 = scmp.eq.s32.totalorder %s52, 0
    %s55 = sadd.s32 %s54, 1
    %s56 = scalar_select %p53, %s54, %s55
    %p59 = pneg %p53
    %p60 = scmp.eq.s32.totalorder %s18, 1
    %p61 = por %p59, %p60
    %p62 = scmp.ne.s32.totalorder %s54, %s57
    %p63 = scmp.eq.s32.totalorder %s18, 0
    %p64 = por %p62, %p63
    %p65 = scmp.ne.s32.totalorder %s54, %s57
    %p66 = scmp.eq.s32.totalorder %s23, 1
    %p67 = por %p65, %p66
    %p68 = scmp.ne.s32.totalorder %s57, %s58
    %p69 = scmp.eq.s32.totalorder %s23, 0
    %p70 = por %p68, %p69
    %p71 = scmp.ne.s32.totalorder %s57, %s58
    %p72 = scmp.eq.s32.totalorder %s24, 1
    %p73 = por %p71, %p72
    %p75 = scmp.ne.s32.totalorder %s58, %s74
    %p76 = scmp.eq.s32.totalorder %s24, 0
    %p77 = por %p75, %p76
    %s79 = sadd.s32 %s78, 1
    %p82 = scmp.eq.s32.totalorder %s18, 1
    %p83 = scmp.ne.s32.totalorder %s78, %s80
    %p84 = scmp.eq.s32.totalorder %s18, 0
    %p85 = por %p83, %p84
    %p86 = scmp.ne.s32.totalorder %s78, %s80
    %p87 = scmp.eq.s32.totalorder %s23, 1
    %p88 = por %p86, %p87
    %p89 = scmp.ne.s32.totalorder %s80, %s81
    %p90 = scmp.eq.s32.totalorder %s23, 0
    %p91 = por %p89, %p90
    %p92 = scmp.ne.s32.totalorder %s80, %s81
    %p93 = scmp.eq.s32.totalorder %s24, 1
    %p94 = por %p92, %p93
    %p96 = scmp.ne.s32.totalorder %s81, %s95
    %p97 = scmp.eq.s32.totalorder %s24, 0
    %p98 = por %p96, %p97
    %s100 = sadd.s32 %s99, 1
    %p103 = scmp.eq.s32.totalorder %s18, 1
    %p104 = scmp.ne.s32.totalorder %s99, %s101
    %p105 = scmp.eq.s32.totalorder %s18, 0
    %p106 = por %p104, %p105
    %p107 = scmp.ne.s32.totalorder %s99, %s101
    %p108 = scmp.eq.s32.totalorder %s23, 1
    %p109 = por %p107, %p108
    %p110 = scmp.ne.s32.totalorder %s101, %s102
    %p111 = scmp.eq.s32.totalorder %s23, 0
    %p112 = por %p110, %p111
    %p113 = scmp.ne.s32.totalorder %s101, %s102
    %p114 = scmp.eq.s32.totalorder %s24, 1
    %p115 = por %p113, %p114
    %p117 = scmp.ne.s32.totalorder %s102, %s116
    %p118 = scmp.eq.s32.totalorder %s24, 0
    %p119 = por %p117, %p118
    %s121 = sadd.s32 %s120, 1
    %p124 = scmp.eq.s32.totalorder %s18, 1
    %p125 = scmp.ne.s32.totalorder %s120, %s122
    %p126 = scmp.eq.s32.totalorder %s18, 0
    %p127 = por %p125, %p126
    %p128 = scmp.ne.s32.totalorder %s120, %s122
    %p129 = scmp.eq.s32.totalorder %s23, 1
    %p130 = por %p128, %p129
    %p131 = scmp.ne.s32.totalorder %s122, %s123
    %p132 = scmp.eq.s32.totalorder %s23, 0
    %p133 = por %p131, %p132
    %p134 = scmp.ne.s32.totalorder %s122, %s123
    %p135 = scmp.eq.s32.totalorder %s24, 1
    %p136 = por %p134, %p135
    %p138 = scmp.ne.s32.totalorder %s123, %s137
    %p139 = scmp.eq.s32.totalorder %s24, 0
    %p140 = por %p138, %p139
    %s142 = sadd.s32 %s141, 1
    %p145 = scmp.eq.s32.totalorder %s18, 1
    %p146 = scmp.ne.s32.totalorder %s141, %s143
    %p147 = scmp.eq.s32.totalorder %s18, 0
    %p148 = por %p146, %p147
    %p149 = scmp.ne.s32.totalorder %s141, %s143
    %p150 = scmp.eq.s32.totalorder %s23, 1
    %p151 = por %p149, %p150
    %p152 = scmp.ne.s32.totalorder %s143, %s144
    %p153 = scmp.eq.s32.totalorder %s23, 0
    %p154 = por %p152, %p153
    %p155 = scmp.ne.s32.totalorder %s143, %s144
    %p156 = scmp.eq.s32.totalorder %s24, 1
    %p157 = por %p155, %p156
    %p159 = scmp.ne.s32.totalorder %s144, %s158
    %p160 = scmp.eq.s32.totalorder %s24, 0
    %p161 = por %p159, %p160
    %s163 = sadd.s32 %s162, 1
    %p166 = scmp.eq.s32.totalorder %s18, 1
    %p167 = scmp.ne.s32.totalorder %s162, %s164
    %p168 = scmp.eq.s32.totalorder %s18, 0
    %p169 = por %p167, %p168
    %p170 = scmp.ne.s32.totalorder %s162, %s164
    %p171 = scmp.eq.s32.totalorder %s23, 1
    %p172 = por %p170, %p171
    %p173 = scmp.ne.s32.totalorder %s164, %s165
    %p174 = scmp.eq.s32.totalorder %s23, 0
    %p175 = por %p173, %p174
    %p176 = scmp.ne.s32.totalorder %s164, %s165
    %p177 = scmp.eq.s32.totalorder %s24, 1
    %p178 = por %p176, %p177
    %p180 = scmp.ne.s32.totalorder %s165, %s179
    %p181 = scmp.eq.s32.totalorder %s24, 0
    %p182 = por %p180, %p181
    %s184 = sadd.s32 %s183, 1
    %p187 = scmp.eq.s32.totalorder %s18, 1
    %p188 = scmp.ne.s32.totalorder %s183, %s185
    %p189 = scmp.eq.s32.totalorder %s18, 0
    %p190 = por %p188, %p189
    %p191 = scmp.ne.s32.totalorder %s183, %s185
    %p192 = scmp.eq.s32.totalorder %s23, 1
    %p193 = por %p191, %p192
    %p194 = scmp.ne.s32.totalorder %s185, %s186
    %p195 = scmp.eq.s32.totalorder %s23, 0
    %p196 = por %p194, %p195
    %p197 = scmp.ne.s32.totalorder %s185, %s186
    %p198 = scmp.eq.s32.totalorder %s24, 1
    %p199 = por %p197, %p198
    %p201 = scmp.ne.s32.totalorder %s186, %s200
    %p202 = scmp.eq.s32.totalorder %s24, 0
    %p203 = por %p201, %p202
    %s205 = sadd.s32 %s204, 1
    %p208 = scmp.eq.s32.totalorder %s18, 1
    %p209 = scmp.ne.s32.totalorder %s204, %s206
    %p210 = scmp.eq.s32.totalorder %s18, 0
    %p211 = por %p209, %p210
    %p212 = scmp.ne.s32.totalorder %s204, %s206
    %p213 = scmp.eq.s32.totalorder %s23, 1
    %p214 = por %p212, %p213
    %p215 = scmp.ne.s32.totalorder %s206, %s207
    %p216 = scmp.eq.s32.totalorder %s23, 0
    %p217 = por %p215, %p216
    %p218 = scmp.ne.s32.totalorder %s206, %s207
    %p219 = scmp.eq.s32.totalorder %s24, 1
    %p220 = por %p218, %p219
    %p222 = scmp.ne.s32.totalorder %s207, %s221
    %p223 = scmp.eq.s32.totalorder %s24, 0
    %p224 = por %p222, %p223
    %s226 = sadd.s32 %s225, 1
    %p229 = scmp.eq.s32.totalorder %s18, 1
    %p230 = scmp.ne.s32.totalorder %s225, %s227
    %p231 = scmp.eq.s32.totalorder %s18, 0
    %p232 = por %p230, %p231
    %p233 = scmp.ne.s32.totalorder %s225, %s227
    %p234 = scmp.eq.s32.totalorder %s23, 1
    %p235 = por %p233, %p234
    %p236 = scmp.ne.s32.totalorder %s227, %s228
    %p237 = scmp.eq.s32.totalorder %s23, 0
    %p238 = por %p236, %p237
    %p239 = scmp.ne.s32.totalorder %s227, %s228
    %p240 = scmp.eq.s32.totalorder %s24, 1
    %p241 = por %p239, %p240
    %p243 = scmp.ne.s32.totalorder %s228, %s242
    %p244 = scmp.eq.s32.totalorder %s24, 0
    %p245 = por %p243, %p244
    %s247 = sadd.s32 %s246, 1
    %p250 = scmp.eq.s32.totalorder %s18, 1
    %p251 = scmp.ne.s32.totalorder %s246, %s248
    %p252 = scmp.eq.s32.totalorder %s18, 0
    %p253 = por %p251, %p252
    %p254 = scmp.ne.s32.totalorder %s246, %s248
    %p255 = scmp.eq.s32.totalorder %s23, 1
    %p256 = por %p254, %p255
    %p257 = scmp.ne.s32.totalorder %s248, %s249
    %p258 = scmp.eq.s32.totalorder %s23, 0
    %p259 = por %p257, %p258
    %p260 = scmp.ne.s32.totalorder %s248, %s249
    %p261 = scmp.eq.s32.totalorder %s24, 1
    %p262 = por %p260, %p261
    %p264 = scmp.ne.s32.totalorder %s249, %s263
    %p265 = scmp.eq.s32.totalorder %s24, 0
    %p266 = por %p264, %p265
    %s268 = sadd.s32 %s267, 1
    %p271 = scmp.eq.s32.totalorder %s18, 1
    %p272 = scmp.ne.s32.totalorder %s267, %s269
    %p273 = scmp.eq.s32.totalorder %s18, 0
    %p274 = por %p272, %p273
    %p275 = scmp.ne.s32.totalorder %s267, %s269
    %p276 = scmp.eq.s32.totalorder %s23, 1
    %p277 = por %p275, %p276
    %p278 = scmp.ne.s32.totalorder %s269, %s270
    %p279 = scmp.eq.s32.totalorder %s23, 0
    %p280 = por %p278, %p279
    %p281 = scmp.ne.s32.totalorder %s269, %s270
    %p282 = scmp.eq.s32.totalorder %s24, 1
    %p283 = por %p281, %p282
    %p285 = scmp.ne.s32.totalorder %s270, %s284
    %p286 = scmp.eq.s32.totalorder %s24, 0
    %p287 = por %p285, %p286
    %s288 = ssub.s32 %s18, %s25
    %p289 = scmp.eq.s32.totalorder %s288, 0
    %s291 = sadd.s32 %s290, 1
    %s292 = scalar_select %p289, %s290, %s291
    %p295 = pneg %p289
    %p296 = scmp.eq.s32.totalorder %s18, 1
    %p297 = por %p295, %p296
    %p298 = scmp.ne.s32.totalorder %s290, %s293
    %p299 = scmp.eq.s32.totalorder %s18, 0
    %p300 = por %p298, %p299
    %p301 = scmp.ne.s32.totalorder %s290, %s293
    %p302 = scmp.eq.s32.totalorder %s23, 1
    %p303 = por %p301, %p302
    %p304 = scmp.ne.s32.totalorder %s293, %s294
    %p305 = scmp.eq.s32.totalorder %s23, 0
    %p306 = por %p304, %p305
    %p307 = scmp.ne.s32.totalorder %s293, %s294
    %p308 = scmp.eq.s32.totalorder %s24, 1
    %p309 = por %p307, %p308
    %p311 = scmp.ne.s32.totalorder %s294, %s310
    %p312 = scmp.eq.s32.totalorder %s24, 0
    %p313 = por %p311, %p312
    %p314 = scmp.le.s32.totalorder 1, %s18
    %p315 = scmp.lt.s32.totalorder %s18, 3
    %p316 = pnand %p314, %p315
    %p317 = pneg %p316
    // Predicated region
    $region9: #{adcdnet_forward.21} parent=5 // pred_check
      _
    $region10: #{adcdnet_forward.21} parent=5 // pred_check_branch
      %319 = sbr.rel (%p316) target = $region12
    $region11: #{adcdnet_forward.21} parent=5 // pred_region
      %s320 = ssub.s32 %s18, 1
      // Predicated region
      $region13: #{adcdnet_forward.21} parent=11 // pred_check
        %p321 = pneg %p91
      $region14: #{adcdnet_forward.21} parent=11 // pred_check_branch
        %323 = sbr.rel (%p321) target = $region16
      $region15: #{adcdnet_forward.21} parent=11 // pred_region
        _
      $region16: #{adcdnet_forward.21} parent=11 // pred_fallthru
        _
      // Predicated region
      $region17: #{adcdnet_forward.21} parent=11 // pred_check
        %p324 = pneg %p112
      $region18: #{adcdnet_forward.21} parent=11 // pred_check_branch
        %326 = sbr.rel (%p324) target = $region20
      $region19: #{adcdnet_forward.21} parent=11 // pred_region
        _
      $region20: #{adcdnet_forward.21} parent=11 // pred_fallthru
        _
      // Predicated region
      $region21: #{adcdnet_forward.21} parent=11 // pred_check
        %p327 = pneg %p133
      $region22: #{adcdnet_forward.21} parent=11 // pred_check_branch
        %329 = sbr.rel (%p327) target = $region24
      $region23: #{adcdnet_forward.21} parent=11 // pred_region
        _
      $region24: #{adcdnet_forward.21} parent=11 // pred_fallthru
        _
      // Predicated region
      $region25: #{adcdnet_forward.21} parent=11 // pred_check
        %p330 = pneg %p154
      $region26: #{adcdnet_forward.21} parent=11 // pred_check_branch
        %332 = sbr.rel (%p330) target = $region28
      $region27: #{adcdnet_forward.21} parent=11 // pred_region
        _
      $region28: #{adcdnet_forward.21} parent=11 // pred_fallthru
        _
      // Predicated region
      $region29: #{adcdnet_forward.21} parent=11 // pred_check
        %p333 = pneg %p175
      $region30: #{adcdnet_forward.21} parent=11 // pred_check_branch
        %335 = sbr.rel (%p333) target = $region32
      $region31: #{adcdnet_forward.21} parent=11 // pred_region
        _
      $region32: #{adcdnet_forward.21} parent=11 // pred_fallthru
        _
      // Predicated region
      $region33: #{adcdnet_forward.21} parent=11 // pred_check
        %p336 = pneg %p196
      $region34: #{adcdnet_forward.21} parent=11 // pred_check_branch
        %338 = sbr.rel (%p336) target = $region36
      $region35: #{adcdnet_forward.21} parent=11 // pred_region
        _
      $region36: #{adcdnet_forward.21} parent=11 // pred_fallthru
        _
      // Predicated region
      $region37: #{adcdnet_forward.21} parent=11 // pred_check
        %p339 = pneg %p217
      $region38: #{adcdnet_forward.21} parent=11 // pred_check_branch
        %341 = sbr.rel (%p339) target = $region40
      $region39: #{adcdnet_forward.21} parent=11 // pred_region
        _
      $region40: #{adcdnet_forward.21} parent=11 // pred_fallthru
        _
      // Predicated region
      $region41: #{adcdnet_forward.21} parent=11 // pred_check
        %p342 = pneg %p238
      $region42: #{adcdnet_forward.21} parent=11 // pred_check_branch
        %344 = sbr.rel (%p342) target = $region44
      $region43: #{adcdnet_forward.21} parent=11 // pred_region
        _
      $region44: #{adcdnet_forward.21} parent=11 // pred_fallthru
        _
      // Predicated region
      $region45: #{adcdnet_forward.21} parent=11 // pred_check
        %p345 = pneg %p259
      $region46: #{adcdnet_forward.21} parent=11 // pred_check_branch
        %347 = sbr.rel (%p345) target = $region48
      $region47: #{adcdnet_forward.21} parent=11 // pred_region
        _
      $region48: #{adcdnet_forward.21} parent=11 // pred_fallthru
        _
      // Predicated region
      $region49: #{adcdnet_forward.21} parent=11 // pred_check
        %p348 = pneg %p280
      $region50: #{adcdnet_forward.21} parent=11 // pred_check_branch
        %350 = sbr.rel (%p348) target = $region52
      $region51: #{adcdnet_forward.21} parent=11 // pred_region
        _
      $region52: #{adcdnet_forward.21} parent=11 // pred_fallthru
        _
    $region12: #{adcdnet_forward.21} parent=5 // pred_fallthru
      _
    %p351 = scmp.lt.s32.totalorder %s18, 2
    // Predicated region
    $region53: #{adcdnet_forward.21} parent=5 // pred_check
      %p352 = pneg %p351
    $region54: #{adcdnet_forward.21} parent=5 // pred_check_branch
      %354 = sbr.rel (%p352) target = $region56
    $region55: #{adcdnet_forward.21} parent=5 // pred_region
      // Predicated region
      $region57: #{adcdnet_forward.21} parent=55 // pred_check
        %p355 = pneg %p38
      $region58: #{adcdnet_forward.21} parent=55 // pred_check_branch
        %357 = sbr.rel (%p355) target = $region60
      $region59: #{adcdnet_forward.21} parent=55 // pred_region
        %s358 = smul.u32 32, %s18
        %p359 = scmp.lt.s32.totalorder %s358, 63
        %s360 = scalar_select %p359, %s358, 63
        %s361 = smul.addr %s360, 8
        %s362 = scalar_lea.vmem %s0, %s361
        %s363 = smul.u32 32, %s18
      $region60: #{adcdnet_forward.21} parent=55 // pred_fallthru
        _
      // Predicated region
      $region61: #{adcdnet_forward.21} parent=55 // pred_check
        %p364 = pneg %p64
      $region62: #{adcdnet_forward.21} parent=55 // pred_check_branch
        %366 = sbr.rel (%p364) target = $region64
      $region63: #{adcdnet_forward.21} parent=55 // pred_region
        %s367 = smul.u32 32, %s18
        %p368 = scmp.lt.s32.totalorder %s367, 63
        %s369 = scalar_select %p368, %s367, 63
        %s370 = smul.addr %s369, 4
        %s371 = scalar_lea.vmem %s1, %s370
        %s372 = smul.u32 32, %s18
      $region64: #{adcdnet_forward.21} parent=55 // pred_fallthru
        _
    $region56: #{adcdnet_forward.21} parent=5 // pred_fallthru
      _
    %p373 = scmp.le.s32.totalorder 1, %s18
    %p374 = scmp.lt.s32.totalorder %s18, 3
    %p375 = pnand %p373, %p374
    %p376 = pneg %p375
    // Predicated region
    $region65: #{adcdnet_forward.21} parent=5 // pred_check
      _
    $region66: #{adcdnet_forward.21} parent=5 // pred_check_branch
      %378 = sbr.rel (%p375) target = $region68
    $region67: #{adcdnet_forward.21} parent=5 // pred_region
      %s379 = ssub.s32 %s18, 1
      %s380 = smul.u32 32, %s23
      %p381 = scmp.lt.s32.totalorder %s380, 63
      %s382 = scalar_select %p381, %s380, 63
      %s383 = smul.addr %s382, 8
      %s384 = scalar_lea.vmem %s0, %s383
      %p385 = pneg %p44
      %p386 = pneg %p41
      %s387 = smul.u32 32, %s23
      %p388 = scmp.lt.s32.totalorder %s387, 63
      %s389 = scalar_select %p388, %s387, 63
      %s390 = smul.addr %s389, 4
      %s391 = scalar_lea.vmem %s1, %s390
      %p392 = pneg %p70
      %p393 = pneg %p67
      %p394 = pneg %p91
      %p395 = pneg %p88
      %p396 = pneg %p112
      %p397 = pneg %p109
      %p398 = pneg %p133
      %p399 = pneg %p130
      %p400 = pneg %p154
      %p401 = pneg %p151
      %p402 = pneg %p175
      %p403 = pneg %p172
      %p404 = pneg %p196
      %p405 = pneg %p193
      %p406 = pneg %p217
      %p407 = pneg %p214
      %p408 = pneg %p238
      %p409 = pneg %p235
      %p410 = pneg %p259
      %p411 = pneg %p256
      %p412 = pneg %p280
      %p413 = pneg %p277
      %p414 = pneg %p306
      %p415 = pneg %p303
      %s416 = smul.u32 2, %s23
      %p417 = scmp.lt.s32.totalorder %s416, 3
      %s418 = scalar_select %p417, %s416, 3
      %s419 = smul.addr %s418, 2
      %s420 = scalar_lea.vmem %s12, %s419
      %s421 = smul.u32 32, %s23
      %p422 = scmp.lt.s32.totalorder %s421, 63
      %s423 = scalar_select %p422, %s421, 63
      %s424 = smul.addr %s423, 8
      %s425 = scalar_lea.vmem %s0, %s424
      %s426 = smul.u32 32, %s23
      %s427 = smul.u32 32, %s23
      %p428 = scmp.lt.s32.totalorder %s427, 63
      %s429 = scalar_select %p428, %s427, 63
      %s430 = smul.addr %s429, 4
      %s431 = scalar_lea.vmem %s1, %s430
      %s432 = smul.u32 32, %s23
      %s433 = smul.u32 2, %s23
      %p434 = scmp.lt.s32.totalorder %s433, 3
      %s435 = scalar_select %p434, %s433, 3
      %s436 = smul.addr %s435, 2
      %s437 = scalar_lea.vmem %s12, %s436
      %s438 = smul.u32 2, %s23
      %v439 = vld [vmem:[%s425] sm:$0xff]
      %v440 = vld [vmem:[%s425 + $0x8] sm:$0xff]
      %v441 = vld [vmem:[%s425 + $0x10] sm:$0xff]
      %v442 = vld [vmem:[%s425 + $0x18] sm:$0xff]
      %v443 = vld [vmem:[%s425 + $0x20] sm:$0xff]
      %v444 = vld [vmem:[%s425 + $0x28] sm:$0xff]
      %v445 = vld [vmem:[%s425 + $0x30] sm:$0xff]
      %v446 = vld [vmem:[%s425 + $0x38] sm:$0xff]
      %v447 = vld [vmem:[%s425 + $0x40] sm:$0xff]
      %v448 = vld [vmem:[%s425 + $0x48] sm:$0xff]
      %v449 = vld [vmem:[%s425 + $0x50] sm:$0xff]
      %v450 = vld [vmem:[%s425 + $0x58] sm:$0xff]
      %v451 = vld [vmem:[%s425 + $0x60] sm:$0xff]
      %v452 = vld [vmem:[%s425 + $0x68] sm:$0xff]
      %v453 = vld [vmem:[%s425 + $0x70] sm:$0xff]
      %v454 = vld [vmem:[%s425 + $0x78] sm:$0xff]
      %v455 = vld [vmem:[%s425 + $0x80] sm:$0xff]
      %v456 = vld [vmem:[%s425 + $0x88] sm:$0xff]
      %v457 = vld [vmem:[%s425 + $0x90] sm:$0xff]
      %v458 = vld [vmem:[%s425 + $0x98] sm:$0xff]
      %v459 = vld [vmem:[%s425 + $0xa0] sm:$0xff]
      %v460 = vld [vmem:[%s425 + $0xa8] sm:$0xff]
      %v461 = vld [vmem:[%s425 + $0xb0] sm:$0xff]
      %v462 = vld [vmem:[%s425 + $0xb8] sm:$0xff]
      %v463 = vld [vmem:[%s425 + $0xc0] sm:$0xff]
      %v464 = vld [vmem:[%s425 + $0xc8] sm:$0xff]
      %v465 = vld [vmem:[%s425 + $0xd0] sm:$0xff]
      %v466 = vld [vmem:[%s425 + $0xd8] sm:$0xff]
      %v467 = vld [vmem:[%s425 + $0xe0] sm:$0xff]
      %v468 = vld [vmem:[%s425 + $0xe8] sm:$0xff]
      %v469 = vld [vmem:[%s425 + $0xf0] sm:$0xff]
      %v470 = vld [vmem:[%s425 + $0xf8] sm:$0xff]
      %v471 = vld [vmem:[%s2] sm:$0xf]
      %v472 = vld [vmem:[%s3] sm:$0x1]
      %v474 = vperm.slane %v472, 0
      %vm476 = vcmask 31744
      %v478 = vsel %vm476, %v439, 0
      %v481 = vsel %vm476, %v440, 0
      %v484 = vsel %vm476, %v441, 0
      %v487 = vsel %vm476, %v442, 0
      %v490 = vsel %vm476, %v443, 0
      %v493 = vsel %vm476, %v444, 0
      %v496 = vsel %vm476, %v445, 0
      %v499 = vsel %vm476, %v446, 0
      %v502 = vsel %vm476, %v447, 0
      %v505 = vsel %vm476, %v448, 0
      %v508 = vsel %vm476, %v449, 0
      %v511 = vsel %vm476, %v450, 0
      %v514 = vsel %vm476, %v451, 0
      %v517 = vsel %vm476, %v452, 0
      %v520 = vsel %vm476, %v453, 0
      %v523 = vsel %vm476, %v454, 0
      %v526 = vsel %vm476, %v455, 0
      %v529 = vsel %vm476, %v456, 0
      %v532 = vsel %vm476, %v457, 0
      %v535 = vsel %vm476, %v458, 0
      %v538 = vsel %vm476, %v459, 0
      %v541 = vsel %vm476, %v460, 0
      %v544 = vsel %vm476, %v461, 0
      %v547 = vsel %vm476, %v462, 0
      %v550 = vsel %vm476, %v463, 0
      %v553 = vsel %vm476, %v464, 0
      %v556 = vsel %vm476, %v465, 0
      %v559 = vsel %vm476, %v466, 0
      %v562 = vsel %vm476, %v467, 0
      %v565 = vsel %vm476, %v468, 0
      %v568 = vsel %vm476, %v469, 0
      %v571 = vsel %vm476, %v470, 0
      %vm573 = vcmask 1043456
      %v575 = vsel %vm573, %v471, 0
      %577 = vmatpush.msra.mxu0 0.0
      %578 = vmatpush.msra.mxu0 0.0
      %579 = vmatpush.msra.mxu0 0.0
      %580 = vmatpush.msra.mxu0 0.0
      %581 = vmatpush.msra.mxu0 0.0
      %582 = vmatpush.msra.mxu0 0.0
      %583 = vmatpush.msra.mxu0 0.0
      %584 = vmatpush.msra.mxu0 0.0
      %585 = vmatpush.msra.mxu0 0.0
      %586 = vmatpush.msra.mxu0 0.0
      %587 = vmatpush.msra.mxu0 0.0
      %588 = vmatpush.msra.mxu0 0.0
      %589 = vmatpush.msra.mxu0 0.0
      %590 = vmatpush.msra.mxu0 0.0
      %591 = vmatpush.msra.mxu0 0.0
      %592 = vmatpush.msra.mxu0 %v575
      %593 = vmatmul.f32.gmra.mxu0 %v478
      %v594 = vpop.f32.mrf.mxu0
      %v595 = vadd.f32 %v474, %v594
      %596 = vmatmul.f32.gmra.mxu0 %v481
      %v597 = vpop.f32.mrf.mxu0
      %v598 = vadd.f32 %v474, %v597
      %599 = vmatmul.f32.gmra.mxu0 %v484
      %v600 = vpop.f32.mrf.mxu0
      %v601 = vadd.f32 %v474, %v600
      %602 = vmatmul.f32.gmra.mxu0 %v487
      %v603 = vpop.f32.mrf.mxu0
      %v604 = vadd.f32 %v474, %v603
      %605 = vmatmul.f32.gmra.mxu0 %v490
      %v606 = vpop.f32.mrf.mxu0
      %v607 = vadd.f32 %v474, %v606
      %608 = vmatmul.f32.gmra.mxu0 %v493
      %v609 = vpop.f32.mrf.mxu0
      %v610 = vadd.f32 %v474, %v609
      %611 = vmatmul.f32.gmra.mxu0 %v496
      %v612 = vpop.f32.mrf.mxu0
      %v613 = vadd.f32 %v474, %v612
      %614 = vmatmul.f32.gmra.mxu0 %v499
      %v615 = vpop.f32.mrf.mxu0
      %v616 = vadd.f32 %v474, %v615
      %617 = vmatmul.f32.gmra.mxu0 %v502
      %v618 = vpop.f32.mrf.mxu0
      %v619 = vadd.f32 %v474, %v618
      %620 = vmatmul.f32.gmra.mxu0 %v505
      %v621 = vpop.f32.mrf.mxu0
      %v622 = vadd.f32 %v474, %v621
      %623 = vmatmul.f32.gmra.mxu0 %v508
      %v624 = vpop.f32.mrf.mxu0
      %v625 = vadd.f32 %v474, %v624
      %626 = vmatmul.f32.gmra.mxu0 %v511
      %v627 = vpop.f32.mrf.mxu0
      %v628 = vadd.f32 %v474, %v627
      %629 = vmatmul.f32.gmra.mxu0 %v514
      %v630 = vpop.f32.mrf.mxu0
      %v631 = vadd.f32 %v474, %v630
      %632 = vmatmul.f32.gmra.mxu0 %v517
      %v633 = vpop.f32.mrf.mxu0
      %v634 = vadd.f32 %v474, %v633
      %635 = vmatmul.f32.gmra.mxu0 %v520
      %v636 = vpop.f32.mrf.mxu0
      %v637 = vadd.f32 %v474, %v636
      %638 = vmatmul.f32.gmra.mxu0 %v523
      %v639 = vpop.f32.mrf.mxu0
      %v640 = vadd.f32 %v474, %v639
      %641 = vmatmul.f32.gmra.mxu0 %v526
      %v642 = vpop.f32.mrf.mxu0
      %v643 = vadd.f32 %v474, %v642
      %644 = vmatmul.f32.gmra.mxu0 %v529
      %v645 = vpop.f32.mrf.mxu0
      %v646 = vadd.f32 %v474, %v645
      %647 = vmatmul.f32.gmra.mxu0 %v532
      %v648 = vpop.f32.mrf.mxu0
      %v649 = vadd.f32 %v474, %v648
      %650 = vmatmul.f32.gmra.mxu0 %v535
      %v651 = vpop.f32.mrf.mxu0
      %v652 = vadd.f32 %v474, %v651
      %653 = vmatmul.f32.gmra.mxu0 %v538
      %v654 = vpop.f32.mrf.mxu0
      %v655 = vadd.f32 %v474, %v654
      %656 = vmatmul.f32.gmra.mxu0 %v541
      %v657 = vpop.f32.mrf.mxu0
      %v658 = vadd.f32 %v474, %v657
      %659 = vmatmul.f32.gmra.mxu0 %v544
      %v660 = vpop.f32.mrf.mxu0
      %v661 = vadd.f32 %v474, %v660
      %662 = vmatmul.f32.gmra.mxu0 %v547
      %v663 = vpop.f32.mrf.mxu0
      %v664 = vadd.f32 %v474, %v663
      %665 = vmatmul.f32.gmra.mxu0 %v550
      %v666 = vpop.f32.mrf.mxu0
      %v667 = vadd.f32 %v474, %v666
      %668 = vmatmul.f32.gmra.mxu0 %v553
      %v669 = vpop.f32.mrf.mxu0
      %v670 = vadd.f32 %v474, %v669
      %671 = vmatmul.f32.gmra.mxu0 %v556
      %v672 = vpop.f32.mrf.mxu0
      %v673 = vadd.f32 %v474, %v672
      %674 = vmatmul.f32.gmra.mxu0 %v559
      %v675 = vpop.f32.mrf.mxu0
      %v676 = vadd.f32 %v474, %v675
      %677 = vmatmul.f32.gmra.mxu0 %v562
      %v678 = vpop.f32.mrf.mxu0
      %v679 = vadd.f32 %v474, %v678
      %680 = vmatmul.f32.gmra.mxu0 %v565
      %v681 = vpop.f32.mrf.mxu0
      %v682 = vadd.f32 %v474, %v681
      %683 = vmatmul.f32.gmra.mxu0 %v568
      %v684 = vpop.f32.mrf.mxu0
      %v685 = vadd.f32 %v474, %v684
      %686 = vmatmul.f32.gmra.mxu0 %v571
      %v687 = vpop.f32.mrf.mxu0
      %v688 = vadd.f32 %v474, %v687
      %689 = vdwg.mxu0
      %v690 = vmul.f32 %v595, 0.5
      %v691 = vmul.f32 %v598, 0.5
      %v692 = vmul.f32 %v601, 0.5
      %v693 = vmul.f32 %v604, 0.5
      %v694 = vmul.f32 %v607, 0.5
      %v695 = vmul.f32 %v610, 0.5
      %v696 = vmul.f32 %v613, 0.5
      %v697 = vmul.f32 %v616, 0.5
      %v698 = vmul.f32 %v619, 0.5
      %v699 = vmul.f32 %v622, 0.5
      %v700 = vmul.f32 %v625, 0.5
      %v701 = vmul.f32 %v628, 0.5
      %v702 = vmul.f32 %v631, 0.5
      %v703 = vmul.f32 %v634, 0.5
      %v704 = vmul.f32 %v637, 0.5
      %v705 = vmul.f32 %v640, 0.5
      %v706 = vmul.f32 %v643, 0.5
      %v707 = vmul.f32 %v646, 0.5
      %v708 = vmul.f32 %v649, 0.5
      %v709 = vmul.f32 %v652, 0.5
      %v710 = vmul.f32 %v655, 0.5
      %v711 = vmul.f32 %v658, 0.5
      %v712 = vmul.f32 %v661, 0.5
      %v713 = vmul.f32 %v664, 0.5
      %v714 = vmul.f32 %v667, 0.5
      %v715 = vmul.f32 %v670, 0.5
      %v716 = vmul.f32 %v673, 0.5
      %v717 = vmul.f32 %v676, 0.5
      %v718 = vmul.f32 %v679, 0.5
      %v719 = vmul.f32 %v682, 0.5
      %v720 = vmul.f32 %v685, 0.5
      %v721 = vmul.f32 %v688, 0.5
      %v722 = vmul.f32 %v595, 0.044715
      %v723 = vmul.f32 %v598, 0.044715
      %v724 = vmul.f32 %v601, 0.044715
      %v725 = vmul.f32 %v604, 0.044715
      %v726 = vmul.f32 %v607, 0.044715
      %v727 = vmul.f32 %v610, 0.044715
      %v728 = vmul.f32 %v613, 0.044715
      %v729 = vmul.f32 %v616, 0.044715
      %v730 = vmul.f32 %v619, 0.044715
      %v731 = vmul.f32 %v622, 0.044715
      %v732 = vmul.f32 %v625, 0.044715
      %v733 = vmul.f32 %v628, 0.044715
      %v734 = vmul.f32 %v631, 0.044715
      %v735 = vmul.f32 %v634, 0.044715
      %v736 = vmul.f32 %v637, 0.044715
      %v737 = vmul.f32 %v640, 0.044715
      %v738 = vmul.f32 %v643, 0.044715
      %v739 = vmul.f32 %v646, 0.044715
      %v740 = vmul.f32 %v649, 0.044715
      %v741 = vmul.f32 %v652, 0.044715
      %v742 = vmul.f32 %v655, 0.044715
      %v743 = vmul.f32 %v658, 0.044715
      %v744 = vmul.f32 %v661, 0.044715
      %v745 = vmul.f32 %v664, 0.044715
      %v746 = vmul.f32 %v667, 0.044715
      %v747 = vmul.f32 %v670, 0.044715
      %v748 = vmul.f32 %v673, 0.044715
      %v749 = vmul.f32 %v676, 0.044715
      %v750 = vmul.f32 %v679, 0.044715
      %v751 = vmul.f32 %v682, 0.044715
      %v752 = vmul.f32 %v685, 0.044715
      %v753 = vmul.f32 %v688, 0.044715
      %v754 = vmul.f32 %v722, %v595
      %v755 = vmul.f32 %v723, %v598
      %v756 = vmul.f32 %v724, %v601
      %v757 = vmul.f32 %v725, %v604
      %v758 = vmul.f32 %v726, %v607
      %v759 = vmul.f32 %v727, %v610
      %v760 = vmul.f32 %v728, %v613
      %v761 = vmul.f32 %v729, %v616
      %v762 = vmul.f32 %v730, %v619
      %v763 = vmul.f32 %v731, %v622
      %v764 = vmul.f32 %v732, %v625
      %v765 = vmul.f32 %v733, %v628
      %v766 = vmul.f32 %v734, %v631
      %v767 = vmul.f32 %v735, %v634
      %v768 = vmul.f32 %v736, %v637
      %v769 = vmul.f32 %v737, %v640
      %v770 = vmul.f32 %v738, %v643
      %v771 = vmul.f32 %v739, %v646
      %v772 = vmul.f32 %v740, %v649
      %v773 = vmul.f32 %v741, %v652
      %v774 = vmul.f32 %v742, %v655
      %v775 = vmul.f32 %v743, %v658
      %v776 = vmul.f32 %v744, %v661
      %v777 = vmul.f32 %v745, %v664
      %v778 = vmul.f32 %v746, %v667
      %v779 = vmul.f32 %v747, %v670
      %v780 = vmul.f32 %v748, %v673
      %v781 = vmul.f32 %v749, %v676
      %v782 = vmul.f32 %v750, %v679
      %v783 = vmul.f32 %v751, %v682
      %v784 = vmul.f32 %v752, %v685
      %v785 = vmul.f32 %v753, %v688
      %v786 = vmul.f32 %v754, %v595
      %v787 = vmul.f32 %v755, %v598
      %v788 = vmul.f32 %v756, %v601
      %v789 = vmul.f32 %v757, %v604
      %v790 = vmul.f32 %v758, %v607
      %v791 = vmul.f32 %v759, %v610
      %v792 = vmul.f32 %v760, %v613
      %v793 = vmul.f32 %v761, %v616
      %v794 = vmul.f32 %v762, %v619
      %v795 = vmul.f32 %v763, %v622
      %v796 = vmul.f32 %v764, %v625
      %v797 = vmul.f32 %v765, %v628
      %v798 = vmul.f32 %v766, %v631
      %v799 = vmul.f32 %v767, %v634
      %v800 = vmul.f32 %v768, %v637
      %v801 = vmul.f32 %v769, %v640
      %v802 = vmul.f32 %v770, %v643
      %v803 = vmul.f32 %v771, %v646
      %v804 = vmul.f32 %v772, %v649
      %v805 = vmul.f32 %v773, %v652
      %v806 = vmul.f32 %v774, %v655
      %v807 = vmul.f32 %v775, %v658
      %v808 = vmul.f32 %v776, %v661
      %v809 = vmul.f32 %v777, %v664
      %v810 = vmul.f32 %v778, %v667
      %v811 = vmul.f32 %v779, %v670
      %v812 = vmul.f32 %v780, %v673
      %v813 = vmul.f32 %v781, %v676
      %v814 = vmul.f32 %v782, %v679
      %v815 = vmul.f32 %v783, %v682
      %v816 = vmul.f32 %v784, %v685
      %v817 = vmul.f32 %v785, %v688
      %v818 = vadd.f32 %v595, %v786
      %v819 = vadd.f32 %v598, %v787
      %v820 = vadd.f32 %v601, %v788
      %v821 = vadd.f32 %v604, %v789
      %v822 = vadd.f32 %v607, %v790
      %v823 = vadd.f32 %v610, %v791
      %v824 = vadd.f32 %v613, %v792
      %v825 = vadd.f32 %v616, %v793
      %v826 = vadd.f32 %v619, %v794
      %v827 = vadd.f32 %v622, %v795
      %v828 = vadd.f32 %v625, %v796
      %v829 = vadd.f32 %v628, %v797
      %v830 = vadd.f32 %v631, %v798
      %v831 = vadd.f32 %v634, %v799
      %v832 = vadd.f32 %v637, %v800
      %v833 = vadd.f32 %v640, %v801
      %v834 = vadd.f32 %v643, %v802
      %v835 = vadd.f32 %v646, %v803
      %v836 = vadd.f32 %v649, %v804
      %v837 = vadd.f32 %v652, %v805
      %v838 = vadd.f32 %v655, %v806
      %v839 = vadd.f32 %v658, %v807
      %v840 = vadd.f32 %v661, %v808
      %v841 = vadd.f32 %v664, %v809
      %v842 = vadd.f32 %v667, %v810
      %v843 = vadd.f32 %v670, %v811
      %v844 = vadd.f32 %v673, %v812
      %v845 = vadd.f32 %v676, %v813
      %v846 = vadd.f32 %v679, %v814
      %v847 = vadd.f32 %v682, %v815
      %v848 = vadd.f32 %v685, %v816
      %v849 = vadd.f32 %v688, %v817
      %v850 = vmul.f32 %v818, 0.7978846
      %v851 = vmul.f32 %v819, 0.7978846
      %v852 = vmul.f32 %v820, 0.7978846
      %v853 = vmul.f32 %v821, 0.7978846
      %v854 = vmul.f32 %v822, 0.7978846
      %v855 = vmul.f32 %v823, 0.7978846
      %v856 = vmul.f32 %v824, 0.7978846
      %v857 = vmul.f32 %v825, 0.7978846
      %v858 = vmul.f32 %v826, 0.7978846
      %v859 = vmul.f32 %v827, 0.7978846
      %v860 = vmul.f32 %v828, 0.7978846
      %v861 = vmul.f32 %v829, 0.7978846
      %v862 = vmul.f32 %v830, 0.7978846
      %v863 = vmul.f32 %v831, 0.7978846
      %v864 = vmul.f32 %v832, 0.7978846
      %v865 = vmul.f32 %v833, 0.7978846
      %v866 = vmul.f32 %v834, 0.7978846
      %v867 = vmul.f32 %v835, 0.7978846
      %v868 = vmul.f32 %v836, 0.7978846
      %v869 = vmul.f32 %v837, 0.7978846
      %v870 = vmul.f32 %v838, 0.7978846
      %v871 = vmul.f32 %v839, 0.7978846
      %v872 = vmul.f32 %v840, 0.7978846
      %v873 = vmul.f32 %v841, 0.7978846
      %v874 = vmul.f32 %v842, 0.7978846
      %v875 = vmul.f32 %v843, 0.7978846
      %v876 = vmul.f32 %v844, 0.7978846
      %v877 = vmul.f32 %v845, 0.7978846
      %v878 = vmul.f32 %v846, 0.7978846
      %v879 = vmul.f32 %v847, 0.7978846
      %v880 = vmul.f32 %v848, 0.7978846
      %v881 = vmul.f32 %v849, 0.7978846
      %v882 = vtanh.pop %v850
      %v883 = vtanh.pop %v851
      %v884 = vtanh.pop %v852
      %v885 = vtanh.pop %v853
      %v886 = vtanh.pop %v854
      %v887 = vtanh.pop %v855
      %v888 = vtanh.pop %v856
      %v889 = vtanh.pop %v857
      %v890 = vtanh.pop %v858
      %v891 = vtanh.pop %v859
      %v892 = vtanh.pop %v860
      %v893 = vtanh.pop %v861
      %v894 = vtanh.pop %v862
      %v895 = vtanh.pop %v863
      %v896 = vtanh.pop %v864
      %v897 = vtanh.pop %v865
      %v898 = vtanh.pop %v866
      %v899 = vtanh.pop %v867
      %v900 = vtanh.pop %v868
      %v901 = vtanh.pop %v869
      %v902 = vtanh.pop %v870
      %v903 = vtanh.pop %v871
      %v904 = vtanh.pop %v872
      %v905 = vtanh.pop %v873
      %v906 = vtanh.pop %v874
      %v907 = vtanh.pop %v875
      %v908 = vtanh.pop %v876
      %v909 = vtanh.pop %v877
      %v910 = vtanh.pop %v878
      %v911 = vtanh.pop %v879
      %v912 = vtanh.pop %v880
      %v913 = vtanh.pop %v881
      %v914 = vadd.f32 %v882, 1.0
      %v915 = vadd.f32 %v883, 1.0
      %v916 = vadd.f32 %v884, 1.0
      %v917 = vadd.f32 %v885, 1.0
      %v918 = vadd.f32 %v886, 1.0
      %v919 = vadd.f32 %v887, 1.0
      %v920 = vadd.f32 %v888, 1.0
      %v921 = vadd.f32 %v889, 1.0
      %v922 = vadd.f32 %v890, 1.0
      %v923 = vadd.f32 %v891, 1.0
      %v924 = vadd.f32 %v892, 1.0
      %v925 = vadd.f32 %v893, 1.0
      %v926 = vadd.f32 %v894, 1.0
      %v927 = vadd.f32 %v895, 1.0
      %v928 = vadd.f32 %v896, 1.0
      %v929 = vadd.f32 %v897, 1.0
      %v930 = vadd.f32 %v898, 1.0
      %v931 = vadd.f32 %v899, 1.0
      %v932 = vadd.f32 %v900, 1.0
      %v933 = vadd.f32 %v901, 1.0
      %v934 = vadd.f32 %v902, 1.0
      %v935 = vadd.f32 %v903, 1.0
      %v936 = vadd.f32 %v904, 1.0
      %v937 = vadd.f32 %v905, 1.0
      %v938 = vadd.f32 %v906, 1.0
      %v939 = vadd.f32 %v907, 1.0
      %v940 = vadd.f32 %v908, 1.0
      %v941 = vadd.f32 %v909, 1.0
      %v942 = vadd.f32 %v910, 1.0
      %v943 = vadd.f32 %v911, 1.0
      %v944 = vadd.f32 %v912, 1.0
      %v945 = vadd.f32 %v913, 1.0
      %v946 = vmul.f32 %v690, %v914
      %v947 = vmul.f32 %v691, %v915
      %v948 = vmul.f32 %v692, %v916
      %v949 = vmul.f32 %v693, %v917
      %v950 = vmul.f32 %v694, %v918
      %v951 = vmul.f32 %v695, %v919
      %v952 = vmul.f32 %v696, %v920
      %v953 = vmul.f32 %v697, %v921
      %v954 = vmul.f32 %v698, %v922
      %v955 = vmul.f32 %v699, %v923
      %v956 = vmul.f32 %v700, %v924
      %v957 = vmul.f32 %v701, %v925
      %v958 = vmul.f32 %v702, %v926
      %v959 = vmul.f32 %v703, %v927
      %v960 = vmul.f32 %v704, %v928
      %v961 = vmul.f32 %v705, %v929
      %v962 = vmul.f32 %v706, %v930
      %v963 = vmul.f32 %v707, %v931
      %v964 = vmul.f32 %v708, %v932
      %v965 = vmul.f32 %v709, %v933
      %v966 = vmul.f32 %v710, %v934
      %v967 = vmul.f32 %v711, %v935
      %v968 = vmul.f32 %v712, %v936
      %v969 = vmul.f32 %v713, %v937
      %v970 = vmul.f32 %v714, %v938
      %v971 = vmul.f32 %v715, %v939
      %v972 = vmul.f32 %v716, %v940
      %v973 = vmul.f32 %v717, %v941
      %v974 = vmul.f32 %v718, %v942
      %v975 = vmul.f32 %v719, %v943
      %v976 = vmul.f32 %v720, %v944
      %v977 = vmul.f32 %v721, %v945
      %v978 = vld [vmem:[%s4] sm:$0xf]
      %v979 = vld [vmem:[%s5] sm:$0x1]
      %v981 = vperm.slane %v979, 0
      %v984 = vsel %vm476, %v946, 0
      %v987 = vsel %vm476, %v947, 0
      %v990 = vsel %vm476, %v948, 0
      %v993 = vsel %vm476, %v949, 0
      %v996 = vsel %vm476, %v950, 0
      %v999 = vsel %vm476, %v951, 0
      %v1002 = vsel %vm476, %v952, 0
      %v1005 = vsel %vm476, %v953, 0
      %v1008 = vsel %vm476, %v954, 0
      %v1011 = vsel %vm476, %v955, 0
      %v1014 = vsel %vm476, %v956, 0
      %v1017 = vsel %vm476, %v957, 0
      %v1020 = vsel %vm476, %v958, 0
      %v1023 = vsel %vm476, %v959, 0
      %v1026 = vsel %vm476, %v960, 0
      %v1029 = vsel %vm476, %v961, 0
      %v1032 = vsel %vm476, %v962, 0
      %v1035 = vsel %vm476, %v963, 0
      %v1038 = vsel %vm476, %v964, 0
      %v1041 = vsel %vm476, %v965, 0
      %v1044 = vsel %vm476, %v966, 0
      %v1047 = vsel %vm476, %v967, 0
      %v1050 = vsel %vm476, %v968, 0
      %v1053 = vsel %vm476, %v969, 0
      %v1056 = vsel %vm476, %v970, 0
      %v1059 = vsel %vm476, %v971, 0
      %v1062 = vsel %vm476, %v972, 0
      %v1065 = vsel %vm476, %v973, 0
      %v1068 = vsel %vm476, %v974, 0
      %v1071 = vsel %vm476, %v975, 0
      %v1074 = vsel %vm476, %v976, 0
      %v1077 = vsel %vm476, %v977, 0
      %v1080 = vsel %vm573, %v978, 0
      %1082 = vmatpush.msra.mxu0 0.0
      %1083 = vmatpush.msra.mxu0 0.0
      %1084 = vmatpush.msra.mxu0 0.0
      %1085 = vmatpush.msra.mxu0 0.0
      %1086 = vmatpush.msra.mxu0 0.0
      %1087 = vmatpush.msra.mxu0 0.0
      %1088 = vmatpush.msra.mxu0 0.0
      %1089 = vmatpush.msra.mxu0 0.0
      %1090 = vmatpush.msra.mxu0 0.0
      %1091 = vmatpush.msra.mxu0 0.0
      %1092 = vmatpush.msra.mxu0 0.0
      %1093 = vmatpush.msra.mxu0 0.0
      %1094 = vmatpush.msra.mxu0 0.0
      %1095 = vmatpush.msra.mxu0 0.0
      %1096 = vmatpush.msra.mxu0 0.0
      %1097 = vmatpush.msra.mxu0 %v1080
      %1098 = vmatmul.f32.gmra.mxu0 %v984
      %v1099 = vpop.f32.mrf.mxu0
      %v1100 = vadd.f32 %v981, %v1099
      %1101 = vmatmul.f32.gmra.mxu0 %v987
      %v1102 = vpop.f32.mrf.mxu0
      %v1103 = vadd.f32 %v981, %v1102
      %1104 = vmatmul.f32.gmra.mxu0 %v990
      %v1105 = vpop.f32.mrf.mxu0
      %v1106 = vadd.f32 %v981, %v1105
      %1107 = vmatmul.f32.gmra.mxu0 %v993
      %v1108 = vpop.f32.mrf.mxu0
      %v1109 = vadd.f32 %v981, %v1108
      %1110 = vmatmul.f32.gmra.mxu0 %v996
      %v1111 = vpop.f32.mrf.mxu0
      %v1112 = vadd.f32 %v981, %v1111
      %1113 = vmatmul.f32.gmra.mxu0 %v999
      %v1114 = vpop.f32.mrf.mxu0
      %v1115 = vadd.f32 %v981, %v1114
      %1116 = vmatmul.f32.gmra.mxu0 %v1002
      %v1117 = vpop.f32.mrf.mxu0
      %v1118 = vadd.f32 %v981, %v1117
      %1119 = vmatmul.f32.gmra.mxu0 %v1005
      %v1120 = vpop.f32.mrf.mxu0
      %v1121 = vadd.f32 %v981, %v1120
      %1122 = vmatmul.f32.gmra.mxu0 %v1008
      %v1123 = vpop.f32.mrf.mxu0
      %v1124 = vadd.f32 %v981, %v1123
      %1125 = vmatmul.f32.gmra.mxu0 %v1011
      %v1126 = vpop.f32.mrf.mxu0
      %v1127 = vadd.f32 %v981, %v1126
      %1128 = vmatmul.f32.gmra.mxu0 %v1014
      %v1129 = vpop.f32.mrf.mxu0
      %v1130 = vadd.f32 %v981, %v1129
      %1131 = vmatmul.f32.gmra.mxu0 %v1017
      %v1132 = vpop.f32.mrf.mxu0
      %v1133 = vadd.f32 %v981, %v1132
      %1134 = vmatmul.f32.gmra.mxu0 %v1020
      %v1135 = vpop.f32.mrf.mxu0
      %v1136 = vadd.f32 %v981, %v1135
      %1137 = vmatmul.f32.gmra.mxu0 %v1023
      %v1138 = vpop.f32.mrf.mxu0
      %v1139 = vadd.f32 %v981, %v1138
      %1140 = vmatmul.f32.gmra.mxu0 %v1026
      %v1141 = vpop.f32.mrf.mxu0
      %v1142 = vadd.f32 %v981, %v1141
      %1143 = vmatmul.f32.gmra.mxu0 %v1029
      %v1144 = vpop.f32.mrf.mxu0
      %v1145 = vadd.f32 %v981, %v1144
      %1146 = vmatmul.f32.gmra.mxu0 %v1032
      %v1147 = vpop.f32.mrf.mxu0
      %v1148 = vadd.f32 %v981, %v1147
      %1149 = vmatmul.f32.gmra.mxu0 %v1035
      %v1150 = vpop.f32.mrf.mxu0
      %v1151 = vadd.f32 %v981, %v1150
      %1152 = vmatmul.f32.gmra.mxu0 %v1038
      %v1153 = vpop.f32.mrf.mxu0
      %v1154 = vadd.f32 %v981, %v1153
      %1155 = vmatmul.f32.gmra.mxu0 %v1041
      %v1156 = vpop.f32.mrf.mxu0
      %v1157 = vadd.f32 %v981, %v1156
      %1158 = vmatmul.f32.gmra.mxu0 %v1044
      %v1159 = vpop.f32.mrf.mxu0
      %v1160 = vadd.f32 %v981, %v1159
      %1161 = vmatmul.f32.gmra.mxu0 %v1047
      %v1162 = vpop.f32.mrf.mxu0
      %v1163 = vadd.f32 %v981, %v1162
      %1164 = vmatmul.f32.gmra.mxu0 %v1050
      %v1165 = vpop.f32.mrf.mxu0
      %v1166 = vadd.f32 %v981, %v1165
      %1167 = vmatmul.f32.gmra.mxu0 %v1053
      %v1168 = vpop.f32.mrf.mxu0
      %v1169 = vadd.f32 %v981, %v1168
      %1170 = vmatmul.f32.gmra.mxu0 %v1056
      %v1171 = vpop.f32.mrf.mxu0
      %v1172 = vadd.f32 %v981, %v1171
      %1173 = vmatmul.f32.gmra.mxu0 %v1059
      %v1174 = vpop.f32.mrf.mxu0
      %v1175 = vadd.f32 %v981, %v1174
      %1176 = vmatmul.f32.gmra.mxu0 %v1062
      %v1177 = vpop.f32.mrf.mxu0
      %v1178 = vadd.f32 %v981, %v1177
      %1179 = vmatmul.f32.gmra.mxu0 %v1065
      %v1180 = vpop.f32.mrf.mxu0
      %v1181 = vadd.f32 %v981, %v1180
      %1182 = vmatmul.f32.gmra.mxu0 %v1068
      %v1183 = vpop.f32.mrf.mxu0
      %v1184 = vadd.f32 %v981, %v1183
      %1185 = vmatmul.f32.gmra.mxu0 %v1071
      %v1186 = vpop.f32.mrf.mxu0
      %v1187 = vadd.f32 %v981, %v1186
      %1188 = vmatmul.f32.gmra.mxu0 %v1074
      %v1189 = vpop.f32.mrf.mxu0
      %v1190 = vadd.f32 %v981, %v1189
      %1191 = vmatmul.f32.gmra.mxu0 %v1077
      %v1192 = vpop.f32.mrf.mxu0
      %v1193 = vadd.f32 %v981, %v1192
      %1194 = vdwg.mxu0
      %v1195 = vld [vmem:[%s6] sm:$0xf]
      %v1196 = vld [vmem:[%s7] sm:$0x1]
      %v1198 = vperm.slane %v1196, 0
      %v1201 = vsel %vm573, %v1195, 0
      %1203 = vmatpush.msra.mxu0 0.0
      %1204 = vmatpush.msra.mxu0 0.0
      %1205 = vmatpush.msra.mxu0 0.0
      %1206 = vmatpush.msra.mxu0 0.0
      %1207 = vmatpush.msra.mxu0 0.0
      %1208 = vmatpush.msra.mxu0 0.0
      %1209 = vmatpush.msra.mxu0 0.0
      %1210 = vmatpush.msra.mxu0 0.0
      %1211 = vmatpush.msra.mxu0 0.0
      %1212 = vmatpush.msra.mxu0 0.0
      %1213 = vmatpush.msra.mxu0 0.0
      %1214 = vmatpush.msra.mxu0 0.0
      %1215 = vmatpush.msra.mxu0 0.0
      %1216 = vmatpush.msra.mxu0 0.0
      %1217 = vmatpush.msra.mxu0 0.0
      %1218 = vmatpush.msra.mxu0 %v1201
      %1219 = vmatmul.f32.gmra.mxu0 %v984
      %v1220 = vpop.f32.mrf.mxu0
      %v1221 = vadd.f32 %v1198, %v1220
      %1222 = vmatmul.f32.gmra.mxu0 %v987
      %v1223 = vpop.f32.mrf.mxu0
      %v1224 = vadd.f32 %v1198, %v1223
      %1225 = vmatmul.f32.gmra.mxu0 %v990
      %v1226 = vpop.f32.mrf.mxu0
      %v1227 = vadd.f32 %v1198, %v1226
      %1228 = vmatmul.f32.gmra.mxu0 %v993
      %v1229 = vpop.f32.mrf.mxu0
      %v1230 = vadd.f32 %v1198, %v1229
      %1231 = vmatmul.f32.gmra.mxu0 %v996
      %v1232 = vpop.f32.mrf.mxu0
      %v1233 = vadd.f32 %v1198, %v1232
      %1234 = vmatmul.f32.gmra.mxu0 %v999
      %v1235 = vpop.f32.mrf.mxu0
      %v1236 = vadd.f32 %v1198, %v1235
      %1237 = vmatmul.f32.gmra.mxu0 %v1002
      %v1238 = vpop.f32.mrf.mxu0
      %v1239 = vadd.f32 %v1198, %v1238
      %1240 = vmatmul.f32.gmra.mxu0 %v1005
      %v1241 = vpop.f32.mrf.mxu0
      %v1242 = vadd.f32 %v1198, %v1241
      %1243 = vmatmul.f32.gmra.mxu0 %v1008
      %v1244 = vpop.f32.mrf.mxu0
      %v1245 = vadd.f32 %v1198, %v1244
      %1246 = vmatmul.f32.gmra.mxu0 %v1011
      %v1247 = vpop.f32.mrf.mxu0
      %v1248 = vadd.f32 %v1198, %v1247
      %1249 = vmatmul.f32.gmra.mxu0 %v1014
      %v1250 = vpop.f32.mrf.mxu0
      %v1251 = vadd.f32 %v1198, %v1250
      %1252 = vmatmul.f32.gmra.mxu0 %v1017
      %v1253 = vpop.f32.mrf.mxu0
      %v1254 = vadd.f32 %v1198, %v1253
      %1255 = vmatmul.f32.gmra.mxu0 %v1020
      %v1256 = vpop.f32.mrf.mxu0
      %v1257 = vadd.f32 %v1198, %v1256
      %1258 = vmatmul.f32.gmra.mxu0 %v1023
      %v1259 = vpop.f32.mrf.mxu0
      %v1260 = vadd.f32 %v1198, %v1259
      %1261 = vmatmul.f32.gmra.mxu0 %v1026
      %v1262 = vpop.f32.mrf.mxu0
      %v1263 = vadd.f32 %v1198, %v1262
      %1264 = vmatmul.f32.gmra.mxu0 %v1029
      %v1265 = vpop.f32.mrf.mxu0
      %v1266 = vadd.f32 %v1198, %v1265
      %1267 = vmatmul.f32.gmra.mxu0 %v1032
      %v1268 = vpop.f32.mrf.mxu0
      %v1269 = vadd.f32 %v1198, %v1268
      %1270 = vmatmul.f32.gmra.mxu0 %v1035
      %v1271 = vpop.f32.mrf.mxu0
      %v1272 = vadd.f32 %v1198, %v1271
      %1273 = vmatmul.f32.gmra.mxu0 %v1038
      %v1274 = vpop.f32.mrf.mxu0
      %v1275 = vadd.f32 %v1198, %v1274
      %1276 = vmatmul.f32.gmra.mxu0 %v1041
      %v1277 = vpop.f32.mrf.mxu0
      %v1278 = vadd.f32 %v1198, %v1277
      %1279 = vmatmul.f32.gmra.mxu0 %v1044
      %v1280 = vpop.f32.mrf.mxu0
      %v1281 = vadd.f32 %v1198, %v1280
      %1282 = vmatmul.f32.gmra.mxu0 %v1047
      %v1283 = vpop.f32.mrf.mxu0
      %v1284 = vadd.f32 %v1198, %v1283
      %1285 = vmatmul.f32.gmra.mxu0 %v1050
      %v1286 = vpop.f32.mrf.mxu0
      %v1287 = vadd.f32 %v1198, %v1286
      %1288 = vmatmul.f32.gmra.mxu0 %v1053
      %v1289 = vpop.f32.mrf.mxu0
      %v1290 = vadd.f32 %v1198, %v1289
      %1291 = vmatmul.f32.gmra.mxu0 %v1056
      %v1292 = vpop.f32.mrf.mxu0
      %v1293 = vadd.f32 %v1198, %v1292
      %1294 = vmatmul.f32.gmra.mxu0 %v1059
      %v1295 = vpop.f32.mrf.mxu0
      %v1296 = vadd.f32 %v1198, %v1295
      %1297 = vmatmul.f32.gmra.mxu0 %v1062
      %v1298 = vpop.f32.mrf.mxu0
      %v1299 = vadd.f32 %v1198, %v1298
      %1300 = vmatmul.f32.gmra.mxu0 %v1065
      %v1301 = vpop.f32.mrf.mxu0
      %v1302 = vadd.f32 %v1198, %v1301
      %1303 = vmatmul.f32.gmra.mxu0 %v1068
      %v1304 = vpop.f32.mrf.mxu0
      %v1305 = vadd.f32 %v1198, %v1304
      %1306 = vmatmul.f32.gmra.mxu0 %v1071
      %v1307 = vpop.f32.mrf.mxu0
      %v1308 = vadd.f32 %v1198, %v1307
      %1309 = vmatmul.f32.gmra.mxu0 %v1074
      %v1310 = vpop.f32.mrf.mxu0
      %v1311 = vadd.f32 %v1198, %v1310
      %1312 = vmatmul.f32.gmra.mxu0 %v1077
      %v1313 = vpop.f32.mrf.mxu0
      %v1314 = vadd.f32 %v1198, %v1313
      %1315 = vdwg.mxu0
      %v1316 = vld [vmem:[%s431] sm:$0xf]
      %v1317 = vld [vmem:[%s431 + $0x4] sm:$0xf]
      %v1318 = vld [vmem:[%s431 + $0x8] sm:$0xf]
      %v1319 = vld [vmem:[%s431 + $0xc] sm:$0xf]
      %v1320 = vld [vmem:[%s431 + $0x10] sm:$0xf]
      %v1321 = vld [vmem:[%s431 + $0x14] sm:$0xf]
      %v1322 = vld [vmem:[%s431 + $0x18] sm:$0xf]
      %v1323 = vld [vmem:[%s431 + $0x1c] sm:$0xf]
      %v1324 = vld [vmem:[%s431 + $0x20] sm:$0xf]
      %v1325 = vld [vmem:[%s431 + $0x24] sm:$0xf]
      %v1326 = vld [vmem:[%s431 + $0x28] sm:$0xf]
      %v1327 = vld [vmem:[%s431 + $0x2c] sm:$0xf]
      %v1328 = vld [vmem:[%s431 + $0x30] sm:$0xf]
      %v1329 = vld [vmem:[%s431 + $0x34] sm:$0xf]
      %v1330 = vld [vmem:[%s431 + $0x38] sm:$0xf]
      %v1331 = vld [vmem:[%s431 + $0x3c] sm:$0xf]
      %v1332 = vld [vmem:[%s431 + $0x40] sm:$0xf]
      %v1333 = vld [vmem:[%s431 + $0x44] sm:$0xf]
      %v1334 = vld [vmem:[%s431 + $0x48] sm:$0xf]
      %v1335 = vld [vmem:[%s431 + $0x4c] sm:$0xf]
      %v1336 = vld [vmem:[%s431 + $0x50] sm:$0xf]
      %v1337 = vld [vmem:[%s431 + $0x54] sm:$0xf]
      %v1338 = vld [vmem:[%s431 + $0x58] sm:$0xf]
      %v1339 = vld [vmem:[%s431 + $0x5c] sm:$0xf]
      %v1340 = vld [vmem:[%s431 + $0x60] sm:$0xf]
      %v1341 = vld [vmem:[%s431 + $0x64] sm:$0xf]
      %v1342 = vld [vmem:[%s431 + $0x68] sm:$0xf]
      %v1343 = vld [vmem:[%s431 + $0x6c] sm:$0xf]
      %v1344 = vld [vmem:[%s431 + $0x70] sm:$0xf]
      %v1345 = vld [vmem:[%s431 + $0x74] sm:$0xf]
      %v1346 = vld [vmem:[%s431 + $0x78] sm:$0xf]
      %v1347 = vld [vmem:[%s431 + $0x7c] sm:$0xf]
      %v1348 = vunpack.c.l.bf16 %v1316
      %v1349 = vunpack.c.l.bf16 %v1317
      %v1350 = vunpack.c.l.bf16 %v1318
      %v1351 = vunpack.c.l.bf16 %v1319
      %v1352 = vunpack.c.l.bf16 %v1320
      %v1353 = vunpack.c.l.bf16 %v1321
      %v1354 = vunpack.c.l.bf16 %v1322
      %v1355 = vunpack.c.l.bf16 %v1323
      %v1356 = vunpack.c.l.bf16 %v1324
      %v1357 = vunpack.c.l.bf16 %v1325
      %v1358 = vunpack.c.l.bf16 %v1326
      %v1359 = vunpack.c.l.bf16 %v1327
      %v1360 = vunpack.c.l.bf16 %v1328
      %v1361 = vunpack.c.l.bf16 %v1329
      %v1362 = vunpack.c.l.bf16 %v1330
      %v1363 = vunpack.c.l.bf16 %v1331
      %v1364 = vunpack.c.l.bf16 %v1332
      %v1365 = vunpack.c.l.bf16 %v1333
      %v1366 = vunpack.c.l.bf16 %v1334
      %v1367 = vunpack.c.l.bf16 %v1335
      %v1368 = vunpack.c.l.bf16 %v1336
      %v1369 = vunpack.c.l.bf16 %v1337
      %v1370 = vunpack.c.l.bf16 %v1338
      %v1371 = vunpack.c.l.bf16 %v1339
      %v1372 = vunpack.c.l.bf16 %v1340
      %v1373 = vunpack.c.l.bf16 %v1341
      %v1374 = vunpack.c.l.bf16 %v1342
      %v1375 = vunpack.c.l.bf16 %v1343
      %v1376 = vunpack.c.l.bf16 %v1344
      %v1377 = vunpack.c.l.bf16 %v1345
      %v1378 = vunpack.c.l.bf16 %v1346
      %v1379 = vunpack.c.l.bf16 %v1347
      %v1380 = vmul.f32 %v1348, %v1100
      %v1381 = vmul.f32 %v1349, %v1103
      %v1382 = vmul.f32 %v1350, %v1106
      %v1383 = vmul.f32 %v1351, %v1109
      %v1384 = vmul.f32 %v1352, %v1112
      %v1385 = vmul.f32 %v1353, %v1115
      %v1386 = vmul.f32 %v1354, %v1118
      %v1387 = vmul.f32 %v1355, %v1121
      %v1388 = vmul.f32 %v1356, %v1124
      %v1389 = vmul.f32 %v1357, %v1127
      %v1390 = vmul.f32 %v1358, %v1130
      %v1391 = vmul.f32 %v1359, %v1133
      %v1392 = vmul.f32 %v1360, %v1136
      %v1393 = vmul.f32 %v1361, %v1139
      %v1394 = vmul.f32 %v1362, %v1142
      %v1395 = vmul.f32 %v1363, %v1145
      %v1396 = vmul.f32 %v1364, %v1148
      %v1397 = vmul.f32 %v1365, %v1151
      %v1398 = vmul.f32 %v1366, %v1154
      %v1399 = vmul.f32 %v1367, %v1157
      %v1400 = vmul.f32 %v1368, %v1160
      %v1401 = vmul.f32 %v1369, %v1163
      %v1402 = vmul.f32 %v1370, %v1166
      %v1403 = vmul.f32 %v1371, %v1169
      %v1404 = vmul.f32 %v1372, %v1172
      %v1405 = vmul.f32 %v1373, %v1175
      %v1406 = vmul.f32 %v1374, %v1178
      %v1407 = vmul.f32 %v1375, %v1181
      %v1408 = vmul.f32 %v1376, %v1184
      %v1409 = vmul.f32 %v1377, %v1187
      %v1410 = vmul.f32 %v1378, %v1190
      %v1411 = vmul.f32 %v1379, %v1193
      %v1412 = vadd.f32 %v1380, %v1221
      %v1413 = vadd.f32 %v1381, %v1224
      %v1414 = vadd.f32 %v1382, %v1227
      %v1415 = vadd.f32 %v1383, %v1230
      %v1416 = vadd.f32 %v1384, %v1233
      %v1417 = vadd.f32 %v1385, %v1236
      %v1418 = vadd.f32 %v1386, %v1239
      %v1419 = vadd.f32 %v1387, %v1242
      %v1420 = vadd.f32 %v1388, %v1245
      %v1421 = vadd.f32 %v1389, %v1248
      %v1422 = vadd.f32 %v1390, %v1251
      %v1423 = vadd.f32 %v1391, %v1254
      %v1424 = vadd.f32 %v1392, %v1257
      %v1425 = vadd.f32 %v1393, %v1260
      %v1426 = vadd.f32 %v1394, %v1263
      %v1427 = vadd.f32 %v1395, %v1266
      %v1428 = vadd.f32 %v1396, %v1269
      %v1429 = vadd.f32 %v1397, %v1272
      %v1430 = vadd.f32 %v1398, %v1275
      %v1431 = vadd.f32 %v1399, %v1278
      %v1432 = vadd.f32 %v1400, %v1281
      %v1433 = vadd.f32 %v1401, %v1284
      %v1434 = vadd.f32 %v1402, %v1287
      %v1435 = vadd.f32 %v1403, %v1290
      %v1436 = vadd.f32 %v1404, %v1293
      %v1437 = vadd.f32 %v1405, %v1296
      %v1438 = vadd.f32 %v1406, %v1299
      %v1439 = vadd.f32 %v1407, %v1302
      %v1440 = vadd.f32 %v1408, %v1305
      %v1441 = vadd.f32 %v1409, %v1308
      %v1442 = vadd.f32 %v1410, %v1311
      %v1443 = vadd.f32 %v1411, %v1314
      %v1444 = vld [vmem:[%s8] sm:$0xff]
      %v1445 = vld [vmem:[%s8 + $0x8] sm:$0xff]
      %v1446 = vld [vmem:[%s8 + $0x10] sm:$0xff]
      %v1447 = vld [vmem:[%s8 + $0x18] sm:$0xff]
      %v1448 = vld [vmem:[%s8 + $0x20] sm:$0xff]
      %v1449 = vld [vmem:[%s8 + $0x28] sm:$0xff]
      %v1450 = vld [vmem:[%s8 + $0x30] sm:$0xff]
      %v1451 = vld [vmem:[%s8 + $0x38] sm:$0xff]
      %v1452 = vld [vmem:[%s8 + $0x40] sm:$0xff]
      %v1453 = vld [vmem:[%s8 + $0x48] sm:$0xff]
      %v1454 = vld [vmem:[%s8 + $0x50] sm:$0xff]
      %v1455 = vld [vmem:[%s8 + $0x58] sm:$0xff]
      %v1456 = vld [vmem:[%s9] sm:$0x1]
      %v1458 = vperm.slane %v1456, 0
      %vm1460 = vcmask 785408
      %v1462 = vsel %vm1460, %v1412, 0
      %v1465 = vsel %vm1460, %v1413, 0
      %v1468 = vsel %vm1460, %v1414, 0
      %v1471 = vsel %vm1460, %v1415, 0
      %v1474 = vsel %vm1460, %v1416, 0
      %v1477 = vsel %vm1460, %v1417, 0
      %v1480 = vsel %vm1460, %v1418, 0
      %v1483 = vsel %vm1460, %v1419, 0
      %v1486 = vsel %vm1460, %v1420, 0
      %v1489 = vsel %vm1460, %v1421, 0
      %v1492 = vsel %vm1460, %v1422, 0
      %v1495 = vsel %vm1460, %v1423, 0
      %v1498 = vsel %vm1460, %v1424, 0
      %v1501 = vsel %vm1460, %v1425, 0
      %v1504 = vsel %vm1460, %v1426, 0
      %v1507 = vsel %vm1460, %v1427, 0
      %v1510 = vsel %vm1460, %v1428, 0
      %v1513 = vsel %vm1460, %v1429, 0
      %v1516 = vsel %vm1460, %v1430, 0
      %v1519 = vsel %vm1460, %v1431, 0
      %v1522 = vsel %vm1460, %v1432, 0
      %v1525 = vsel %vm1460, %v1433, 0
      %v1528 = vsel %vm1460, %v1434, 0
      %v1531 = vsel %vm1460, %v1435, 0
      %v1534 = vsel %vm1460, %v1436, 0
      %v1537 = vsel %vm1460, %v1437, 0
      %v1540 = vsel %vm1460, %v1438, 0
      %v1543 = vsel %vm1460, %v1439, 0
      %v1546 = vsel %vm1460, %v1440, 0
      %v1549 = vsel %vm1460, %v1441, 0
      %v1552 = vsel %vm1460, %v1442, 0
      %v1555 = vsel %vm1460, %v1443, 0
      %1557 = vmatpush.msra.mxu0 0.0
      %1558 = vmatpush.msra.mxu0 0.0
      %1559 = vmatpush.msra.mxu0 0.0
      %1560 = vmatpush.msra.mxu0 0.0
      %1561 = vmatpush.msra.mxu0 %v1455
      %1562 = vmatpush.msra.mxu0 %v1454
      %1563 = vmatpush.msra.mxu0 %v1453
      %1564 = vmatpush.msra.mxu0 %v1452
      %1565 = vmatpush.msra.mxu0 %v1451
      %1566 = vmatpush.msra.mxu0 %v1450
      %1567 = vmatpush.msra.mxu0 %v1449
      %1568 = vmatpush.msra.mxu0 %v1448
      %1569 = vmatpush.msra.mxu0 %v1447
      %1570 = vmatpush.msra.mxu0 %v1446
      %1571 = vmatpush.msra.mxu0 %v1445
      %1572 = vmatpush.msra.mxu0 %v1444
      %1573 = vmatmul.f32.gmra.mxu0 %v1462
      %v1574 = vpop.f32.mrf.mxu0
      %v1575 = vadd.f32 %v1458, %v1574
      %1576 = vmatmul.f32.gmra.mxu0 %v1465
      %v1577 = vpop.f32.mrf.mxu0
      %v1578 = vadd.f32 %v1458, %v1577
      %1579 = vmatmul.f32.gmra.mxu0 %v1468
      %v1580 = vpop.f32.mrf.mxu0
      %v1581 = vadd.f32 %v1458, %v1580
      %1582 = vmatmul.f32.gmra.mxu0 %v1471
      %v1583 = vpop.f32.mrf.mxu0
      %v1584 = vadd.f32 %v1458, %v1583
      %1585 = vmatmul.f32.gmra.mxu0 %v1474
      %v1586 = vpop.f32.mrf.mxu0
      %v1587 = vadd.f32 %v1458, %v1586
      %1588 = vmatmul.f32.gmra.mxu0 %v1477
      %v1589 = vpop.f32.mrf.mxu0
      %v1590 = vadd.f32 %v1458, %v1589
      %1591 = vmatmul.f32.gmra.mxu0 %v1480
      %v1592 = vpop.f32.mrf.mxu0
      %v1593 = vadd.f32 %v1458, %v1592
      %1594 = vmatmul.f32.gmra.mxu0 %v1483
      %v1595 = vpop.f32.mrf.mxu0
      %v1596 = vadd.f32 %v1458, %v1595
      %1597 = vmatmul.f32.gmra.mxu0 %v1486
      %v1598 = vpop.f32.mrf.mxu0
      %v1599 = vadd.f32 %v1458, %v1598
      %1600 = vmatmul.f32.gmra.mxu0 %v1489
      %v1601 = vpop.f32.mrf.mxu0
      %v1602 = vadd.f32 %v1458, %v1601
      %1603 = vmatmul.f32.gmra.mxu0 %v1492
      %v1604 = vpop.f32.mrf.mxu0
      %v1605 = vadd.f32 %v1458, %v1604
      %1606 = vmatmul.f32.gmra.mxu0 %v1495
      %v1607 = vpop.f32.mrf.mxu0
      %v1608 = vadd.f32 %v1458, %v1607
      %1609 = vmatmul.f32.gmra.mxu0 %v1498
      %v1610 = vpop.f32.mrf.mxu0
      %v1611 = vadd.f32 %v1458, %v1610
      %1612 = vmatmul.f32.gmra.mxu0 %v1501
      %v1613 = vpop.f32.mrf.mxu0
      %v1614 = vadd.f32 %v1458, %v1613
      %1615 = vmatmul.f32.gmra.mxu0 %v1504
      %v1616 = vpop.f32.mrf.mxu0
      %v1617 = vadd.f32 %v1458, %v1616
      %1618 = vmatmul.f32.gmra.mxu0 %v1507
      %v1619 = vpop.f32.mrf.mxu0
      %v1620 = vadd.f32 %v1458, %v1619
      %1621 = vmatmul.f32.gmra.mxu0 %v1510
      %v1622 = vpop.f32.mrf.mxu0
      %v1623 = vadd.f32 %v1458, %v1622
      %1624 = vmatmul.f32.gmra.mxu0 %v1513
      %v1625 = vpop.f32.mrf.mxu0
      %v1626 = vadd.f32 %v1458, %v1625
      %1627 = vmatmul.f32.gmra.mxu0 %v1516
      %v1628 = vpop.f32.mrf.mxu0
      %v1629 = vadd.f32 %v1458, %v1628
      %1630 = vmatmul.f32.gmra.mxu0 %v1519
      %v1631 = vpop.f32.mrf.mxu0
      %v1632 = vadd.f32 %v1458, %v1631
      %1633 = vmatmul.f32.gmra.mxu0 %v1522
      %v1634 = vpop.f32.mrf.mxu0
      %v1635 = vadd.f32 %v1458, %v1634
      %1636 = vmatmul.f32.gmra.mxu0 %v1525
      %v1637 = vpop.f32.mrf.mxu0
      %v1638 = vadd.f32 %v1458, %v1637
      %1639 = vmatmul.f32.gmra.mxu0 %v1528
      %v1640 = vpop.f32.mrf.mxu0
      %v1641 = vadd.f32 %v1458, %v1640
      %1642 = vmatmul.f32.gmra.mxu0 %v1531
      %v1643 = vpop.f32.mrf.mxu0
      %v1644 = vadd.f32 %v1458, %v1643
      %1645 = vmatmul.f32.gmra.mxu0 %v1534
      %v1646 = vpop.f32.mrf.mxu0
      %v1647 = vadd.f32 %v1458, %v1646
      %1648 = vmatmul.f32.gmra.mxu0 %v1537
      %v1649 = vpop.f32.mrf.mxu0
      %v1650 = vadd.f32 %v1458, %v1649
      %1651 = vmatmul.f32.gmra.mxu0 %v1540
      %v1652 = vpop.f32.mrf.mxu0
      %v1653 = vadd.f32 %v1458, %v1652
      %1654 = vmatmul.f32.gmra.mxu0 %v1543
      %v1655 = vpop.f32.mrf.mxu0
      %v1656 = vadd.f32 %v1458, %v1655
      %1657 = vmatmul.f32.gmra.mxu0 %v1546
      %v1658 = vpop.f32.mrf.mxu0
      %v1659 = vadd.f32 %v1458, %v1658
      %1660 = vmatmul.f32.gmra.mxu0 %v1549
      %v1661 = vpop.f32.mrf.mxu0
      %v1662 = vadd.f32 %v1458, %v1661
      %1663 = vmatmul.f32.gmra.mxu0 %v1552
      %v1664 = vpop.f32.mrf.mxu0
      %v1665 = vadd.f32 %v1458, %v1664
      %1666 = vmatmul.f32.gmra.mxu0 %v1555
      %v1667 = vpop.f32.mrf.mxu0
      %v1668 = vadd.f32 %v1458, %v1667
      %1669 = vdwg.mxu0
      %v1670 = vmul.f32 %v1575, 0.5
      %v1671 = vmul.f32 %v1578, 0.5
      %v1672 = vmul.f32 %v1581, 0.5
      %v1673 = vmul.f32 %v1584, 0.5
      %v1674 = vmul.f32 %v1587, 0.5
      %v1675 = vmul.f32 %v1590, 0.5
      %v1676 = vmul.f32 %v1593, 0.5
      %v1677 = vmul.f32 %v1596, 0.5
      %v1678 = vmul.f32 %v1599, 0.5
      %v1679 = vmul.f32 %v1602, 0.5
      %v1680 = vmul.f32 %v1605, 0.5
      %v1681 = vmul.f32 %v1608, 0.5
      %v1682 = vmul.f32 %v1611, 0.5
      %v1683 = vmul.f32 %v1614, 0.5
      %v1684 = vmul.f32 %v1617, 0.5
      %v1685 = vmul.f32 %v1620, 0.5
      %v1686 = vmul.f32 %v1623, 0.5
      %v1687 = vmul.f32 %v1626, 0.5
      %v1688 = vmul.f32 %v1629, 0.5
      %v1689 = vmul.f32 %v1632, 0.5
      %v1690 = vmul.f32 %v1635, 0.5
      %v1691 = vmul.f32 %v1638, 0.5
      %v1692 = vmul.f32 %v1641, 0.5
      %v1693 = vmul.f32 %v1644, 0.5
      %v1694 = vmul.f32 %v1647, 0.5
      %v1695 = vmul.f32 %v1650, 0.5
      %v1696 = vmul.f32 %v1653, 0.5
      %v1697 = vmul.f32 %v1656, 0.5
      %v1698 = vmul.f32 %v1659, 0.5
      %v1699 = vmul.f32 %v1662, 0.5
      %v1700 = vmul.f32 %v1665, 0.5
      %v1701 = vmul.f32 %v1668, 0.5
      %v1702 = vmul.f32 %v1575, 0.044715
      %v1703 = vmul.f32 %v1578, 0.044715
      %v1704 = vmul.f32 %v1581, 0.044715
      %v1705 = vmul.f32 %v1584, 0.044715
      %v1706 = vmul.f32 %v1587, 0.044715
      %v1707 = vmul.f32 %v1590, 0.044715
      %v1708 = vmul.f32 %v1593, 0.044715
      %v1709 = vmul.f32 %v1596, 0.044715
      %v1710 = vmul.f32 %v1599, 0.044715
      %v1711 = vmul.f32 %v1602, 0.044715
      %v1712 = vmul.f32 %v1605, 0.044715
      %v1713 = vmul.f32 %v1608, 0.044715
      %v1714 = vmul.f32 %v1611, 0.044715
      %v1715 = vmul.f32 %v1614, 0.044715
      %v1716 = vmul.f32 %v1617, 0.044715
      %v1717 = vmul.f32 %v1620, 0.044715
      %v1718 = vmul.f32 %v1623, 0.044715
      %v1719 = vmul.f32 %v1626, 0.044715
      %v1720 = vmul.f32 %v1629, 0.044715
      %v1721 = vmul.f32 %v1632, 0.044715
      %v1722 = vmul.f32 %v1635, 0.044715
      %v1723 = vmul.f32 %v1638, 0.044715
      %v1724 = vmul.f32 %v1641, 0.044715
      %v1725 = vmul.f32 %v1644, 0.044715
      %v1726 = vmul.f32 %v1647, 0.044715
      %v1727 = vmul.f32 %v1650, 0.044715
      %v1728 = vmul.f32 %v1653, 0.044715
      %v1729 = vmul.f32 %v1656, 0.044715
      %v1730 = vmul.f32 %v1659, 0.044715
      %v1731 = vmul.f32 %v1662, 0.044715
      %v1732 = vmul.f32 %v1665, 0.044715
      %v1733 = vmul.f32 %v1668, 0.044715
      %v1734 = vmul.f32 %v1702, %v1575
      %v1735 = vmul.f32 %v1703, %v1578
      %v1736 = vmul.f32 %v1704, %v1581
      %v1737 = vmul.f32 %v1705, %v1584
      %v1738 = vmul.f32 %v1706, %v1587
      %v1739 = vmul.f32 %v1707, %v1590
      %v1740 = vmul.f32 %v1708, %v1593
      %v1741 = vmul.f32 %v1709, %v1596
      %v1742 = vmul.f32 %v1710, %v1599
      %v1743 = vmul.f32 %v1711, %v1602
      %v1744 = vmul.f32 %v1712, %v1605
      %v1745 = vmul.f32 %v1713, %v1608
      %v1746 = vmul.f32 %v1714, %v1611
      %v1747 = vmul.f32 %v1715, %v1614
      %v1748 = vmul.f32 %v1716, %v1617
      %v1749 = vmul.f32 %v1717, %v1620
      %v1750 = vmul.f32 %v1718, %v1623
      %v1751 = vmul.f32 %v1719, %v1626
      %v1752 = vmul.f32 %v1720, %v1629
      %v1753 = vmul.f32 %v1721, %v1632
      %v1754 = vmul.f32 %v1722, %v1635
      %v1755 = vmul.f32 %v1723, %v1638
      %v1756 = vmul.f32 %v1724, %v1641
      %v1757 = vmul.f32 %v1725, %v1644
      %v1758 = vmul.f32 %v1726, %v1647
      %v1759 = vmul.f32 %v1727, %v1650
      %v1760 = vmul.f32 %v1728, %v1653
      %v1761 = vmul.f32 %v1729, %v1656
      %v1762 = vmul.f32 %v1730, %v1659
      %v1763 = vmul.f32 %v1731, %v1662
      %v1764 = vmul.f32 %v1732, %v1665
      %v1765 = vmul.f32 %v1733, %v1668
      %v1766 = vmul.f32 %v1734, %v1575
      %v1767 = vmul.f32 %v1735, %v1578
      %v1768 = vmul.f32 %v1736, %v1581
      %v1769 = vmul.f32 %v1737, %v1584
      %v1770 = vmul.f32 %v1738, %v1587
      %v1771 = vmul.f32 %v1739, %v1590
      %v1772 = vmul.f32 %v1740, %v1593
      %v1773 = vmul.f32 %v1741, %v1596
      %v1774 = vmul.f32 %v1742, %v1599
      %v1775 = vmul.f32 %v1743, %v1602
      %v1776 = vmul.f32 %v1744, %v1605
      %v1777 = vmul.f32 %v1745, %v1608
      %v1778 = vmul.f32 %v1746, %v1611
      %v1779 = vmul.f32 %v1747, %v1614
      %v1780 = vmul.f32 %v1748, %v1617
      %v1781 = vmul.f32 %v1749, %v1620
      %v1782 = vmul.f32 %v1750, %v1623
      %v1783 = vmul.f32 %v1751, %v1626
      %v1784 = vmul.f32 %v1752, %v1629
      %v1785 = vmul.f32 %v1753, %v1632
      %v1786 = vmul.f32 %v1754, %v1635
      %v1787 = vmul.f32 %v1755, %v1638
      %v1788 = vmul.f32 %v1756, %v1641
      %v1789 = vmul.f32 %v1757, %v1644
      %v1790 = vmul.f32 %v1758, %v1647
      %v1791 = vmul.f32 %v1759, %v1650
      %v1792 = vmul.f32 %v1760, %v1653
      %v1793 = vmul.f32 %v1761, %v1656
      %v1794 = vmul.f32 %v1762, %v1659
      %v1795 = vmul.f32 %v1763, %v1662
      %v1796 = vmul.f32 %v1764, %v1665
      %v1797 = vmul.f32 %v1765, %v1668
      %v1798 = vadd.f32 %v1575, %v1766
      %v1799 = vadd.f32 %v1578, %v1767
      %v1800 = vadd.f32 %v1581, %v1768
      %v1801 = vadd.f32 %v1584, %v1769
      %v1802 = vadd.f32 %v1587, %v1770
      %v1803 = vadd.f32 %v1590, %v1771
      %v1804 = vadd.f32 %v1593, %v1772
      %v1805 = vadd.f32 %v1596, %v1773
      %v1806 = vadd.f32 %v1599, %v1774
      %v1807 = vadd.f32 %v1602, %v1775
      %v1808 = vadd.f32 %v1605, %v1776
      %v1809 = vadd.f32 %v1608, %v1777
      %v1810 = vadd.f32 %v1611, %v1778
      %v1811 = vadd.f32 %v1614, %v1779
      %v1812 = vadd.f32 %v1617, %v1780
      %v1813 = vadd.f32 %v1620, %v1781
      %v1814 = vadd.f32 %v1623, %v1782
      %v1815 = vadd.f32 %v1626, %v1783
      %v1816 = vadd.f32 %v1629, %v1784
      %v1817 = vadd.f32 %v1632, %v1785
      %v1818 = vadd.f32 %v1635, %v1786
      %v1819 = vadd.f32 %v1638, %v1787
      %v1820 = vadd.f32 %v1641, %v1788
      %v1821 = vadd.f32 %v1644, %v1789
      %v1822 = vadd.f32 %v1647, %v1790
      %v1823 = vadd.f32 %v1650, %v1791
      %v1824 = vadd.f32 %v1653, %v1792
      %v1825 = vadd.f32 %v1656, %v1793
      %v1826 = vadd.f32 %v1659, %v1794
      %v1827 = vadd.f32 %v1662, %v1795
      %v1828 = vadd.f32 %v1665, %v1796
      %v1829 = vadd.f32 %v1668, %v1797
      %v1830 = vmul.f32 %v1798, 0.7978846
      %v1831 = vmul.f32 %v1799, 0.7978846
      %v1832 = vmul.f32 %v1800, 0.7978846
      %v1833 = vmul.f32 %v1801, 0.7978846
      %v1834 = vmul.f32 %v1802, 0.7978846
      %v1835 = vmul.f32 %v1803, 0.7978846
      %v1836 = vmul.f32 %v1804, 0.7978846
      %v1837 = vmul.f32 %v1805, 0.7978846
      %v1838 = vmul.f32 %v1806, 0.7978846
      %v1839 = vmul.f32 %v1807, 0.7978846
      %v1840 = vmul.f32 %v1808, 0.7978846
      %v1841 = vmul.f32 %v1809, 0.7978846
      %v1842 = vmul.f32 %v1810, 0.7978846
      %v1843 = vmul.f32 %v1811, 0.7978846
      %v1844 = vmul.f32 %v1812, 0.7978846
      %v1845 = vmul.f32 %v1813, 0.7978846
      %v1846 = vmul.f32 %v1814, 0.7978846
      %v1847 = vmul.f32 %v1815, 0.7978846
      %v1848 = vmul.f32 %v1816, 0.7978846
      %v1849 = vmul.f32 %v1817, 0.7978846
      %v1850 = vmul.f32 %v1818, 0.7978846
      %v1851 = vmul.f32 %v1819, 0.7978846
      %v1852 = vmul.f32 %v1820, 0.7978846
      %v1853 = vmul.f32 %v1821, 0.7978846
      %v1854 = vmul.f32 %v1822, 0.7978846
      %v1855 = vmul.f32 %v1823, 0.7978846
      %v1856 = vmul.f32 %v1824, 0.7978846
      %v1857 = vmul.f32 %v1825, 0.7978846
      %v1858 = vmul.f32 %v1826, 0.7978846
      %v1859 = vmul.f32 %v1827, 0.7978846
      %v1860 = vmul.f32 %v1828, 0.7978846
      %v1861 = vmul.f32 %v1829, 0.7978846
      %v1862 = vtanh.pop %v1830
      %v1863 = vtanh.pop %v1831
      %v1864 = vtanh.pop %v1832
      %v1865 = vtanh.pop %v1833
      %v1866 = vtanh.pop %v1834
      %v1867 = vtanh.pop %v1835
      %v1868 = vtanh.pop %v1836
      %v1869 = vtanh.pop %v1837
      %v1870 = vtanh.pop %v1838
      %v1871 = vtanh.pop %v1839
      %v1872 = vtanh.pop %v1840
      %v1873 = vtanh.pop %v1841
      %v1874 = vtanh.pop %v1842
      %v1875 = vtanh.pop %v1843
      %v1876 = vtanh.pop %v1844
      %v1877 = vtanh.pop %v1845
      %v1878 = vtanh.pop %v1846
      %v1879 = vtanh.pop %v1847
      %v1880 = vtanh.pop %v1848
      %v1881 = vtanh.pop %v1849
      %v1882 = vtanh.pop %v1850
      %v1883 = vtanh.pop %v1851
      %v1884 = vtanh.pop %v1852
      %v1885 = vtanh.pop %v1853
      %v1886 = vtanh.pop %v1854
      %v1887 = vtanh.pop %v1855
      %v1888 = vtanh.pop %v1856
      %v1889 = vtanh.pop %v1857
      %v1890 = vtanh.pop %v1858
      %v1891 = vtanh.pop %v1859
      %v1892 = vtanh.pop %v1860
      %v1893 = vtanh.pop %v1861
      %v1894 = vadd.f32 %v1862, 1.0
      %v1895 = vadd.f32 %v1863, 1.0
      %v1896 = vadd.f32 %v1864, 1.0
      %v1897 = vadd.f32 %v1865, 1.0
      %v1898 = vadd.f32 %v1866, 1.0
      %v1899 = vadd.f32 %v1867, 1.0
      %v1900 = vadd.f32 %v1868, 1.0
      %v1901 = vadd.f32 %v1869, 1.0
      %v1902 = vadd.f32 %v1870, 1.0
      %v1903 = vadd.f32 %v1871, 1.0
      %v1904 = vadd.f32 %v1872, 1.0
      %v1905 = vadd.f32 %v1873, 1.0
      %v1906 = vadd.f32 %v1874, 1.0
      %v1907 = vadd.f32 %v1875, 1.0
      %v1908 = vadd.f32 %v1876, 1.0
      %v1909 = vadd.f32 %v1877, 1.0
      %v1910 = vadd.f32 %v1878, 1.0
      %v1911 = vadd.f32 %v1879, 1.0
      %v1912 = vadd.f32 %v1880, 1.0
      %v1913 = vadd.f32 %v1881, 1.0
      %v1914 = vadd.f32 %v1882, 1.0
      %v1915 = vadd.f32 %v1883, 1.0
      %v1916 = vadd.f32 %v1884, 1.0
      %v1917 = vadd.f32 %v1885, 1.0
      %v1918 = vadd.f32 %v1886, 1.0
      %v1919 = vadd.f32 %v1887, 1.0
      %v1920 = vadd.f32 %v1888, 1.0
      %v1921 = vadd.f32 %v1889, 1.0
      %v1922 = vadd.f32 %v1890, 1.0
      %v1923 = vadd.f32 %v1891, 1.0
      %v1924 = vadd.f32 %v1892, 1.0
      %v1925 = vadd.f32 %v1893, 1.0
      %v1926 = vmul.f32 %v1670, %v1894
      %v1927 = vmul.f32 %v1671, %v1895
      %v1928 = vmul.f32 %v1672, %v1896
      %v1929 = vmul.f32 %v1673, %v1897
      %v1930 = vmul.f32 %v1674, %v1898
      %v1931 = vmul.f32 %v1675, %v1899
      %v1932 = vmul.f32 %v1676, %v1900
      %v1933 = vmul.f32 %v1677, %v1901
      %v1934 = vmul.f32 %v1678, %v1902
      %v1935 = vmul.f32 %v1679, %v1903
      %v1936 = vmul.f32 %v1680, %v1904
      %v1937 = vmul.f32 %v1681, %v1905
      %v1938 = vmul.f32 %v1682, %v1906
      %v1939 = vmul.f32 %v1683, %v1907
      %v1940 = vmul.f32 %v1684, %v1908
      %v1941 = vmul.f32 %v1685, %v1909
      %v1942 = vmul.f32 %v1686, %v1910
      %v1943 = vmul.f32 %v1687, %v1911
      %v1944 = vmul.f32 %v1688, %v1912
      %v1945 = vmul.f32 %v1689, %v1913
      %v1946 = vmul.f32 %v1690, %v1914
      %v1947 = vmul.f32 %v1691, %v1915
      %v1948 = vmul.f32 %v1692, %v1916
      %v1949 = vmul.f32 %v1693, %v1917
      %v1950 = vmul.f32 %v1694, %v1918
      %v1951 = vmul.f32 %v1695, %v1919
      %v1952 = vmul.f32 %v1696, %v1920
      %v1953 = vmul.f32 %v1697, %v1921
      %v1954 = vmul.f32 %v1698, %v1922
      %v1955 = vmul.f32 %v1699, %v1923
      %v1956 = vmul.f32 %v1700, %v1924
      %v1957 = vmul.f32 %v1701, %v1925
      %v1958 = vld [vmem:[%s10] sm:$0x3]
      %v1959 = vld [vmem:[%s11] sm:$0x3]
      %1961 = vset.pattern.permute.xlu0 0
      %1962 = vperm.xlu0 %1961, %v1959
      %v1963 = vpop.permute.xlu0 %1962
      %vm1965 = vcmask 392192
      %v1967 = vsel %vm1965, %v1958, 0
      %v1970 = vsel %vm1965, %v1926, 0
      %v1973 = vsel %vm1965, %v1927, 0
      %v1976 = vsel %vm1965, %v1928, 0
      %v1979 = vsel %vm1965, %v1929, 0
      %v1982 = vsel %vm1965, %v1930, 0
      %v1985 = vsel %vm1965, %v1931, 0
      %v1988 = vsel %vm1965, %v1932, 0
      %v1991 = vsel %vm1965, %v1933, 0
      %v1994 = vsel %vm1965, %v1934, 0
      %v1997 = vsel %vm1965, %v1935, 0
      %v2000 = vsel %vm1965, %v1936, 0
      %v2003 = vsel %vm1965, %v1937, 0
      %v2006 = vsel %vm1965, %v1938, 0
      %v2009 = vsel %vm1965, %v1939, 0
      %v2012 = vsel %vm1965, %v1940, 0
      %v2015 = vsel %vm1965, %v1941, 0
      %v2018 = vsel %vm1965, %v1942, 0
      %v2021 = vsel %vm1965, %v1943, 0
      %v2024 = vsel %vm1965, %v1944, 0
      %v2027 = vsel %vm1965, %v1945, 0
      %v2030 = vsel %vm1965, %v1946, 0
      %v2033 = vsel %vm1965, %v1947, 0
      %v2036 = vsel %vm1965, %v1948, 0
      %v2039 = vsel %vm1965, %v1949, 0
      %v2042 = vsel %vm1965, %v1950, 0
      %v2045 = vsel %vm1965, %v1951, 0
      %v2048 = vsel %vm1965, %v1952, 0
      %v2051 = vsel %vm1965, %v1953, 0
      %v2054 = vsel %vm1965, %v1954, 0
      %v2057 = vsel %vm1965, %v1955, 0
      %v2060 = vsel %vm1965, %v1956, 0
      %v2063 = vsel %vm1965, %v1957, 0
      %2065 = vmatpush.xpose.msra.mxu0 %v2015
      %2066 = vmatpush.xpose.msra.mxu0 %v2012
      %2067 = vmatpush.xpose.msra.mxu0 %v2009
      %2068 = vmatpush.xpose.msra.mxu0 %v2006
      %2069 = vmatpush.xpose.msra.mxu0 %v2003
      %2070 = vmatpush.xpose.msra.mxu0 %v2000
      %2071 = vmatpush.xpose.msra.mxu0 %v1997
      %2072 = vmatpush.xpose.msra.mxu0 %v1994
      %2073 = vmatpush.xpose.msra.mxu0 %v1991
      %2074 = vmatpush.xpose.msra.mxu0 %v1988
      %2075 = vmatpush.xpose.msra.mxu0 %v1985
      %2076 = vmatpush.xpose.msra.mxu0 %v1982
      %2077 = vmatpush.xpose.msra.mxu0 %v1979
      %2078 = vmatpush.xpose.msra.mxu0 %v1976
      %2079 = vmatpush.xpose.msra.mxu0 %v1973
      %2080 = vmatpush.xpose.msra.mxu0 %v1970
      %2081 = vmatmul.f32.gmra.mxu0 %v1967
      %v2082 = vpop.f32.mrf.mxu0
      %v2083 = vadd.f32 %v1963, %v2082
      %2084 = vdwg.mxu0
      %2085 = vmatpush.xpose.msra.mxu0 %v2063
      %2086 = vmatpush.xpose.msra.mxu0 %v2060
      %2087 = vmatpush.xpose.msra.mxu0 %v2057
      %2088 = vmatpush.xpose.msra.mxu0 %v2054
      %2089 = vmatpush.xpose.msra.mxu0 %v2051
      %2090 = vmatpush.xpose.msra.mxu0 %v2048
      %2091 = vmatpush.xpose.msra.mxu0 %v2045
      %2092 = vmatpush.xpose.msra.mxu0 %v2042
      %2093 = vmatpush.xpose.msra.mxu0 %v2039
      %2094 = vmatpush.xpose.msra.mxu0 %v2036
      %2095 = vmatpush.xpose.msra.mxu0 %v2033
      %2096 = vmatpush.xpose.msra.mxu0 %v2030
      %2097 = vmatpush.xpose.msra.mxu0 %v2027
      %2098 = vmatpush.xpose.msra.mxu0 %v2024
      %2099 = vmatpush.xpose.msra.mxu0 %v2021
      %2100 = vmatpush.xpose.msra.mxu0 %v2018
      %2101 = vmatmul.f32.gmra.mxu0 %v1967
      %v2102 = vpop.f32.mrf.mxu0
      %v2103 = vadd.f32 %v1963, %v2102
      %2104 = vdwg.mxu0
      %v2107 = vrot.slane %v2103, 6
      %vm2108 = vcmask 1041408
      %v2109 = vsel %vm2108, %v2083, %v2107
      %2111 = vst [vmem:[%s437] sm:$0xf] %v2109
      %s2112 = smul.u32 2, %s23
      %p2113 = scmp.lt.s32.totalorder %s2112, 3
      %s2114 = scalar_select %p2113, %s2112, 3
      %s2115 = smul.addr %s2114, 2
      %s2116 = scalar_lea.vmem %s12, %s2115
      // Predicated region
      $region69: #{adcdnet_forward.21} parent=67 // pred_check
        %p2117 = pneg %p303
      $region70: #{adcdnet_forward.21} parent=67 // pred_check_branch
        %2119 = sbr.rel (%p2117) target = $region72
      $region71: #{adcdnet_forward.21} parent=67 // pred_region
        %s2120 = smul.u32 2, %s23
      $region72: #{adcdnet_forward.21} parent=67 // pred_fallthru
        _
    $region68: #{adcdnet_forward.21} parent=5 // pred_fallthru
      _
    %p2121 = scmp.le.s32.totalorder 2, %s18
    // Predicated region
    $region73: #{adcdnet_forward.21} parent=5 // pred_check
      %p2122 = pneg %p2121
    $region74: #{adcdnet_forward.21} parent=5 // pred_check_branch
      %2124 = sbr.rel (%p2122) target = $region76
    $region75: #{adcdnet_forward.21} parent=5 // pred_region
      %s2125 = ssub.s32 %s18, 2
      // Predicated region
      $region77: #{adcdnet_forward.21} parent=75 // pred_check
        %p2126 = pneg %p309
      $region78: #{adcdnet_forward.21} parent=75 // pred_check_branch
        %2128 = sbr.rel (%p2126) target = $region80
      $region79: #{adcdnet_forward.21} parent=75 // pred_region
        %s2129 = smul.u32 2, %s24
        %p2130 = scmp.lt.s32.totalorder %s2129, 3
        %s2131 = scalar_select %p2130, %s2129, 3
        %s2132 = smul.addr %s2131, 2
        %s2133 = scalar_lea.vmem %s12, %s2132
      $region80: #{adcdnet_forward.21} parent=75 // pred_fallthru
        _
    $region76: #{adcdnet_forward.21} parent=5 // pred_fallthru
      _
  $region6: #{adcdnet_forward.21} parent=0 // loop_footer
    %s22 = sadd.s32 1, %s18
  $region7: #{adcdnet_forward.21} parent=0 // loop_footer_branch
    %17 = sbr.rel target = $region3
  $region8: #{adcdnet_forward.21} parent=0 // loop_exit
    _

</llo_original>
